<compile_context>
chip_gen: v6e
topology: v6e:2x2x1
jax: 0.10.0
libtpu: 0.0.40
codegen_flags: <defaults>
</compile_context>

<pallas_src>
import jax
import jax.numpy as jnp
from jax.experimental import pallas as pl
from jax.experimental.pallas import tpu as pltpu

_COL_CANDIDATES = (4096, 2048, 1024, 512, 256, 128)  # lane-dense widths
_TARGET_TILE_BYTES = 4 << 20      # ~4 MiB per buffer per grid step
_SMALL_BYTES = 256 << 10          # below this, plain XLA elementwise wins
_SUBLANE = {4: 8, 2: 16, 1: 32}   # sublane multiple by itemsize


def _complex_relu_kernel(r_ref, i_ref, or_ref, oi_ref):
    # One VPU max per vreg; dtype-matched scalar zero (no zero array, no
    # accidental promotion for integer dtypes).
    or_ref[...] = jnp.maximum(r_ref[...], jnp.zeros((), or_ref.dtype))
    oi_ref[...] = jnp.maximum(i_ref[...], jnp.zeros((), oi_ref.dtype))


def _choose_layout(total, dtype):
    """Return (cols, rows, tile_rows) requiring no padding, or None."""
    itemsize = jnp.dtype(dtype).itemsize
    sub = _SUBLANE.get(itemsize)
    if sub is None:            # f64 / complex etc.: no TPU vector path
        return None
    for cols in _COL_CANDIDATES:
        if total % cols:
            continue
        rows = total // cols
        target_rows = max(_TARGET_TILE_BYTES // (cols * itemsize), sub)
        if rows <= target_rows:
            return cols, rows, rows          # single full-height tile
        # Largest divisor of rows that is <= target_rows and a sublane multiple
        # (keeps every block (sub,128)-aligned and the grid exactly even).
        for t in range(target_rows, sub - 1, -sub):
            if rows % t == 0:
                return cols, rows, t
    return None


def complex_relu(input_r, input_i):
    """ReLU applied separately to real and imaginary tensors (any shape)."""
    assert input_r.shape == input_i.shape
    assert input_r.dtype == input_i.dtype
    orig_shape = input_r.shape
    dtype = input_r.dtype
    total = int(input_r.size)
    zero = jnp.zeros((), dtype)

    # Small tensors: repack + launch overhead dominates; XLA elementwise wins.
    if total * jnp.dtype(dtype).itemsize < _SMALL_BYTES:
        return jnp.maximum(input_r, zero), jnp.maximum(input_i, zero)

    layout = _choose_layout(total, dtype)
    if layout is None:
        # Ragged / unsupported sizes: skip Pallas rather than pay pad copies.
        return jnp.maximum(input_r, zero), jnp.maximum(input_i, zero)

    cols, rows, tile_rows = layout

    # Lane-dense 2-D slab: pure reshape of contiguous data, no pad, no slice.
    r2 = input_r.reshape(rows, cols)
    i2 = input_i.reshape(rows, cols)

    spec = pl.BlockSpec((tile_rows, cols), lambda i: (i, 0))

    out_r, out_i = pl.pallas_call(
        _complex_relu_kernel,
        out_shape=(
            jax.ShapeDtypeStruct((rows, cols), dtype),
            jax.ShapeDtypeStruct((rows, cols), dtype),
        ),
        grid=(rows // tile_rows,),
        in_specs=[spec, spec],
        out_specs=(spec, spec),
        compiler_params=pltpu.CompilerParams(
            # Portable multi-TensorCore sharding hint (no-op on 1-TC chips).
            dimension_semantics=("parallel",),
            # 4 arrays x 2 (double-buffer) x <=4 MiB = 32 MiB + Mosaic scratch.
            vmem_limit_bytes=48 << 20,
        ),
    )(r2, i2)

    return out_r.reshape(orig_shape), out_i.reshape(orig_shape)


if __name__ == "__main__":
    key = jax.random.PRNGKey(0)
    k0, k1, k2, k3 = jax.random.split(key, 4)

    # 1) Small NCHW shape consistent with the module -> small-tensor fallback.
    x_r = jax.random.normal(k0, (2, 4, 16, 16), dtype=jnp.float32)
    x_i = jax.random.normal(k1, (2, 4, 16, 16), dtype=jnp.float32)
    out_r, out_i = complex_relu(x_r, x_i)
    jax.block_until_ready((out_r, out_i))
    assert out_r.shape == x_r.shape and out_i.shape == x_i.shape
    assert jnp.allclose(out_r, jnp.maximum(x_r, 0.0))
    assert jnp.allclose(out_i, jnp.maximum(x_i, 0.0))

    # 2) Larger NCHW shape -> Pallas path (multi-tile grid, no padding).
    #    total = 2*32*128*256 = 2M elems -> cols=4096, rows=512, tile=256, grid=2.
    y_r = jax.random.normal(k2, (2, 32, 128, 256), dtype=jnp.float32)
    y_i = jax.random.normal(k3, (2, 32, 128, 256), dtype=jnp.float32)
    o_r, o_i = complex_relu(y_r, y_i)
    jax.block_until_ready((o_r, o_i))
    assert o_r.shape == y_r.shape and o_i.shape == y_i.shape
    assert jnp.allclose(o_r, jnp.maximum(y_r, 0.0))
    assert jnp.allclose(o_i, jnp.maximum(y_i, 0.0))

    # 3) bf16 Pallas path (tile rows scale with itemsize; same VMEM footprint).
    z_r = jax.random.normal(k0, (2, 16, 64, 128), dtype=jnp.bfloat16)
    z_i = jax.random.normal(k1, (2, 16, 64, 128), dtype=jnp.bfloat16)
    p_r, p_i = complex_relu(z_r, z_i)
    jax.block_until_ready((p_r, p_i))
    assert jnp.allclose(p_r, jnp.maximum(z_r, jnp.zeros((), jnp.bfloat16)))
    assert jnp.allclose(p_i, jnp.maximum(z_i, jnp.zeros((), jnp.bfloat16)))

    print("KERNEL_OK")
</pallas_src>

<mosaic_0001>
module attributes {stable_mosaic.version = 11 : i64} {
  func.func @_complex_relu_kernel(%arg0: i32, %arg1: memref<256x4096xf32, #tpu.memory_space<vmem>>, %arg2: memref<256x4096xf32, #tpu.memory_space<vmem>>, %arg3: memref<256x4096xf32, #tpu.memory_space<vmem>>, %arg4: memref<256x4096xf32, #tpu.memory_space<vmem>>) attributes {dimension_semantics = [#tpu.dimension_semantics<parallel>], iteration_bounds = array<i64: 2>, scalar_prefetch = 0 : i64, scratch_operands = 0 : i64, tpu.core_type = #tpu.core_type<tc>, window_params = [{transform_indices = @transform_0, window_bounds = array<i64: 256, 4096>}, {transform_indices = @transform_1, window_bounds = array<i64: 256, 4096>}, {transform_indices = @transform_2, window_bounds = array<i64: 256, 4096>}, {transform_indices = @transform_3, window_bounds = array<i64: 256, 4096>}]} {
    %c0 = arith.constant 0 : index
    %c0_0 = arith.constant 0 : index
    %0 = vector.load %arg1[%c0, %c0_0] : memref<256x4096xf32, #tpu.memory_space<vmem>>, vector<256x4096xf32>
    %cst = arith.constant 0.000000e+00 : f32
    %1 = vector.broadcast %cst : f32 to vector<256x4096xf32>
    %2 = arith.maximumf %0, %1 : vector<256x4096xf32>
    %c0_1 = arith.constant 0 : index
    %c0_2 = arith.constant 0 : index
    %3 = vector.load %arg3[%c0_1, %c0_2] : memref<256x4096xf32, #tpu.memory_space<vmem>>, vector<256x4096xf32>
    tpu.vector_store %arg3[%c0_1, %c0_2], %2 {strides = array<i32>} : memref<256x4096xf32, #tpu.memory_space<vmem>>, vector<256x4096xf32>,
    %c0_3 = arith.constant 0 : index
    %c0_4 = arith.constant 0 : index
    %4 = vector.load %arg2[%c0_3, %c0_4] : memref<256x4096xf32, #tpu.memory_space<vmem>>, vector<256x4096xf32>
    %cst_5 = arith.constant 0.000000e+00 : f32
    %5 = vector.broadcast %cst_5 : f32 to vector<256x4096xf32>
    %6 = arith.maximumf %4, %5 : vector<256x4096xf32>
    %c0_6 = arith.constant 0 : index
    %c0_7 = arith.constant 0 : index
    %7 = vector.load %arg4[%c0_6, %c0_7] : memref<256x4096xf32, #tpu.memory_space<vmem>>, vector<256x4096xf32>
    tpu.vector_store %arg4[%c0_6, %c0_7], %6 {strides = array<i32>} : memref<256x4096xf32, #tpu.memory_space<vmem>>, vector<256x4096xf32>,
    return
  }
  func.func @transform_0(%arg0: i32) -> (i32, i32) {
    %c0_i32 = arith.constant 0 : i32
    %c0_i32_0 = arith.constant 0 : i32
    return %arg0, %c0_i32 : i32, i32
  }
  func.func @transform_1(%arg0: i32) -> (i32, i32) {
    %c0_i32 = arith.constant 0 : i32
    %c0_i32_0 = arith.constant 0 : i32
    return %arg0, %c0_i32 : i32, i32
  }
  func.func @transform_2(%arg0: i32) -> (i32, i32) {
    %c0_i32 = arith.constant 0 : i32
    %c0_i32_0 = arith.constant 0 : i32
    return %arg0, %c0_i32 : i32, i32
  }
  func.func @transform_3(%arg0: i32) -> (i32, i32) {
    %c0_i32 = arith.constant 0 : i32
    %c0_i32_0 = arith.constant 0 : i32
    return %arg0, %c0_i32 : i32, i32
  }
}

</mosaic_0001>

<llo_original>
// kernel: tpu_custom_call.1
$region0: #{tpu_custom_call.1}
  #allocation0 [shape = 'u32[]', space=smem, size = 0x4, offset = 0x4, fixed_abs, tag = 'smem constant byte address 0x4 - core index']
  #allocation1 [shape = 'u32[144,128]{1,0:T(1,128)}', space=vmem, size = 0x12000, scoped, tag = 'internal scratch']
  %s0 = inlined_call_operand.hbm [shape: f32[512,4096], index: 0, kind: input, shape index: {}]
  %s1 = inlined_call_operand.hbm [shape: f32[512,4096], index: 1, kind: input, shape index: {}]
  %s2 = inlined_call_operand.hbm [shape: f32[512,4096], index: 2, kind: output, shape index: {0}]
  %s3 = inlined_call_operand.hbm [shape: f32[512,4096], index: 3, kind: output, shape index: {1}]
  %4 = xla_tuple %s2, %s3
  %s5 = sld [smem:[#allocation0]]
  $region57: #{tpu_custom_call.1} parent=0
    _
  %s7 = ssub.s32 1, %s5
  %s8 = scalar_select 0, %s7, %s5
  $region1: #{tpu_custom_call.1} parent=0
    #allocation2 [shape = 'u8[8388608]{0}', space=vmem, size = 0x800000, scoped, tag = 'input window, operand 0']
    #allocation3 [shape = 's32[2]{0}', space=sflag, size = 0x8, scoped, tag = 'scoped memory for tpu_custom_call.1']
    #allocation4 [shape = 's32[2]{0}', space=sflag, size = 0x8, scoped, tag = 'scoped memory for tpu_custom_call.1']
    #allocation5 [shape = 'u8[8388608]{0}', space=vmem, size = 0x800000, scoped, tag = 'input window, operand 1']
    #allocation6 [shape = 's32[2]{0}', space=sflag, size = 0x8, scoped, tag = 'scoped memory for tpu_custom_call.1']
    #allocation7 [shape = 'u8[8388608]{0}', space=vmem, size = 0x800000, scoped, tag = 'output window, operand 0']
    #allocation8 [shape = 'u8[8388608]{0}', space=vmem, size = 0x800000, scoped, tag = 'output window, operand 1']
    #allocation9 [shape = 's32[2]{0}', space=sflag, size = 0x8, scoped, tag = 'scoped memory for tpu_custom_call.1']
    %9 = vsyncpa [#allocation3], 0
    %s10 = scalar_lea.sflag [#allocation3], 1
    %11 = vsyncpa %s10, 0
    %12 = vsyncpa [#allocation6], 0
    %s13 = scalar_lea.sflag [#allocation6], 1
    %14 = vsyncpa %s13, 0
    %15 = vsyncpa [#allocation4], 0
    %s16 = scalar_lea.sflag [#allocation4], 1
    %17 = vsyncpa %s16, 0
    %18 = vsyncpa [#allocation9], 0
    %s19 = scalar_lea.sflag [#allocation9], 1
    %20 = vsyncpa %s19, 0
    loop: start=0, step=1, limit=4
    $region2: #{tpu_custom_call.1} parent=1 // loop_pre_header
      _
    $region3: #{tpu_custom_call.1} parent=1 // loop_header
      %s22 = sphi 0, %s26
      %p23 = scmp.ge.s32.totalorder %s22, 4
      %s32 = sphi 0, %s34
      %s35 = sphi 0, %s32
      %s36 = sphi 0, %s35
      %s52 = sphi 0, %s36
      %s58 = sphi 0, %s60
      %s61 = sphi 0, %s58
      %s62 = sphi 0, %s61
      %s78 = sphi 0, %s62
      %s84 = sphi 0, %s86
      %s87 = sphi 0, %s84
      %s88 = sphi 0, %s87
      %s104 = sphi 0, %s88
      %s110 = sphi 0, %s112
      %s113 = sphi 0, %s110
      %s114 = sphi 0, %s113
      %s130 = sphi 0, %s114
    $region4: #{tpu_custom_call.1} parent=1 // loop_header_branch
      %25 = sbr.rel (%p23) target = $region8
    $region5: #{tpu_custom_call.1} parent=1 // loop_body
      %s27 = ssub.s32 %s22, 1
      %s28 = ssub.s32 %s22, 2
      %s29 = sadd.s32 %s22, 1
      %s30 = ssub.s32 %s22, %s29
      %p31 = scmp.eq.s32.totalorder %s30, 0
      %s33 = sadd.s32 %s32, 1
      %s34 = scalar_select %p31, %s32, %s33
      %p37 = pneg %p31
      %p38 = scmp.eq.s32.totalorder %s22, 1
      %p39 = por %p37, %p38
      %p40 = scmp.ne.s32.totalorder %s32, %s35
      %p41 = scmp.eq.s32.totalorder %s22, 0
      %p42 = por %p40, %p41
      %p43 = scmp.ne.s32.totalorder %s32, %s35
      %p44 = scmp.eq.s32.totalorder %s27, 1
      %p45 = por %p43, %p44
      %p46 = scmp.ne.s32.totalorder %s35, %s36
      %p47 = scmp.eq.s32.totalorder %s27, 0
      %p48 = por %p46, %p47
      %p49 = scmp.ne.s32.totalorder %s35, %s36
      %p50 = scmp.eq.s32.totalorder %s28, 1
      %p51 = por %p49, %p50
      %p53 = scmp.ne.s32.totalorder %s36, %s52
      %p54 = scmp.eq.s32.totalorder %s28, 0
      %p55 = por %p53, %p54
      %s56 = ssub.s32 %s22, %s29
      %p57 = scmp.eq.s32.totalorder %s56, 0
      %s59 = sadd.s32 %s58, 1
      %s60 = scalar_select %p57, %s58, %s59
      %p63 = pneg %p57
      %p64 = scmp.eq.s32.totalorder %s22, 1
      %p65 = por %p63, %p64
      %p66 = scmp.ne.s32.totalorder %s58, %s61
      %p67 = scmp.eq.s32.totalorder %s22, 0
      %p68 = por %p66, %p67
      %p69 = scmp.ne.s32.totalorder %s58, %s61
      %p70 = scmp.eq.s32.totalorder %s27, 1
      %p71 = por %p69, %p70
      %p72 = scmp.ne.s32.totalorder %s61, %s62
      %p73 = scmp.eq.s32.totalorder %s27, 0
      %p74 = por %p72, %p73
      %p75 = scmp.ne.s32.totalorder %s61, %s62
      %p76 = scmp.eq.s32.totalorder %s28, 1
      %p77 = por %p75, %p76
      %p79 = scmp.ne.s32.totalorder %s62, %s78
      %p80 = scmp.eq.s32.totalorder %s28, 0
      %p81 = por %p79, %p80
      %s82 = ssub.s32 %s22, %s29
      %p83 = scmp.eq.s32.totalorder %s82, 0
      %s85 = sadd.s32 %s84, 1
      %s86 = scalar_select %p83, %s84, %s85
      %p89 = pneg %p83
      %p90 = scmp.eq.s32.totalorder %s22, 1
      %p91 = por %p89, %p90
      %p92 = scmp.ne.s32.totalorder %s84, %s87
      %p93 = scmp.eq.s32.totalorder %s22, 0
      %p94 = por %p92, %p93
      %p95 = scmp.ne.s32.totalorder %s84, %s87
      %p96 = scmp.eq.s32.totalorder %s27, 1
      %p97 = por %p95, %p96
      %p98 = scmp.ne.s32.totalorder %s87, %s88
      %p99 = scmp.eq.s32.totalorder %s27, 0
      %p100 = por %p98, %p99
      %p101 = scmp.ne.s32.totalorder %s87, %s88
      %p102 = scmp.eq.s32.totalorder %s28, 1
      %p103 = por %p101, %p102
      %p105 = scmp.ne.s32.totalorder %s88, %s104
      %p106 = scmp.eq.s32.totalorder %s28, 0
      %p107 = por %p105, %p106
      %s108 = ssub.s32 %s22, %s29
      %p109 = scmp.eq.s32.totalorder %s108, 0
      %s111 = sadd.s32 %s110, 1
      %s112 = scalar_select %p109, %s110, %s111
      %p115 = pneg %p109
      %p116 = scmp.eq.s32.totalorder %s22, 1
      %p117 = por %p115, %p116
      %p118 = scmp.ne.s32.totalorder %s110, %s113
      %p119 = scmp.eq.s32.totalorder %s22, 0
      %p120 = por %p118, %p119
      %p121 = scmp.ne.s32.totalorder %s110, %s113
      %p122 = scmp.eq.s32.totalorder %s27, 1
      %p123 = por %p121, %p122
      %p124 = scmp.ne.s32.totalorder %s113, %s114
      %p125 = scmp.eq.s32.totalorder %s27, 0
      %p126 = por %p124, %p125
      %p127 = scmp.ne.s32.totalorder %s113, %s114
      %p128 = scmp.eq.s32.totalorder %s28, 1
      %p129 = por %p127, %p128
      %p131 = scmp.ne.s32.totalorder %s114, %s130
      %p132 = scmp.eq.s32.totalorder %s28, 0
      %p133 = por %p131, %p132
      %p134 = scmp.le.s32.totalorder 1, %s22
      %p135 = scmp.lt.s32.totalorder %s22, 3
      %p136 = pnand %p134, %p135
      %p137 = pneg %p136
      // Predicated region
      $region9: #{tpu_custom_call.1} parent=5 // pred_check
        _
      $region10: #{tpu_custom_call.1} parent=5 // pred_check_branch
        %139 = sbr.rel (%p136) target = $region12
      $region11: #{tpu_custom_call.1} parent=5 // pred_region
        %s140 = ssub.s32 %s22, 1
      $region12: #{tpu_custom_call.1} parent=5 // pred_fallthru
        _
      %p141 = scmp.lt.s32.totalorder %s22, 2
      // Predicated region
      $region13: #{tpu_custom_call.1} parent=5 // pred_check
        %p142 = pneg %p141
      $region14: #{tpu_custom_call.1} parent=5 // pred_check_branch
        %144 = sbr.rel (%p142) target = $region16
      $region15: #{tpu_custom_call.1} parent=5 // pred_region
        // Predicated region
        $region17: #{tpu_custom_call.1} parent=15 // pred_check
          %p145 = pneg %p42
        $region18: #{tpu_custom_call.1} parent=15 // pred_check_branch
          %147 = sbr.rel (%p145) target = $region20
        $region19: #{tpu_custom_call.1} parent=15 // pred_region
          %s148 = sand.u32 %s32, 1
          %s149 = scalar_lea.sflag [#allocation3], %s148
          %s150 = sand.u32 %s32, 1
          %s151 = smul.addr %s150, 8192
          %s152 = scalar_lea.vmem [#allocation2], %s151
          %s153 = smul.u32 32, %s22
          %s155 = ssub.s32 131072, 131072
          %156 = vsyncadd %s149, %s155
          %s157 = smul.addr %s153, 32
          %s158 = smul.addr %s157, 128
          %s159 = scalar_lea.hbm %s0, %s158
          %s160 = sshll.u32 %s152, 4
          %s161 = int_to_ptr.vmem [resolvable:$true] %s160
          %166 = dma.hbm_to_vmem [thread:$0]  %s159, 131072, %s161, %s149, 4096, 4096, 256
        $region20: #{tpu_custom_call.1} parent=15 // pred_fallthru
          _
        // Predicated region
        $region21: #{tpu_custom_call.1} parent=15 // pred_check
          %p167 = pneg %p68
        $region22: #{tpu_custom_call.1} parent=15 // pred_check_branch
          %169 = sbr.rel (%p167) target = $region24
        $region23: #{tpu_custom_call.1} parent=15 // pred_region
          %s170 = sand.u32 %s58, 1
          %s171 = scalar_lea.sflag [#allocation6], %s170
          %s172 = sand.u32 %s58, 1
          %s173 = smul.addr %s172, 8192
          %s174 = scalar_lea.vmem [#allocation5], %s173
          %s175 = smul.u32 32, %s22
          %s177 = ssub.s32 131072, 131072
          %178 = vsyncadd %s171, %s177
          %s179 = smul.addr %s175, 32
          %s180 = smul.addr %s179, 128
          %s181 = scalar_lea.hbm %s1, %s180
          %s182 = sshll.u32 %s174, 4
          %s183 = int_to_ptr.vmem [resolvable:$true] %s182
          %188 = dma.hbm_to_vmem [thread:$0]  %s181, 131072, %s183, %s171, 4096, 4096, 256
        $region24: #{tpu_custom_call.1} parent=15 // pred_fallthru
          _
      $region16: #{tpu_custom_call.1} parent=5 // pred_fallthru
        _
      %p189 = scmp.le.s32.totalorder 1, %s22
      %p190 = scmp.lt.s32.totalorder %s22, 3
      %p191 = pnand %p189, %p190
      %p192 = pneg %p191
      // Predicated region
      $region25: #{tpu_custom_call.1} parent=5 // pred_check
        _
      $region26: #{tpu_custom_call.1} parent=5 // pred_check_branch
        %194 = sbr.rel (%p191) target = $region28
      $region27: #{tpu_custom_call.1} parent=5 // pred_region
        %s195 = ssub.s32 %s22, 1
        %s196 = sand.u32 %s35, 1
        %s197 = scalar_lea.sflag [#allocation3], %s196
        %s198 = sand.u32 %s35, 1
        %s199 = smul.addr %s198, 8192
        %s200 = scalar_lea.vmem [#allocation2], %s199
        // Predicated region
        $region29: #{tpu_custom_call.1} parent=27 // pred_check
          %p201 = pneg %p48
        $region30: #{tpu_custom_call.1} parent=27 // pred_check_branch
          %203 = sbr.rel (%p201) target = $region32
        $region31: #{tpu_custom_call.1} parent=27 // pred_region
          %204 = dma.done %s197, 131072
        $region32: #{tpu_custom_call.1} parent=27 // pred_fallthru
          _
        %s205 = sand.u32 %s61, 1
        %s206 = scalar_lea.sflag [#allocation6], %s205
        %s207 = sand.u32 %s61, 1
        %s208 = smul.addr %s207, 8192
        %s209 = scalar_lea.vmem [#allocation5], %s208
        // Predicated region
        $region33: #{tpu_custom_call.1} parent=27 // pred_check
          %p210 = pneg %p74
        $region34: #{tpu_custom_call.1} parent=27 // pred_check_branch
          %212 = sbr.rel (%p210) target = $region36
        $region35: #{tpu_custom_call.1} parent=27 // pred_region
          %213 = dma.done %s206, 131072
        $region36: #{tpu_custom_call.1} parent=27 // pred_fallthru
          _
        %s214 = sand.u32 %s35, 1
        %s215 = scalar_lea.sflag [#allocation3], %s214
        %s216 = sand.u32 %s35, 1
        %s217 = smul.addr %s216, 8192
        %s218 = scalar_lea.vmem [#allocation2], %s217
        %p219 = pneg %p48
        %p220 = pneg %p45
        %s221 = sand.u32 %s61, 1
        %s222 = scalar_lea.sflag [#allocation6], %s221
        %s223 = sand.u32 %s61, 1
        %s224 = smul.addr %s223, 8192
        %s225 = scalar_lea.vmem [#allocation5], %s224
        %p226 = pneg %p74
        %p227 = pneg %p71
        %p228 = pneg %p100
        %p229 = pneg %p97
        %s230 = sand.u32 %s87, 1
        %s231 = scalar_lea.sflag [#allocation4], %s230
        %s232 = sand.u32 %s87, 1
        %s233 = smul.addr %s232, 8192
        %s234 = scalar_lea.vmem [#allocation7], %s233
        %p235 = pneg %p126
        %p236 = pneg %p123
        %s237 = sand.u32 %s113, 1
        %s238 = scalar_lea.sflag [#allocation9], %s237
        %s239 = sand.u32 %s113, 1
        %s240 = smul.addr %s239, 8192
        %s241 = scalar_lea.vmem [#allocation8], %s240
        %s242 = smul.u32 32, %s27
        %s243 = smul.u32 32, %s27
        %s244 = smul.u32 32, %s27
        %s245 = smul.u32 32, %s27
        %v246 = vld [vmem:[%s200] sm:$0xff]
        %v247 = vld [vmem:[%s200 + $0x8] sm:$0xff]
        %v248 = vld [vmem:[%s200 + $0x10] sm:$0xff]
        %v249 = vld [vmem:[%s200 + $0x18] sm:$0xff]
        %v250 = vld [vmem:[%s200 + $0x20] sm:$0xff]
        %v251 = vld [vmem:[%s200 + $0x28] sm:$0xff]
        %v252 = vld [vmem:[%s200 + $0x30] sm:$0xff]
        %v253 = vld [vmem:[%s200 + $0x38] sm:$0xff]
        %v254 = vld [vmem:[%s200 + $0x40] sm:$0xff]
        %v255 = vld [vmem:[%s200 + $0x48] sm:$0xff]
        %v256 = vld [vmem:[%s200 + $0x50] sm:$0xff]
        %v257 = vld [vmem:[%s200 + $0x58] sm:$0xff]
        %v258 = vld [vmem:[%s200 + $0x60] sm:$0xff]
        %v259 = vld [vmem:[%s200 + $0x68] sm:$0xff]
        %v260 = vld [vmem:[%s200 + $0x70] sm:$0xff]
        %v261 = vld [vmem:[%s200 + $0x78] sm:$0xff]
        %v262 = vld [vmem:[%s200 + $0x80] sm:$0xff]
        %v263 = vld [vmem:[%s200 + $0x88] sm:$0xff]
        %v264 = vld [vmem:[%s200 + $0x90] sm:$0xff]
        %v265 = vld [vmem:[%s200 + $0x98] sm:$0xff]
        %v266 = vld [vmem:[%s200 + $0xa0] sm:$0xff]
        %v267 = vld [vmem:[%s200 + $0xa8] sm:$0xff]
        %v268 = vld [vmem:[%s200 + $0xb0] sm:$0xff]
        %v269 = vld [vmem:[%s200 + $0xb8] sm:$0xff]
        %v270 = vld [vmem:[%s200 + $0xc0] sm:$0xff]
        %v271 = vld [vmem:[%s200 + $0xc8] sm:$0xff]
        %v272 = vld [vmem:[%s200 + $0xd0] sm:$0xff]
        %v273 = vld [vmem:[%s200 + $0xd8] sm:$0xff]
        %v274 = vld [vmem:[%s200 + $0xe0] sm:$0xff]
        %v275 = vld [vmem:[%s200 + $0xe8] sm:$0xff]
        %v276 = vld [vmem:[%s200 + $0xf0] sm:$0xff]
        %v277 = vld [vmem:[%s200 + $0xf8] sm:$0xff]
        %v278 = vld [vmem:[%s200 + $0x100] sm:$0xff]
        %v279 = vld [vmem:[%s200 + $0x108] sm:$0xff]
        %v280 = vld [vmem:[%s200 + $0x110] sm:$0xff]
        %v281 = vld [vmem:[%s200 + $0x118] sm:$0xff]
        %v282 = vld [vmem:[%s200 + $0x120] sm:$0xff]
        %v283 = vld [vmem:[%s200 + $0x128] sm:$0xff]
        %v284 = vld [vmem:[%s200 + $0x130] sm:$0xff]
        %v285 = vld [vmem:[%s200 + $0x138] sm:$0xff]
        %v286 = vld [vmem:[%s200 + $0x140] sm:$0xff]
        %v287 = vld [vmem:[%s200 + $0x148] sm:$0xff]
        %v288 = vld [vmem:[%s200 + $0x150] sm:$0xff]
        %v289 = vld [vmem:[%s200 + $0x158] sm:$0xff]
        %v290 = vld [vmem:[%s200 + $0x160] sm:$0xff]
        %v291 = vld [vmem:[%s200 + $0x168] sm:$0xff]
        %v292 = vld [vmem:[%s200 + $0x170] sm:$0xff]
        %v293 = vld [vmem:[%s200 + $0x178] sm:$0xff]
        %v294 = vld [vmem:[%s200 + $0x180] sm:$0xff]
        %v295 = vld [vmem:[%s200 + $0x188] sm:$0xff]
        %v296 = vld [vmem:[%s200 + $0x190] sm:$0xff]
        %v297 = vld [vmem:[%s200 + $0x198] sm:$0xff]
        %v298 = vld [vmem:[%s200 + $0x1a0] sm:$0xff]
        %v299 = vld [vmem:[%s200 + $0x1a8] sm:$0xff]
        %v300 = vld [vmem:[%s200 + $0x1b0] sm:$0xff]
        %v301 = vld [vmem:[%s200 + $0x1b8] sm:$0xff]
        %v302 = vld [vmem:[%s200 + $0x1c0] sm:$0xff]
        %v303 = vld [vmem:[%s200 + $0x1c8] sm:$0xff]
        %v304 = vld [vmem:[%s200 + $0x1d0] sm:$0xff]
        %v305 = vld [vmem:[%s200 + $0x1d8] sm:$0xff]
        %v306 = vld [vmem:[%s200 + $0x1e0] sm:$0xff]
        %v307 = vld [vmem:[%s200 + $0x1e8] sm:$0xff]
        %v308 = vld [vmem:[%s200 + $0x1f0] sm:$0xff]
        %v309 = vld [vmem:[%s200 + $0x1f8] sm:$0xff]
        %v310 = vld [vmem:[%s200 + $0x200] sm:$0xff]
        %v311 = vld [vmem:[%s200 + $0x208] sm:$0xff]
        %v312 = vld [vmem:[%s200 + $0x210] sm:$0xff]
        %v313 = vld [vmem:[%s200 + $0x218] sm:$0xff]
        %v314 = vld [vmem:[%s200 + $0x220] sm:$0xff]
        %v315 = vld [vmem:[%s200 + $0x228] sm:$0xff]
        %v316 = vld [vmem:[%s200 + $0x230] sm:$0xff]
        %v317 = vld [vmem:[%s200 + $0x238] sm:$0xff]
        %v318 = vld [vmem:[%s200 + $0x240] sm:$0xff]
        %v319 = vld [vmem:[%s200 + $0x248] sm:$0xff]
        %v320 = vld [vmem:[%s200 + $0x250] sm:$0xff]
        %v321 = vld [vmem:[%s200 + $0x258] sm:$0xff]
        %v322 = vld [vmem:[%s200 + $0x260] sm:$0xff]
        %v323 = vld [vmem:[%s200 + $0x268] sm:$0xff]
        %v324 = vld [vmem:[%s200 + $0x270] sm:$0xff]
        %v325 = vld [vmem:[%s200 + $0x278] sm:$0xff]
        %v326 = vld [vmem:[%s200 + $0x280] sm:$0xff]
        %v327 = vld [vmem:[%s200 + $0x288] sm:$0xff]
        %v328 = vld [vmem:[%s200 + $0x290] sm:$0xff]
        %v329 = vld [vmem:[%s200 + $0x298] sm:$0xff]
        %v330 = vld [vmem:[%s200 + $0x2a0] sm:$0xff]
        %v331 = vld [vmem:[%s200 + $0x2a8] sm:$0xff]
        %v332 = vld [vmem:[%s200 + $0x2b0] sm:$0xff]
        %v333 = vld [vmem:[%s200 + $0x2b8] sm:$0xff]
        %v334 = vld [vmem:[%s200 + $0x2c0] sm:$0xff]
        %v335 = vld [vmem:[%s200 + $0x2c8] sm:$0xff]
        %v336 = vld [vmem:[%s200 + $0x2d0] sm:$0xff]
        %v337 = vld [vmem:[%s200 + $0x2d8] sm:$0xff]
        %v338 = vld [vmem:[%s200 + $0x2e0] sm:$0xff]
        %v339 = vld [vmem:[%s200 + $0x2e8] sm:$0xff]
        %v340 = vld [vmem:[%s200 + $0x2f0] sm:$0xff]
        %v341 = vld [vmem:[%s200 + $0x2f8] sm:$0xff]
        %v342 = vld [vmem:[%s200 + $0x300] sm:$0xff]
        %v343 = vld [vmem:[%s200 + $0x308] sm:$0xff]
        %v344 = vld [vmem:[%s200 + $0x310] sm:$0xff]
        %v345 = vld [vmem:[%s200 + $0x318] sm:$0xff]
        %v346 = vld [vmem:[%s200 + $0x320] sm:$0xff]
        %v347 = vld [vmem:[%s200 + $0x328] sm:$0xff]
        %v348 = vld [vmem:[%s200 + $0x330] sm:$0xff]
        %v349 = vld [vmem:[%s200 + $0x338] sm:$0xff]
        %v350 = vld [vmem:[%s200 + $0x340] sm:$0xff]
        %v351 = vld [vmem:[%s200 + $0x348] sm:$0xff]
        %v352 = vld [vmem:[%s200 + $0x350] sm:$0xff]
        %v353 = vld [vmem:[%s200 + $0x358] sm:$0xff]
        %v354 = vld [vmem:[%s200 + $0x360] sm:$0xff]
        %v355 = vld [vmem:[%s200 + $0x368] sm:$0xff]
        %v356 = vld [vmem:[%s200 + $0x370] sm:$0xff]
        %v357 = vld [vmem:[%s200 + $0x378] sm:$0xff]
        %v358 = vld [vmem:[%s200 + $0x380] sm:$0xff]
        %v359 = vld [vmem:[%s200 + $0x388] sm:$0xff]
        %v360 = vld [vmem:[%s200 + $0x390] sm:$0xff]
        %v361 = vld [vmem:[%s200 + $0x398] sm:$0xff]
        %v362 = vld [vmem:[%s200 + $0x3a0] sm:$0xff]
        %v363 = vld [vmem:[%s200 + $0x3a8] sm:$0xff]
        %v364 = vld [vmem:[%s200 + $0x3b0] sm:$0xff]
        %v365 = vld [vmem:[%s200 + $0x3b8] sm:$0xff]
        %v366 = vld [vmem:[%s200 + $0x3c0] sm:$0xff]
        %v367 = vld [vmem:[%s200 + $0x3c8] sm:$0xff]
        %v368 = vld [vmem:[%s200 + $0x3d0] sm:$0xff]
        %v369 = vld [vmem:[%s200 + $0x3d8] sm:$0xff]
        %v370 = vld [vmem:[%s200 + $0x3e0] sm:$0xff]
        %v371 = vld [vmem:[%s200 + $0x3e8] sm:$0xff]
        %v372 = vld [vmem:[%s200 + $0x3f0] sm:$0xff]
        %v373 = vld [vmem:[%s200 + $0x3f8] sm:$0xff]
        %v374 = vld [vmem:[%s200 + $0x400] sm:$0xff]
        %v375 = vld [vmem:[%s200 + $0x408] sm:$0xff]
        %v376 = vld [vmem:[%s200 + $0x410] sm:$0xff]
        %v377 = vld [vmem:[%s200 + $0x418] sm:$0xff]
        %v378 = vld [vmem:[%s200 + $0x420] sm:$0xff]
        %v379 = vld [vmem:[%s200 + $0x428] sm:$0xff]
        %v380 = vld [vmem:[%s200 + $0x430] sm:$0xff]
        %v381 = vld [vmem:[%s200 + $0x438] sm:$0xff]
        %v382 = vld [vmem:[%s200 + $0x440] sm:$0xff]
        %v383 = vld [vmem:[%s200 + $0x448] sm:$0xff]
        %v384 = vld [vmem:[%s200 + $0x450] sm:$0xff]
        %v385 = vld [vmem:[%s200 + $0x458] sm:$0xff]
        %v386 = vld [vmem:[%s200 + $0x460] sm:$0xff]
        %v387 = vld [vmem:[%s200 + $0x468] sm:$0xff]
        %v388 = vld [vmem:[%s200 + $0x470] sm:$0xff]
        %v389 = vld [vmem:[%s200 + $0x478] sm:$0xff]
        %v390 = vld [vmem:[%s200 + $0x480] sm:$0xff]
        %v391 = vld [vmem:[%s200 + $0x488] sm:$0xff]
        %v392 = vld [vmem:[%s200 + $0x490] sm:$0xff]
        %v393 = vld [vmem:[%s200 + $0x498] sm:$0xff]
        %v394 = vld [vmem:[%s200 + $0x4a0] sm:$0xff]
        %v395 = vld [vmem:[%s200 + $0x4a8] sm:$0xff]
        %v396 = vld [vmem:[%s200 + $0x4b0] sm:$0xff]
        %v397 = vld [vmem:[%s200 + $0x4b8] sm:$0xff]
        %v398 = vld [vmem:[%s200 + $0x4c0] sm:$0xff]
        %v399 = vld [vmem:[%s200 + $0x4c8] sm:$0xff]
        %v400 = vld [vmem:[%s200 + $0x4d0] sm:$0xff]
        %v401 = vld [vmem:[%s200 + $0x4d8] sm:$0xff]
        %v402 = vld [vmem:[%s200 + $0x4e0] sm:$0xff]
        %v403 = vld [vmem:[%s200 + $0x4e8] sm:$0xff]
        %v404 = vld [vmem:[%s200 + $0x4f0] sm:$0xff]
        %v405 = vld [vmem:[%s200 + $0x4f8] sm:$0xff]
        %v406 = vld [vmem:[%s200 + $0x500] sm:$0xff]
        %v407 = vld [vmem:[%s200 + $0x508] sm:$0xff]
        %v408 = vld [vmem:[%s200 + $0x510] sm:$0xff]
        %v409 = vld [vmem:[%s200 + $0x518] sm:$0xff]
        %v410 = vld [vmem:[%s200 + $0x520] sm:$0xff]
        %v411 = vld [vmem:[%s200 + $0x528] sm:$0xff]
        %v412 = vld [vmem:[%s200 + $0x530] sm:$0xff]
        %v413 = vld [vmem:[%s200 + $0x538] sm:$0xff]
        %v414 = vld [vmem:[%s200 + $0x540] sm:$0xff]
        %v415 = vld [vmem:[%s200 + $0x548] sm:$0xff]
        %v416 = vld [vmem:[%s200 + $0x550] sm:$0xff]
        %v417 = vld [vmem:[%s200 + $0x558] sm:$0xff]
        %v418 = vld [vmem:[%s200 + $0x560] sm:$0xff]
        %v419 = vld [vmem:[%s200 + $0x568] sm:$0xff]
        %v420 = vld [vmem:[%s200 + $0x570] sm:$0xff]
        %v421 = vld [vmem:[%s200 + $0x578] sm:$0xff]
        %v422 = vld [vmem:[%s200 + $0x580] sm:$0xff]
        %v423 = vld [vmem:[%s200 + $0x588] sm:$0xff]
        %v424 = vld [vmem:[%s200 + $0x590] sm:$0xff]
        %v425 = vld [vmem:[%s200 + $0x598] sm:$0xff]
        %v426 = vld [vmem:[%s200 + $0x5a0] sm:$0xff]
        %v427 = vld [vmem:[%s200 + $0x5a8] sm:$0xff]
        %v428 = vld [vmem:[%s200 + $0x5b0] sm:$0xff]
        %v429 = vld [vmem:[%s200 + $0x5b8] sm:$0xff]
        %v430 = vld [vmem:[%s200 + $0x5c0] sm:$0xff]
        %v431 = vld [vmem:[%s200 + $0x5c8] sm:$0xff]
        %v432 = vld [vmem:[%s200 + $0x5d0] sm:$0xff]
        %v433 = vld [vmem:[%s200 + $0x5d8] sm:$0xff]
        %v434 = vld [vmem:[%s200 + $0x5e0] sm:$0xff]
        %v435 = vld [vmem:[%s200 + $0x5e8] sm:$0xff]
        %v436 = vld [vmem:[%s200 + $0x5f0] sm:$0xff]
        %v437 = vld [vmem:[%s200 + $0x5f8] sm:$0xff]
        %v438 = vld [vmem:[%s200 + $0x600] sm:$0xff]
        %v439 = vld [vmem:[%s200 + $0x608] sm:$0xff]
        %v440 = vld [vmem:[%s200 + $0x610] sm:$0xff]
        %v441 = vld [vmem:[%s200 + $0x618] sm:$0xff]
        %v442 = vld [vmem:[%s200 + $0x620] sm:$0xff]
        %v443 = vld [vmem:[%s200 + $0x628] sm:$0xff]
        %v444 = vld [vmem:[%s200 + $0x630] sm:$0xff]
        %v445 = vld [vmem:[%s200 + $0x638] sm:$0xff]
        %v446 = vld [vmem:[%s200 + $0x640] sm:$0xff]
        %v447 = vld [vmem:[%s200 + $0x648] sm:$0xff]
        %v448 = vld [vmem:[%s200 + $0x650] sm:$0xff]
        %v449 = vld [vmem:[%s200 + $0x658] sm:$0xff]
        %v450 = vld [vmem:[%s200 + $0x660] sm:$0xff]
        %v451 = vld [vmem:[%s200 + $0x668] sm:$0xff]
        %v452 = vld [vmem:[%s200 + $0x670] sm:$0xff]
        %v453 = vld [vmem:[%s200 + $0x678] sm:$0xff]
        %v454 = vld [vmem:[%s200 + $0x680] sm:$0xff]
        %v455 = vld [vmem:[%s200 + $0x688] sm:$0xff]
        %v456 = vld [vmem:[%s200 + $0x690] sm:$0xff]
        %v457 = vld [vmem:[%s200 + $0x698] sm:$0xff]
        %v458 = vld [vmem:[%s200 + $0x6a0] sm:$0xff]
        %v459 = vld [vmem:[%s200 + $0x6a8] sm:$0xff]
        %v460 = vld [vmem:[%s200 + $0x6b0] sm:$0xff]
        %v461 = vld [vmem:[%s200 + $0x6b8] sm:$0xff]
        %v462 = vld [vmem:[%s200 + $0x6c0] sm:$0xff]
        %v463 = vld [vmem:[%s200 + $0x6c8] sm:$0xff]
        %v464 = vld [vmem:[%s200 + $0x6d0] sm:$0xff]
        %v465 = vld [vmem:[%s200 + $0x6d8] sm:$0xff]
        %v466 = vld [vmem:[%s200 + $0x6e0] sm:$0xff]
        %v467 = vld [vmem:[%s200 + $0x6e8] sm:$0xff]
        %v468 = vld [vmem:[%s200 + $0x6f0] sm:$0xff]
        %v469 = vld [vmem:[%s200 + $0x6f8] sm:$0xff]
        %v470 = vld [vmem:[%s200 + $0x700] sm:$0xff]
        %v471 = vld [vmem:[%s200 + $0x708] sm:$0xff]
        %v472 = vld [vmem:[%s200 + $0x710] sm:$0xff]
        %v473 = vld [vmem:[%s200 + $0x718] sm:$0xff]
        %v474 = vld [vmem:[%s200 + $0x720] sm:$0xff]
        %v475 = vld [vmem:[%s200 + $0x728] sm:$0xff]
        %v476 = vld [vmem:[%s200 + $0x730] sm:$0xff]
        %v477 = vld [vmem:[%s200 + $0x738] sm:$0xff]
        %v478 = vld [vmem:[%s200 + $0x740] sm:$0xff]
        %v479 = vld [vmem:[%s200 + $0x748] sm:$0xff]
        %v480 = vld [vmem:[%s200 + $0x750] sm:$0xff]
        %v481 = vld [vmem:[%s200 + $0x758] sm:$0xff]
        %v482 = vld [vmem:[%s200 + $0x760] sm:$0xff]
        %v483 = vld [vmem:[%s200 + $0x768] sm:$0xff]
        %v484 = vld [vmem:[%s200 + $0x770] sm:$0xff]
        %v485 = vld [vmem:[%s200 + $0x778] sm:$0xff]
        %v486 = vld [vmem:[%s200 + $0x780] sm:$0xff]
        %v487 = vld [vmem:[%s200 + $0x788] sm:$0xff]
        %v488 = vld [vmem:[%s200 + $0x790] sm:$0xff]
        %v489 = vld [vmem:[%s200 + $0x798] sm:$0xff]
        %v490 = vld [vmem:[%s200 + $0x7a0] sm:$0xff]
        %v491 = vld [vmem:[%s200 + $0x7a8] sm:$0xff]
        %v492 = vld [vmem:[%s200 + $0x7b0] sm:$0xff]
        %v493 = vld [vmem:[%s200 + $0x7b8] sm:$0xff]
        %v494 = vld [vmem:[%s200 + $0x7c0] sm:$0xff]
        %v495 = vld [vmem:[%s200 + $0x7c8] sm:$0xff]
        %v496 = vld [vmem:[%s200 + $0x7d0] sm:$0xff]
        %v497 = vld [vmem:[%s200 + $0x7d8] sm:$0xff]
        %v498 = vld [vmem:[%s200 + $0x7e0] sm:$0xff]
        %v499 = vld [vmem:[%s200 + $0x7e8] sm:$0xff]
        %v500 = vld [vmem:[%s200 + $0x7f0] sm:$0xff]
        %v501 = vld [vmem:[%s200 + $0x7f8] sm:$0xff]
        %v502 = vld [vmem:[%s200 + $0x800] sm:$0xff]
        %v503 = vld [vmem:[%s200 + $0x808] sm:$0xff]
        %v504 = vld [vmem:[%s200 + $0x810] sm:$0xff]
        %v505 = vld [vmem:[%s200 + $0x818] sm:$0xff]
        %v506 = vld [vmem:[%s200 + $0x820] sm:$0xff]
        %v507 = vld [vmem:[%s200 + $0x828] sm:$0xff]
        %v508 = vld [vmem:[%s200 + $0x830] sm:$0xff]
        %v509 = vld [vmem:[%s200 + $0x838] sm:$0xff]
        %v510 = vld [vmem:[%s200 + $0x840] sm:$0xff]
        %v511 = vld [vmem:[%s200 + $0x848] sm:$0xff]
        %v512 = vld [vmem:[%s200 + $0x850] sm:$0xff]
        %v513 = vld [vmem:[%s200 + $0x858] sm:$0xff]
        %v514 = vld [vmem:[%s200 + $0x860] sm:$0xff]
        %v515 = vld [vmem:[%s200 + $0x868] sm:$0xff]
        %v516 = vld [vmem:[%s200 + $0x870] sm:$0xff]
        %v517 = vld [vmem:[%s200 + $0x878] sm:$0xff]
        %v518 = vld [vmem:[%s200 + $0x880] sm:$0xff]
        %v519 = vld [vmem:[%s200 + $0x888] sm:$0xff]
        %v520 = vld [vmem:[%s200 + $0x890] sm:$0xff]
        %v521 = vld [vmem:[%s200 + $0x898] sm:$0xff]
        %v522 = vld [vmem:[%s200 + $0x8a0] sm:$0xff]
        %v523 = vld [vmem:[%s200 + $0x8a8] sm:$0xff]
        %v524 = vld [vmem:[%s200 + $0x8b0] sm:$0xff]
        %v525 = vld [vmem:[%s200 + $0x8b8] sm:$0xff]
        %v526 = vld [vmem:[%s200 + $0x8c0] sm:$0xff]
        %v527 = vld [vmem:[%s200 + $0x8c8] sm:$0xff]
        %v528 = vld [vmem:[%s200 + $0x8d0] sm:$0xff]
        %v529 = vld [vmem:[%s200 + $0x8d8] sm:$0xff]
        %v530 = vld [vmem:[%s200 + $0x8e0] sm:$0xff]
        %v531 = vld [vmem:[%s200 + $0x8e8] sm:$0xff]
        %v532 = vld [vmem:[%s200 + $0x8f0] sm:$0xff]
        %v533 = vld [vmem:[%s200 + $0x8f8] sm:$0xff]
        %v534 = vld [vmem:[%s200 + $0x900] sm:$0xff]
        %v535 = vld [vmem:[%s200 + $0x908] sm:$0xff]
        %v536 = vld [vmem:[%s200 + $0x910] sm:$0xff]
        %v537 = vld [vmem:[%s200 + $0x918] sm:$0xff]
        %v538 = vld [vmem:[%s200 + $0x920] sm:$0xff]
        %v539 = vld [vmem:[%s200 + $0x928] sm:$0xff]
        %v540 = vld [vmem:[%s200 + $0x930] sm:$0xff]
        %v541 = vld [vmem:[%s200 + $0x938] sm:$0xff]
        %v542 = vld [vmem:[%s200 + $0x940] sm:$0xff]
        %v543 = vld [vmem:[%s200 + $0x948] sm:$0xff]
        %v544 = vld [vmem:[%s200 + $0x950] sm:$0xff]
        %v545 = vld [vmem:[%s200 + $0x958] sm:$0xff]
        %v546 = vld [vmem:[%s200 + $0x960] sm:$0xff]
        %v547 = vld [vmem:[%s200 + $0x968] sm:$0xff]
        %v548 = vld [vmem:[%s200 + $0x970] sm:$0xff]
        %v549 = vld [vmem:[%s200 + $0x978] sm:$0xff]
        %v550 = vld [vmem:[%s200 + $0x980] sm:$0xff]
        %v551 = vld [vmem:[%s200 + $0x988] sm:$0xff]
        %v552 = vld [vmem:[%s200 + $0x990] sm:$0xff]
        %v553 = vld [vmem:[%s200 + $0x998] sm:$0xff]
        %v554 = vld [vmem:[%s200 + $0x9a0] sm:$0xff]
        %v555 = vld [vmem:[%s200 + $0x9a8] sm:$0xff]
        %v556 = vld [vmem:[%s200 + $0x9b0] sm:$0xff]
        %v557 = vld [vmem:[%s200 + $0x9b8] sm:$0xff]
        %v558 = vld [vmem:[%s200 + $0x9c0] sm:$0xff]
        %v559 = vld [vmem:[%s200 + $0x9c8] sm:$0xff]
        %v560 = vld [vmem:[%s200 + $0x9d0] sm:$0xff]
        %v561 = vld [vmem:[%s200 + $0x9d8] sm:$0xff]
        %v562 = vld [vmem:[%s200 + $0x9e0] sm:$0xff]
        %v563 = vld [vmem:[%s200 + $0x9e8] sm:$0xff]
        %v564 = vld [vmem:[%s200 + $0x9f0] sm:$0xff]
        %v565 = vld [vmem:[%s200 + $0x9f8] sm:$0xff]
        %v566 = vld [vmem:[%s200 + $0xa00] sm:$0xff]
        %v567 = vld [vmem:[%s200 + $0xa08] sm:$0xff]
        %v568 = vld [vmem:[%s200 + $0xa10] sm:$0xff]
        %v569 = vld [vmem:[%s200 + $0xa18] sm:$0xff]
        %v570 = vld [vmem:[%s200 + $0xa20] sm:$0xff]
        %v571 = vld [vmem:[%s200 + $0xa28] sm:$0xff]
        %v572 = vld [vmem:[%s200 + $0xa30] sm:$0xff]
        %v573 = vld [vmem:[%s200 + $0xa38] sm:$0xff]
        %v574 = vld [vmem:[%s200 + $0xa40] sm:$0xff]
        %v575 = vld [vmem:[%s200 + $0xa48] sm:$0xff]
        %v576 = vld [vmem:[%s200 + $0xa50] sm:$0xff]
        %v577 = vld [vmem:[%s200 + $0xa58] sm:$0xff]
        %v578 = vld [vmem:[%s200 + $0xa60] sm:$0xff]
        %v579 = vld [vmem:[%s200 + $0xa68] sm:$0xff]
        %v580 = vld [vmem:[%s200 + $0xa70] sm:$0xff]
        %v581 = vld [vmem:[%s200 + $0xa78] sm:$0xff]
        %v582 = vld [vmem:[%s200 + $0xa80] sm:$0xff]
        %v583 = vld [vmem:[%s200 + $0xa88] sm:$0xff]
        %v584 = vld [vmem:[%s200 + $0xa90] sm:$0xff]
        %v585 = vld [vmem:[%s200 + $0xa98] sm:$0xff]
        %v586 = vld [vmem:[%s200 + $0xaa0] sm:$0xff]
        %v587 = vld [vmem:[%s200 + $0xaa8] sm:$0xff]
        %v588 = vld [vmem:[%s200 + $0xab0] sm:$0xff]
        %v589 = vld [vmem:[%s200 + $0xab8] sm:$0xff]
        %v590 = vld [vmem:[%s200 + $0xac0] sm:$0xff]
        %v591 = vld [vmem:[%s200 + $0xac8] sm:$0xff]
        %v592 = vld [vmem:[%s200 + $0xad0] sm:$0xff]
        %v593 = vld [vmem:[%s200 + $0xad8] sm:$0xff]
        %v594 = vld [vmem:[%s200 + $0xae0] sm:$0xff]
        %v595 = vld [vmem:[%s200 + $0xae8] sm:$0xff]
        %v596 = vld [vmem:[%s200 + $0xaf0] sm:$0xff]
        %v597 = vld [vmem:[%s200 + $0xaf8] sm:$0xff]
        %v598 = vld [vmem:[%s200 + $0xb00] sm:$0xff]
        %v599 = vld [vmem:[%s200 + $0xb08] sm:$0xff]
        %v600 = vld [vmem:[%s200 + $0xb10] sm:$0xff]
        %v601 = vld [vmem:[%s200 + $0xb18] sm:$0xff]
        %v602 = vld [vmem:[%s200 + $0xb20] sm:$0xff]
        %v603 = vld [vmem:[%s200 + $0xb28] sm:$0xff]
        %v604 = vld [vmem:[%s200 + $0xb30] sm:$0xff]
        %v605 = vld [vmem:[%s200 + $0xb38] sm:$0xff]
        %v606 = vld [vmem:[%s200 + $0xb40] sm:$0xff]
        %v607 = vld [vmem:[%s200 + $0xb48] sm:$0xff]
        %v608 = vld [vmem:[%s200 + $0xb50] sm:$0xff]
        %v609 = vld [vmem:[%s200 + $0xb58] sm:$0xff]
        %v610 = vld [vmem:[%s200 + $0xb60] sm:$0xff]
        %v611 = vld [vmem:[%s200 + $0xb68] sm:$0xff]
        %v612 = vld [vmem:[%s200 + $0xb70] sm:$0xff]
        %v613 = vld [vmem:[%s200 + $0xb78] sm:$0xff]
        %v614 = vld [vmem:[%s200 + $0xb80] sm:$0xff]
        %v615 = vld [vmem:[%s200 + $0xb88] sm:$0xff]
        %v616 = vld [vmem:[%s200 + $0xb90] sm:$0xff]
        %v617 = vld [vmem:[%s200 + $0xb98] sm:$0xff]
        %v618 = vld [vmem:[%s200 + $0xba0] sm:$0xff]
        %v619 = vld [vmem:[%s200 + $0xba8] sm:$0xff]
        %v620 = vld [vmem:[%s200 + $0xbb0] sm:$0xff]
        %v621 = vld [vmem:[%s200 + $0xbb8] sm:$0xff]
        %v622 = vld [vmem:[%s200 + $0xbc0] sm:$0xff]
        %v623 = vld [vmem:[%s200 + $0xbc8] sm:$0xff]
        %v624 = vld [vmem:[%s200 + $0xbd0] sm:$0xff]
        %v625 = vld [vmem:[%s200 + $0xbd8] sm:$0xff]
        %v626 = vld [vmem:[%s200 + $0xbe0] sm:$0xff]
        %v627 = vld [vmem:[%s200 + $0xbe8] sm:$0xff]
        %v628 = vld [vmem:[%s200 + $0xbf0] sm:$0xff]
        %v629 = vld [vmem:[%s200 + $0xbf8] sm:$0xff]
        %v630 = vld [vmem:[%s200 + $0xc00] sm:$0xff]
        %v631 = vld [vmem:[%s200 + $0xc08] sm:$0xff]
        %v632 = vld [vmem:[%s200 + $0xc10] sm:$0xff]
        %v633 = vld [vmem:[%s200 + $0xc18] sm:$0xff]
        %v634 = vld [vmem:[%s200 + $0xc20] sm:$0xff]
        %v635 = vld [vmem:[%s200 + $0xc28] sm:$0xff]
        %v636 = vld [vmem:[%s200 + $0xc30] sm:$0xff]
        %v637 = vld [vmem:[%s200 + $0xc38] sm:$0xff]
        %v638 = vld [vmem:[%s200 + $0xc40] sm:$0xff]
        %v639 = vld [vmem:[%s200 + $0xc48] sm:$0xff]
        %v640 = vld [vmem:[%s200 + $0xc50] sm:$0xff]
        %v641 = vld [vmem:[%s200 + $0xc58] sm:$0xff]
        %v642 = vld [vmem:[%s200 + $0xc60] sm:$0xff]
        %v643 = vld [vmem:[%s200 + $0xc68] sm:$0xff]
        %v644 = vld [vmem:[%s200 + $0xc70] sm:$0xff]
        %v645 = vld [vmem:[%s200 + $0xc78] sm:$0xff]
        %v646 = vld [vmem:[%s200 + $0xc80] sm:$0xff]
        %v647 = vld [vmem:[%s200 + $0xc88] sm:$0xff]
        %v648 = vld [vmem:[%s200 + $0xc90] sm:$0xff]
        %v649 = vld [vmem:[%s200 + $0xc98] sm:$0xff]
        %v650 = vld [vmem:[%s200 + $0xca0] sm:$0xff]
        %v651 = vld [vmem:[%s200 + $0xca8] sm:$0xff]
        %v652 = vld [vmem:[%s200 + $0xcb0] sm:$0xff]
        %v653 = vld [vmem:[%s200 + $0xcb8] sm:$0xff]
        %v654 = vld [vmem:[%s200 + $0xcc0] sm:$0xff]
        %v655 = vld [vmem:[%s200 + $0xcc8] sm:$0xff]
        %v656 = vld [vmem:[%s200 + $0xcd0] sm:$0xff]
        %v657 = vld [vmem:[%s200 + $0xcd8] sm:$0xff]
        %v658 = vld [vmem:[%s200 + $0xce0] sm:$0xff]
        %v659 = vld [vmem:[%s200 + $0xce8] sm:$0xff]
        %v660 = vld [vmem:[%s200 + $0xcf0] sm:$0xff]
        %v661 = vld [vmem:[%s200 + $0xcf8] sm:$0xff]
        %v662 = vld [vmem:[%s200 + $0xd00] sm:$0xff]
        %v663 = vld [vmem:[%s200 + $0xd08] sm:$0xff]
        %v664 = vld [vmem:[%s200 + $0xd10] sm:$0xff]
        %v665 = vld [vmem:[%s200 + $0xd18] sm:$0xff]
        %v666 = vld [vmem:[%s200 + $0xd20] sm:$0xff]
        %v667 = vld [vmem:[%s200 + $0xd28] sm:$0xff]
        %v668 = vld [vmem:[%s200 + $0xd30] sm:$0xff]
        %v669 = vld [vmem:[%s200 + $0xd38] sm:$0xff]
        %v670 = vld [vmem:[%s200 + $0xd40] sm:$0xff]
        %v671 = vld [vmem:[%s200 + $0xd48] sm:$0xff]
        %v672 = vld [vmem:[%s200 + $0xd50] sm:$0xff]
        %v673 = vld [vmem:[%s200 + $0xd58] sm:$0xff]
        %v674 = vld [vmem:[%s200 + $0xd60] sm:$0xff]
        %v675 = vld [vmem:[%s200 + $0xd68] sm:$0xff]
        %v676 = vld [vmem:[%s200 + $0xd70] sm:$0xff]
        %v677 = vld [vmem:[%s200 + $0xd78] sm:$0xff]
        %v678 = vld [vmem:[%s200 + $0xd80] sm:$0xff]
        %v679 = vld [vmem:[%s200 + $0xd88] sm:$0xff]
        %v680 = vld [vmem:[%s200 + $0xd90] sm:$0xff]
        %v681 = vld [vmem:[%s200 + $0xd98] sm:$0xff]
        %v682 = vld [vmem:[%s200 + $0xda0] sm:$0xff]
        %v683 = vld [vmem:[%s200 + $0xda8] sm:$0xff]
        %v684 = vld [vmem:[%s200 + $0xdb0] sm:$0xff]
        %v685 = vld [vmem:[%s200 + $0xdb8] sm:$0xff]
        %v686 = vld [vmem:[%s200 + $0xdc0] sm:$0xff]
        %v687 = vld [vmem:[%s200 + $0xdc8] sm:$0xff]
        %v688 = vld [vmem:[%s200 + $0xdd0] sm:$0xff]
        %v689 = vld [vmem:[%s200 + $0xdd8] sm:$0xff]
        %v690 = vld [vmem:[%s200 + $0xde0] sm:$0xff]
        %v691 = vld [vmem:[%s200 + $0xde8] sm:$0xff]
        %v692 = vld [vmem:[%s200 + $0xdf0] sm:$0xff]
        %v693 = vld [vmem:[%s200 + $0xdf8] sm:$0xff]
        %v694 = vld [vmem:[%s200 + $0xe00] sm:$0xff]
        %v695 = vld [vmem:[%s200 + $0xe08] sm:$0xff]
        %v696 = vld [vmem:[%s200 + $0xe10] sm:$0xff]
        %v697 = vld [vmem:[%s200 + $0xe18] sm:$0xff]
        %v698 = vld [vmem:[%s200 + $0xe20] sm:$0xff]
        %v699 = vld [vmem:[%s200 + $0xe28] sm:$0xff]
        %v700 = vld [vmem:[%s200 + $0xe30] sm:$0xff]
        %v701 = vld [vmem:[%s200 + $0xe38] sm:$0xff]
        %v702 = vld [vmem:[%s200 + $0xe40] sm:$0xff]
        %v703 = vld [vmem:[%s200 + $0xe48] sm:$0xff]
        %v704 = vld [vmem:[%s200 + $0xe50] sm:$0xff]
        %v705 = vld [vmem:[%s200 + $0xe58] sm:$0xff]
        %v706 = vld [vmem:[%s200 + $0xe60] sm:$0xff]
        %v707 = vld [vmem:[%s200 + $0xe68] sm:$0xff]
        %v708 = vld [vmem:[%s200 + $0xe70] sm:$0xff]
        %v709 = vld [vmem:[%s200 + $0xe78] sm:$0xff]
        %v710 = vld [vmem:[%s200 + $0xe80] sm:$0xff]
        %v711 = vld [vmem:[%s200 + $0xe88] sm:$0xff]
        %v712 = vld [vmem:[%s200 + $0xe90] sm:$0xff]
        %v713 = vld [vmem:[%s200 + $0xe98] sm:$0xff]
        %v714 = vld [vmem:[%s200 + $0xea0] sm:$0xff]
        %v715 = vld [vmem:[%s200 + $0xea8] sm:$0xff]
        %v716 = vld [vmem:[%s200 + $0xeb0] sm:$0xff]
        %v717 = vld [vmem:[%s200 + $0xeb8] sm:$0xff]
        %v718 = vld [vmem:[%s200 + $0xec0] sm:$0xff]
        %v719 = vld [vmem:[%s200 + $0xec8] sm:$0xff]
        %v720 = vld [vmem:[%s200 + $0xed0] sm:$0xff]
        %v721 = vld [vmem:[%s200 + $0xed8] sm:$0xff]
        %v722 = vld [vmem:[%s200 + $0xee0] sm:$0xff]
        %v723 = vld [vmem:[%s200 + $0xee8] sm:$0xff]
        %v724 = vld [vmem:[%s200 + $0xef0] sm:$0xff]
        %v725 = vld [vmem:[%s200 + $0xef8] sm:$0xff]
        %v726 = vld [vmem:[%s200 + $0xf00] sm:$0xff]
        %v727 = vld [vmem:[%s200 + $0xf08] sm:$0xff]
        %v728 = vld [vmem:[%s200 + $0xf10] sm:$0xff]
        %v729 = vld [vmem:[%s200 + $0xf18] sm:$0xff]
        %v730 = vld [vmem:[%s200 + $0xf20] sm:$0xff]
        %v731 = vld [vmem:[%s200 + $0xf28] sm:$0xff]
        %v732 = vld [vmem:[%s200 + $0xf30] sm:$0xff]
        %v733 = vld [vmem:[%s200 + $0xf38] sm:$0xff]
        %v734 = vld [vmem:[%s200 + $0xf40] sm:$0xff]
        %v735 = vld [vmem:[%s200 + $0xf48] sm:$0xff]
        %v736 = vld [vmem:[%s200 + $0xf50] sm:$0xff]
        %v737 = vld [vmem:[%s200 + $0xf58] sm:$0xff]
        %v738 = vld [vmem:[%s200 + $0xf60] sm:$0xff]
        %v739 = vld [vmem:[%s200 + $0xf68] sm:$0xff]
        %v740 = vld [vmem:[%s200 + $0xf70] sm:$0xff]
        %v741 = vld [vmem:[%s200 + $0xf78] sm:$0xff]
        %v742 = vld [vmem:[%s200 + $0xf80] sm:$0xff]
        %v743 = vld [vmem:[%s200 + $0xf88] sm:$0xff]
        %v744 = vld [vmem:[%s200 + $0xf90] sm:$0xff]
        %v745 = vld [vmem:[%s200 + $0xf98] sm:$0xff]
        %v746 = vld [vmem:[%s200 + $0xfa0] sm:$0xff]
        %v747 = vld [vmem:[%s200 + $0xfa8] sm:$0xff]
        %v748 = vld [vmem:[%s200 + $0xfb0] sm:$0xff]
        %v749 = vld [vmem:[%s200 + $0xfb8] sm:$0xff]
        %v750 = vld [vmem:[%s200 + $0xfc0] sm:$0xff]
        %v751 = vld [vmem:[%s200 + $0xfc8] sm:$0xff]
        %v752 = vld [vmem:[%s200 + $0xfd0] sm:$0xff]
        %v753 = vld [vmem:[%s200 + $0xfd8] sm:$0xff]
        %v754 = vld [vmem:[%s200 + $0xfe0] sm:$0xff]
        %v755 = vld [vmem:[%s200 + $0xfe8] sm:$0xff]
        %v756 = vld [vmem:[%s200 + $0xff0] sm:$0xff]
        %v757 = vld [vmem:[%s200 + $0xff8] sm:$0xff]
        %v758 = vld [vmem:[%s200 + $0x1000] sm:$0xff]
        %v759 = vld [vmem:[%s200 + $0x1008] sm:$0xff]
        %v760 = vld [vmem:[%s200 + $0x1010] sm:$0xff]
        %v761 = vld [vmem:[%s200 + $0x1018] sm:$0xff]
        %v762 = vld [vmem:[%s200 + $0x1020] sm:$0xff]
        %v763 = vld [vmem:[%s200 + $0x1028] sm:$0xff]
        %v764 = vld [vmem:[%s200 + $0x1030] sm:$0xff]
        %v765 = vld [vmem:[%s200 + $0x1038] sm:$0xff]
        %v766 = vld [vmem:[%s200 + $0x1040] sm:$0xff]
        %v767 = vld [vmem:[%s200 + $0x1048] sm:$0xff]
        %v768 = vld [vmem:[%s200 + $0x1050] sm:$0xff]
        %v769 = vld [vmem:[%s200 + $0x1058] sm:$0xff]
        %v770 = vld [vmem:[%s200 + $0x1060] sm:$0xff]
        %v771 = vld [vmem:[%s200 + $0x1068] sm:$0xff]
        %v772 = vld [vmem:[%s200 + $0x1070] sm:$0xff]
        %v773 = vld [vmem:[%s200 + $0x1078] sm:$0xff]
        %v774 = vld [vmem:[%s200 + $0x1080] sm:$0xff]
        %v775 = vld [vmem:[%s200 + $0x1088] sm:$0xff]
        %v776 = vld [vmem:[%s200 + $0x1090] sm:$0xff]
        %v777 = vld [vmem:[%s200 + $0x1098] sm:$0xff]
        %v778 = vld [vmem:[%s200 + $0x10a0] sm:$0xff]
        %v779 = vld [vmem:[%s200 + $0x10a8] sm:$0xff]
        %v780 = vld [vmem:[%s200 + $0x10b0] sm:$0xff]
        %v781 = vld [vmem:[%s200 + $0x10b8] sm:$0xff]
        %v782 = vld [vmem:[%s200 + $0x10c0] sm:$0xff]
        %v783 = vld [vmem:[%s200 + $0x10c8] sm:$0xff]
        %v784 = vld [vmem:[%s200 + $0x10d0] sm:$0xff]
        %v785 = vld [vmem:[%s200 + $0x10d8] sm:$0xff]
        %v786 = vld [vmem:[%s200 + $0x10e0] sm:$0xff]
        %v787 = vld [vmem:[%s200 + $0x10e8] sm:$0xff]
        %v788 = vld [vmem:[%s200 + $0x10f0] sm:$0xff]
        %v789 = vld [vmem:[%s200 + $0x10f8] sm:$0xff]
        %v790 = vld [vmem:[%s200 + $0x1100] sm:$0xff]
        %v791 = vld [vmem:[%s200 + $0x1108] sm:$0xff]
        %v792 = vld [vmem:[%s200 + $0x1110] sm:$0xff]
        %v793 = vld [vmem:[%s200 + $0x1118] sm:$0xff]
        %v794 = vld [vmem:[%s200 + $0x1120] sm:$0xff]
        %v795 = vld [vmem:[%s200 + $0x1128] sm:$0xff]
        %v796 = vld [vmem:[%s200 + $0x1130] sm:$0xff]
        %v797 = vld [vmem:[%s200 + $0x1138] sm:$0xff]
        %v798 = vld [vmem:[%s200 + $0x1140] sm:$0xff]
        %v799 = vld [vmem:[%s200 + $0x1148] sm:$0xff]
        %v800 = vld [vmem:[%s200 + $0x1150] sm:$0xff]
        %v801 = vld [vmem:[%s200 + $0x1158] sm:$0xff]
        %v802 = vld [vmem:[%s200 + $0x1160] sm:$0xff]
        %v803 = vld [vmem:[%s200 + $0x1168] sm:$0xff]
        %v804 = vld [vmem:[%s200 + $0x1170] sm:$0xff]
        %v805 = vld [vmem:[%s200 + $0x1178] sm:$0xff]
        %v806 = vld [vmem:[%s200 + $0x1180] sm:$0xff]
        %v807 = vld [vmem:[%s200 + $0x1188] sm:$0xff]
        %v808 = vld [vmem:[%s200 + $0x1190] sm:$0xff]
        %v809 = vld [vmem:[%s200 + $0x1198] sm:$0xff]
        %v810 = vld [vmem:[%s200 + $0x11a0] sm:$0xff]
        %v811 = vld [vmem:[%s200 + $0x11a8] sm:$0xff]
        %v812 = vld [vmem:[%s200 + $0x11b0] sm:$0xff]
        %v813 = vld [vmem:[%s200 + $0x11b8] sm:$0xff]
        %v814 = vld [vmem:[%s200 + $0x11c0] sm:$0xff]
        %v815 = vld [vmem:[%s200 + $0x11c8] sm:$0xff]
        %v816 = vld [vmem:[%s200 + $0x11d0] sm:$0xff]
        %v817 = vld [vmem:[%s200 + $0x11d8] sm:$0xff]
        %v818 = vld [vmem:[%s200 + $0x11e0] sm:$0xff]
        %v819 = vld [vmem:[%s200 + $0x11e8] sm:$0xff]
        %v820 = vld [vmem:[%s200 + $0x11f0] sm:$0xff]
        %v821 = vld [vmem:[%s200 + $0x11f8] sm:$0xff]
        %v822 = vld [vmem:[%s200 + $0x1200] sm:$0xff]
        %v823 = vld [vmem:[%s200 + $0x1208] sm:$0xff]
        %v824 = vld [vmem:[%s200 + $0x1210] sm:$0xff]
        %v825 = vld [vmem:[%s200 + $0x1218] sm:$0xff]
        %v826 = vld [vmem:[%s200 + $0x1220] sm:$0xff]
        %v827 = vld [vmem:[%s200 + $0x1228] sm:$0xff]
        %v828 = vld [vmem:[%s200 + $0x1230] sm:$0xff]
        %v829 = vld [vmem:[%s200 + $0x1238] sm:$0xff]
        %v830 = vld [vmem:[%s200 + $0x1240] sm:$0xff]
        %v831 = vld [vmem:[%s200 + $0x1248] sm:$0xff]
        %v832 = vld [vmem:[%s200 + $0x1250] sm:$0xff]
        %v833 = vld [vmem:[%s200 + $0x1258] sm:$0xff]
        %v834 = vld [vmem:[%s200 + $0x1260] sm:$0xff]
        %v835 = vld [vmem:[%s200 + $0x1268] sm:$0xff]
        %v836 = vld [vmem:[%s200 + $0x1270] sm:$0xff]
        %v837 = vld [vmem:[%s200 + $0x1278] sm:$0xff]
        %v838 = vld [vmem:[%s200 + $0x1280] sm:$0xff]
        %v839 = vld [vmem:[%s200 + $0x1288] sm:$0xff]
        %v840 = vld [vmem:[%s200 + $0x1290] sm:$0xff]
        %v841 = vld [vmem:[%s200 + $0x1298] sm:$0xff]
        %v842 = vld [vmem:[%s200 + $0x12a0] sm:$0xff]
        %v843 = vld [vmem:[%s200 + $0x12a8] sm:$0xff]
        %v844 = vld [vmem:[%s200 + $0x12b0] sm:$0xff]
        %v845 = vld [vmem:[%s200 + $0x12b8] sm:$0xff]
        %v846 = vld [vmem:[%s200 + $0x12c0] sm:$0xff]
        %v847 = vld [vmem:[%s200 + $0x12c8] sm:$0xff]
        %v848 = vld [vmem:[%s200 + $0x12d0] sm:$0xff]
        %v849 = vld [vmem:[%s200 + $0x12d8] sm:$0xff]
        %v850 = vld [vmem:[%s200 + $0x12e0] sm:$0xff]
        %v851 = vld [vmem:[%s200 + $0x12e8] sm:$0xff]
        %v852 = vld [vmem:[%s200 + $0x12f0] sm:$0xff]
        %v853 = vld [vmem:[%s200 + $0x12f8] sm:$0xff]
        %v854 = vld [vmem:[%s200 + $0x1300] sm:$0xff]
        %v855 = vld [vmem:[%s200 + $0x1308] sm:$0xff]
        %v856 = vld [vmem:[%s200 + $0x1310] sm:$0xff]
        %v857 = vld [vmem:[%s200 + $0x1318] sm:$0xff]
        %v858 = vld [vmem:[%s200 + $0x1320] sm:$0xff]
        %v859 = vld [vmem:[%s200 + $0x1328] sm:$0xff]
        %v860 = vld [vmem:[%s200 + $0x1330] sm:$0xff]
        %v861 = vld [vmem:[%s200 + $0x1338] sm:$0xff]
        %v862 = vld [vmem:[%s200 + $0x1340] sm:$0xff]
        %v863 = vld [vmem:[%s200 + $0x1348] sm:$0xff]
        %v864 = vld [vmem:[%s200 + $0x1350] sm:$0xff]
        %v865 = vld [vmem:[%s200 + $0x1358] sm:$0xff]
        %v866 = vld [vmem:[%s200 + $0x1360] sm:$0xff]
        %v867 = vld [vmem:[%s200 + $0x1368] sm:$0xff]
        %v868 = vld [vmem:[%s200 + $0x1370] sm:$0xff]
        %v869 = vld [vmem:[%s200 + $0x1378] sm:$0xff]
        %v870 = vld [vmem:[%s200 + $0x1380] sm:$0xff]
        %v871 = vld [vmem:[%s200 + $0x1388] sm:$0xff]
        %v872 = vld [vmem:[%s200 + $0x1390] sm:$0xff]
        %v873 = vld [vmem:[%s200 + $0x1398] sm:$0xff]
        %v874 = vld [vmem:[%s200 + $0x13a0] sm:$0xff]
        %v875 = vld [vmem:[%s200 + $0x13a8] sm:$0xff]
        %v876 = vld [vmem:[%s200 + $0x13b0] sm:$0xff]
        %v877 = vld [vmem:[%s200 + $0x13b8] sm:$0xff]
        %v878 = vld [vmem:[%s200 + $0x13c0] sm:$0xff]
        %v879 = vld [vmem:[%s200 + $0x13c8] sm:$0xff]
        %v880 = vld [vmem:[%s200 + $0x13d0] sm:$0xff]
        %v881 = vld [vmem:[%s200 + $0x13d8] sm:$0xff]
        %v882 = vld [vmem:[%s200 + $0x13e0] sm:$0xff]
        %v883 = vld [vmem:[%s200 + $0x13e8] sm:$0xff]
        %v884 = vld [vmem:[%s200 + $0x13f0] sm:$0xff]
        %v885 = vld [vmem:[%s200 + $0x13f8] sm:$0xff]
        %v886 = vld [vmem:[%s200 + $0x1400] sm:$0xff]
        %v887 = vld [vmem:[%s200 + $0x1408] sm:$0xff]
        %v888 = vld [vmem:[%s200 + $0x1410] sm:$0xff]
        %v889 = vld [vmem:[%s200 + $0x1418] sm:$0xff]
        %v890 = vld [vmem:[%s200 + $0x1420] sm:$0xff]
        %v891 = vld [vmem:[%s200 + $0x1428] sm:$0xff]
        %v892 = vld [vmem:[%s200 + $0x1430] sm:$0xff]
        %v893 = vld [vmem:[%s200 + $0x1438] sm:$0xff]
        %v894 = vld [vmem:[%s200 + $0x1440] sm:$0xff]
        %v895 = vld [vmem:[%s200 + $0x1448] sm:$0xff]
        %v896 = vld [vmem:[%s200 + $0x1450] sm:$0xff]
        %v897 = vld [vmem:[%s200 + $0x1458] sm:$0xff]
        %v898 = vld [vmem:[%s200 + $0x1460] sm:$0xff]
        %v899 = vld [vmem:[%s200 + $0x1468] sm:$0xff]
        %v900 = vld [vmem:[%s200 + $0x1470] sm:$0xff]
        %v901 = vld [vmem:[%s200 + $0x1478] sm:$0xff]
        %v902 = vld [vmem:[%s200 + $0x1480] sm:$0xff]
        %v903 = vld [vmem:[%s200 + $0x1488] sm:$0xff]
        %v904 = vld [vmem:[%s200 + $0x1490] sm:$0xff]
        %v905 = vld [vmem:[%s200 + $0x1498] sm:$0xff]
        %v906 = vld [vmem:[%s200 + $0x14a0] sm:$0xff]
        %v907 = vld [vmem:[%s200 + $0x14a8] sm:$0xff]
        %v908 = vld [vmem:[%s200 + $0x14b0] sm:$0xff]
        %v909 = vld [vmem:[%s200 + $0x14b8] sm:$0xff]
        %v910 = vld [vmem:[%s200 + $0x14c0] sm:$0xff]
        %v911 = vld [vmem:[%s200 + $0x14c8] sm:$0xff]
        %v912 = vld [vmem:[%s200 + $0x14d0] sm:$0xff]
        %v913 = vld [vmem:[%s200 + $0x14d8] sm:$0xff]
        %v914 = vld [vmem:[%s200 + $0x14e0] sm:$0xff]
        %v915 = vld [vmem:[%s200 + $0x14e8] sm:$0xff]
        %v916 = vld [vmem:[%s200 + $0x14f0] sm:$0xff]
        %v917 = vld [vmem:[%s200 + $0x14f8] sm:$0xff]
        %v918 = vld [vmem:[%s200 + $0x1500] sm:$0xff]
        %v919 = vld [vmem:[%s200 + $0x1508] sm:$0xff]
        %v920 = vld [vmem:[%s200 + $0x1510] sm:$0xff]
        %v921 = vld [vmem:[%s200 + $0x1518] sm:$0xff]
        %v922 = vld [vmem:[%s200 + $0x1520] sm:$0xff]
        %v923 = vld [vmem:[%s200 + $0x1528] sm:$0xff]
        %v924 = vld [vmem:[%s200 + $0x1530] sm:$0xff]
        %v925 = vld [vmem:[%s200 + $0x1538] sm:$0xff]
        %v926 = vld [vmem:[%s200 + $0x1540] sm:$0xff]
        %v927 = vld [vmem:[%s200 + $0x1548] sm:$0xff]
        %v928 = vld [vmem:[%s200 + $0x1550] sm:$0xff]
        %v929 = vld [vmem:[%s200 + $0x1558] sm:$0xff]
        %v930 = vld [vmem:[%s200 + $0x1560] sm:$0xff]
        %v931 = vld [vmem:[%s200 + $0x1568] sm:$0xff]
        %v932 = vld [vmem:[%s200 + $0x1570] sm:$0xff]
        %v933 = vld [vmem:[%s200 + $0x1578] sm:$0xff]
        %v934 = vld [vmem:[%s200 + $0x1580] sm:$0xff]
        %v935 = vld [vmem:[%s200 + $0x1588] sm:$0xff]
        %v936 = vld [vmem:[%s200 + $0x1590] sm:$0xff]
        %v937 = vld [vmem:[%s200 + $0x1598] sm:$0xff]
        %v938 = vld [vmem:[%s200 + $0x15a0] sm:$0xff]
        %v939 = vld [vmem:[%s200 + $0x15a8] sm:$0xff]
        %v940 = vld [vmem:[%s200 + $0x15b0] sm:$0xff]
        %v941 = vld [vmem:[%s200 + $0x15b8] sm:$0xff]
        %v942 = vld [vmem:[%s200 + $0x15c0] sm:$0xff]
        %v943 = vld [vmem:[%s200 + $0x15c8] sm:$0xff]
        %v944 = vld [vmem:[%s200 + $0x15d0] sm:$0xff]
        %v945 = vld [vmem:[%s200 + $0x15d8] sm:$0xff]
        %v946 = vld [vmem:[%s200 + $0x15e0] sm:$0xff]
        %v947 = vld [vmem:[%s200 + $0x15e8] sm:$0xff]
        %v948 = vld [vmem:[%s200 + $0x15f0] sm:$0xff]
        %v949 = vld [vmem:[%s200 + $0x15f8] sm:$0xff]
        %v950 = vld [vmem:[%s200 + $0x1600] sm:$0xff]
        %v951 = vld [vmem:[%s200 + $0x1608] sm:$0xff]
        %v952 = vld [vmem:[%s200 + $0x1610] sm:$0xff]
        %v953 = vld [vmem:[%s200 + $0x1618] sm:$0xff]
        %v954 = vld [vmem:[%s200 + $0x1620] sm:$0xff]
        %v955 = vld [vmem:[%s200 + $0x1628] sm:$0xff]
        %v956 = vld [vmem:[%s200 + $0x1630] sm:$0xff]
        %v957 = vld [vmem:[%s200 + $0x1638] sm:$0xff]
        %v958 = vld [vmem:[%s200 + $0x1640] sm:$0xff]
        %v959 = vld [vmem:[%s200 + $0x1648] sm:$0xff]
        %v960 = vld [vmem:[%s200 + $0x1650] sm:$0xff]
        %v961 = vld [vmem:[%s200 + $0x1658] sm:$0xff]
        %v962 = vld [vmem:[%s200 + $0x1660] sm:$0xff]
        %v963 = vld [vmem:[%s200 + $0x1668] sm:$0xff]
        %v964 = vld [vmem:[%s200 + $0x1670] sm:$0xff]
        %v965 = vld [vmem:[%s200 + $0x1678] sm:$0xff]
        %v966 = vld [vmem:[%s200 + $0x1680] sm:$0xff]
        %v967 = vld [vmem:[%s200 + $0x1688] sm:$0xff]
        %v968 = vld [vmem:[%s200 + $0x1690] sm:$0xff]
        %v969 = vld [vmem:[%s200 + $0x1698] sm:$0xff]
        %v970 = vld [vmem:[%s200 + $0x16a0] sm:$0xff]
        %v971 = vld [vmem:[%s200 + $0x16a8] sm:$0xff]
        %v972 = vld [vmem:[%s200 + $0x16b0] sm:$0xff]
        %v973 = vld [vmem:[%s200 + $0x16b8] sm:$0xff]
        %v974 = vld [vmem:[%s200 + $0x16c0] sm:$0xff]
        %v975 = vld [vmem:[%s200 + $0x16c8] sm:$0xff]
        %v976 = vld [vmem:[%s200 + $0x16d0] sm:$0xff]
        %v977 = vld [vmem:[%s200 + $0x16d8] sm:$0xff]
        %v978 = vld [vmem:[%s200 + $0x16e0] sm:$0xff]
        %v979 = vld [vmem:[%s200 + $0x16e8] sm:$0xff]
        %v980 = vld [vmem:[%s200 + $0x16f0] sm:$0xff]
        %v981 = vld [vmem:[%s200 + $0x16f8] sm:$0xff]
        %v982 = vld [vmem:[%s200 + $0x1700] sm:$0xff]
        %v983 = vld [vmem:[%s200 + $0x1708] sm:$0xff]
        %v984 = vld [vmem:[%s200 + $0x1710] sm:$0xff]
        %v985 = vld [vmem:[%s200 + $0x1718] sm:$0xff]
        %v986 = vld [vmem:[%s200 + $0x1720] sm:$0xff]
        %v987 = vld [vmem:[%s200 + $0x1728] sm:$0xff]
        %v988 = vld [vmem:[%s200 + $0x1730] sm:$0xff]
        %v989 = vld [vmem:[%s200 + $0x1738] sm:$0xff]
        %v990 = vld [vmem:[%s200 + $0x1740] sm:$0xff]
        %v991 = vld [vmem:[%s200 + $0x1748] sm:$0xff]
        %v992 = vld [vmem:[%s200 + $0x1750] sm:$0xff]
        %v993 = vld [vmem:[%s200 + $0x1758] sm:$0xff]
        %v994 = vld [vmem:[%s200 + $0x1760] sm:$0xff]
        %v995 = vld [vmem:[%s200 + $0x1768] sm:$0xff]
        %v996 = vld [vmem:[%s200 + $0x1770] sm:$0xff]
        %v997 = vld [vmem:[%s200 + $0x1778] sm:$0xff]
        %v998 = vld [vmem:[%s200 + $0x1780] sm:$0xff]
        %v999 = vld [vmem:[%s200 + $0x1788] sm:$0xff]
        %v1000 = vld [vmem:[%s200 + $0x1790] sm:$0xff]
        %v1001 = vld [vmem:[%s200 + $0x1798] sm:$0xff]
        %v1002 = vld [vmem:[%s200 + $0x17a0] sm:$0xff]
        %v1003 = vld [vmem:[%s200 + $0x17a8] sm:$0xff]
        %v1004 = vld [vmem:[%s200 + $0x17b0] sm:$0xff]
        %v1005 = vld [vmem:[%s200 + $0x17b8] sm:$0xff]
        %v1006 = vld [vmem:[%s200 + $0x17c0] sm:$0xff]
        %v1007 = vld [vmem:[%s200 + $0x17c8] sm:$0xff]
        %v1008 = vld [vmem:[%s200 + $0x17d0] sm:$0xff]
        %v1009 = vld [vmem:[%s200 + $0x17d8] sm:$0xff]
        %v1010 = vld [vmem:[%s200 + $0x17e0] sm:$0xff]
        %v1011 = vld [vmem:[%s200 + $0x17e8] sm:$0xff]
        %v1012 = vld [vmem:[%s200 + $0x17f0] sm:$0xff]
        %v1013 = vld [vmem:[%s200 + $0x17f8] sm:$0xff]
        %v1014 = vld [vmem:[%s200 + $0x1800] sm:$0xff]
        %v1015 = vld [vmem:[%s200 + $0x1808] sm:$0xff]
        %v1016 = vld [vmem:[%s200 + $0x1810] sm:$0xff]
        %v1017 = vld [vmem:[%s200 + $0x1818] sm:$0xff]
        %v1018 = vld [vmem:[%s200 + $0x1820] sm:$0xff]
        %v1019 = vld [vmem:[%s200 + $0x1828] sm:$0xff]
        %v1020 = vld [vmem:[%s200 + $0x1830] sm:$0xff]
        %v1021 = vld [vmem:[%s200 + $0x1838] sm:$0xff]
        %v1022 = vld [vmem:[%s200 + $0x1840] sm:$0xff]
        %v1023 = vld [vmem:[%s200 + $0x1848] sm:$0xff]
        %v1024 = vld [vmem:[%s200 + $0x1850] sm:$0xff]
        %v1025 = vld [vmem:[%s200 + $0x1858] sm:$0xff]
        %v1026 = vld [vmem:[%s200 + $0x1860] sm:$0xff]
        %v1027 = vld [vmem:[%s200 + $0x1868] sm:$0xff]
        %v1028 = vld [vmem:[%s200 + $0x1870] sm:$0xff]
        %v1029 = vld [vmem:[%s200 + $0x1878] sm:$0xff]
        %v1030 = vld [vmem:[%s200 + $0x1880] sm:$0xff]
        %v1031 = vld [vmem:[%s200 + $0x1888] sm:$0xff]
        %v1032 = vld [vmem:[%s200 + $0x1890] sm:$0xff]
        %v1033 = vld [vmem:[%s200 + $0x1898] sm:$0xff]
        %v1034 = vld [vmem:[%s200 + $0x18a0] sm:$0xff]
        %v1035 = vld [vmem:[%s200 + $0x18a8] sm:$0xff]
        %v1036 = vld [vmem:[%s200 + $0x18b0] sm:$0xff]
        %v1037 = vld [vmem:[%s200 + $0x18b8] sm:$0xff]
        %v1038 = vld [vmem:[%s200 + $0x18c0] sm:$0xff]
        %v1039 = vld [vmem:[%s200 + $0x18c8] sm:$0xff]
        %v1040 = vld [vmem:[%s200 + $0x18d0] sm:$0xff]
        %v1041 = vld [vmem:[%s200 + $0x18d8] sm:$0xff]
        %v1042 = vld [vmem:[%s200 + $0x18e0] sm:$0xff]
        %v1043 = vld [vmem:[%s200 + $0x18e8] sm:$0xff]
        %v1044 = vld [vmem:[%s200 + $0x18f0] sm:$0xff]
        %v1045 = vld [vmem:[%s200 + $0x18f8] sm:$0xff]
        %v1046 = vld [vmem:[%s200 + $0x1900] sm:$0xff]
        %v1047 = vld [vmem:[%s200 + $0x1908] sm:$0xff]
        %v1048 = vld [vmem:[%s200 + $0x1910] sm:$0xff]
        %v1049 = vld [vmem:[%s200 + $0x1918] sm:$0xff]
        %v1050 = vld [vmem:[%s200 + $0x1920] sm:$0xff]
        %v1051 = vld [vmem:[%s200 + $0x1928] sm:$0xff]
        %v1052 = vld [vmem:[%s200 + $0x1930] sm:$0xff]
        %v1053 = vld [vmem:[%s200 + $0x1938] sm:$0xff]
        %v1054 = vld [vmem:[%s200 + $0x1940] sm:$0xff]
        %v1055 = vld [vmem:[%s200 + $0x1948] sm:$0xff]
        %v1056 = vld [vmem:[%s200 + $0x1950] sm:$0xff]
        %v1057 = vld [vmem:[%s200 + $0x1958] sm:$0xff]
        %v1058 = vld [vmem:[%s200 + $0x1960] sm:$0xff]
        %v1059 = vld [vmem:[%s200 + $0x1968] sm:$0xff]
        %v1060 = vld [vmem:[%s200 + $0x1970] sm:$0xff]
        %v1061 = vld [vmem:[%s200 + $0x1978] sm:$0xff]
        %v1062 = vld [vmem:[%s200 + $0x1980] sm:$0xff]
        %v1063 = vld [vmem:[%s200 + $0x1988] sm:$0xff]
        %v1064 = vld [vmem:[%s200 + $0x1990] sm:$0xff]
        %v1065 = vld [vmem:[%s200 + $0x1998] sm:$0xff]
        %v1066 = vld [vmem:[%s200 + $0x19a0] sm:$0xff]
        %v1067 = vld [vmem:[%s200 + $0x19a8] sm:$0xff]
        %v1068 = vld [vmem:[%s200 + $0x19b0] sm:$0xff]
        %v1069 = vld [vmem:[%s200 + $0x19b8] sm:$0xff]
        %v1070 = vld [vmem:[%s200 + $0x19c0] sm:$0xff]
        %v1071 = vld [vmem:[%s200 + $0x19c8] sm:$0xff]
        %v1072 = vld [vmem:[%s200 + $0x19d0] sm:$0xff]
        %v1073 = vld [vmem:[%s200 + $0x19d8] sm:$0xff]
        %v1074 = vld [vmem:[%s200 + $0x19e0] sm:$0xff]
        %v1075 = vld [vmem:[%s200 + $0x19e8] sm:$0xff]
        %v1076 = vld [vmem:[%s200 + $0x19f0] sm:$0xff]
        %v1077 = vld [vmem:[%s200 + $0x19f8] sm:$0xff]
        %v1078 = vld [vmem:[%s200 + $0x1a00] sm:$0xff]
        %v1079 = vld [vmem:[%s200 + $0x1a08] sm:$0xff]
        %v1080 = vld [vmem:[%s200 + $0x1a10] sm:$0xff]
        %v1081 = vld [vmem:[%s200 + $0x1a18] sm:$0xff]
        %v1082 = vld [vmem:[%s200 + $0x1a20] sm:$0xff]
        %v1083 = vld [vmem:[%s200 + $0x1a28] sm:$0xff]
        %v1084 = vld [vmem:[%s200 + $0x1a30] sm:$0xff]
        %v1085 = vld [vmem:[%s200 + $0x1a38] sm:$0xff]
        %v1086 = vld [vmem:[%s200 + $0x1a40] sm:$0xff]
        %v1087 = vld [vmem:[%s200 + $0x1a48] sm:$0xff]
        %v1088 = vld [vmem:[%s200 + $0x1a50] sm:$0xff]
        %v1089 = vld [vmem:[%s200 + $0x1a58] sm:$0xff]
        %v1090 = vld [vmem:[%s200 + $0x1a60] sm:$0xff]
        %v1091 = vld [vmem:[%s200 + $0x1a68] sm:$0xff]
        %v1092 = vld [vmem:[%s200 + $0x1a70] sm:$0xff]
        %v1093 = vld [vmem:[%s200 + $0x1a78] sm:$0xff]
        %v1094 = vld [vmem:[%s200 + $0x1a80] sm:$0xff]
        %v1095 = vld [vmem:[%s200 + $0x1a88] sm:$0xff]
        %v1096 = vld [vmem:[%s200 + $0x1a90] sm:$0xff]
        %v1097 = vld [vmem:[%s200 + $0x1a98] sm:$0xff]
        %v1098 = vld [vmem:[%s200 + $0x1aa0] sm:$0xff]
        %v1099 = vld [vmem:[%s200 + $0x1aa8] sm:$0xff]
        %v1100 = vld [vmem:[%s200 + $0x1ab0] sm:$0xff]
        %v1101 = vld [vmem:[%s200 + $0x1ab8] sm:$0xff]
        %v1102 = vld [vmem:[%s200 + $0x1ac0] sm:$0xff]
        %v1103 = vld [vmem:[%s200 + $0x1ac8] sm:$0xff]
        %v1104 = vld [vmem:[%s200 + $0x1ad0] sm:$0xff]
        %v1105 = vld [vmem:[%s200 + $0x1ad8] sm:$0xff]
        %v1106 = vld [vmem:[%s200 + $0x1ae0] sm:$0xff]
        %v1107 = vld [vmem:[%s200 + $0x1ae8] sm:$0xff]
        %v1108 = vld [vmem:[%s200 + $0x1af0] sm:$0xff]
        %v1109 = vld [vmem:[%s200 + $0x1af8] sm:$0xff]
        %v1110 = vld [vmem:[%s200 + $0x1b00] sm:$0xff]
        %v1111 = vld [vmem:[%s200 + $0x1b08] sm:$0xff]
        %v1112 = vld [vmem:[%s200 + $0x1b10] sm:$0xff]
        %v1113 = vld [vmem:[%s200 + $0x1b18] sm:$0xff]
        %v1114 = vld [vmem:[%s200 + $0x1b20] sm:$0xff]
        %v1115 = vld [vmem:[%s200 + $0x1b28] sm:$0xff]
        %v1116 = vld [vmem:[%s200 + $0x1b30] sm:$0xff]
        %v1117 = vld [vmem:[%s200 + $0x1b38] sm:$0xff]
        %v1118 = vld [vmem:[%s200 + $0x1b40] sm:$0xff]
        %v1119 = vld [vmem:[%s200 + $0x1b48] sm:$0xff]
        %v1120 = vld [vmem:[%s200 + $0x1b50] sm:$0xff]
        %v1121 = vld [vmem:[%s200 + $0x1b58] sm:$0xff]
        %v1122 = vld [vmem:[%s200 + $0x1b60] sm:$0xff]
        %v1123 = vld [vmem:[%s200 + $0x1b68] sm:$0xff]
        %v1124 = vld [vmem:[%s200 + $0x1b70] sm:$0xff]
        %v1125 = vld [vmem:[%s200 + $0x1b78] sm:$0xff]
        %v1126 = vld [vmem:[%s200 + $0x1b80] sm:$0xff]
        %v1127 = vld [vmem:[%s200 + $0x1b88] sm:$0xff]
        %v1128 = vld [vmem:[%s200 + $0x1b90] sm:$0xff]
        %v1129 = vld [vmem:[%s200 + $0x1b98] sm:$0xff]
        %v1130 = vld [vmem:[%s200 + $0x1ba0] sm:$0xff]
        %v1131 = vld [vmem:[%s200 + $0x1ba8] sm:$0xff]
        %v1132 = vld [vmem:[%s200 + $0x1bb0] sm:$0xff]
        %v1133 = vld [vmem:[%s200 + $0x1bb8] sm:$0xff]
        %v1134 = vld [vmem:[%s200 + $0x1bc0] sm:$0xff]
        %v1135 = vld [vmem:[%s200 + $0x1bc8] sm:$0xff]
        %v1136 = vld [vmem:[%s200 + $0x1bd0] sm:$0xff]
        %v1137 = vld [vmem:[%s200 + $0x1bd8] sm:$0xff]
        %v1138 = vld [vmem:[%s200 + $0x1be0] sm:$0xff]
        %v1139 = vld [vmem:[%s200 + $0x1be8] sm:$0xff]
        %v1140 = vld [vmem:[%s200 + $0x1bf0] sm:$0xff]
        %v1141 = vld [vmem:[%s200 + $0x1bf8] sm:$0xff]
        %v1142 = vld [vmem:[%s200 + $0x1c00] sm:$0xff]
        %v1143 = vld [vmem:[%s200 + $0x1c08] sm:$0xff]
        %v1144 = vld [vmem:[%s200 + $0x1c10] sm:$0xff]
        %v1145 = vld [vmem:[%s200 + $0x1c18] sm:$0xff]
        %v1146 = vld [vmem:[%s200 + $0x1c20] sm:$0xff]
        %v1147 = vld [vmem:[%s200 + $0x1c28] sm:$0xff]
        %v1148 = vld [vmem:[%s200 + $0x1c30] sm:$0xff]
        %v1149 = vld [vmem:[%s200 + $0x1c38] sm:$0xff]
        %v1150 = vld [vmem:[%s200 + $0x1c40] sm:$0xff]
        %v1151 = vld [vmem:[%s200 + $0x1c48] sm:$0xff]
        %v1152 = vld [vmem:[%s200 + $0x1c50] sm:$0xff]
        %v1153 = vld [vmem:[%s200 + $0x1c58] sm:$0xff]
        %v1154 = vld [vmem:[%s200 + $0x1c60] sm:$0xff]
        %v1155 = vld [vmem:[%s200 + $0x1c68] sm:$0xff]
        %v1156 = vld [vmem:[%s200 + $0x1c70] sm:$0xff]
        %v1157 = vld [vmem:[%s200 + $0x1c78] sm:$0xff]
        %v1158 = vld [vmem:[%s200 + $0x1c80] sm:$0xff]
        %v1159 = vld [vmem:[%s200 + $0x1c88] sm:$0xff]
        %v1160 = vld [vmem:[%s200 + $0x1c90] sm:$0xff]
        %v1161 = vld [vmem:[%s200 + $0x1c98] sm:$0xff]
        %v1162 = vld [vmem:[%s200 + $0x1ca0] sm:$0xff]
        %v1163 = vld [vmem:[%s200 + $0x1ca8] sm:$0xff]
        %v1164 = vld [vmem:[%s200 + $0x1cb0] sm:$0xff]
        %v1165 = vld [vmem:[%s200 + $0x1cb8] sm:$0xff]
        %v1166 = vld [vmem:[%s200 + $0x1cc0] sm:$0xff]
        %v1167 = vld [vmem:[%s200 + $0x1cc8] sm:$0xff]
        %v1168 = vld [vmem:[%s200 + $0x1cd0] sm:$0xff]
        %v1169 = vld [vmem:[%s200 + $0x1cd8] sm:$0xff]
        %v1170 = vld [vmem:[%s200 + $0x1ce0] sm:$0xff]
        %v1171 = vld [vmem:[%s200 + $0x1ce8] sm:$0xff]
        %v1172 = vld [vmem:[%s200 + $0x1cf0] sm:$0xff]
        %v1173 = vld [vmem:[%s200 + $0x1cf8] sm:$0xff]
        %v1174 = vld [vmem:[%s200 + $0x1d00] sm:$0xff]
        %v1175 = vld [vmem:[%s200 + $0x1d08] sm:$0xff]
        %v1176 = vld [vmem:[%s200 + $0x1d10] sm:$0xff]
        %v1177 = vld [vmem:[%s200 + $0x1d18] sm:$0xff]
        %v1178 = vld [vmem:[%s200 + $0x1d20] sm:$0xff]
        %v1179 = vld [vmem:[%s200 + $0x1d28] sm:$0xff]
        %v1180 = vld [vmem:[%s200 + $0x1d30] sm:$0xff]
        %v1181 = vld [vmem:[%s200 + $0x1d38] sm:$0xff]
        %v1182 = vld [vmem:[%s200 + $0x1d40] sm:$0xff]
        %v1183 = vld [vmem:[%s200 + $0x1d48] sm:$0xff]
        %v1184 = vld [vmem:[%s200 + $0x1d50] sm:$0xff]
        %v1185 = vld [vmem:[%s200 + $0x1d58] sm:$0xff]
        %v1186 = vld [vmem:[%s200 + $0x1d60] sm:$0xff]
        %v1187 = vld [vmem:[%s200 + $0x1d68] sm:$0xff]
        %v1188 = vld [vmem:[%s200 + $0x1d70] sm:$0xff]
        %v1189 = vld [vmem:[%s200 + $0x1d78] sm:$0xff]
        %v1190 = vld [vmem:[%s200 + $0x1d80] sm:$0xff]
        %v1191 = vld [vmem:[%s200 + $0x1d88] sm:$0xff]
        %v1192 = vld [vmem:[%s200 + $0x1d90] sm:$0xff]
        %v1193 = vld [vmem:[%s200 + $0x1d98] sm:$0xff]
        %v1194 = vld [vmem:[%s200 + $0x1da0] sm:$0xff]
        %v1195 = vld [vmem:[%s200 + $0x1da8] sm:$0xff]
        %v1196 = vld [vmem:[%s200 + $0x1db0] sm:$0xff]
        %v1197 = vld [vmem:[%s200 + $0x1db8] sm:$0xff]
        %v1198 = vld [vmem:[%s200 + $0x1dc0] sm:$0xff]
        %v1199 = vld [vmem:[%s200 + $0x1dc8] sm:$0xff]
        %v1200 = vld [vmem:[%s200 + $0x1dd0] sm:$0xff]
        %v1201 = vld [vmem:[%s200 + $0x1dd8] sm:$0xff]
        %v1202 = vld [vmem:[%s200 + $0x1de0] sm:$0xff]
        %v1203 = vld [vmem:[%s200 + $0x1de8] sm:$0xff]
        %v1204 = vld [vmem:[%s200 + $0x1df0] sm:$0xff]
        %v1205 = vld [vmem:[%s200 + $0x1df8] sm:$0xff]
        %v1206 = vld [vmem:[%s200 + $0x1e00] sm:$0xff]
        %v1207 = vld [vmem:[%s200 + $0x1e08] sm:$0xff]
        %v1208 = vld [vmem:[%s200 + $0x1e10] sm:$0xff]
        %v1209 = vld [vmem:[%s200 + $0x1e18] sm:$0xff]
        %v1210 = vld [vmem:[%s200 + $0x1e20] sm:$0xff]
        %v1211 = vld [vmem:[%s200 + $0x1e28] sm:$0xff]
        %v1212 = vld [vmem:[%s200 + $0x1e30] sm:$0xff]
        %v1213 = vld [vmem:[%s200 + $0x1e38] sm:$0xff]
        %v1214 = vld [vmem:[%s200 + $0x1e40] sm:$0xff]
        %v1215 = vld [vmem:[%s200 + $0x1e48] sm:$0xff]
        %v1216 = vld [vmem:[%s200 + $0x1e50] sm:$0xff]
        %v1217 = vld [vmem:[%s200 + $0x1e58] sm:$0xff]
        %v1218 = vld [vmem:[%s200 + $0x1e60] sm:$0xff]
        %v1219 = vld [vmem:[%s200 + $0x1e68] sm:$0xff]
        %v1220 = vld [vmem:[%s200 + $0x1e70] sm:$0xff]
        %v1221 = vld [vmem:[%s200 + $0x1e78] sm:$0xff]
        %v1222 = vld [vmem:[%s200 + $0x1e80] sm:$0xff]
        %v1223 = vld [vmem:[%s200 + $0x1e88] sm:$0xff]
        %v1224 = vld [vmem:[%s200 + $0x1e90] sm:$0xff]
        %v1225 = vld [vmem:[%s200 + $0x1e98] sm:$0xff]
        %v1226 = vld [vmem:[%s200 + $0x1ea0] sm:$0xff]
        %v1227 = vld [vmem:[%s200 + $0x1ea8] sm:$0xff]
        %v1228 = vld [vmem:[%s200 + $0x1eb0] sm:$0xff]
        %v1229 = vld [vmem:[%s200 + $0x1eb8] sm:$0xff]
        %v1230 = vld [vmem:[%s200 + $0x1ec0] sm:$0xff]
        %v1231 = vld [vmem:[%s200 + $0x1ec8] sm:$0xff]
        %v1232 = vld [vmem:[%s200 + $0x1ed0] sm:$0xff]
        %v1233 = vld [vmem:[%s200 + $0x1ed8] sm:$0xff]
        %v1234 = vld [vmem:[%s200 + $0x1ee0] sm:$0xff]
        %v1235 = vld [vmem:[%s200 + $0x1ee8] sm:$0xff]
        %v1236 = vld [vmem:[%s200 + $0x1ef0] sm:$0xff]
        %v1237 = vld [vmem:[%s200 + $0x1ef8] sm:$0xff]
        %v1238 = vld [vmem:[%s200 + $0x1f00] sm:$0xff]
        %v1239 = vld [vmem:[%s200 + $0x1f08] sm:$0xff]
        %v1240 = vld [vmem:[%s200 + $0x1f10] sm:$0xff]
        %v1241 = vld [vmem:[%s200 + $0x1f18] sm:$0xff]
        %v1242 = vld [vmem:[%s200 + $0x1f20] sm:$0xff]
        %v1243 = vld [vmem:[%s200 + $0x1f28] sm:$0xff]
        %v1244 = vld [vmem:[%s200 + $0x1f30] sm:$0xff]
        %v1245 = vld [vmem:[%s200 + $0x1f38] sm:$0xff]
        %v1246 = vld [vmem:[%s200 + $0x1f40] sm:$0xff]
        %v1247 = vld [vmem:[%s200 + $0x1f48] sm:$0xff]
        %v1248 = vld [vmem:[%s200 + $0x1f50] sm:$0xff]
        %v1249 = vld [vmem:[%s200 + $0x1f58] sm:$0xff]
        %v1250 = vld [vmem:[%s200 + $0x1f60] sm:$0xff]
        %v1251 = vld [vmem:[%s200 + $0x1f68] sm:$0xff]
        %v1252 = vld [vmem:[%s200 + $0x1f70] sm:$0xff]
        %v1253 = vld [vmem:[%s200 + $0x1f78] sm:$0xff]
        %v1254 = vld [vmem:[%s200 + $0x1f80] sm:$0xff]
        %v1255 = vld [vmem:[%s200 + $0x1f88] sm:$0xff]
        %v1256 = vld [vmem:[%s200 + $0x1f90] sm:$0xff]
        %v1257 = vld [vmem:[%s200 + $0x1f98] sm:$0xff]
        %v1258 = vld [vmem:[%s200 + $0x1fa0] sm:$0xff]
        %v1259 = vld [vmem:[%s200 + $0x1fa8] sm:$0xff]
        %v1260 = vld [vmem:[%s200 + $0x1fb0] sm:$0xff]
        %v1261 = vld [vmem:[%s200 + $0x1fb8] sm:$0xff]
        %v1262 = vld [vmem:[%s200 + $0x1fc0] sm:$0xff]
        %v1263 = vld [vmem:[%s200 + $0x1fc8] sm:$0xff]
        %v1264 = vld [vmem:[%s200 + $0x1fd0] sm:$0xff]
        %v1265 = vld [vmem:[%s200 + $0x1fd8] sm:$0xff]
        %v1266 = vld [vmem:[%s200 + $0x1fe0] sm:$0xff]
        %v1267 = vld [vmem:[%s200 + $0x1fe8] sm:$0xff]
        %v1268 = vld [vmem:[%s200 + $0x1ff0] sm:$0xff]
        %v1269 = vld [vmem:[%s200 + $0x1ff8] sm:$0xff]
        %v1270 = vmax.f32 %v246, 0.0
        %v1271 = vmax.f32 %v247, 0.0
        %v1272 = vmax.f32 %v248, 0.0
        %v1273 = vmax.f32 %v249, 0.0
        %v1274 = vmax.f32 %v250, 0.0
        %v1275 = vmax.f32 %v251, 0.0
        %v1276 = vmax.f32 %v252, 0.0
        %v1277 = vmax.f32 %v253, 0.0
        %v1278 = vmax.f32 %v254, 0.0
        %v1279 = vmax.f32 %v255, 0.0
        %v1280 = vmax.f32 %v256, 0.0
        %v1281 = vmax.f32 %v257, 0.0
        %v1282 = vmax.f32 %v258, 0.0
        %v1283 = vmax.f32 %v259, 0.0
        %v1284 = vmax.f32 %v260, 0.0
        %v1285 = vmax.f32 %v261, 0.0
        %v1286 = vmax.f32 %v262, 0.0
        %v1287 = vmax.f32 %v263, 0.0
        %v1288 = vmax.f32 %v264, 0.0
        %v1289 = vmax.f32 %v265, 0.0
        %v1290 = vmax.f32 %v266, 0.0
        %v1291 = vmax.f32 %v267, 0.0
        %v1292 = vmax.f32 %v268, 0.0
        %v1293 = vmax.f32 %v269, 0.0
        %v1294 = vmax.f32 %v270, 0.0
        %v1295 = vmax.f32 %v271, 0.0
        %v1296 = vmax.f32 %v272, 0.0
        %v1297 = vmax.f32 %v273, 0.0
        %v1298 = vmax.f32 %v274, 0.0
        %v1299 = vmax.f32 %v275, 0.0
        %v1300 = vmax.f32 %v276, 0.0
        %v1301 = vmax.f32 %v277, 0.0
        %v1302 = vmax.f32 %v278, 0.0
        %v1303 = vmax.f32 %v279, 0.0
        %v1304 = vmax.f32 %v280, 0.0
        %v1305 = vmax.f32 %v281, 0.0
        %v1306 = vmax.f32 %v282, 0.0
        %v1307 = vmax.f32 %v283, 0.0
        %v1308 = vmax.f32 %v284, 0.0
        %v1309 = vmax.f32 %v285, 0.0
        %v1310 = vmax.f32 %v286, 0.0
        %v1311 = vmax.f32 %v287, 0.0
        %v1312 = vmax.f32 %v288, 0.0
        %v1313 = vmax.f32 %v289, 0.0
        %v1314 = vmax.f32 %v290, 0.0
        %v1315 = vmax.f32 %v291, 0.0
        %v1316 = vmax.f32 %v292, 0.0
        %v1317 = vmax.f32 %v293, 0.0
        %v1318 = vmax.f32 %v294, 0.0
        %v1319 = vmax.f32 %v295, 0.0
        %v1320 = vmax.f32 %v296, 0.0
        %v1321 = vmax.f32 %v297, 0.0
        %v1322 = vmax.f32 %v298, 0.0
        %v1323 = vmax.f32 %v299, 0.0
        %v1324 = vmax.f32 %v300, 0.0
        %v1325 = vmax.f32 %v301, 0.0
        %v1326 = vmax.f32 %v302, 0.0
        %v1327 = vmax.f32 %v303, 0.0
        %v1328 = vmax.f32 %v304, 0.0
        %v1329 = vmax.f32 %v305, 0.0
        %v1330 = vmax.f32 %v306, 0.0
        %v1331 = vmax.f32 %v307, 0.0
        %v1332 = vmax.f32 %v308, 0.0
        %v1333 = vmax.f32 %v309, 0.0
        %v1334 = vmax.f32 %v310, 0.0
        %v1335 = vmax.f32 %v311, 0.0
        %v1336 = vmax.f32 %v312, 0.0
        %v1337 = vmax.f32 %v313, 0.0
        %v1338 = vmax.f32 %v314, 0.0
        %v1339 = vmax.f32 %v315, 0.0
        %v1340 = vmax.f32 %v316, 0.0
        %v1341 = vmax.f32 %v317, 0.0
        %v1342 = vmax.f32 %v318, 0.0
        %v1343 = vmax.f32 %v319, 0.0
        %v1344 = vmax.f32 %v320, 0.0
        %v1345 = vmax.f32 %v321, 0.0
        %v1346 = vmax.f32 %v322, 0.0
        %v1347 = vmax.f32 %v323, 0.0
        %v1348 = vmax.f32 %v324, 0.0
        %v1349 = vmax.f32 %v325, 0.0
        %v1350 = vmax.f32 %v326, 0.0
        %v1351 = vmax.f32 %v327, 0.0
        %v1352 = vmax.f32 %v328, 0.0
        %v1353 = vmax.f32 %v329, 0.0
        %v1354 = vmax.f32 %v330, 0.0
        %v1355 = vmax.f32 %v331, 0.0
        %v1356 = vmax.f32 %v332, 0.0
        %v1357 = vmax.f32 %v333, 0.0
        %v1358 = vmax.f32 %v334, 0.0
        %v1359 = vmax.f32 %v335, 0.0
        %v1360 = vmax.f32 %v336, 0.0
        %v1361 = vmax.f32 %v337, 0.0
        %v1362 = vmax.f32 %v338, 0.0
        %v1363 = vmax.f32 %v339, 0.0
        %v1364 = vmax.f32 %v340, 0.0
        %v1365 = vmax.f32 %v341, 0.0
        %v1366 = vmax.f32 %v342, 0.0
        %v1367 = vmax.f32 %v343, 0.0
        %v1368 = vmax.f32 %v344, 0.0
        %v1369 = vmax.f32 %v345, 0.0
        %v1370 = vmax.f32 %v346, 0.0
        %v1371 = vmax.f32 %v347, 0.0
        %v1372 = vmax.f32 %v348, 0.0
        %v1373 = vmax.f32 %v349, 0.0
        %v1374 = vmax.f32 %v350, 0.0
        %v1375 = vmax.f32 %v351, 0.0
        %v1376 = vmax.f32 %v352, 0.0
        %v1377 = vmax.f32 %v353, 0.0
        %v1378 = vmax.f32 %v354, 0.0
        %v1379 = vmax.f32 %v355, 0.0
        %v1380 = vmax.f32 %v356, 0.0
        %v1381 = vmax.f32 %v357, 0.0
        %v1382 = vmax.f32 %v358, 0.0
        %v1383 = vmax.f32 %v359, 0.0
        %v1384 = vmax.f32 %v360, 0.0
        %v1385 = vmax.f32 %v361, 0.0
        %v1386 = vmax.f32 %v362, 0.0
        %v1387 = vmax.f32 %v363, 0.0
        %v1388 = vmax.f32 %v364, 0.0
        %v1389 = vmax.f32 %v365, 0.0
        %v1390 = vmax.f32 %v366, 0.0
        %v1391 = vmax.f32 %v367, 0.0
        %v1392 = vmax.f32 %v368, 0.0
        %v1393 = vmax.f32 %v369, 0.0
        %v1394 = vmax.f32 %v370, 0.0
        %v1395 = vmax.f32 %v371, 0.0
        %v1396 = vmax.f32 %v372, 0.0
        %v1397 = vmax.f32 %v373, 0.0
        %v1398 = vmax.f32 %v374, 0.0
        %v1399 = vmax.f32 %v375, 0.0
        %v1400 = vmax.f32 %v376, 0.0
        %v1401 = vmax.f32 %v377, 0.0
        %v1402 = vmax.f32 %v378, 0.0
        %v1403 = vmax.f32 %v379, 0.0
        %v1404 = vmax.f32 %v380, 0.0
        %v1405 = vmax.f32 %v381, 0.0
        %v1406 = vmax.f32 %v382, 0.0
        %v1407 = vmax.f32 %v383, 0.0
        %v1408 = vmax.f32 %v384, 0.0
        %v1409 = vmax.f32 %v385, 0.0
        %v1410 = vmax.f32 %v386, 0.0
        %v1411 = vmax.f32 %v387, 0.0
        %v1412 = vmax.f32 %v388, 0.0
        %v1413 = vmax.f32 %v389, 0.0
        %v1414 = vmax.f32 %v390, 0.0
        %v1415 = vmax.f32 %v391, 0.0
        %v1416 = vmax.f32 %v392, 0.0
        %v1417 = vmax.f32 %v393, 0.0
        %v1418 = vmax.f32 %v394, 0.0
        %v1419 = vmax.f32 %v395, 0.0
        %v1420 = vmax.f32 %v396, 0.0
        %v1421 = vmax.f32 %v397, 0.0
        %v1422 = vmax.f32 %v398, 0.0
        %v1423 = vmax.f32 %v399, 0.0
        %v1424 = vmax.f32 %v400, 0.0
        %v1425 = vmax.f32 %v401, 0.0
        %v1426 = vmax.f32 %v402, 0.0
        %v1427 = vmax.f32 %v403, 0.0
        %v1428 = vmax.f32 %v404, 0.0
        %v1429 = vmax.f32 %v405, 0.0
        %v1430 = vmax.f32 %v406, 0.0
        %v1431 = vmax.f32 %v407, 0.0
        %v1432 = vmax.f32 %v408, 0.0
        %v1433 = vmax.f32 %v409, 0.0
        %v1434 = vmax.f32 %v410, 0.0
        %v1435 = vmax.f32 %v411, 0.0
        %v1436 = vmax.f32 %v412, 0.0
        %v1437 = vmax.f32 %v413, 0.0
        %v1438 = vmax.f32 %v414, 0.0
        %v1439 = vmax.f32 %v415, 0.0
        %v1440 = vmax.f32 %v416, 0.0
        %v1441 = vmax.f32 %v417, 0.0
        %v1442 = vmax.f32 %v418, 0.0
        %v1443 = vmax.f32 %v419, 0.0
        %v1444 = vmax.f32 %v420, 0.0
        %v1445 = vmax.f32 %v421, 0.0
        %v1446 = vmax.f32 %v422, 0.0
        %v1447 = vmax.f32 %v423, 0.0
        %v1448 = vmax.f32 %v424, 0.0
        %v1449 = vmax.f32 %v425, 0.0
        %v1450 = vmax.f32 %v426, 0.0
        %v1451 = vmax.f32 %v427, 0.0
        %v1452 = vmax.f32 %v428, 0.0
        %v1453 = vmax.f32 %v429, 0.0
        %v1454 = vmax.f32 %v430, 0.0
        %v1455 = vmax.f32 %v431, 0.0
        %v1456 = vmax.f32 %v432, 0.0
        %v1457 = vmax.f32 %v433, 0.0
        %v1458 = vmax.f32 %v434, 0.0
        %v1459 = vmax.f32 %v435, 0.0
        %v1460 = vmax.f32 %v436, 0.0
        %v1461 = vmax.f32 %v437, 0.0
        %v1462 = vmax.f32 %v438, 0.0
        %v1463 = vmax.f32 %v439, 0.0
        %v1464 = vmax.f32 %v440, 0.0
        %v1465 = vmax.f32 %v441, 0.0
        %v1466 = vmax.f32 %v442, 0.0
        %v1467 = vmax.f32 %v443, 0.0
        %v1468 = vmax.f32 %v444, 0.0
        %v1469 = vmax.f32 %v445, 0.0
        %v1470 = vmax.f32 %v446, 0.0
        %v1471 = vmax.f32 %v447, 0.0
        %v1472 = vmax.f32 %v448, 0.0
        %v1473 = vmax.f32 %v449, 0.0
        %v1474 = vmax.f32 %v450, 0.0
        %v1475 = vmax.f32 %v451, 0.0
        %v1476 = vmax.f32 %v452, 0.0
        %v1477 = vmax.f32 %v453, 0.0
        %v1478 = vmax.f32 %v454, 0.0
        %v1479 = vmax.f32 %v455, 0.0
        %v1480 = vmax.f32 %v456, 0.0
        %v1481 = vmax.f32 %v457, 0.0
        %v1482 = vmax.f32 %v458, 0.0
        %v1483 = vmax.f32 %v459, 0.0
        %v1484 = vmax.f32 %v460, 0.0
        %v1485 = vmax.f32 %v461, 0.0
        %v1486 = vmax.f32 %v462, 0.0
        %v1487 = vmax.f32 %v463, 0.0
        %v1488 = vmax.f32 %v464, 0.0
        %v1489 = vmax.f32 %v465, 0.0
        %v1490 = vmax.f32 %v466, 0.0
        %v1491 = vmax.f32 %v467, 0.0
        %v1492 = vmax.f32 %v468, 0.0
        %v1493 = vmax.f32 %v469, 0.0
        %v1494 = vmax.f32 %v470, 0.0
        %v1495 = vmax.f32 %v471, 0.0
        %v1496 = vmax.f32 %v472, 0.0
        %v1497 = vmax.f32 %v473, 0.0
        %v1498 = vmax.f32 %v474, 0.0
        %v1499 = vmax.f32 %v475, 0.0
        %v1500 = vmax.f32 %v476, 0.0
        %v1501 = vmax.f32 %v477, 0.0
        %v1502 = vmax.f32 %v478, 0.0
        %v1503 = vmax.f32 %v479, 0.0
        %v1504 = vmax.f32 %v480, 0.0
        %v1505 = vmax.f32 %v481, 0.0
        %v1506 = vmax.f32 %v482, 0.0
        %v1507 = vmax.f32 %v483, 0.0
        %v1508 = vmax.f32 %v484, 0.0
        %v1509 = vmax.f32 %v485, 0.0
        %v1510 = vmax.f32 %v486, 0.0
        %v1511 = vmax.f32 %v487, 0.0
        %v1512 = vmax.f32 %v488, 0.0
        %v1513 = vmax.f32 %v489, 0.0
        %v1514 = vmax.f32 %v490, 0.0
        %v1515 = vmax.f32 %v491, 0.0
        %v1516 = vmax.f32 %v492, 0.0
        %v1517 = vmax.f32 %v493, 0.0
        %v1518 = vmax.f32 %v494, 0.0
        %v1519 = vmax.f32 %v495, 0.0
        %v1520 = vmax.f32 %v496, 0.0
        %v1521 = vmax.f32 %v497, 0.0
        %v1522 = vmax.f32 %v498, 0.0
        %v1523 = vmax.f32 %v499, 0.0
        %v1524 = vmax.f32 %v500, 0.0
        %v1525 = vmax.f32 %v501, 0.0
        %v1526 = vmax.f32 %v502, 0.0
        %v1527 = vmax.f32 %v503, 0.0
        %v1528 = vmax.f32 %v504, 0.0
        %v1529 = vmax.f32 %v505, 0.0
        %v1530 = vmax.f32 %v506, 0.0
        %v1531 = vmax.f32 %v507, 0.0
        %v1532 = vmax.f32 %v508, 0.0
        %v1533 = vmax.f32 %v509, 0.0
        %v1534 = vmax.f32 %v510, 0.0
        %v1535 = vmax.f32 %v511, 0.0
        %v1536 = vmax.f32 %v512, 0.0
        %v1537 = vmax.f32 %v513, 0.0
        %v1538 = vmax.f32 %v514, 0.0
        %v1539 = vmax.f32 %v515, 0.0
        %v1540 = vmax.f32 %v516, 0.0
        %v1541 = vmax.f32 %v517, 0.0
        %v1542 = vmax.f32 %v518, 0.0
        %v1543 = vmax.f32 %v519, 0.0
        %v1544 = vmax.f32 %v520, 0.0
        %v1545 = vmax.f32 %v521, 0.0
        %v1546 = vmax.f32 %v522, 0.0
        %v1547 = vmax.f32 %v523, 0.0
        %v1548 = vmax.f32 %v524, 0.0
        %v1549 = vmax.f32 %v525, 0.0
        %v1550 = vmax.f32 %v526, 0.0
        %v1551 = vmax.f32 %v527, 0.0
        %v1552 = vmax.f32 %v528, 0.0
        %v1553 = vmax.f32 %v529, 0.0
        %v1554 = vmax.f32 %v530, 0.0
        %v1555 = vmax.f32 %v531, 0.0
        %v1556 = vmax.f32 %v532, 0.0
        %v1557 = vmax.f32 %v533, 0.0
        %v1558 = vmax.f32 %v534, 0.0
        %v1559 = vmax.f32 %v535, 0.0
        %v1560 = vmax.f32 %v536, 0.0
        %v1561 = vmax.f32 %v537, 0.0
        %v1562 = vmax.f32 %v538, 0.0
        %v1563 = vmax.f32 %v539, 0.0
        %v1564 = vmax.f32 %v540, 0.0
        %v1565 = vmax.f32 %v541, 0.0
        %v1566 = vmax.f32 %v542, 0.0
        %v1567 = vmax.f32 %v543, 0.0
        %v1568 = vmax.f32 %v544, 0.0
        %v1569 = vmax.f32 %v545, 0.0
        %v1570 = vmax.f32 %v546, 0.0
        %v1571 = vmax.f32 %v547, 0.0
        %v1572 = vmax.f32 %v548, 0.0
        %v1573 = vmax.f32 %v549, 0.0
        %v1574 = vmax.f32 %v550, 0.0
        %v1575 = vmax.f32 %v551, 0.0
        %v1576 = vmax.f32 %v552, 0.0
        %v1577 = vmax.f32 %v553, 0.0
        %v1578 = vmax.f32 %v554, 0.0
        %v1579 = vmax.f32 %v555, 0.0
        %v1580 = vmax.f32 %v556, 0.0
        %v1581 = vmax.f32 %v557, 0.0
        %v1582 = vmax.f32 %v558, 0.0
        %v1583 = vmax.f32 %v559, 0.0
        %v1584 = vmax.f32 %v560, 0.0
        %v1585 = vmax.f32 %v561, 0.0
        %v1586 = vmax.f32 %v562, 0.0
        %v1587 = vmax.f32 %v563, 0.0
        %v1588 = vmax.f32 %v564, 0.0
        %v1589 = vmax.f32 %v565, 0.0
        %v1590 = vmax.f32 %v566, 0.0
        %v1591 = vmax.f32 %v567, 0.0
        %v1592 = vmax.f32 %v568, 0.0
        %v1593 = vmax.f32 %v569, 0.0
        %v1594 = vmax.f32 %v570, 0.0
        %v1595 = vmax.f32 %v571, 0.0
        %v1596 = vmax.f32 %v572, 0.0
        %v1597 = vmax.f32 %v573, 0.0
        %v1598 = vmax.f32 %v574, 0.0
        %v1599 = vmax.f32 %v575, 0.0
        %v1600 = vmax.f32 %v576, 0.0
        %v1601 = vmax.f32 %v577, 0.0
        %v1602 = vmax.f32 %v578, 0.0
        %v1603 = vmax.f32 %v579, 0.0
        %v1604 = vmax.f32 %v580, 0.0
        %v1605 = vmax.f32 %v581, 0.0
        %v1606 = vmax.f32 %v582, 0.0
        %v1607 = vmax.f32 %v583, 0.0
        %v1608 = vmax.f32 %v584, 0.0
        %v1609 = vmax.f32 %v585, 0.0
        %v1610 = vmax.f32 %v586, 0.0
        %v1611 = vmax.f32 %v587, 0.0
        %v1612 = vmax.f32 %v588, 0.0
        %v1613 = vmax.f32 %v589, 0.0
        %v1614 = vmax.f32 %v590, 0.0
        %v1615 = vmax.f32 %v591, 0.0
        %v1616 = vmax.f32 %v592, 0.0
        %v1617 = vmax.f32 %v593, 0.0
        %v1618 = vmax.f32 %v594, 0.0
        %v1619 = vmax.f32 %v595, 0.0
        %v1620 = vmax.f32 %v596, 0.0
        %v1621 = vmax.f32 %v597, 0.0
        %v1622 = vmax.f32 %v598, 0.0
        %v1623 = vmax.f32 %v599, 0.0
        %v1624 = vmax.f32 %v600, 0.0
        %v1625 = vmax.f32 %v601, 0.0
        %v1626 = vmax.f32 %v602, 0.0
        %v1627 = vmax.f32 %v603, 0.0
        %v1628 = vmax.f32 %v604, 0.0
        %v1629 = vmax.f32 %v605, 0.0
        %v1630 = vmax.f32 %v606, 0.0
        %v1631 = vmax.f32 %v607, 0.0
        %v1632 = vmax.f32 %v608, 0.0
        %v1633 = vmax.f32 %v609, 0.0
        %v1634 = vmax.f32 %v610, 0.0
        %v1635 = vmax.f32 %v611, 0.0
        %v1636 = vmax.f32 %v612, 0.0
        %v1637 = vmax.f32 %v613, 0.0
        %v1638 = vmax.f32 %v614, 0.0
        %v1639 = vmax.f32 %v615, 0.0
        %v1640 = vmax.f32 %v616, 0.0
        %v1641 = vmax.f32 %v617, 0.0
        %v1642 = vmax.f32 %v618, 0.0
        %v1643 = vmax.f32 %v619, 0.0
        %v1644 = vmax.f32 %v620, 0.0
        %v1645 = vmax.f32 %v621, 0.0
        %v1646 = vmax.f32 %v622, 0.0
        %v1647 = vmax.f32 %v623, 0.0
        %v1648 = vmax.f32 %v624, 0.0
        %v1649 = vmax.f32 %v625, 0.0
        %v1650 = vmax.f32 %v626, 0.0
        %v1651 = vmax.f32 %v627, 0.0
        %v1652 = vmax.f32 %v628, 0.0
        %v1653 = vmax.f32 %v629, 0.0
        %v1654 = vmax.f32 %v630, 0.0
        %v1655 = vmax.f32 %v631, 0.0
        %v1656 = vmax.f32 %v632, 0.0
        %v1657 = vmax.f32 %v633, 0.0
        %v1658 = vmax.f32 %v634, 0.0
        %v1659 = vmax.f32 %v635, 0.0
        %v1660 = vmax.f32 %v636, 0.0
        %v1661 = vmax.f32 %v637, 0.0
        %v1662 = vmax.f32 %v638, 0.0
        %v1663 = vmax.f32 %v639, 0.0
        %v1664 = vmax.f32 %v640, 0.0
        %v1665 = vmax.f32 %v641, 0.0
        %v1666 = vmax.f32 %v642, 0.0
        %v1667 = vmax.f32 %v643, 0.0
        %v1668 = vmax.f32 %v644, 0.0
        %v1669 = vmax.f32 %v645, 0.0
        %v1670 = vmax.f32 %v646, 0.0
        %v1671 = vmax.f32 %v647, 0.0
        %v1672 = vmax.f32 %v648, 0.0
        %v1673 = vmax.f32 %v649, 0.0
        %v1674 = vmax.f32 %v650, 0.0
        %v1675 = vmax.f32 %v651, 0.0
        %v1676 = vmax.f32 %v652, 0.0
        %v1677 = vmax.f32 %v653, 0.0
        %v1678 = vmax.f32 %v654, 0.0
        %v1679 = vmax.f32 %v655, 0.0
        %v1680 = vmax.f32 %v656, 0.0
        %v1681 = vmax.f32 %v657, 0.0
        %v1682 = vmax.f32 %v658, 0.0
        %v1683 = vmax.f32 %v659, 0.0
        %v1684 = vmax.f32 %v660, 0.0
        %v1685 = vmax.f32 %v661, 0.0
        %v1686 = vmax.f32 %v662, 0.0
        %v1687 = vmax.f32 %v663, 0.0
        %v1688 = vmax.f32 %v664, 0.0
        %v1689 = vmax.f32 %v665, 0.0
        %v1690 = vmax.f32 %v666, 0.0
        %v1691 = vmax.f32 %v667, 0.0
        %v1692 = vmax.f32 %v668, 0.0
        %v1693 = vmax.f32 %v669, 0.0
        %v1694 = vmax.f32 %v670, 0.0
        %v1695 = vmax.f32 %v671, 0.0
        %v1696 = vmax.f32 %v672, 0.0
        %v1697 = vmax.f32 %v673, 0.0
        %v1698 = vmax.f32 %v674, 0.0
        %v1699 = vmax.f32 %v675, 0.0
        %v1700 = vmax.f32 %v676, 0.0
        %v1701 = vmax.f32 %v677, 0.0
        %v1702 = vmax.f32 %v678, 0.0
        %v1703 = vmax.f32 %v679, 0.0
        %v1704 = vmax.f32 %v680, 0.0
        %v1705 = vmax.f32 %v681, 0.0
        %v1706 = vmax.f32 %v682, 0.0
        %v1707 = vmax.f32 %v683, 0.0
        %v1708 = vmax.f32 %v684, 0.0
        %v1709 = vmax.f32 %v685, 0.0
        %v1710 = vmax.f32 %v686, 0.0
        %v1711 = vmax.f32 %v687, 0.0
        %v1712 = vmax.f32 %v688, 0.0
        %v1713 = vmax.f32 %v689, 0.0
        %v1714 = vmax.f32 %v690, 0.0
        %v1715 = vmax.f32 %v691, 0.0
        %v1716 = vmax.f32 %v692, 0.0
        %v1717 = vmax.f32 %v693, 0.0
        %v1718 = vmax.f32 %v694, 0.0
        %v1719 = vmax.f32 %v695, 0.0
        %v1720 = vmax.f32 %v696, 0.0
        %v1721 = vmax.f32 %v697, 0.0
        %v1722 = vmax.f32 %v698, 0.0
        %v1723 = vmax.f32 %v699, 0.0
        %v1724 = vmax.f32 %v700, 0.0
        %v1725 = vmax.f32 %v701, 0.0
        %v1726 = vmax.f32 %v702, 0.0
        %v1727 = vmax.f32 %v703, 0.0
        %v1728 = vmax.f32 %v704, 0.0
        %v1729 = vmax.f32 %v705, 0.0
        %v1730 = vmax.f32 %v706, 0.0
        %v1731 = vmax.f32 %v707, 0.0
        %v1732 = vmax.f32 %v708, 0.0
        %v1733 = vmax.f32 %v709, 0.0
        %v1734 = vmax.f32 %v710, 0.0
        %v1735 = vmax.f32 %v711, 0.0
        %v1736 = vmax.f32 %v712, 0.0
        %v1737 = vmax.f32 %v713, 0.0
        %v1738 = vmax.f32 %v714, 0.0
        %v1739 = vmax.f32 %v715, 0.0
        %v1740 = vmax.f32 %v716, 0.0
        %v1741 = vmax.f32 %v717, 0.0
        %v1742 = vmax.f32 %v718, 0.0
        %v1743 = vmax.f32 %v719, 0.0
        %v1744 = vmax.f32 %v720, 0.0
        %v1745 = vmax.f32 %v721, 0.0
        %v1746 = vmax.f32 %v722, 0.0
        %v1747 = vmax.f32 %v723, 0.0
        %v1748 = vmax.f32 %v724, 0.0
        %v1749 = vmax.f32 %v725, 0.0
        %v1750 = vmax.f32 %v726, 0.0
        %v1751 = vmax.f32 %v727, 0.0
        %v1752 = vmax.f32 %v728, 0.0
        %v1753 = vmax.f32 %v729, 0.0
        %v1754 = vmax.f32 %v730, 0.0
        %v1755 = vmax.f32 %v731, 0.0
        %v1756 = vmax.f32 %v732, 0.0
        %v1757 = vmax.f32 %v733, 0.0
        %v1758 = vmax.f32 %v734, 0.0
        %v1759 = vmax.f32 %v735, 0.0
        %v1760 = vmax.f32 %v736, 0.0
        %v1761 = vmax.f32 %v737, 0.0
        %v1762 = vmax.f32 %v738, 0.0
        %v1763 = vmax.f32 %v739, 0.0
        %v1764 = vmax.f32 %v740, 0.0
        %v1765 = vmax.f32 %v741, 0.0
        %v1766 = vmax.f32 %v742, 0.0
        %v1767 = vmax.f32 %v743, 0.0
        %v1768 = vmax.f32 %v744, 0.0
        %v1769 = vmax.f32 %v745, 0.0
        %v1770 = vmax.f32 %v746, 0.0
        %v1771 = vmax.f32 %v747, 0.0
        %v1772 = vmax.f32 %v748, 0.0
        %v1773 = vmax.f32 %v749, 0.0
        %v1774 = vmax.f32 %v750, 0.0
        %v1775 = vmax.f32 %v751, 0.0
        %v1776 = vmax.f32 %v752, 0.0
        %v1777 = vmax.f32 %v753, 0.0
        %v1778 = vmax.f32 %v754, 0.0
        %v1779 = vmax.f32 %v755, 0.0
        %v1780 = vmax.f32 %v756, 0.0
        %v1781 = vmax.f32 %v757, 0.0
        %v1782 = vmax.f32 %v758, 0.0
        %v1783 = vmax.f32 %v759, 0.0
        %v1784 = vmax.f32 %v760, 0.0
        %v1785 = vmax.f32 %v761, 0.0
        %v1786 = vmax.f32 %v762, 0.0
        %v1787 = vmax.f32 %v763, 0.0
        %v1788 = vmax.f32 %v764, 0.0
        %v1789 = vmax.f32 %v765, 0.0
        %v1790 = vmax.f32 %v766, 0.0
        %v1791 = vmax.f32 %v767, 0.0
        %v1792 = vmax.f32 %v768, 0.0
        %v1793 = vmax.f32 %v769, 0.0
        %v1794 = vmax.f32 %v770, 0.0
        %v1795 = vmax.f32 %v771, 0.0
        %v1796 = vmax.f32 %v772, 0.0
        %v1797 = vmax.f32 %v773, 0.0
        %v1798 = vmax.f32 %v774, 0.0
        %v1799 = vmax.f32 %v775, 0.0
        %v1800 = vmax.f32 %v776, 0.0
        %v1801 = vmax.f32 %v777, 0.0
        %v1802 = vmax.f32 %v778, 0.0
        %v1803 = vmax.f32 %v779, 0.0
        %v1804 = vmax.f32 %v780, 0.0
        %v1805 = vmax.f32 %v781, 0.0
        %v1806 = vmax.f32 %v782, 0.0
        %v1807 = vmax.f32 %v783, 0.0
        %v1808 = vmax.f32 %v784, 0.0
        %v1809 = vmax.f32 %v785, 0.0
        %v1810 = vmax.f32 %v786, 0.0
        %v1811 = vmax.f32 %v787, 0.0
        %v1812 = vmax.f32 %v788, 0.0
        %v1813 = vmax.f32 %v789, 0.0
        %v1814 = vmax.f32 %v790, 0.0
        %v1815 = vmax.f32 %v791, 0.0
        %v1816 = vmax.f32 %v792, 0.0
        %v1817 = vmax.f32 %v793, 0.0
        %v1818 = vmax.f32 %v794, 0.0
        %v1819 = vmax.f32 %v795, 0.0
        %v1820 = vmax.f32 %v796, 0.0
        %v1821 = vmax.f32 %v797, 0.0
        %v1822 = vmax.f32 %v798, 0.0
        %v1823 = vmax.f32 %v799, 0.0
        %v1824 = vmax.f32 %v800, 0.0
        %v1825 = vmax.f32 %v801, 0.0
        %v1826 = vmax.f32 %v802, 0.0
        %v1827 = vmax.f32 %v803, 0.0
        %v1828 = vmax.f32 %v804, 0.0
        %v1829 = vmax.f32 %v805, 0.0
        %v1830 = vmax.f32 %v806, 0.0
        %v1831 = vmax.f32 %v807, 0.0
        %v1832 = vmax.f32 %v808, 0.0
        %v1833 = vmax.f32 %v809, 0.0
        %v1834 = vmax.f32 %v810, 0.0
        %v1835 = vmax.f32 %v811, 0.0
        %v1836 = vmax.f32 %v812, 0.0
        %v1837 = vmax.f32 %v813, 0.0
        %v1838 = vmax.f32 %v814, 0.0
        %v1839 = vmax.f32 %v815, 0.0
        %v1840 = vmax.f32 %v816, 0.0
        %v1841 = vmax.f32 %v817, 0.0
        %v1842 = vmax.f32 %v818, 0.0
        %v1843 = vmax.f32 %v819, 0.0
        %v1844 = vmax.f32 %v820, 0.0
        %v1845 = vmax.f32 %v821, 0.0
        %v1846 = vmax.f32 %v822, 0.0
        %v1847 = vmax.f32 %v823, 0.0
        %v1848 = vmax.f32 %v824, 0.0
        %v1849 = vmax.f32 %v825, 0.0
        %v1850 = vmax.f32 %v826, 0.0
        %v1851 = vmax.f32 %v827, 0.0
        %v1852 = vmax.f32 %v828, 0.0
        %v1853 = vmax.f32 %v829, 0.0
        %v1854 = vmax.f32 %v830, 0.0
        %v1855 = vmax.f32 %v831, 0.0
        %v1856 = vmax.f32 %v832, 0.0
        %v1857 = vmax.f32 %v833, 0.0
        %v1858 = vmax.f32 %v834, 0.0
        %v1859 = vmax.f32 %v835, 0.0
        %v1860 = vmax.f32 %v836, 0.0
        %v1861 = vmax.f32 %v837, 0.0
        %v1862 = vmax.f32 %v838, 0.0
        %v1863 = vmax.f32 %v839, 0.0
        %v1864 = vmax.f32 %v840, 0.0
        %v1865 = vmax.f32 %v841, 0.0
        %v1866 = vmax.f32 %v842, 0.0
        %v1867 = vmax.f32 %v843, 0.0
        %v1868 = vmax.f32 %v844, 0.0
        %v1869 = vmax.f32 %v845, 0.0
        %v1870 = vmax.f32 %v846, 0.0
        %v1871 = vmax.f32 %v847, 0.0
        %v1872 = vmax.f32 %v848, 0.0
        %v1873 = vmax.f32 %v849, 0.0
        %v1874 = vmax.f32 %v850, 0.0
        %v1875 = vmax.f32 %v851, 0.0
        %v1876 = vmax.f32 %v852, 0.0
        %v1877 = vmax.f32 %v853, 0.0
        %v1878 = vmax.f32 %v854, 0.0
        %v1879 = vmax.f32 %v855, 0.0
        %v1880 = vmax.f32 %v856, 0.0
        %v1881 = vmax.f32 %v857, 0.0
        %v1882 = vmax.f32 %v858, 0.0
        %v1883 = vmax.f32 %v859, 0.0
        %v1884 = vmax.f32 %v860, 0.0
        %v1885 = vmax.f32 %v861, 0.0
        %v1886 = vmax.f32 %v862, 0.0
        %v1887 = vmax.f32 %v863, 0.0
        %v1888 = vmax.f32 %v864, 0.0
        %v1889 = vmax.f32 %v865, 0.0
        %v1890 = vmax.f32 %v866, 0.0
        %v1891 = vmax.f32 %v867, 0.0
        %v1892 = vmax.f32 %v868, 0.0
        %v1893 = vmax.f32 %v869, 0.0
        %v1894 = vmax.f32 %v870, 0.0
        %v1895 = vmax.f32 %v871, 0.0
        %v1896 = vmax.f32 %v872, 0.0
        %v1897 = vmax.f32 %v873, 0.0
        %v1898 = vmax.f32 %v874, 0.0
        %v1899 = vmax.f32 %v875, 0.0
        %v1900 = vmax.f32 %v876, 0.0
        %v1901 = vmax.f32 %v877, 0.0
        %v1902 = vmax.f32 %v878, 0.0
        %v1903 = vmax.f32 %v879, 0.0
        %v1904 = vmax.f32 %v880, 0.0
        %v1905 = vmax.f32 %v881, 0.0
        %v1906 = vmax.f32 %v882, 0.0
        %v1907 = vmax.f32 %v883, 0.0
        %v1908 = vmax.f32 %v884, 0.0
        %v1909 = vmax.f32 %v885, 0.0
        %v1910 = vmax.f32 %v886, 0.0
        %v1911 = vmax.f32 %v887, 0.0
        %v1912 = vmax.f32 %v888, 0.0
        %v1913 = vmax.f32 %v889, 0.0
        %v1914 = vmax.f32 %v890, 0.0
        %v1915 = vmax.f32 %v891, 0.0
        %v1916 = vmax.f32 %v892, 0.0
        %v1917 = vmax.f32 %v893, 0.0
        %v1918 = vmax.f32 %v894, 0.0
        %v1919 = vmax.f32 %v895, 0.0
        %v1920 = vmax.f32 %v896, 0.0
        %v1921 = vmax.f32 %v897, 0.0
        %v1922 = vmax.f32 %v898, 0.0
        %v1923 = vmax.f32 %v899, 0.0
        %v1924 = vmax.f32 %v900, 0.0
        %v1925 = vmax.f32 %v901, 0.0
        %v1926 = vmax.f32 %v902, 0.0
        %v1927 = vmax.f32 %v903, 0.0
        %v1928 = vmax.f32 %v904, 0.0
        %v1929 = vmax.f32 %v905, 0.0
        %v1930 = vmax.f32 %v906, 0.0
        %v1931 = vmax.f32 %v907, 0.0
        %v1932 = vmax.f32 %v908, 0.0
        %v1933 = vmax.f32 %v909, 0.0
        %v1934 = vmax.f32 %v910, 0.0
        %v1935 = vmax.f32 %v911, 0.0
        %v1936 = vmax.f32 %v912, 0.0
        %v1937 = vmax.f32 %v913, 0.0
        %v1938 = vmax.f32 %v914, 0.0
        %v1939 = vmax.f32 %v915, 0.0
        %v1940 = vmax.f32 %v916, 0.0
        %v1941 = vmax.f32 %v917, 0.0
        %v1942 = vmax.f32 %v918, 0.0
        %v1943 = vmax.f32 %v919, 0.0
        %v1944 = vmax.f32 %v920, 0.0
        %v1945 = vmax.f32 %v921, 0.0
        %v1946 = vmax.f32 %v922, 0.0
        %v1947 = vmax.f32 %v923, 0.0
        %v1948 = vmax.f32 %v924, 0.0
        %v1949 = vmax.f32 %v925, 0.0
        %v1950 = vmax.f32 %v926, 0.0
        %v1951 = vmax.f32 %v927, 0.0
        %v1952 = vmax.f32 %v928, 0.0
        %v1953 = vmax.f32 %v929, 0.0
        %v1954 = vmax.f32 %v930, 0.0
        %v1955 = vmax.f32 %v931, 0.0
        %v1956 = vmax.f32 %v932, 0.0
        %v1957 = vmax.f32 %v933, 0.0
        %v1958 = vmax.f32 %v934, 0.0
        %v1959 = vmax.f32 %v935, 0.0
        %v1960 = vmax.f32 %v936, 0.0
        %v1961 = vmax.f32 %v937, 0.0
        %v1962 = vmax.f32 %v938, 0.0
        %v1963 = vmax.f32 %v939, 0.0
        %v1964 = vmax.f32 %v940, 0.0
        %v1965 = vmax.f32 %v941, 0.0
        %v1966 = vmax.f32 %v942, 0.0
        %v1967 = vmax.f32 %v943, 0.0
        %v1968 = vmax.f32 %v944, 0.0
        %v1969 = vmax.f32 %v945, 0.0
        %v1970 = vmax.f32 %v946, 0.0
        %v1971 = vmax.f32 %v947, 0.0
        %v1972 = vmax.f32 %v948, 0.0
        %v1973 = vmax.f32 %v949, 0.0
        %v1974 = vmax.f32 %v950, 0.0
        %v1975 = vmax.f32 %v951, 0.0
        %v1976 = vmax.f32 %v952, 0.0
        %v1977 = vmax.f32 %v953, 0.0
        %v1978 = vmax.f32 %v954, 0.0
        %v1979 = vmax.f32 %v955, 0.0
        %v1980 = vmax.f32 %v956, 0.0
        %v1981 = vmax.f32 %v957, 0.0
        %v1982 = vmax.f32 %v958, 0.0
        %v1983 = vmax.f32 %v959, 0.0
        %v1984 = vmax.f32 %v960, 0.0
        %v1985 = vmax.f32 %v961, 0.0
        %v1986 = vmax.f32 %v962, 0.0
        %v1987 = vmax.f32 %v963, 0.0
        %v1988 = vmax.f32 %v964, 0.0
        %v1989 = vmax.f32 %v965, 0.0
        %v1990 = vmax.f32 %v966, 0.0
        %v1991 = vmax.f32 %v967, 0.0
        %v1992 = vmax.f32 %v968, 0.0
        %v1993 = vmax.f32 %v969, 0.0
        %v1994 = vmax.f32 %v970, 0.0
        %v1995 = vmax.f32 %v971, 0.0
        %v1996 = vmax.f32 %v972, 0.0
        %v1997 = vmax.f32 %v973, 0.0
        %v1998 = vmax.f32 %v974, 0.0
        %v1999 = vmax.f32 %v975, 0.0
        %v2000 = vmax.f32 %v976, 0.0
        %v2001 = vmax.f32 %v977, 0.0
        %v2002 = vmax.f32 %v978, 0.0
        %v2003 = vmax.f32 %v979, 0.0
        %v2004 = vmax.f32 %v980, 0.0
        %v2005 = vmax.f32 %v981, 0.0
        %v2006 = vmax.f32 %v982, 0.0
        %v2007 = vmax.f32 %v983, 0.0
        %v2008 = vmax.f32 %v984, 0.0
        %v2009 = vmax.f32 %v985, 0.0
        %v2010 = vmax.f32 %v986, 0.0
        %v2011 = vmax.f32 %v987, 0.0
        %v2012 = vmax.f32 %v988, 0.0
        %v2013 = vmax.f32 %v989, 0.0
        %v2014 = vmax.f32 %v990, 0.0
        %v2015 = vmax.f32 %v991, 0.0
        %v2016 = vmax.f32 %v992, 0.0
        %v2017 = vmax.f32 %v993, 0.0
        %v2018 = vmax.f32 %v994, 0.0
        %v2019 = vmax.f32 %v995, 0.0
        %v2020 = vmax.f32 %v996, 0.0
        %v2021 = vmax.f32 %v997, 0.0
        %v2022 = vmax.f32 %v998, 0.0
        %v2023 = vmax.f32 %v999, 0.0
        %v2024 = vmax.f32 %v1000, 0.0
        %v2025 = vmax.f32 %v1001, 0.0
        %v2026 = vmax.f32 %v1002, 0.0
        %v2027 = vmax.f32 %v1003, 0.0
        %v2028 = vmax.f32 %v1004, 0.0
        %v2029 = vmax.f32 %v1005, 0.0
        %v2030 = vmax.f32 %v1006, 0.0
        %v2031 = vmax.f32 %v1007, 0.0
        %v2032 = vmax.f32 %v1008, 0.0
        %v2033 = vmax.f32 %v1009, 0.0
        %v2034 = vmax.f32 %v1010, 0.0
        %v2035 = vmax.f32 %v1011, 0.0
        %v2036 = vmax.f32 %v1012, 0.0
        %v2037 = vmax.f32 %v1013, 0.0
        %v2038 = vmax.f32 %v1014, 0.0
        %v2039 = vmax.f32 %v1015, 0.0
        %v2040 = vmax.f32 %v1016, 0.0
        %v2041 = vmax.f32 %v1017, 0.0
        %v2042 = vmax.f32 %v1018, 0.0
        %v2043 = vmax.f32 %v1019, 0.0
        %v2044 = vmax.f32 %v1020, 0.0
        %v2045 = vmax.f32 %v1021, 0.0
        %v2046 = vmax.f32 %v1022, 0.0
        %v2047 = vmax.f32 %v1023, 0.0
        %v2048 = vmax.f32 %v1024, 0.0
        %v2049 = vmax.f32 %v1025, 0.0
        %v2050 = vmax.f32 %v1026, 0.0
        %v2051 = vmax.f32 %v1027, 0.0
        %v2052 = vmax.f32 %v1028, 0.0
        %v2053 = vmax.f32 %v1029, 0.0
        %v2054 = vmax.f32 %v1030, 0.0
        %v2055 = vmax.f32 %v1031, 0.0
        %v2056 = vmax.f32 %v1032, 0.0
        %v2057 = vmax.f32 %v1033, 0.0
        %v2058 = vmax.f32 %v1034, 0.0
        %v2059 = vmax.f32 %v1035, 0.0
        %v2060 = vmax.f32 %v1036, 0.0
        %v2061 = vmax.f32 %v1037, 0.0
        %v2062 = vmax.f32 %v1038, 0.0
        %v2063 = vmax.f32 %v1039, 0.0
        %v2064 = vmax.f32 %v1040, 0.0
        %v2065 = vmax.f32 %v1041, 0.0
        %v2066 = vmax.f32 %v1042, 0.0
        %v2067 = vmax.f32 %v1043, 0.0
        %v2068 = vmax.f32 %v1044, 0.0
        %v2069 = vmax.f32 %v1045, 0.0
        %v2070 = vmax.f32 %v1046, 0.0
        %v2071 = vmax.f32 %v1047, 0.0
        %v2072 = vmax.f32 %v1048, 0.0
        %v2073 = vmax.f32 %v1049, 0.0
        %v2074 = vmax.f32 %v1050, 0.0
        %v2075 = vmax.f32 %v1051, 0.0
        %v2076 = vmax.f32 %v1052, 0.0
        %v2077 = vmax.f32 %v1053, 0.0
        %v2078 = vmax.f32 %v1054, 0.0
        %v2079 = vmax.f32 %v1055, 0.0
        %v2080 = vmax.f32 %v1056, 0.0
        %v2081 = vmax.f32 %v1057, 0.0
        %v2082 = vmax.f32 %v1058, 0.0
        %v2083 = vmax.f32 %v1059, 0.0
        %v2084 = vmax.f32 %v1060, 0.0
        %v2085 = vmax.f32 %v1061, 0.0
        %v2086 = vmax.f32 %v1062, 0.0
        %v2087 = vmax.f32 %v1063, 0.0
        %v2088 = vmax.f32 %v1064, 0.0
        %v2089 = vmax.f32 %v1065, 0.0
        %v2090 = vmax.f32 %v1066, 0.0
        %v2091 = vmax.f32 %v1067, 0.0
        %v2092 = vmax.f32 %v1068, 0.0
        %v2093 = vmax.f32 %v1069, 0.0
        %v2094 = vmax.f32 %v1070, 0.0
        %v2095 = vmax.f32 %v1071, 0.0
        %v2096 = vmax.f32 %v1072, 0.0
        %v2097 = vmax.f32 %v1073, 0.0
        %v2098 = vmax.f32 %v1074, 0.0
        %v2099 = vmax.f32 %v1075, 0.0
        %v2100 = vmax.f32 %v1076, 0.0
        %v2101 = vmax.f32 %v1077, 0.0
        %v2102 = vmax.f32 %v1078, 0.0
        %v2103 = vmax.f32 %v1079, 0.0
        %v2104 = vmax.f32 %v1080, 0.0
        %v2105 = vmax.f32 %v1081, 0.0
        %v2106 = vmax.f32 %v1082, 0.0
        %v2107 = vmax.f32 %v1083, 0.0
        %v2108 = vmax.f32 %v1084, 0.0
        %v2109 = vmax.f32 %v1085, 0.0
        %v2110 = vmax.f32 %v1086, 0.0
        %v2111 = vmax.f32 %v1087, 0.0
        %v2112 = vmax.f32 %v1088, 0.0
        %v2113 = vmax.f32 %v1089, 0.0
        %v2114 = vmax.f32 %v1090, 0.0
        %v2115 = vmax.f32 %v1091, 0.0
        %v2116 = vmax.f32 %v1092, 0.0
        %v2117 = vmax.f32 %v1093, 0.0
        %v2118 = vmax.f32 %v1094, 0.0
        %v2119 = vmax.f32 %v1095, 0.0
        %v2120 = vmax.f32 %v1096, 0.0
        %v2121 = vmax.f32 %v1097, 0.0
        %v2122 = vmax.f32 %v1098, 0.0
        %v2123 = vmax.f32 %v1099, 0.0
        %v2124 = vmax.f32 %v1100, 0.0
        %v2125 = vmax.f32 %v1101, 0.0
        %v2126 = vmax.f32 %v1102, 0.0
        %v2127 = vmax.f32 %v1103, 0.0
        %v2128 = vmax.f32 %v1104, 0.0
        %v2129 = vmax.f32 %v1105, 0.0
        %v2130 = vmax.f32 %v1106, 0.0
        %v2131 = vmax.f32 %v1107, 0.0
        %v2132 = vmax.f32 %v1108, 0.0
        %v2133 = vmax.f32 %v1109, 0.0
        %v2134 = vmax.f32 %v1110, 0.0
        %v2135 = vmax.f32 %v1111, 0.0
        %v2136 = vmax.f32 %v1112, 0.0
        %v2137 = vmax.f32 %v1113, 0.0
        %v2138 = vmax.f32 %v1114, 0.0
        %v2139 = vmax.f32 %v1115, 0.0
        %v2140 = vmax.f32 %v1116, 0.0
        %v2141 = vmax.f32 %v1117, 0.0
        %v2142 = vmax.f32 %v1118, 0.0
        %v2143 = vmax.f32 %v1119, 0.0
        %v2144 = vmax.f32 %v1120, 0.0
        %v2145 = vmax.f32 %v1121, 0.0
        %v2146 = vmax.f32 %v1122, 0.0
        %v2147 = vmax.f32 %v1123, 0.0
        %v2148 = vmax.f32 %v1124, 0.0
        %v2149 = vmax.f32 %v1125, 0.0
        %v2150 = vmax.f32 %v1126, 0.0
        %v2151 = vmax.f32 %v1127, 0.0
        %v2152 = vmax.f32 %v1128, 0.0
        %v2153 = vmax.f32 %v1129, 0.0
        %v2154 = vmax.f32 %v1130, 0.0
        %v2155 = vmax.f32 %v1131, 0.0
        %v2156 = vmax.f32 %v1132, 0.0
        %v2157 = vmax.f32 %v1133, 0.0
        %v2158 = vmax.f32 %v1134, 0.0
        %v2159 = vmax.f32 %v1135, 0.0
        %v2160 = vmax.f32 %v1136, 0.0
        %v2161 = vmax.f32 %v1137, 0.0
        %v2162 = vmax.f32 %v1138, 0.0
        %v2163 = vmax.f32 %v1139, 0.0
        %v2164 = vmax.f32 %v1140, 0.0
        %v2165 = vmax.f32 %v1141, 0.0
        %v2166 = vmax.f32 %v1142, 0.0
        %v2167 = vmax.f32 %v1143, 0.0
        %v2168 = vmax.f32 %v1144, 0.0
        %v2169 = vmax.f32 %v1145, 0.0
        %v2170 = vmax.f32 %v1146, 0.0
        %v2171 = vmax.f32 %v1147, 0.0
        %v2172 = vmax.f32 %v1148, 0.0
        %v2173 = vmax.f32 %v1149, 0.0
        %v2174 = vmax.f32 %v1150, 0.0
        %v2175 = vmax.f32 %v1151, 0.0
        %v2176 = vmax.f32 %v1152, 0.0
        %v2177 = vmax.f32 %v1153, 0.0
        %v2178 = vmax.f32 %v1154, 0.0
        %v2179 = vmax.f32 %v1155, 0.0
        %v2180 = vmax.f32 %v1156, 0.0
        %v2181 = vmax.f32 %v1157, 0.0
        %v2182 = vmax.f32 %v1158, 0.0
        %v2183 = vmax.f32 %v1159, 0.0
        %v2184 = vmax.f32 %v1160, 0.0
        %v2185 = vmax.f32 %v1161, 0.0
        %v2186 = vmax.f32 %v1162, 0.0
        %v2187 = vmax.f32 %v1163, 0.0
        %v2188 = vmax.f32 %v1164, 0.0
        %v2189 = vmax.f32 %v1165, 0.0
        %v2190 = vmax.f32 %v1166, 0.0
        %v2191 = vmax.f32 %v1167, 0.0
        %v2192 = vmax.f32 %v1168, 0.0
        %v2193 = vmax.f32 %v1169, 0.0
        %v2194 = vmax.f32 %v1170, 0.0
        %v2195 = vmax.f32 %v1171, 0.0
        %v2196 = vmax.f32 %v1172, 0.0
        %v2197 = vmax.f32 %v1173, 0.0
        %v2198 = vmax.f32 %v1174, 0.0
        %v2199 = vmax.f32 %v1175, 0.0
        %v2200 = vmax.f32 %v1176, 0.0
        %v2201 = vmax.f32 %v1177, 0.0
        %v2202 = vmax.f32 %v1178, 0.0
        %v2203 = vmax.f32 %v1179, 0.0
        %v2204 = vmax.f32 %v1180, 0.0
        %v2205 = vmax.f32 %v1181, 0.0
        %v2206 = vmax.f32 %v1182, 0.0
        %v2207 = vmax.f32 %v1183, 0.0
        %v2208 = vmax.f32 %v1184, 0.0
        %v2209 = vmax.f32 %v1185, 0.0
        %v2210 = vmax.f32 %v1186, 0.0
        %v2211 = vmax.f32 %v1187, 0.0
        %v2212 = vmax.f32 %v1188, 0.0
        %v2213 = vmax.f32 %v1189, 0.0
        %v2214 = vmax.f32 %v1190, 0.0
        %v2215 = vmax.f32 %v1191, 0.0
        %v2216 = vmax.f32 %v1192, 0.0
        %v2217 = vmax.f32 %v1193, 0.0
        %v2218 = vmax.f32 %v1194, 0.0
        %v2219 = vmax.f32 %v1195, 0.0
        %v2220 = vmax.f32 %v1196, 0.0
        %v2221 = vmax.f32 %v1197, 0.0
        %v2222 = vmax.f32 %v1198, 0.0
        %v2223 = vmax.f32 %v1199, 0.0
        %v2224 = vmax.f32 %v1200, 0.0
        %v2225 = vmax.f32 %v1201, 0.0
        %v2226 = vmax.f32 %v1202, 0.0
        %v2227 = vmax.f32 %v1203, 0.0
        %v2228 = vmax.f32 %v1204, 0.0
        %v2229 = vmax.f32 %v1205, 0.0
        %v2230 = vmax.f32 %v1206, 0.0
        %v2231 = vmax.f32 %v1207, 0.0
        %v2232 = vmax.f32 %v1208, 0.0
        %v2233 = vmax.f32 %v1209, 0.0
        %v2234 = vmax.f32 %v1210, 0.0
        %v2235 = vmax.f32 %v1211, 0.0
        %v2236 = vmax.f32 %v1212, 0.0
        %v2237 = vmax.f32 %v1213, 0.0
        %v2238 = vmax.f32 %v1214, 0.0
        %v2239 = vmax.f32 %v1215, 0.0
        %v2240 = vmax.f32 %v1216, 0.0
        %v2241 = vmax.f32 %v1217, 0.0
        %v2242 = vmax.f32 %v1218, 0.0
        %v2243 = vmax.f32 %v1219, 0.0
        %v2244 = vmax.f32 %v1220, 0.0
        %v2245 = vmax.f32 %v1221, 0.0
        %v2246 = vmax.f32 %v1222, 0.0
        %v2247 = vmax.f32 %v1223, 0.0
        %v2248 = vmax.f32 %v1224, 0.0
        %v2249 = vmax.f32 %v1225, 0.0
        %v2250 = vmax.f32 %v1226, 0.0
        %v2251 = vmax.f32 %v1227, 0.0
        %v2252 = vmax.f32 %v1228, 0.0
        %v2253 = vmax.f32 %v1229, 0.0
        %v2254 = vmax.f32 %v1230, 0.0
        %v2255 = vmax.f32 %v1231, 0.0
        %v2256 = vmax.f32 %v1232, 0.0
        %v2257 = vmax.f32 %v1233, 0.0
        %v2258 = vmax.f32 %v1234, 0.0
        %v2259 = vmax.f32 %v1235, 0.0
        %v2260 = vmax.f32 %v1236, 0.0
        %v2261 = vmax.f32 %v1237, 0.0
        %v2262 = vmax.f32 %v1238, 0.0
        %v2263 = vmax.f32 %v1239, 0.0
        %v2264 = vmax.f32 %v1240, 0.0
        %v2265 = vmax.f32 %v1241, 0.0
        %v2266 = vmax.f32 %v1242, 0.0
        %v2267 = vmax.f32 %v1243, 0.0
        %v2268 = vmax.f32 %v1244, 0.0
        %v2269 = vmax.f32 %v1245, 0.0
        %v2270 = vmax.f32 %v1246, 0.0
        %v2271 = vmax.f32 %v1247, 0.0
        %v2272 = vmax.f32 %v1248, 0.0
        %v2273 = vmax.f32 %v1249, 0.0
        %v2274 = vmax.f32 %v1250, 0.0
        %v2275 = vmax.f32 %v1251, 0.0
        %v2276 = vmax.f32 %v1252, 0.0
        %v2277 = vmax.f32 %v1253, 0.0
        %v2278 = vmax.f32 %v1254, 0.0
        %v2279 = vmax.f32 %v1255, 0.0
        %v2280 = vmax.f32 %v1256, 0.0
        %v2281 = vmax.f32 %v1257, 0.0
        %v2282 = vmax.f32 %v1258, 0.0
        %v2283 = vmax.f32 %v1259, 0.0
        %v2284 = vmax.f32 %v1260, 0.0
        %v2285 = vmax.f32 %v1261, 0.0
        %v2286 = vmax.f32 %v1262, 0.0
        %v2287 = vmax.f32 %v1263, 0.0
        %v2288 = vmax.f32 %v1264, 0.0
        %v2289 = vmax.f32 %v1265, 0.0
        %v2290 = vmax.f32 %v1266, 0.0
        %v2291 = vmax.f32 %v1267, 0.0
        %v2292 = vmax.f32 %v1268, 0.0
        %v2293 = vmax.f32 %v1269, 0.0
        %2294 = vst [vmem:[%s234] sm:$0xff] %v1270
        %2295 = vst [vmem:[%s234 + $0x8] sm:$0xff] %v1271
        %2296 = vst [vmem:[%s234 + $0x10] sm:$0xff] %v1272
        %2297 = vst [vmem:[%s234 + $0x18] sm:$0xff] %v1273
        %2298 = vst [vmem:[%s234 + $0x20] sm:$0xff] %v1274
        %2299 = vst [vmem:[%s234 + $0x28] sm:$0xff] %v1275
        %2300 = vst [vmem:[%s234 + $0x30] sm:$0xff] %v1276
        %2301 = vst [vmem:[%s234 + $0x38] sm:$0xff] %v1277
        %2302 = vst [vmem:[%s234 + $0x40] sm:$0xff] %v1278
        %2303 = vst [vmem:[%s234 + $0x48] sm:$0xff] %v1279
        %2304 = vst [vmem:[%s234 + $0x50] sm:$0xff] %v1280
        %2305 = vst [vmem:[%s234 + $0x58] sm:$0xff] %v1281
        %2306 = vst [vmem:[%s234 + $0x60] sm:$0xff] %v1282
        %2307 = vst [vmem:[%s234 + $0x68] sm:$0xff] %v1283
        %2308 = vst [vmem:[%s234 + $0x70] sm:$0xff] %v1284
        %2309 = vst [vmem:[%s234 + $0x78] sm:$0xff] %v1285
        %2310 = vst [vmem:[%s234 + $0x80] sm:$0xff] %v1286
        %2311 = vst [vmem:[%s234 + $0x88] sm:$0xff] %v1287
        %2312 = vst [vmem:[%s234 + $0x90] sm:$0xff] %v1288
        %2313 = vst [vmem:[%s234 + $0x98] sm:$0xff] %v1289
        %2314 = vst [vmem:[%s234 + $0xa0] sm:$0xff] %v1290
        %2315 = vst [vmem:[%s234 + $0xa8] sm:$0xff] %v1291
        %2316 = vst [vmem:[%s234 + $0xb0] sm:$0xff] %v1292
        %2317 = vst [vmem:[%s234 + $0xb8] sm:$0xff] %v1293
        %2318 = vst [vmem:[%s234 + $0xc0] sm:$0xff] %v1294
        %2319 = vst [vmem:[%s234 + $0xc8] sm:$0xff] %v1295
        %2320 = vst [vmem:[%s234 + $0xd0] sm:$0xff] %v1296
        %2321 = vst [vmem:[%s234 + $0xd8] sm:$0xff] %v1297
        %2322 = vst [vmem:[%s234 + $0xe0] sm:$0xff] %v1298
        %2323 = vst [vmem:[%s234 + $0xe8] sm:$0xff] %v1299
        %2324 = vst [vmem:[%s234 + $0xf0] sm:$0xff] %v1300
        %2325 = vst [vmem:[%s234 + $0xf8] sm:$0xff] %v1301
        %2326 = vst [vmem:[%s234 + $0x100] sm:$0xff] %v1302
        %2327 = vst [vmem:[%s234 + $0x108] sm:$0xff] %v1303
        %2328 = vst [vmem:[%s234 + $0x110] sm:$0xff] %v1304
        %2329 = vst [vmem:[%s234 + $0x118] sm:$0xff] %v1305
        %2330 = vst [vmem:[%s234 + $0x120] sm:$0xff] %v1306
        %2331 = vst [vmem:[%s234 + $0x128] sm:$0xff] %v1307
        %2332 = vst [vmem:[%s234 + $0x130] sm:$0xff] %v1308
        %2333 = vst [vmem:[%s234 + $0x138] sm:$0xff] %v1309
        %2334 = vst [vmem:[%s234 + $0x140] sm:$0xff] %v1310
        %2335 = vst [vmem:[%s234 + $0x148] sm:$0xff] %v1311
        %2336 = vst [vmem:[%s234 + $0x150] sm:$0xff] %v1312
        %2337 = vst [vmem:[%s234 + $0x158] sm:$0xff] %v1313
        %2338 = vst [vmem:[%s234 + $0x160] sm:$0xff] %v1314
        %2339 = vst [vmem:[%s234 + $0x168] sm:$0xff] %v1315
        %2340 = vst [vmem:[%s234 + $0x170] sm:$0xff] %v1316
        %2341 = vst [vmem:[%s234 + $0x178] sm:$0xff] %v1317
        %2342 = vst [vmem:[%s234 + $0x180] sm:$0xff] %v1318
        %2343 = vst [vmem:[%s234 + $0x188] sm:$0xff] %v1319
        %2344 = vst [vmem:[%s234 + $0x190] sm:$0xff] %v1320
        %2345 = vst [vmem:[%s234 + $0x198] sm:$0xff] %v1321
        %2346 = vst [vmem:[%s234 + $0x1a0] sm:$0xff] %v1322
        %2347 = vst [vmem:[%s234 + $0x1a8] sm:$0xff] %v1323
        %2348 = vst [vmem:[%s234 + $0x1b0] sm:$0xff] %v1324
        %2349 = vst [vmem:[%s234 + $0x1b8] sm:$0xff] %v1325
        %2350 = vst [vmem:[%s234 + $0x1c0] sm:$0xff] %v1326
        %2351 = vst [vmem:[%s234 + $0x1c8] sm:$0xff] %v1327
        %2352 = vst [vmem:[%s234 + $0x1d0] sm:$0xff] %v1328
        %2353 = vst [vmem:[%s234 + $0x1d8] sm:$0xff] %v1329
        %2354 = vst [vmem:[%s234 + $0x1e0] sm:$0xff] %v1330
        %2355 = vst [vmem:[%s234 + $0x1e8] sm:$0xff] %v1331
        %2356 = vst [vmem:[%s234 + $0x1f0] sm:$0xff] %v1332
        %2357 = vst [vmem:[%s234 + $0x1f8] sm:$0xff] %v1333
        %2358 = vst [vmem:[%s234 + $0x200] sm:$0xff] %v1334
        %2359 = vst [vmem:[%s234 + $0x208] sm:$0xff] %v1335
        %2360 = vst [vmem:[%s234 + $0x210] sm:$0xff] %v1336
        %2361 = vst [vmem:[%s234 + $0x218] sm:$0xff] %v1337
        %2362 = vst [vmem:[%s234 + $0x220] sm:$0xff] %v1338
        %2363 = vst [vmem:[%s234 + $0x228] sm:$0xff] %v1339
        %2364 = vst [vmem:[%s234 + $0x230] sm:$0xff] %v1340
        %2365 = vst [vmem:[%s234 + $0x238] sm:$0xff] %v1341
        %2366 = vst [vmem:[%s234 + $0x240] sm:$0xff] %v1342
        %2367 = vst [vmem:[%s234 + $0x248] sm:$0xff] %v1343
        %2368 = vst [vmem:[%s234 + $0x250] sm:$0xff] %v1344
        %2369 = vst [vmem:[%s234 + $0x258] sm:$0xff] %v1345
        %2370 = vst [vmem:[%s234 + $0x260] sm:$0xff] %v1346
        %2371 = vst [vmem:[%s234 + $0x268] sm:$0xff] %v1347
        %2372 = vst [vmem:[%s234 + $0x270] sm:$0xff] %v1348
        %2373 = vst [vmem:[%s234 + $0x278] sm:$0xff] %v1349
        %2374 = vst [vmem:[%s234 + $0x280] sm:$0xff] %v1350
        %2375 = vst [vmem:[%s234 + $0x288] sm:$0xff] %v1351
        %2376 = vst [vmem:[%s234 + $0x290] sm:$0xff] %v1352
        %2377 = vst [vmem:[%s234 + $0x298] sm:$0xff] %v1353
        %2378 = vst [vmem:[%s234 + $0x2a0] sm:$0xff] %v1354
        %2379 = vst [vmem:[%s234 + $0x2a8] sm:$0xff] %v1355
        %2380 = vst [vmem:[%s234 + $0x2b0] sm:$0xff] %v1356
        %2381 = vst [vmem:[%s234 + $0x2b8] sm:$0xff] %v1357
        %2382 = vst [vmem:[%s234 + $0x2c0] sm:$0xff] %v1358
        %2383 = vst [vmem:[%s234 + $0x2c8] sm:$0xff] %v1359
        %2384 = vst [vmem:[%s234 + $0x2d0] sm:$0xff] %v1360
        %2385 = vst [vmem:[%s234 + $0x2d8] sm:$0xff] %v1361
        %2386 = vst [vmem:[%s234 + $0x2e0] sm:$0xff] %v1362
        %2387 = vst [vmem:[%s234 + $0x2e8] sm:$0xff] %v1363
        %2388 = vst [vmem:[%s234 + $0x2f0] sm:$0xff] %v1364
        %2389 = vst [vmem:[%s234 + $0x2f8] sm:$0xff] %v1365
        %2390 = vst [vmem:[%s234 + $0x300] sm:$0xff] %v1366
        %2391 = vst [vmem:[%s234 + $0x308] sm:$0xff] %v1367
        %2392 = vst [vmem:[%s234 + $0x310] sm:$0xff] %v1368
        %2393 = vst [vmem:[%s234 + $0x318] sm:$0xff] %v1369
        %2394 = vst [vmem:[%s234 + $0x320] sm:$0xff] %v1370
        %2395 = vst [vmem:[%s234 + $0x328] sm:$0xff] %v1371
        %2396 = vst [vmem:[%s234 + $0x330] sm:$0xff] %v1372
        %2397 = vst [vmem:[%s234 + $0x338] sm:$0xff] %v1373
        %2398 = vst [vmem:[%s234 + $0x340] sm:$0xff] %v1374
        %2399 = vst [vmem:[%s234 + $0x348] sm:$0xff] %v1375
        %2400 = vst [vmem:[%s234 + $0x350] sm:$0xff] %v1376
        %2401 = vst [vmem:[%s234 + $0x358] sm:$0xff] %v1377
        %2402 = vst [vmem:[%s234 + $0x360] sm:$0xff] %v1378
        %2403 = vst [vmem:[%s234 + $0x368] sm:$0xff] %v1379
        %2404 = vst [vmem:[%s234 + $0x370] sm:$0xff] %v1380
        %2405 = vst [vmem:[%s234 + $0x378] sm:$0xff] %v1381
        %2406 = vst [vmem:[%s234 + $0x380] sm:$0xff] %v1382
        %2407 = vst [vmem:[%s234 + $0x388] sm:$0xff] %v1383
        %2408 = vst [vmem:[%s234 + $0x390] sm:$0xff] %v1384
        %2409 = vst [vmem:[%s234 + $0x398] sm:$0xff] %v1385
        %2410 = vst [vmem:[%s234 + $0x3a0] sm:$0xff] %v1386
        %2411 = vst [vmem:[%s234 + $0x3a8] sm:$0xff] %v1387
        %2412 = vst [vmem:[%s234 + $0x3b0] sm:$0xff] %v1388
        %2413 = vst [vmem:[%s234 + $0x3b8] sm:$0xff] %v1389
        %2414 = vst [vmem:[%s234 + $0x3c0] sm:$0xff] %v1390
        %2415 = vst [vmem:[%s234 + $0x3c8] sm:$0xff] %v1391
        %2416 = vst [vmem:[%s234 + $0x3d0] sm:$0xff] %v1392
        %2417 = vst [vmem:[%s234 + $0x3d8] sm:$0xff] %v1393
        %2418 = vst [vmem:[%s234 + $0x3e0] sm:$0xff] %v1394
        %2419 = vst [vmem:[%s234 + $0x3e8] sm:$0xff] %v1395
        %2420 = vst [vmem:[%s234 + $0x3f0] sm:$0xff] %v1396
        %2421 = vst [vmem:[%s234 + $0x3f8] sm:$0xff] %v1397
        %2422 = vst [vmem:[%s234 + $0x400] sm:$0xff] %v1398
        %2423 = vst [vmem:[%s234 + $0x408] sm:$0xff] %v1399
        %2424 = vst [vmem:[%s234 + $0x410] sm:$0xff] %v1400
        %2425 = vst [vmem:[%s234 + $0x418] sm:$0xff] %v1401
        %2426 = vst [vmem:[%s234 + $0x420] sm:$0xff] %v1402
        %2427 = vst [vmem:[%s234 + $0x428] sm:$0xff] %v1403
        %2428 = vst [vmem:[%s234 + $0x430] sm:$0xff] %v1404
        %2429 = vst [vmem:[%s234 + $0x438] sm:$0xff] %v1405
        %2430 = vst [vmem:[%s234 + $0x440] sm:$0xff] %v1406
        %2431 = vst [vmem:[%s234 + $0x448] sm:$0xff] %v1407
        %2432 = vst [vmem:[%s234 + $0x450] sm:$0xff] %v1408
        %2433 = vst [vmem:[%s234 + $0x458] sm:$0xff] %v1409
        %2434 = vst [vmem:[%s234 + $0x460] sm:$0xff] %v1410
        %2435 = vst [vmem:[%s234 + $0x468] sm:$0xff] %v1411
        %2436 = vst [vmem:[%s234 + $0x470] sm:$0xff] %v1412
        %2437 = vst [vmem:[%s234 + $0x478] sm:$0xff] %v1413
        %2438 = vst [vmem:[%s234 + $0x480] sm:$0xff] %v1414
        %2439 = vst [vmem:[%s234 + $0x488] sm:$0xff] %v1415
        %2440 = vst [vmem:[%s234 + $0x490] sm:$0xff] %v1416
        %2441 = vst [vmem:[%s234 + $0x498] sm:$0xff] %v1417
        %2442 = vst [vmem:[%s234 + $0x4a0] sm:$0xff] %v1418
        %2443 = vst [vmem:[%s234 + $0x4a8] sm:$0xff] %v1419
        %2444 = vst [vmem:[%s234 + $0x4b0] sm:$0xff] %v1420
        %2445 = vst [vmem:[%s234 + $0x4b8] sm:$0xff] %v1421
        %2446 = vst [vmem:[%s234 + $0x4c0] sm:$0xff] %v1422
        %2447 = vst [vmem:[%s234 + $0x4c8] sm:$0xff] %v1423
        %2448 = vst [vmem:[%s234 + $0x4d0] sm:$0xff] %v1424
        %2449 = vst [vmem:[%s234 + $0x4d8] sm:$0xff] %v1425
        %2450 = vst [vmem:[%s234 + $0x4e0] sm:$0xff] %v1426
        %2451 = vst [vmem:[%s234 + $0x4e8] sm:$0xff] %v1427
        %2452 = vst [vmem:[%s234 + $0x4f0] sm:$0xff] %v1428
        %2453 = vst [vmem:[%s234 + $0x4f8] sm:$0xff] %v1429
        %2454 = vst [vmem:[%s234 + $0x500] sm:$0xff] %v1430
        %2455 = vst [vmem:[%s234 + $0x508] sm:$0xff] %v1431
        %2456 = vst [vmem:[%s234 + $0x510] sm:$0xff] %v1432
        %2457 = vst [vmem:[%s234 + $0x518] sm:$0xff] %v1433
        %2458 = vst [vmem:[%s234 + $0x520] sm:$0xff] %v1434
        %2459 = vst [vmem:[%s234 + $0x528] sm:$0xff] %v1435
        %2460 = vst [vmem:[%s234 + $0x530] sm:$0xff] %v1436
        %2461 = vst [vmem:[%s234 + $0x538] sm:$0xff] %v1437
        %2462 = vst [vmem:[%s234 + $0x540] sm:$0xff] %v1438
        %2463 = vst [vmem:[%s234 + $0x548] sm:$0xff] %v1439
        %2464 = vst [vmem:[%s234 + $0x550] sm:$0xff] %v1440
        %2465 = vst [vmem:[%s234 + $0x558] sm:$0xff] %v1441
        %2466 = vst [vmem:[%s234 + $0x560] sm:$0xff] %v1442
        %2467 = vst [vmem:[%s234 + $0x568] sm:$0xff] %v1443
        %2468 = vst [vmem:[%s234 + $0x570] sm:$0xff] %v1444
        %2469 = vst [vmem:[%s234 + $0x578] sm:$0xff] %v1445
        %2470 = vst [vmem:[%s234 + $0x580] sm:$0xff] %v1446
        %2471 = vst [vmem:[%s234 + $0x588] sm:$0xff] %v1447
        %2472 = vst [vmem:[%s234 + $0x590] sm:$0xff] %v1448
        %2473 = vst [vmem:[%s234 + $0x598] sm:$0xff] %v1449
        %2474 = vst [vmem:[%s234 + $0x5a0] sm:$0xff] %v1450
        %2475 = vst [vmem:[%s234 + $0x5a8] sm:$0xff] %v1451
        %2476 = vst [vmem:[%s234 + $0x5b0] sm:$0xff] %v1452
        %2477 = vst [vmem:[%s234 + $0x5b8] sm:$0xff] %v1453
        %2478 = vst [vmem:[%s234 + $0x5c0] sm:$0xff] %v1454
        %2479 = vst [vmem:[%s234 + $0x5c8] sm:$0xff] %v1455
        %2480 = vst [vmem:[%s234 + $0x5d0] sm:$0xff] %v1456
        %2481 = vst [vmem:[%s234 + $0x5d8] sm:$0xff] %v1457
        %2482 = vst [vmem:[%s234 + $0x5e0] sm:$0xff] %v1458
        %2483 = vst [vmem:[%s234 + $0x5e8] sm:$0xff] %v1459
        %2484 = vst [vmem:[%s234 + $0x5f0] sm:$0xff] %v1460
        %2485 = vst [vmem:[%s234 + $0x5f8] sm:$0xff] %v1461
        %2486 = vst [vmem:[%s234 + $0x600] sm:$0xff] %v1462
        %2487 = vst [vmem:[%s234 + $0x608] sm:$0xff] %v1463
        %2488 = vst [vmem:[%s234 + $0x610] sm:$0xff] %v1464
        %2489 = vst [vmem:[%s234 + $0x618] sm:$0xff] %v1465
        %2490 = vst [vmem:[%s234 + $0x620] sm:$0xff] %v1466
        %2491 = vst [vmem:[%s234 + $0x628] sm:$0xff] %v1467
        %2492 = vst [vmem:[%s234 + $0x630] sm:$0xff] %v1468
        %2493 = vst [vmem:[%s234 + $0x638] sm:$0xff] %v1469
        %2494 = vst [vmem:[%s234 + $0x640] sm:$0xff] %v1470
        %2495 = vst [vmem:[%s234 + $0x648] sm:$0xff] %v1471
        %2496 = vst [vmem:[%s234 + $0x650] sm:$0xff] %v1472
        %2497 = vst [vmem:[%s234 + $0x658] sm:$0xff] %v1473
        %2498 = vst [vmem:[%s234 + $0x660] sm:$0xff] %v1474
        %2499 = vst [vmem:[%s234 + $0x668] sm:$0xff] %v1475
        %2500 = vst [vmem:[%s234 + $0x670] sm:$0xff] %v1476
        %2501 = vst [vmem:[%s234 + $0x678] sm:$0xff] %v1477
        %2502 = vst [vmem:[%s234 + $0x680] sm:$0xff] %v1478
        %2503 = vst [vmem:[%s234 + $0x688] sm:$0xff] %v1479
        %2504 = vst [vmem:[%s234 + $0x690] sm:$0xff] %v1480
        %2505 = vst [vmem:[%s234 + $0x698] sm:$0xff] %v1481
        %2506 = vst [vmem:[%s234 + $0x6a0] sm:$0xff] %v1482
        %2507 = vst [vmem:[%s234 + $0x6a8] sm:$0xff] %v1483
        %2508 = vst [vmem:[%s234 + $0x6b0] sm:$0xff] %v1484
        %2509 = vst [vmem:[%s234 + $0x6b8] sm:$0xff] %v1485
        %2510 = vst [vmem:[%s234 + $0x6c0] sm:$0xff] %v1486
        %2511 = vst [vmem:[%s234 + $0x6c8] sm:$0xff] %v1487
        %2512 = vst [vmem:[%s234 + $0x6d0] sm:$0xff] %v1488
        %2513 = vst [vmem:[%s234 + $0x6d8] sm:$0xff] %v1489
        %2514 = vst [vmem:[%s234 + $0x6e0] sm:$0xff] %v1490
        %2515 = vst [vmem:[%s234 + $0x6e8] sm:$0xff] %v1491
        %2516 = vst [vmem:[%s234 + $0x6f0] sm:$0xff] %v1492
        %2517 = vst [vmem:[%s234 + $0x6f8] sm:$0xff] %v1493
        %2518 = vst [vmem:[%s234 + $0x700] sm:$0xff] %v1494
        %2519 = vst [vmem:[%s234 + $0x708] sm:$0xff] %v1495
        %2520 = vst [vmem:[%s234 + $0x710] sm:$0xff] %v1496
        %2521 = vst [vmem:[%s234 + $0x718] sm:$0xff] %v1497
        %2522 = vst [vmem:[%s234 + $0x720] sm:$0xff] %v1498
        %2523 = vst [vmem:[%s234 + $0x728] sm:$0xff] %v1499
        %2524 = vst [vmem:[%s234 + $0x730] sm:$0xff] %v1500
        %2525 = vst [vmem:[%s234 + $0x738] sm:$0xff] %v1501
        %2526 = vst [vmem:[%s234 + $0x740] sm:$0xff] %v1502
        %2527 = vst [vmem:[%s234 + $0x748] sm:$0xff] %v1503
        %2528 = vst [vmem:[%s234 + $0x750] sm:$0xff] %v1504
        %2529 = vst [vmem:[%s234 + $0x758] sm:$0xff] %v1505
        %2530 = vst [vmem:[%s234 + $0x760] sm:$0xff] %v1506
        %2531 = vst [vmem:[%s234 + $0x768] sm:$0xff] %v1507
        %2532 = vst [vmem:[%s234 + $0x770] sm:$0xff] %v1508
        %2533 = vst [vmem:[%s234 + $0x778] sm:$0xff] %v1509
        %2534 = vst [vmem:[%s234 + $0x780] sm:$0xff] %v1510
        %2535 = vst [vmem:[%s234 + $0x788] sm:$0xff] %v1511
        %2536 = vst [vmem:[%s234 + $0x790] sm:$0xff] %v1512
        %2537 = vst [vmem:[%s234 + $0x798] sm:$0xff] %v1513
        %2538 = vst [vmem:[%s234 + $0x7a0] sm:$0xff] %v1514
        %2539 = vst [vmem:[%s234 + $0x7a8] sm:$0xff] %v1515
        %2540 = vst [vmem:[%s234 + $0x7b0] sm:$0xff] %v1516
        %2541 = vst [vmem:[%s234 + $0x7b8] sm:$0xff] %v1517
        %2542 = vst [vmem:[%s234 + $0x7c0] sm:$0xff] %v1518
        %2543 = vst [vmem:[%s234 + $0x7c8] sm:$0xff] %v1519
        %2544 = vst [vmem:[%s234 + $0x7d0] sm:$0xff] %v1520
        %2545 = vst [vmem:[%s234 + $0x7d8] sm:$0xff] %v1521
        %2546 = vst [vmem:[%s234 + $0x7e0] sm:$0xff] %v1522
        %2547 = vst [vmem:[%s234 + $0x7e8] sm:$0xff] %v1523
        %2548 = vst [vmem:[%s234 + $0x7f0] sm:$0xff] %v1524
        %2549 = vst [vmem:[%s234 + $0x7f8] sm:$0xff] %v1525
        %2550 = vst [vmem:[%s234 + $0x800] sm:$0xff] %v1526
        %2551 = vst [vmem:[%s234 + $0x808] sm:$0xff] %v1527
        %2552 = vst [vmem:[%s234 + $0x810] sm:$0xff] %v1528
        %2553 = vst [vmem:[%s234 + $0x818] sm:$0xff] %v1529
        %2554 = vst [vmem:[%s234 + $0x820] sm:$0xff] %v1530
        %2555 = vst [vmem:[%s234 + $0x828] sm:$0xff] %v1531
        %2556 = vst [vmem:[%s234 + $0x830] sm:$0xff] %v1532
        %2557 = vst [vmem:[%s234 + $0x838] sm:$0xff] %v1533
        %2558 = vst [vmem:[%s234 + $0x840] sm:$0xff] %v1534
        %2559 = vst [vmem:[%s234 + $0x848] sm:$0xff] %v1535
        %2560 = vst [vmem:[%s234 + $0x850] sm:$0xff] %v1536
        %2561 = vst [vmem:[%s234 + $0x858] sm:$0xff] %v1537
        %2562 = vst [vmem:[%s234 + $0x860] sm:$0xff] %v1538
        %2563 = vst [vmem:[%s234 + $0x868] sm:$0xff] %v1539
        %2564 = vst [vmem:[%s234 + $0x870] sm:$0xff] %v1540
        %2565 = vst [vmem:[%s234 + $0x878] sm:$0xff] %v1541
        %2566 = vst [vmem:[%s234 + $0x880] sm:$0xff] %v1542
        %2567 = vst [vmem:[%s234 + $0x888] sm:$0xff] %v1543
        %2568 = vst [vmem:[%s234 + $0x890] sm:$0xff] %v1544
        %2569 = vst [vmem:[%s234 + $0x898] sm:$0xff] %v1545
        %2570 = vst [vmem:[%s234 + $0x8a0] sm:$0xff] %v1546
        %2571 = vst [vmem:[%s234 + $0x8a8] sm:$0xff] %v1547
        %2572 = vst [vmem:[%s234 + $0x8b0] sm:$0xff] %v1548
        %2573 = vst [vmem:[%s234 + $0x8b8] sm:$0xff] %v1549
        %2574 = vst [vmem:[%s234 + $0x8c0] sm:$0xff] %v1550
        %2575 = vst [vmem:[%s234 + $0x8c8] sm:$0xff] %v1551
        %2576 = vst [vmem:[%s234 + $0x8d0] sm:$0xff] %v1552
        %2577 = vst [vmem:[%s234 + $0x8d8] sm:$0xff] %v1553
        %2578 = vst [vmem:[%s234 + $0x8e0] sm:$0xff] %v1554
        %2579 = vst [vmem:[%s234 + $0x8e8] sm:$0xff] %v1555
        %2580 = vst [vmem:[%s234 + $0x8f0] sm:$0xff] %v1556
        %2581 = vst [vmem:[%s234 + $0x8f8] sm:$0xff] %v1557
        %2582 = vst [vmem:[%s234 + $0x900] sm:$0xff] %v1558
        %2583 = vst [vmem:[%s234 + $0x908] sm:$0xff] %v1559
        %2584 = vst [vmem:[%s234 + $0x910] sm:$0xff] %v1560
        %2585 = vst [vmem:[%s234 + $0x918] sm:$0xff] %v1561
        %2586 = vst [vmem:[%s234 + $0x920] sm:$0xff] %v1562
        %2587 = vst [vmem:[%s234 + $0x928] sm:$0xff] %v1563
        %2588 = vst [vmem:[%s234 + $0x930] sm:$0xff] %v1564
        %2589 = vst [vmem:[%s234 + $0x938] sm:$0xff] %v1565
        %2590 = vst [vmem:[%s234 + $0x940] sm:$0xff] %v1566
        %2591 = vst [vmem:[%s234 + $0x948] sm:$0xff] %v1567
        %2592 = vst [vmem:[%s234 + $0x950] sm:$0xff] %v1568
        %2593 = vst [vmem:[%s234 + $0x958] sm:$0xff] %v1569
        %2594 = vst [vmem:[%s234 + $0x960] sm:$0xff] %v1570
        %2595 = vst [vmem:[%s234 + $0x968] sm:$0xff] %v1571
        %2596 = vst [vmem:[%s234 + $0x970] sm:$0xff] %v1572
        %2597 = vst [vmem:[%s234 + $0x978] sm:$0xff] %v1573
        %2598 = vst [vmem:[%s234 + $0x980] sm:$0xff] %v1574
        %2599 = vst [vmem:[%s234 + $0x988] sm:$0xff] %v1575
        %2600 = vst [vmem:[%s234 + $0x990] sm:$0xff] %v1576
        %2601 = vst [vmem:[%s234 + $0x998] sm:$0xff] %v1577
        %2602 = vst [vmem:[%s234 + $0x9a0] sm:$0xff] %v1578
        %2603 = vst [vmem:[%s234 + $0x9a8] sm:$0xff] %v1579
        %2604 = vst [vmem:[%s234 + $0x9b0] sm:$0xff] %v1580
        %2605 = vst [vmem:[%s234 + $0x9b8] sm:$0xff] %v1581
        %2606 = vst [vmem:[%s234 + $0x9c0] sm:$0xff] %v1582
        %2607 = vst [vmem:[%s234 + $0x9c8] sm:$0xff] %v1583
        %2608 = vst [vmem:[%s234 + $0x9d0] sm:$0xff] %v1584
        %2609 = vst [vmem:[%s234 + $0x9d8] sm:$0xff] %v1585
        %2610 = vst [vmem:[%s234 + $0x9e0] sm:$0xff] %v1586
        %2611 = vst [vmem:[%s234 + $0x9e8] sm:$0xff] %v1587
        %2612 = vst [vmem:[%s234 + $0x9f0] sm:$0xff] %v1588
        %2613 = vst [vmem:[%s234 + $0x9f8] sm:$0xff] %v1589
        %2614 = vst [vmem:[%s234 + $0xa00] sm:$0xff] %v1590
        %2615 = vst [vmem:[%s234 + $0xa08] sm:$0xff] %v1591
        %2616 = vst [vmem:[%s234 + $0xa10] sm:$0xff] %v1592
        %2617 = vst [vmem:[%s234 + $0xa18] sm:$0xff] %v1593
        %2618 = vst [vmem:[%s234 + $0xa20] sm:$0xff] %v1594
        %2619 = vst [vmem:[%s234 + $0xa28] sm:$0xff] %v1595
        %2620 = vst [vmem:[%s234 + $0xa30] sm:$0xff] %v1596
        %2621 = vst [vmem:[%s234 + $0xa38] sm:$0xff] %v1597
        %2622 = vst [vmem:[%s234 + $0xa40] sm:$0xff] %v1598
        %2623 = vst [vmem:[%s234 + $0xa48] sm:$0xff] %v1599
        %2624 = vst [vmem:[%s234 + $0xa50] sm:$0xff] %v1600
        %2625 = vst [vmem:[%s234 + $0xa58] sm:$0xff] %v1601
        %2626 = vst [vmem:[%s234 + $0xa60] sm:$0xff] %v1602
        %2627 = vst [vmem:[%s234 + $0xa68] sm:$0xff] %v1603
        %2628 = vst [vmem:[%s234 + $0xa70] sm:$0xff] %v1604
        %2629 = vst [vmem:[%s234 + $0xa78] sm:$0xff] %v1605
        %2630 = vst [vmem:[%s234 + $0xa80] sm:$0xff] %v1606
        %2631 = vst [vmem:[%s234 + $0xa88] sm:$0xff] %v1607
        %2632 = vst [vmem:[%s234 + $0xa90] sm:$0xff] %v1608
        %2633 = vst [vmem:[%s234 + $0xa98] sm:$0xff] %v1609
        %2634 = vst [vmem:[%s234 + $0xaa0] sm:$0xff] %v1610
        %2635 = vst [vmem:[%s234 + $0xaa8] sm:$0xff] %v1611
        %2636 = vst [vmem:[%s234 + $0xab0] sm:$0xff] %v1612
        %2637 = vst [vmem:[%s234 + $0xab8] sm:$0xff] %v1613
        %2638 = vst [vmem:[%s234 + $0xac0] sm:$0xff] %v1614
        %2639 = vst [vmem:[%s234 + $0xac8] sm:$0xff] %v1615
        %2640 = vst [vmem:[%s234 + $0xad0] sm:$0xff] %v1616
        %2641 = vst [vmem:[%s234 + $0xad8] sm:$0xff] %v1617
        %2642 = vst [vmem:[%s234 + $0xae0] sm:$0xff] %v1618
        %2643 = vst [vmem:[%s234 + $0xae8] sm:$0xff] %v1619
        %2644 = vst [vmem:[%s234 + $0xaf0] sm:$0xff] %v1620
        %2645 = vst [vmem:[%s234 + $0xaf8] sm:$0xff] %v1621
        %2646 = vst [vmem:[%s234 + $0xb00] sm:$0xff] %v1622
        %2647 = vst [vmem:[%s234 + $0xb08] sm:$0xff] %v1623
        %2648 = vst [vmem:[%s234 + $0xb10] sm:$0xff] %v1624
        %2649 = vst [vmem:[%s234 + $0xb18] sm:$0xff] %v1625
        %2650 = vst [vmem:[%s234 + $0xb20] sm:$0xff] %v1626
        %2651 = vst [vmem:[%s234 + $0xb28] sm:$0xff] %v1627
        %2652 = vst [vmem:[%s234 + $0xb30] sm:$0xff] %v1628
        %2653 = vst [vmem:[%s234 + $0xb38] sm:$0xff] %v1629
        %2654 = vst [vmem:[%s234 + $0xb40] sm:$0xff] %v1630
        %2655 = vst [vmem:[%s234 + $0xb48] sm:$0xff] %v1631
        %2656 = vst [vmem:[%s234 + $0xb50] sm:$0xff] %v1632
        %2657 = vst [vmem:[%s234 + $0xb58] sm:$0xff] %v1633
        %2658 = vst [vmem:[%s234 + $0xb60] sm:$0xff] %v1634
        %2659 = vst [vmem:[%s234 + $0xb68] sm:$0xff] %v1635
        %2660 = vst [vmem:[%s234 + $0xb70] sm:$0xff] %v1636
        %2661 = vst [vmem:[%s234 + $0xb78] sm:$0xff] %v1637
        %2662 = vst [vmem:[%s234 + $0xb80] sm:$0xff] %v1638
        %2663 = vst [vmem:[%s234 + $0xb88] sm:$0xff] %v1639
        %2664 = vst [vmem:[%s234 + $0xb90] sm:$0xff] %v1640
        %2665 = vst [vmem:[%s234 + $0xb98] sm:$0xff] %v1641
        %2666 = vst [vmem:[%s234 + $0xba0] sm:$0xff] %v1642
        %2667 = vst [vmem:[%s234 + $0xba8] sm:$0xff] %v1643
        %2668 = vst [vmem:[%s234 + $0xbb0] sm:$0xff] %v1644
        %2669 = vst [vmem:[%s234 + $0xbb8] sm:$0xff] %v1645
        %2670 = vst [vmem:[%s234 + $0xbc0] sm:$0xff] %v1646
        %2671 = vst [vmem:[%s234 + $0xbc8] sm:$0xff] %v1647
        %2672 = vst [vmem:[%s234 + $0xbd0] sm:$0xff] %v1648
        %2673 = vst [vmem:[%s234 + $0xbd8] sm:$0xff] %v1649
        %2674 = vst [vmem:[%s234 + $0xbe0] sm:$0xff] %v1650
        %2675 = vst [vmem:[%s234 + $0xbe8] sm:$0xff] %v1651
        %2676 = vst [vmem:[%s234 + $0xbf0] sm:$0xff] %v1652
        %2677 = vst [vmem:[%s234 + $0xbf8] sm:$0xff] %v1653
        %2678 = vst [vmem:[%s234 + $0xc00] sm:$0xff] %v1654
        %2679 = vst [vmem:[%s234 + $0xc08] sm:$0xff] %v1655
        %2680 = vst [vmem:[%s234 + $0xc10] sm:$0xff] %v1656
        %2681 = vst [vmem:[%s234 + $0xc18] sm:$0xff] %v1657
        %2682 = vst [vmem:[%s234 + $0xc20] sm:$0xff] %v1658
        %2683 = vst [vmem:[%s234 + $0xc28] sm:$0xff] %v1659
        %2684 = vst [vmem:[%s234 + $0xc30] sm:$0xff] %v1660
        %2685 = vst [vmem:[%s234 + $0xc38] sm:$0xff] %v1661
        %2686 = vst [vmem:[%s234 + $0xc40] sm:$0xff] %v1662
        %2687 = vst [vmem:[%s234 + $0xc48] sm:$0xff] %v1663
        %2688 = vst [vmem:[%s234 + $0xc50] sm:$0xff] %v1664
        %2689 = vst [vmem:[%s234 + $0xc58] sm:$0xff] %v1665
        %2690 = vst [vmem:[%s234 + $0xc60] sm:$0xff] %v1666
        %2691 = vst [vmem:[%s234 + $0xc68] sm:$0xff] %v1667
        %2692 = vst [vmem:[%s234 + $0xc70] sm:$0xff] %v1668
        %2693 = vst [vmem:[%s234 + $0xc78] sm:$0xff] %v1669
        %2694 = vst [vmem:[%s234 + $0xc80] sm:$0xff] %v1670
        %2695 = vst [vmem:[%s234 + $0xc88] sm:$0xff] %v1671
        %2696 = vst [vmem:[%s234 + $0xc90] sm:$0xff] %v1672
        %2697 = vst [vmem:[%s234 + $0xc98] sm:$0xff] %v1673
        %2698 = vst [vmem:[%s234 + $0xca0] sm:$0xff] %v1674
        %2699 = vst [vmem:[%s234 + $0xca8] sm:$0xff] %v1675
        %2700 = vst [vmem:[%s234 + $0xcb0] sm:$0xff] %v1676
        %2701 = vst [vmem:[%s234 + $0xcb8] sm:$0xff] %v1677
        %2702 = vst [vmem:[%s234 + $0xcc0] sm:$0xff] %v1678
        %2703 = vst [vmem:[%s234 + $0xcc8] sm:$0xff] %v1679
        %2704 = vst [vmem:[%s234 + $0xcd0] sm:$0xff] %v1680
        %2705 = vst [vmem:[%s234 + $0xcd8] sm:$0xff] %v1681
        %2706 = vst [vmem:[%s234 + $0xce0] sm:$0xff] %v1682
        %2707 = vst [vmem:[%s234 + $0xce8] sm:$0xff] %v1683
        %2708 = vst [vmem:[%s234 + $0xcf0] sm:$0xff] %v1684
        %2709 = vst [vmem:[%s234 + $0xcf8] sm:$0xff] %v1685
        %2710 = vst [vmem:[%s234 + $0xd00] sm:$0xff] %v1686
        %2711 = vst [vmem:[%s234 + $0xd08] sm:$0xff] %v1687
        %2712 = vst [vmem:[%s234 + $0xd10] sm:$0xff] %v1688
        %2713 = vst [vmem:[%s234 + $0xd18] sm:$0xff] %v1689
        %2714 = vst [vmem:[%s234 + $0xd20] sm:$0xff] %v1690
        %2715 = vst [vmem:[%s234 + $0xd28] sm:$0xff] %v1691
        %2716 = vst [vmem:[%s234 + $0xd30] sm:$0xff] %v1692
        %2717 = vst [vmem:[%s234 + $0xd38] sm:$0xff] %v1693
        %2718 = vst [vmem:[%s234 + $0xd40] sm:$0xff] %v1694
        %2719 = vst [vmem:[%s234 + $0xd48] sm:$0xff] %v1695
        %2720 = vst [vmem:[%s234 + $0xd50] sm:$0xff] %v1696
        %2721 = vst [vmem:[%s234 + $0xd58] sm:$0xff] %v1697
        %2722 = vst [vmem:[%s234 + $0xd60] sm:$0xff] %v1698
        %2723 = vst [vmem:[%s234 + $0xd68] sm:$0xff] %v1699
        %2724 = vst [vmem:[%s234 + $0xd70] sm:$0xff] %v1700
        %2725 = vst [vmem:[%s234 + $0xd78] sm:$0xff] %v1701
        %2726 = vst [vmem:[%s234 + $0xd80] sm:$0xff] %v1702
        %2727 = vst [vmem:[%s234 + $0xd88] sm:$0xff] %v1703
        %2728 = vst [vmem:[%s234 + $0xd90] sm:$0xff] %v1704
        %2729 = vst [vmem:[%s234 + $0xd98] sm:$0xff] %v1705
        %2730 = vst [vmem:[%s234 + $0xda0] sm:$0xff] %v1706
        %2731 = vst [vmem:[%s234 + $0xda8] sm:$0xff] %v1707
        %2732 = vst [vmem:[%s234 + $0xdb0] sm:$0xff] %v1708
        %2733 = vst [vmem:[%s234 + $0xdb8] sm:$0xff] %v1709
        %2734 = vst [vmem:[%s234 + $0xdc0] sm:$0xff] %v1710
        %2735 = vst [vmem:[%s234 + $0xdc8] sm:$0xff] %v1711
        %2736 = vst [vmem:[%s234 + $0xdd0] sm:$0xff] %v1712
        %2737 = vst [vmem:[%s234 + $0xdd8] sm:$0xff] %v1713
        %2738 = vst [vmem:[%s234 + $0xde0] sm:$0xff] %v1714
        %2739 = vst [vmem:[%s234 + $0xde8] sm:$0xff] %v1715
        %2740 = vst [vmem:[%s234 + $0xdf0] sm:$0xff] %v1716
        %2741 = vst [vmem:[%s234 + $0xdf8] sm:$0xff] %v1717
        %2742 = vst [vmem:[%s234 + $0xe00] sm:$0xff] %v1718
        %2743 = vst [vmem:[%s234 + $0xe08] sm:$0xff] %v1719
        %2744 = vst [vmem:[%s234 + $0xe10] sm:$0xff] %v1720
        %2745 = vst [vmem:[%s234 + $0xe18] sm:$0xff] %v1721
        %2746 = vst [vmem:[%s234 + $0xe20] sm:$0xff] %v1722
        %2747 = vst [vmem:[%s234 + $0xe28] sm:$0xff] %v1723
        %2748 = vst [vmem:[%s234 + $0xe30] sm:$0xff] %v1724
        %2749 = vst [vmem:[%s234 + $0xe38] sm:$0xff] %v1725
        %2750 = vst [vmem:[%s234 + $0xe40] sm:$0xff] %v1726
        %2751 = vst [vmem:[%s234 + $0xe48] sm:$0xff] %v1727
        %2752 = vst [vmem:[%s234 + $0xe50] sm:$0xff] %v1728
        %2753 = vst [vmem:[%s234 + $0xe58] sm:$0xff] %v1729
        %2754 = vst [vmem:[%s234 + $0xe60] sm:$0xff] %v1730
        %2755 = vst [vmem:[%s234 + $0xe68] sm:$0xff] %v1731
        %2756 = vst [vmem:[%s234 + $0xe70] sm:$0xff] %v1732
        %2757 = vst [vmem:[%s234 + $0xe78] sm:$0xff] %v1733
        %2758 = vst [vmem:[%s234 + $0xe80] sm:$0xff] %v1734
        %2759 = vst [vmem:[%s234 + $0xe88] sm:$0xff] %v1735
        %2760 = vst [vmem:[%s234 + $0xe90] sm:$0xff] %v1736
        %2761 = vst [vmem:[%s234 + $0xe98] sm:$0xff] %v1737
        %2762 = vst [vmem:[%s234 + $0xea0] sm:$0xff] %v1738
        %2763 = vst [vmem:[%s234 + $0xea8] sm:$0xff] %v1739
        %2764 = vst [vmem:[%s234 + $0xeb0] sm:$0xff] %v1740
        %2765 = vst [vmem:[%s234 + $0xeb8] sm:$0xff] %v1741
        %2766 = vst [vmem:[%s234 + $0xec0] sm:$0xff] %v1742
        %2767 = vst [vmem:[%s234 + $0xec8] sm:$0xff] %v1743
        %2768 = vst [vmem:[%s234 + $0xed0] sm:$0xff] %v1744
        %2769 = vst [vmem:[%s234 + $0xed8] sm:$0xff] %v1745
        %2770 = vst [vmem:[%s234 + $0xee0] sm:$0xff] %v1746
        %2771 = vst [vmem:[%s234 + $0xee8] sm:$0xff] %v1747
        %2772 = vst [vmem:[%s234 + $0xef0] sm:$0xff] %v1748
        %2773 = vst [vmem:[%s234 + $0xef8] sm:$0xff] %v1749
        %2774 = vst [vmem:[%s234 + $0xf00] sm:$0xff] %v1750
        %2775 = vst [vmem:[%s234 + $0xf08] sm:$0xff] %v1751
        %2776 = vst [vmem:[%s234 + $0xf10] sm:$0xff] %v1752
        %2777 = vst [vmem:[%s234 + $0xf18] sm:$0xff] %v1753
        %2778 = vst [vmem:[%s234 + $0xf20] sm:$0xff] %v1754
        %2779 = vst [vmem:[%s234 + $0xf28] sm:$0xff] %v1755
        %2780 = vst [vmem:[%s234 + $0xf30] sm:$0xff] %v1756
        %2781 = vst [vmem:[%s234 + $0xf38] sm:$0xff] %v1757
        %2782 = vst [vmem:[%s234 + $0xf40] sm:$0xff] %v1758
        %2783 = vst [vmem:[%s234 + $0xf48] sm:$0xff] %v1759
        %2784 = vst [vmem:[%s234 + $0xf50] sm:$0xff] %v1760
        %2785 = vst [vmem:[%s234 + $0xf58] sm:$0xff] %v1761
        %2786 = vst [vmem:[%s234 + $0xf60] sm:$0xff] %v1762
        %2787 = vst [vmem:[%s234 + $0xf68] sm:$0xff] %v1763
        %2788 = vst [vmem:[%s234 + $0xf70] sm:$0xff] %v1764
        %2789 = vst [vmem:[%s234 + $0xf78] sm:$0xff] %v1765
        %2790 = vst [vmem:[%s234 + $0xf80] sm:$0xff] %v1766
        %2791 = vst [vmem:[%s234 + $0xf88] sm:$0xff] %v1767
        %2792 = vst [vmem:[%s234 + $0xf90] sm:$0xff] %v1768
        %2793 = vst [vmem:[%s234 + $0xf98] sm:$0xff] %v1769
        %2794 = vst [vmem:[%s234 + $0xfa0] sm:$0xff] %v1770
        %2795 = vst [vmem:[%s234 + $0xfa8] sm:$0xff] %v1771
        %2796 = vst [vmem:[%s234 + $0xfb0] sm:$0xff] %v1772
        %2797 = vst [vmem:[%s234 + $0xfb8] sm:$0xff] %v1773
        %2798 = vst [vmem:[%s234 + $0xfc0] sm:$0xff] %v1774
        %2799 = vst [vmem:[%s234 + $0xfc8] sm:$0xff] %v1775
        %2800 = vst [vmem:[%s234 + $0xfd0] sm:$0xff] %v1776
        %2801 = vst [vmem:[%s234 + $0xfd8] sm:$0xff] %v1777
        %2802 = vst [vmem:[%s234 + $0xfe0] sm:$0xff] %v1778
        %2803 = vst [vmem:[%s234 + $0xfe8] sm:$0xff] %v1779
        %2804 = vst [vmem:[%s234 + $0xff0] sm:$0xff] %v1780
        %2805 = vst [vmem:[%s234 + $0xff8] sm:$0xff] %v1781
        %2806 = vst [vmem:[%s234 + $0x1000] sm:$0xff] %v1782
        %2807 = vst [vmem:[%s234 + $0x1008] sm:$0xff] %v1783
        %2808 = vst [vmem:[%s234 + $0x1010] sm:$0xff] %v1784
        %2809 = vst [vmem:[%s234 + $0x1018] sm:$0xff] %v1785
        %2810 = vst [vmem:[%s234 + $0x1020] sm:$0xff] %v1786
        %2811 = vst [vmem:[%s234 + $0x1028] sm:$0xff] %v1787
        %2812 = vst [vmem:[%s234 + $0x1030] sm:$0xff] %v1788
        %2813 = vst [vmem:[%s234 + $0x1038] sm:$0xff] %v1789
        %2814 = vst [vmem:[%s234 + $0x1040] sm:$0xff] %v1790
        %2815 = vst [vmem:[%s234 + $0x1048] sm:$0xff] %v1791
        %2816 = vst [vmem:[%s234 + $0x1050] sm:$0xff] %v1792
        %2817 = vst [vmem:[%s234 + $0x1058] sm:$0xff] %v1793
        %2818 = vst [vmem:[%s234 + $0x1060] sm:$0xff] %v1794
        %2819 = vst [vmem:[%s234 + $0x1068] sm:$0xff] %v1795
        %2820 = vst [vmem:[%s234 + $0x1070] sm:$0xff] %v1796
        %2821 = vst [vmem:[%s234 + $0x1078] sm:$0xff] %v1797
        %2822 = vst [vmem:[%s234 + $0x1080] sm:$0xff] %v1798
        %2823 = vst [vmem:[%s234 + $0x1088] sm:$0xff] %v1799
        %2824 = vst [vmem:[%s234 + $0x1090] sm:$0xff] %v1800
        %2825 = vst [vmem:[%s234 + $0x1098] sm:$0xff] %v1801
        %2826 = vst [vmem:[%s234 + $0x10a0] sm:$0xff] %v1802
        %2827 = vst [vmem:[%s234 + $0x10a8] sm:$0xff] %v1803
        %2828 = vst [vmem:[%s234 + $0x10b0] sm:$0xff] %v1804
        %2829 = vst [vmem:[%s234 + $0x10b8] sm:$0xff] %v1805
        %2830 = vst [vmem:[%s234 + $0x10c0] sm:$0xff] %v1806
        %2831 = vst [vmem:[%s234 + $0x10c8] sm:$0xff] %v1807
        %2832 = vst [vmem:[%s234 + $0x10d0] sm:$0xff] %v1808
        %2833 = vst [vmem:[%s234 + $0x10d8] sm:$0xff] %v1809
        %2834 = vst [vmem:[%s234 + $0x10e0] sm:$0xff] %v1810
        %2835 = vst [vmem:[%s234 + $0x10e8] sm:$0xff] %v1811
        %2836 = vst [vmem:[%s234 + $0x10f0] sm:$0xff] %v1812
        %2837 = vst [vmem:[%s234 + $0x10f8] sm:$0xff] %v1813
        %2838 = vst [vmem:[%s234 + $0x1100] sm:$0xff] %v1814
        %2839 = vst [vmem:[%s234 + $0x1108] sm:$0xff] %v1815
        %2840 = vst [vmem:[%s234 + $0x1110] sm:$0xff] %v1816
        %2841 = vst [vmem:[%s234 + $0x1118] sm:$0xff] %v1817
        %2842 = vst [vmem:[%s234 + $0x1120] sm:$0xff] %v1818
        %2843 = vst [vmem:[%s234 + $0x1128] sm:$0xff] %v1819
        %2844 = vst [vmem:[%s234 + $0x1130] sm:$0xff] %v1820
        %2845 = vst [vmem:[%s234 + $0x1138] sm:$0xff] %v1821
        %2846 = vst [vmem:[%s234 + $0x1140] sm:$0xff] %v1822
        %2847 = vst [vmem:[%s234 + $0x1148] sm:$0xff] %v1823
        %2848 = vst [vmem:[%s234 + $0x1150] sm:$0xff] %v1824
        %2849 = vst [vmem:[%s234 + $0x1158] sm:$0xff] %v1825
        %2850 = vst [vmem:[%s234 + $0x1160] sm:$0xff] %v1826
        %2851 = vst [vmem:[%s234 + $0x1168] sm:$0xff] %v1827
        %2852 = vst [vmem:[%s234 + $0x1170] sm:$0xff] %v1828
        %2853 = vst [vmem:[%s234 + $0x1178] sm:$0xff] %v1829
        %2854 = vst [vmem:[%s234 + $0x1180] sm:$0xff] %v1830
        %2855 = vst [vmem:[%s234 + $0x1188] sm:$0xff] %v1831
        %2856 = vst [vmem:[%s234 + $0x1190] sm:$0xff] %v1832
        %2857 = vst [vmem:[%s234 + $0x1198] sm:$0xff] %v1833
        %2858 = vst [vmem:[%s234 + $0x11a0] sm:$0xff] %v1834
        %2859 = vst [vmem:[%s234 + $0x11a8] sm:$0xff] %v1835
        %2860 = vst [vmem:[%s234 + $0x11b0] sm:$0xff] %v1836
        %2861 = vst [vmem:[%s234 + $0x11b8] sm:$0xff] %v1837
        %2862 = vst [vmem:[%s234 + $0x11c0] sm:$0xff] %v1838
        %2863 = vst [vmem:[%s234 + $0x11c8] sm:$0xff] %v1839
        %2864 = vst [vmem:[%s234 + $0x11d0] sm:$0xff] %v1840
        %2865 = vst [vmem:[%s234 + $0x11d8] sm:$0xff] %v1841
        %2866 = vst [vmem:[%s234 + $0x11e0] sm:$0xff] %v1842
        %2867 = vst [vmem:[%s234 + $0x11e8] sm:$0xff] %v1843
        %2868 = vst [vmem:[%s234 + $0x11f0] sm:$0xff] %v1844
        %2869 = vst [vmem:[%s234 + $0x11f8] sm:$0xff] %v1845
        %2870 = vst [vmem:[%s234 + $0x1200] sm:$0xff] %v1846
        %2871 = vst [vmem:[%s234 + $0x1208] sm:$0xff] %v1847
        %2872 = vst [vmem:[%s234 + $0x1210] sm:$0xff] %v1848
        %2873 = vst [vmem:[%s234 + $0x1218] sm:$0xff] %v1849
        %2874 = vst [vmem:[%s234 + $0x1220] sm:$0xff] %v1850
        %2875 = vst [vmem:[%s234 + $0x1228] sm:$0xff] %v1851
        %2876 = vst [vmem:[%s234 + $0x1230] sm:$0xff] %v1852
        %2877 = vst [vmem:[%s234 + $0x1238] sm:$0xff] %v1853
        %2878 = vst [vmem:[%s234 + $0x1240] sm:$0xff] %v1854
        %2879 = vst [vmem:[%s234 + $0x1248] sm:$0xff] %v1855
        %2880 = vst [vmem:[%s234 + $0x1250] sm:$0xff] %v1856
        %2881 = vst [vmem:[%s234 + $0x1258] sm:$0xff] %v1857
        %2882 = vst [vmem:[%s234 + $0x1260] sm:$0xff] %v1858
        %2883 = vst [vmem:[%s234 + $0x1268] sm:$0xff] %v1859
        %2884 = vst [vmem:[%s234 + $0x1270] sm:$0xff] %v1860
        %2885 = vst [vmem:[%s234 + $0x1278] sm:$0xff] %v1861
        %2886 = vst [vmem:[%s234 + $0x1280] sm:$0xff] %v1862
        %2887 = vst [vmem:[%s234 + $0x1288] sm:$0xff] %v1863
        %2888 = vst [vmem:[%s234 + $0x1290] sm:$0xff] %v1864
        %2889 = vst [vmem:[%s234 + $0x1298] sm:$0xff] %v1865
        %2890 = vst [vmem:[%s234 + $0x12a0] sm:$0xff] %v1866
        %2891 = vst [vmem:[%s234 + $0x12a8] sm:$0xff] %v1867
        %2892 = vst [vmem:[%s234 + $0x12b0] sm:$0xff] %v1868
        %2893 = vst [vmem:[%s234 + $0x12b8] sm:$0xff] %v1869
        %2894 = vst [vmem:[%s234 + $0x12c0] sm:$0xff] %v1870
        %2895 = vst [vmem:[%s234 + $0x12c8] sm:$0xff] %v1871
        %2896 = vst [vmem:[%s234 + $0x12d0] sm:$0xff] %v1872
        %2897 = vst [vmem:[%s234 + $0x12d8] sm:$0xff] %v1873
        %2898 = vst [vmem:[%s234 + $0x12e0] sm:$0xff] %v1874
        %2899 = vst [vmem:[%s234 + $0x12e8] sm:$0xff] %v1875
        %2900 = vst [vmem:[%s234 + $0x12f0] sm:$0xff] %v1876
        %2901 = vst [vmem:[%s234 + $0x12f8] sm:$0xff] %v1877
        %2902 = vst [vmem:[%s234 + $0x1300] sm:$0xff] %v1878
        %2903 = vst [vmem:[%s234 + $0x1308] sm:$0xff] %v1879
        %2904 = vst [vmem:[%s234 + $0x1310] sm:$0xff] %v1880
        %2905 = vst [vmem:[%s234 + $0x1318] sm:$0xff] %v1881
        %2906 = vst [vmem:[%s234 + $0x1320] sm:$0xff] %v1882
        %2907 = vst [vmem:[%s234 + $0x1328] sm:$0xff] %v1883
        %2908 = vst [vmem:[%s234 + $0x1330] sm:$0xff] %v1884
        %2909 = vst [vmem:[%s234 + $0x1338] sm:$0xff] %v1885
        %2910 = vst [vmem:[%s234 + $0x1340] sm:$0xff] %v1886
        %2911 = vst [vmem:[%s234 + $0x1348] sm:$0xff] %v1887
        %2912 = vst [vmem:[%s234 + $0x1350] sm:$0xff] %v1888
        %2913 = vst [vmem:[%s234 + $0x1358] sm:$0xff] %v1889
        %2914 = vst [vmem:[%s234 + $0x1360] sm:$0xff] %v1890
        %2915 = vst [vmem:[%s234 + $0x1368] sm:$0xff] %v1891
        %2916 = vst [vmem:[%s234 + $0x1370] sm:$0xff] %v1892
        %2917 = vst [vmem:[%s234 + $0x1378] sm:$0xff] %v1893
        %2918 = vst [vmem:[%s234 + $0x1380] sm:$0xff] %v1894
        %2919 = vst [vmem:[%s234 + $0x1388] sm:$0xff] %v1895
        %2920 = vst [vmem:[%s234 + $0x1390] sm:$0xff] %v1896
        %2921 = vst [vmem:[%s234 + $0x1398] sm:$0xff] %v1897
        %2922 = vst [vmem:[%s234 + $0x13a0] sm:$0xff] %v1898
        %2923 = vst [vmem:[%s234 + $0x13a8] sm:$0xff] %v1899
        %2924 = vst [vmem:[%s234 + $0x13b0] sm:$0xff] %v1900
        %2925 = vst [vmem:[%s234 + $0x13b8] sm:$0xff] %v1901
        %2926 = vst [vmem:[%s234 + $0x13c0] sm:$0xff] %v1902
        %2927 = vst [vmem:[%s234 + $0x13c8] sm:$0xff] %v1903
        %2928 = vst [vmem:[%s234 + $0x13d0] sm:$0xff] %v1904
        %2929 = vst [vmem:[%s234 + $0x13d8] sm:$0xff] %v1905
        %2930 = vst [vmem:[%s234 + $0x13e0] sm:$0xff] %v1906
        %2931 = vst [vmem:[%s234 + $0x13e8] sm:$0xff] %v1907
        %2932 = vst [vmem:[%s234 + $0x13f0] sm:$0xff] %v1908
        %2933 = vst [vmem:[%s234 + $0x13f8] sm:$0xff] %v1909
        %2934 = vst [vmem:[%s234 + $0x1400] sm:$0xff] %v1910
        %2935 = vst [vmem:[%s234 + $0x1408] sm:$0xff] %v1911
        %2936 = vst [vmem:[%s234 + $0x1410] sm:$0xff] %v1912
        %2937 = vst [vmem:[%s234 + $0x1418] sm:$0xff] %v1913
        %2938 = vst [vmem:[%s234 + $0x1420] sm:$0xff] %v1914
        %2939 = vst [vmem:[%s234 + $0x1428] sm:$0xff] %v1915
        %2940 = vst [vmem:[%s234 + $0x1430] sm:$0xff] %v1916
        %2941 = vst [vmem:[%s234 + $0x1438] sm:$0xff] %v1917
        %2942 = vst [vmem:[%s234 + $0x1440] sm:$0xff] %v1918
        %2943 = vst [vmem:[%s234 + $0x1448] sm:$0xff] %v1919
        %2944 = vst [vmem:[%s234 + $0x1450] sm:$0xff] %v1920
        %2945 = vst [vmem:[%s234 + $0x1458] sm:$0xff] %v1921
        %2946 = vst [vmem:[%s234 + $0x1460] sm:$0xff] %v1922
        %2947 = vst [vmem:[%s234 + $0x1468] sm:$0xff] %v1923
        %2948 = vst [vmem:[%s234 + $0x1470] sm:$0xff] %v1924
        %2949 = vst [vmem:[%s234 + $0x1478] sm:$0xff] %v1925
        %2950 = vst [vmem:[%s234 + $0x1480] sm:$0xff] %v1926
        %2951 = vst [vmem:[%s234 + $0x1488] sm:$0xff] %v1927
        %2952 = vst [vmem:[%s234 + $0x1490] sm:$0xff] %v1928
        %2953 = vst [vmem:[%s234 + $0x1498] sm:$0xff] %v1929
        %2954 = vst [vmem:[%s234 + $0x14a0] sm:$0xff] %v1930
        %2955 = vst [vmem:[%s234 + $0x14a8] sm:$0xff] %v1931
        %2956 = vst [vmem:[%s234 + $0x14b0] sm:$0xff] %v1932
        %2957 = vst [vmem:[%s234 + $0x14b8] sm:$0xff] %v1933
        %2958 = vst [vmem:[%s234 + $0x14c0] sm:$0xff] %v1934
        %2959 = vst [vmem:[%s234 + $0x14c8] sm:$0xff] %v1935
        %2960 = vst [vmem:[%s234 + $0x14d0] sm:$0xff] %v1936
        %2961 = vst [vmem:[%s234 + $0x14d8] sm:$0xff] %v1937
        %2962 = vst [vmem:[%s234 + $0x14e0] sm:$0xff] %v1938
        %2963 = vst [vmem:[%s234 + $0x14e8] sm:$0xff] %v1939
        %2964 = vst [vmem:[%s234 + $0x14f0] sm:$0xff] %v1940
        %2965 = vst [vmem:[%s234 + $0x14f8] sm:$0xff] %v1941
        %2966 = vst [vmem:[%s234 + $0x1500] sm:$0xff] %v1942
        %2967 = vst [vmem:[%s234 + $0x1508] sm:$0xff] %v1943
        %2968 = vst [vmem:[%s234 + $0x1510] sm:$0xff] %v1944
        %2969 = vst [vmem:[%s234 + $0x1518] sm:$0xff] %v1945
        %2970 = vst [vmem:[%s234 + $0x1520] sm:$0xff] %v1946
        %2971 = vst [vmem:[%s234 + $0x1528] sm:$0xff] %v1947
        %2972 = vst [vmem:[%s234 + $0x1530] sm:$0xff] %v1948
        %2973 = vst [vmem:[%s234 + $0x1538] sm:$0xff] %v1949
        %2974 = vst [vmem:[%s234 + $0x1540] sm:$0xff] %v1950
        %2975 = vst [vmem:[%s234 + $0x1548] sm:$0xff] %v1951
        %2976 = vst [vmem:[%s234 + $0x1550] sm:$0xff] %v1952
        %2977 = vst [vmem:[%s234 + $0x1558] sm:$0xff] %v1953
        %2978 = vst [vmem:[%s234 + $0x1560] sm:$0xff] %v1954
        %2979 = vst [vmem:[%s234 + $0x1568] sm:$0xff] %v1955
        %2980 = vst [vmem:[%s234 + $0x1570] sm:$0xff] %v1956
        %2981 = vst [vmem:[%s234 + $0x1578] sm:$0xff] %v1957
        %2982 = vst [vmem:[%s234 + $0x1580] sm:$0xff] %v1958
        %2983 = vst [vmem:[%s234 + $0x1588] sm:$0xff] %v1959
        %2984 = vst [vmem:[%s234 + $0x1590] sm:$0xff] %v1960
        %2985 = vst [vmem:[%s234 + $0x1598] sm:$0xff] %v1961
        %2986 = vst [vmem:[%s234 + $0x15a0] sm:$0xff] %v1962
        %2987 = vst [vmem:[%s234 + $0x15a8] sm:$0xff] %v1963
        %2988 = vst [vmem:[%s234 + $0x15b0] sm:$0xff] %v1964
        %2989 = vst [vmem:[%s234 + $0x15b8] sm:$0xff] %v1965
        %2990 = vst [vmem:[%s234 + $0x15c0] sm:$0xff] %v1966
        %2991 = vst [vmem:[%s234 + $0x15c8] sm:$0xff] %v1967
        %2992 = vst [vmem:[%s234 + $0x15d0] sm:$0xff] %v1968
        %2993 = vst [vmem:[%s234 + $0x15d8] sm:$0xff] %v1969
        %2994 = vst [vmem:[%s234 + $0x15e0] sm:$0xff] %v1970
        %2995 = vst [vmem:[%s234 + $0x15e8] sm:$0xff] %v1971
        %2996 = vst [vmem:[%s234 + $0x15f0] sm:$0xff] %v1972
        %2997 = vst [vmem:[%s234 + $0x15f8] sm:$0xff] %v1973
        %2998 = vst [vmem:[%s234 + $0x1600] sm:$0xff] %v1974
        %2999 = vst [vmem:[%s234 + $0x1608] sm:$0xff] %v1975
        %3000 = vst [vmem:[%s234 + $0x1610] sm:$0xff] %v1976
        %3001 = vst [vmem:[%s234 + $0x1618] sm:$0xff] %v1977
        %3002 = vst [vmem:[%s234 + $0x1620] sm:$0xff] %v1978
        %3003 = vst [vmem:[%s234 + $0x1628] sm:$0xff] %v1979
        %3004 = vst [vmem:[%s234 + $0x1630] sm:$0xff] %v1980
        %3005 = vst [vmem:[%s234 + $0x1638] sm:$0xff] %v1981
        %3006 = vst [vmem:[%s234 + $0x1640] sm:$0xff] %v1982
        %3007 = vst [vmem:[%s234 + $0x1648] sm:$0xff] %v1983
        %3008 = vst [vmem:[%s234 + $0x1650] sm:$0xff] %v1984
        %3009 = vst [vmem:[%s234 + $0x1658] sm:$0xff] %v1985
        %3010 = vst [vmem:[%s234 + $0x1660] sm:$0xff] %v1986
        %3011 = vst [vmem:[%s234 + $0x1668] sm:$0xff] %v1987
        %3012 = vst [vmem:[%s234 + $0x1670] sm:$0xff] %v1988
        %3013 = vst [vmem:[%s234 + $0x1678] sm:$0xff] %v1989
        %3014 = vst [vmem:[%s234 + $0x1680] sm:$0xff] %v1990
        %3015 = vst [vmem:[%s234 + $0x1688] sm:$0xff] %v1991
        %3016 = vst [vmem:[%s234 + $0x1690] sm:$0xff] %v1992
        %3017 = vst [vmem:[%s234 + $0x1698] sm:$0xff] %v1993
        %3018 = vst [vmem:[%s234 + $0x16a0] sm:$0xff] %v1994
        %3019 = vst [vmem:[%s234 + $0x16a8] sm:$0xff] %v1995
        %3020 = vst [vmem:[%s234 + $0x16b0] sm:$0xff] %v1996
        %3021 = vst [vmem:[%s234 + $0x16b8] sm:$0xff] %v1997
        %3022 = vst [vmem:[%s234 + $0x16c0] sm:$0xff] %v1998
        %3023 = vst [vmem:[%s234 + $0x16c8] sm:$0xff] %v1999
        %3024 = vst [vmem:[%s234 + $0x16d0] sm:$0xff] %v2000
        %3025 = vst [vmem:[%s234 + $0x16d8] sm:$0xff] %v2001
        %3026 = vst [vmem:[%s234 + $0x16e0] sm:$0xff] %v2002
        %3027 = vst [vmem:[%s234 + $0x16e8] sm:$0xff] %v2003
        %3028 = vst [vmem:[%s234 + $0x16f0] sm:$0xff] %v2004
        %3029 = vst [vmem:[%s234 + $0x16f8] sm:$0xff] %v2005
        %3030 = vst [vmem:[%s234 + $0x1700] sm:$0xff] %v2006
        %3031 = vst [vmem:[%s234 + $0x1708] sm:$0xff] %v2007
        %3032 = vst [vmem:[%s234 + $0x1710] sm:$0xff] %v2008
        %3033 = vst [vmem:[%s234 + $0x1718] sm:$0xff] %v2009
        %3034 = vst [vmem:[%s234 + $0x1720] sm:$0xff] %v2010
        %3035 = vst [vmem:[%s234 + $0x1728] sm:$0xff] %v2011
        %3036 = vst [vmem:[%s234 + $0x1730] sm:$0xff] %v2012
        %3037 = vst [vmem:[%s234 + $0x1738] sm:$0xff] %v2013
        %3038 = vst [vmem:[%s234 + $0x1740] sm:$0xff] %v2014
        %3039 = vst [vmem:[%s234 + $0x1748] sm:$0xff] %v2015
        %3040 = vst [vmem:[%s234 + $0x1750] sm:$0xff] %v2016
        %3041 = vst [vmem:[%s234 + $0x1758] sm:$0xff] %v2017
        %3042 = vst [vmem:[%s234 + $0x1760] sm:$0xff] %v2018
        %3043 = vst [vmem:[%s234 + $0x1768] sm:$0xff] %v2019
        %3044 = vst [vmem:[%s234 + $0x1770] sm:$0xff] %v2020
        %3045 = vst [vmem:[%s234 + $0x1778] sm:$0xff] %v2021
        %3046 = vst [vmem:[%s234 + $0x1780] sm:$0xff] %v2022
        %3047 = vst [vmem:[%s234 + $0x1788] sm:$0xff] %v2023
        %3048 = vst [vmem:[%s234 + $0x1790] sm:$0xff] %v2024
        %3049 = vst [vmem:[%s234 + $0x1798] sm:$0xff] %v2025
        %3050 = vst [vmem:[%s234 + $0x17a0] sm:$0xff] %v2026
        %3051 = vst [vmem:[%s234 + $0x17a8] sm:$0xff] %v2027
        %3052 = vst [vmem:[%s234 + $0x17b0] sm:$0xff] %v2028
        %3053 = vst [vmem:[%s234 + $0x17b8] sm:$0xff] %v2029
        %3054 = vst [vmem:[%s234 + $0x17c0] sm:$0xff] %v2030
        %3055 = vst [vmem:[%s234 + $0x17c8] sm:$0xff] %v2031
        %3056 = vst [vmem:[%s234 + $0x17d0] sm:$0xff] %v2032
        %3057 = vst [vmem:[%s234 + $0x17d8] sm:$0xff] %v2033
        %3058 = vst [vmem:[%s234 + $0x17e0] sm:$0xff] %v2034
        %3059 = vst [vmem:[%s234 + $0x17e8] sm:$0xff] %v2035
        %3060 = vst [vmem:[%s234 + $0x17f0] sm:$0xff] %v2036
        %3061 = vst [vmem:[%s234 + $0x17f8] sm:$0xff] %v2037
        %3062 = vst [vmem:[%s234 + $0x1800] sm:$0xff] %v2038
        %3063 = vst [vmem:[%s234 + $0x1808] sm:$0xff] %v2039
        %3064 = vst [vmem:[%s234 + $0x1810] sm:$0xff] %v2040
        %3065 = vst [vmem:[%s234 + $0x1818] sm:$0xff] %v2041
        %3066 = vst [vmem:[%s234 + $0x1820] sm:$0xff] %v2042
        %3067 = vst [vmem:[%s234 + $0x1828] sm:$0xff] %v2043
        %3068 = vst [vmem:[%s234 + $0x1830] sm:$0xff] %v2044
        %3069 = vst [vmem:[%s234 + $0x1838] sm:$0xff] %v2045
        %3070 = vst [vmem:[%s234 + $0x1840] sm:$0xff] %v2046
        %3071 = vst [vmem:[%s234 + $0x1848] sm:$0xff] %v2047
        %3072 = vst [vmem:[%s234 + $0x1850] sm:$0xff] %v2048
        %3073 = vst [vmem:[%s234 + $0x1858] sm:$0xff] %v2049
        %3074 = vst [vmem:[%s234 + $0x1860] sm:$0xff] %v2050
        %3075 = vst [vmem:[%s234 + $0x1868] sm:$0xff] %v2051
        %3076 = vst [vmem:[%s234 + $0x1870] sm:$0xff] %v2052
        %3077 = vst [vmem:[%s234 + $0x1878] sm:$0xff] %v2053
        %3078 = vst [vmem:[%s234 + $0x1880] sm:$0xff] %v2054
        %3079 = vst [vmem:[%s234 + $0x1888] sm:$0xff] %v2055
        %3080 = vst [vmem:[%s234 + $0x1890] sm:$0xff] %v2056
        %3081 = vst [vmem:[%s234 + $0x1898] sm:$0xff] %v2057
        %3082 = vst [vmem:[%s234 + $0x18a0] sm:$0xff] %v2058
        %3083 = vst [vmem:[%s234 + $0x18a8] sm:$0xff] %v2059
        %3084 = vst [vmem:[%s234 + $0x18b0] sm:$0xff] %v2060
        %3085 = vst [vmem:[%s234 + $0x18b8] sm:$0xff] %v2061
        %3086 = vst [vmem:[%s234 + $0x18c0] sm:$0xff] %v2062
        %3087 = vst [vmem:[%s234 + $0x18c8] sm:$0xff] %v2063
        %3088 = vst [vmem:[%s234 + $0x18d0] sm:$0xff] %v2064
        %3089 = vst [vmem:[%s234 + $0x18d8] sm:$0xff] %v2065
        %3090 = vst [vmem:[%s234 + $0x18e0] sm:$0xff] %v2066
        %3091 = vst [vmem:[%s234 + $0x18e8] sm:$0xff] %v2067
        %3092 = vst [vmem:[%s234 + $0x18f0] sm:$0xff] %v2068
        %3093 = vst [vmem:[%s234 + $0x18f8] sm:$0xff] %v2069
        %3094 = vst [vmem:[%s234 + $0x1900] sm:$0xff] %v2070
        %3095 = vst [vmem:[%s234 + $0x1908] sm:$0xff] %v2071
        %3096 = vst [vmem:[%s234 + $0x1910] sm:$0xff] %v2072
        %3097 = vst [vmem:[%s234 + $0x1918] sm:$0xff] %v2073
        %3098 = vst [vmem:[%s234 + $0x1920] sm:$0xff] %v2074
        %3099 = vst [vmem:[%s234 + $0x1928] sm:$0xff] %v2075
        %3100 = vst [vmem:[%s234 + $0x1930] sm:$0xff] %v2076
        %3101 = vst [vmem:[%s234 + $0x1938] sm:$0xff] %v2077
        %3102 = vst [vmem:[%s234 + $0x1940] sm:$0xff] %v2078
        %3103 = vst [vmem:[%s234 + $0x1948] sm:$0xff] %v2079
        %3104 = vst [vmem:[%s234 + $0x1950] sm:$0xff] %v2080
        %3105 = vst [vmem:[%s234 + $0x1958] sm:$0xff] %v2081
        %3106 = vst [vmem:[%s234 + $0x1960] sm:$0xff] %v2082
        %3107 = vst [vmem:[%s234 + $0x1968] sm:$0xff] %v2083
        %3108 = vst [vmem:[%s234 + $0x1970] sm:$0xff] %v2084
        %3109 = vst [vmem:[%s234 + $0x1978] sm:$0xff] %v2085
        %3110 = vst [vmem:[%s234 + $0x1980] sm:$0xff] %v2086
        %3111 = vst [vmem:[%s234 + $0x1988] sm:$0xff] %v2087
        %3112 = vst [vmem:[%s234 + $0x1990] sm:$0xff] %v2088
        %3113 = vst [vmem:[%s234 + $0x1998] sm:$0xff] %v2089
        %3114 = vst [vmem:[%s234 + $0x19a0] sm:$0xff] %v2090
        %3115 = vst [vmem:[%s234 + $0x19a8] sm:$0xff] %v2091
        %3116 = vst [vmem:[%s234 + $0x19b0] sm:$0xff] %v2092
        %3117 = vst [vmem:[%s234 + $0x19b8] sm:$0xff] %v2093
        %3118 = vst [vmem:[%s234 + $0x19c0] sm:$0xff] %v2094
        %3119 = vst [vmem:[%s234 + $0x19c8] sm:$0xff] %v2095
        %3120 = vst [vmem:[%s234 + $0x19d0] sm:$0xff] %v2096
        %3121 = vst [vmem:[%s234 + $0x19d8] sm:$0xff] %v2097
        %3122 = vst [vmem:[%s234 + $0x19e0] sm:$0xff] %v2098
        %3123 = vst [vmem:[%s234 + $0x19e8] sm:$0xff] %v2099
        %3124 = vst [vmem:[%s234 + $0x19f0] sm:$0xff] %v2100
        %3125 = vst [vmem:[%s234 + $0x19f8] sm:$0xff] %v2101
        %3126 = vst [vmem:[%s234 + $0x1a00] sm:$0xff] %v2102
        %3127 = vst [vmem:[%s234 + $0x1a08] sm:$0xff] %v2103
        %3128 = vst [vmem:[%s234 + $0x1a10] sm:$0xff] %v2104
        %3129 = vst [vmem:[%s234 + $0x1a18] sm:$0xff] %v2105
        %3130 = vst [vmem:[%s234 + $0x1a20] sm:$0xff] %v2106
        %3131 = vst [vmem:[%s234 + $0x1a28] sm:$0xff] %v2107
        %3132 = vst [vmem:[%s234 + $0x1a30] sm:$0xff] %v2108
        %3133 = vst [vmem:[%s234 + $0x1a38] sm:$0xff] %v2109
        %3134 = vst [vmem:[%s234 + $0x1a40] sm:$0xff] %v2110
        %3135 = vst [vmem:[%s234 + $0x1a48] sm:$0xff] %v2111
        %3136 = vst [vmem:[%s234 + $0x1a50] sm:$0xff] %v2112
        %3137 = vst [vmem:[%s234 + $0x1a58] sm:$0xff] %v2113
        %3138 = vst [vmem:[%s234 + $0x1a60] sm:$0xff] %v2114
        %3139 = vst [vmem:[%s234 + $0x1a68] sm:$0xff] %v2115
        %3140 = vst [vmem:[%s234 + $0x1a70] sm:$0xff] %v2116
        %3141 = vst [vmem:[%s234 + $0x1a78] sm:$0xff] %v2117
        %3142 = vst [vmem:[%s234 + $0x1a80] sm:$0xff] %v2118
        %3143 = vst [vmem:[%s234 + $0x1a88] sm:$0xff] %v2119
        %3144 = vst [vmem:[%s234 + $0x1a90] sm:$0xff] %v2120
        %3145 = vst [vmem:[%s234 + $0x1a98] sm:$0xff] %v2121
        %3146 = vst [vmem:[%s234 + $0x1aa0] sm:$0xff] %v2122
        %3147 = vst [vmem:[%s234 + $0x1aa8] sm:$0xff] %v2123
        %3148 = vst [vmem:[%s234 + $0x1ab0] sm:$0xff] %v2124
        %3149 = vst [vmem:[%s234 + $0x1ab8] sm:$0xff] %v2125
        %3150 = vst [vmem:[%s234 + $0x1ac0] sm:$0xff] %v2126
        %3151 = vst [vmem:[%s234 + $0x1ac8] sm:$0xff] %v2127
        %3152 = vst [vmem:[%s234 + $0x1ad0] sm:$0xff] %v2128
        %3153 = vst [vmem:[%s234 + $0x1ad8] sm:$0xff] %v2129
        %3154 = vst [vmem:[%s234 + $0x1ae0] sm:$0xff] %v2130
        %3155 = vst [vmem:[%s234 + $0x1ae8] sm:$0xff] %v2131
        %3156 = vst [vmem:[%s234 + $0x1af0] sm:$0xff] %v2132
        %3157 = vst [vmem:[%s234 + $0x1af8] sm:$0xff] %v2133
        %3158 = vst [vmem:[%s234 + $0x1b00] sm:$0xff] %v2134
        %3159 = vst [vmem:[%s234 + $0x1b08] sm:$0xff] %v2135
        %3160 = vst [vmem:[%s234 + $0x1b10] sm:$0xff] %v2136
        %3161 = vst [vmem:[%s234 + $0x1b18] sm:$0xff] %v2137
        %3162 = vst [vmem:[%s234 + $0x1b20] sm:$0xff] %v2138
        %3163 = vst [vmem:[%s234 + $0x1b28] sm:$0xff] %v2139
        %3164 = vst [vmem:[%s234 + $0x1b30] sm:$0xff] %v2140
        %3165 = vst [vmem:[%s234 + $0x1b38] sm:$0xff] %v2141
        %3166 = vst [vmem:[%s234 + $0x1b40] sm:$0xff] %v2142
        %3167 = vst [vmem:[%s234 + $0x1b48] sm:$0xff] %v2143
        %3168 = vst [vmem:[%s234 + $0x1b50] sm:$0xff] %v2144
        %3169 = vst [vmem:[%s234 + $0x1b58] sm:$0xff] %v2145
        %3170 = vst [vmem:[%s234 + $0x1b60] sm:$0xff] %v2146
        %3171 = vst [vmem:[%s234 + $0x1b68] sm:$0xff] %v2147
        %3172 = vst [vmem:[%s234 + $0x1b70] sm:$0xff] %v2148
        %3173 = vst [vmem:[%s234 + $0x1b78] sm:$0xff] %v2149
        %3174 = vst [vmem:[%s234 + $0x1b80] sm:$0xff] %v2150
        %3175 = vst [vmem:[%s234 + $0x1b88] sm:$0xff] %v2151
        %3176 = vst [vmem:[%s234 + $0x1b90] sm:$0xff] %v2152
        %3177 = vst [vmem:[%s234 + $0x1b98] sm:$0xff] %v2153
        %3178 = vst [vmem:[%s234 + $0x1ba0] sm:$0xff] %v2154
        %3179 = vst [vmem:[%s234 + $0x1ba8] sm:$0xff] %v2155
        %3180 = vst [vmem:[%s234 + $0x1bb0] sm:$0xff] %v2156
        %3181 = vst [vmem:[%s234 + $0x1bb8] sm:$0xff] %v2157
        %3182 = vst [vmem:[%s234 + $0x1bc0] sm:$0xff] %v2158
        %3183 = vst [vmem:[%s234 + $0x1bc8] sm:$0xff] %v2159
        %3184 = vst [vmem:[%s234 + $0x1bd0] sm:$0xff] %v2160
        %3185 = vst [vmem:[%s234 + $0x1bd8] sm:$0xff] %v2161
        %3186 = vst [vmem:[%s234 + $0x1be0] sm:$0xff] %v2162
        %3187 = vst [vmem:[%s234 + $0x1be8] sm:$0xff] %v2163
        %3188 = vst [vmem:[%s234 + $0x1bf0] sm:$0xff] %v2164
        %3189 = vst [vmem:[%s234 + $0x1bf8] sm:$0xff] %v2165
        %3190 = vst [vmem:[%s234 + $0x1c00] sm:$0xff] %v2166
        %3191 = vst [vmem:[%s234 + $0x1c08] sm:$0xff] %v2167
        %3192 = vst [vmem:[%s234 + $0x1c10] sm:$0xff] %v2168
        %3193 = vst [vmem:[%s234 + $0x1c18] sm:$0xff] %v2169
        %3194 = vst [vmem:[%s234 + $0x1c20] sm:$0xff] %v2170
        %3195 = vst [vmem:[%s234 + $0x1c28] sm:$0xff] %v2171
        %3196 = vst [vmem:[%s234 + $0x1c30] sm:$0xff] %v2172
        %3197 = vst [vmem:[%s234 + $0x1c38] sm:$0xff] %v2173
        %3198 = vst [vmem:[%s234 + $0x1c40] sm:$0xff] %v2174
        %3199 = vst [vmem:[%s234 + $0x1c48] sm:$0xff] %v2175
        %3200 = vst [vmem:[%s234 + $0x1c50] sm:$0xff] %v2176
        %3201 = vst [vmem:[%s234 + $0x1c58] sm:$0xff] %v2177
        %3202 = vst [vmem:[%s234 + $0x1c60] sm:$0xff] %v2178
        %3203 = vst [vmem:[%s234 + $0x1c68] sm:$0xff] %v2179
        %3204 = vst [vmem:[%s234 + $0x1c70] sm:$0xff] %v2180
        %3205 = vst [vmem:[%s234 + $0x1c78] sm:$0xff] %v2181
        %3206 = vst [vmem:[%s234 + $0x1c80] sm:$0xff] %v2182
        %3207 = vst [vmem:[%s234 + $0x1c88] sm:$0xff] %v2183
        %3208 = vst [vmem:[%s234 + $0x1c90] sm:$0xff] %v2184
        %3209 = vst [vmem:[%s234 + $0x1c98] sm:$0xff] %v2185
        %3210 = vst [vmem:[%s234 + $0x1ca0] sm:$0xff] %v2186
        %3211 = vst [vmem:[%s234 + $0x1ca8] sm:$0xff] %v2187
        %3212 = vst [vmem:[%s234 + $0x1cb0] sm:$0xff] %v2188
        %3213 = vst [vmem:[%s234 + $0x1cb8] sm:$0xff] %v2189
        %3214 = vst [vmem:[%s234 + $0x1cc0] sm:$0xff] %v2190
        %3215 = vst [vmem:[%s234 + $0x1cc8] sm:$0xff] %v2191
        %3216 = vst [vmem:[%s234 + $0x1cd0] sm:$0xff] %v2192
        %3217 = vst [vmem:[%s234 + $0x1cd8] sm:$0xff] %v2193
        %3218 = vst [vmem:[%s234 + $0x1ce0] sm:$0xff] %v2194
        %3219 = vst [vmem:[%s234 + $0x1ce8] sm:$0xff] %v2195
        %3220 = vst [vmem:[%s234 + $0x1cf0] sm:$0xff] %v2196
        %3221 = vst [vmem:[%s234 + $0x1cf8] sm:$0xff] %v2197
        %3222 = vst [vmem:[%s234 + $0x1d00] sm:$0xff] %v2198
        %3223 = vst [vmem:[%s234 + $0x1d08] sm:$0xff] %v2199
        %3224 = vst [vmem:[%s234 + $0x1d10] sm:$0xff] %v2200
        %3225 = vst [vmem:[%s234 + $0x1d18] sm:$0xff] %v2201
        %3226 = vst [vmem:[%s234 + $0x1d20] sm:$0xff] %v2202
        %3227 = vst [vmem:[%s234 + $0x1d28] sm:$0xff] %v2203
        %3228 = vst [vmem:[%s234 + $0x1d30] sm:$0xff] %v2204
        %3229 = vst [vmem:[%s234 + $0x1d38] sm:$0xff] %v2205
        %3230 = vst [vmem:[%s234 + $0x1d40] sm:$0xff] %v2206
        %3231 = vst [vmem:[%s234 + $0x1d48] sm:$0xff] %v2207
        %3232 = vst [vmem:[%s234 + $0x1d50] sm:$0xff] %v2208
        %3233 = vst [vmem:[%s234 + $0x1d58] sm:$0xff] %v2209
        %3234 = vst [vmem:[%s234 + $0x1d60] sm:$0xff] %v2210
        %3235 = vst [vmem:[%s234 + $0x1d68] sm:$0xff] %v2211
        %3236 = vst [vmem:[%s234 + $0x1d70] sm:$0xff] %v2212
        %3237 = vst [vmem:[%s234 + $0x1d78] sm:$0xff] %v2213
        %3238 = vst [vmem:[%s234 + $0x1d80] sm:$0xff] %v2214
        %3239 = vst [vmem:[%s234 + $0x1d88] sm:$0xff] %v2215
        %3240 = vst [vmem:[%s234 + $0x1d90] sm:$0xff] %v2216
        %3241 = vst [vmem:[%s234 + $0x1d98] sm:$0xff] %v2217
        %3242 = vst [vmem:[%s234 + $0x1da0] sm:$0xff] %v2218
        %3243 = vst [vmem:[%s234 + $0x1da8] sm:$0xff] %v2219
        %3244 = vst [vmem:[%s234 + $0x1db0] sm:$0xff] %v2220
        %3245 = vst [vmem:[%s234 + $0x1db8] sm:$0xff] %v2221
        %3246 = vst [vmem:[%s234 + $0x1dc0] sm:$0xff] %v2222
        %3247 = vst [vmem:[%s234 + $0x1dc8] sm:$0xff] %v2223
        %3248 = vst [vmem:[%s234 + $0x1dd0] sm:$0xff] %v2224
        %3249 = vst [vmem:[%s234 + $0x1dd8] sm:$0xff] %v2225
        %3250 = vst [vmem:[%s234 + $0x1de0] sm:$0xff] %v2226
        %3251 = vst [vmem:[%s234 + $0x1de8] sm:$0xff] %v2227
        %3252 = vst [vmem:[%s234 + $0x1df0] sm:$0xff] %v2228
        %3253 = vst [vmem:[%s234 + $0x1df8] sm:$0xff] %v2229
        %3254 = vst [vmem:[%s234 + $0x1e00] sm:$0xff] %v2230
        %3255 = vst [vmem:[%s234 + $0x1e08] sm:$0xff] %v2231
        %3256 = vst [vmem:[%s234 + $0x1e10] sm:$0xff] %v2232
        %3257 = vst [vmem:[%s234 + $0x1e18] sm:$0xff] %v2233
        %3258 = vst [vmem:[%s234 + $0x1e20] sm:$0xff] %v2234
        %3259 = vst [vmem:[%s234 + $0x1e28] sm:$0xff] %v2235
        %3260 = vst [vmem:[%s234 + $0x1e30] sm:$0xff] %v2236
        %3261 = vst [vmem:[%s234 + $0x1e38] sm:$0xff] %v2237
        %3262 = vst [vmem:[%s234 + $0x1e40] sm:$0xff] %v2238
        %3263 = vst [vmem:[%s234 + $0x1e48] sm:$0xff] %v2239
        %3264 = vst [vmem:[%s234 + $0x1e50] sm:$0xff] %v2240
        %3265 = vst [vmem:[%s234 + $0x1e58] sm:$0xff] %v2241
        %3266 = vst [vmem:[%s234 + $0x1e60] sm:$0xff] %v2242
        %3267 = vst [vmem:[%s234 + $0x1e68] sm:$0xff] %v2243
        %3268 = vst [vmem:[%s234 + $0x1e70] sm:$0xff] %v2244
        %3269 = vst [vmem:[%s234 + $0x1e78] sm:$0xff] %v2245
        %3270 = vst [vmem:[%s234 + $0x1e80] sm:$0xff] %v2246
        %3271 = vst [vmem:[%s234 + $0x1e88] sm:$0xff] %v2247
        %3272 = vst [vmem:[%s234 + $0x1e90] sm:$0xff] %v2248
        %3273 = vst [vmem:[%s234 + $0x1e98] sm:$0xff] %v2249
        %3274 = vst [vmem:[%s234 + $0x1ea0] sm:$0xff] %v2250
        %3275 = vst [vmem:[%s234 + $0x1ea8] sm:$0xff] %v2251
        %3276 = vst [vmem:[%s234 + $0x1eb0] sm:$0xff] %v2252
        %3277 = vst [vmem:[%s234 + $0x1eb8] sm:$0xff] %v2253
        %3278 = vst [vmem:[%s234 + $0x1ec0] sm:$0xff] %v2254
        %3279 = vst [vmem:[%s234 + $0x1ec8] sm:$0xff] %v2255
        %3280 = vst [vmem:[%s234 + $0x1ed0] sm:$0xff] %v2256
        %3281 = vst [vmem:[%s234 + $0x1ed8] sm:$0xff] %v2257
        %3282 = vst [vmem:[%s234 + $0x1ee0] sm:$0xff] %v2258
        %3283 = vst [vmem:[%s234 + $0x1ee8] sm:$0xff] %v2259
        %3284 = vst [vmem:[%s234 + $0x1ef0] sm:$0xff] %v2260
        %3285 = vst [vmem:[%s234 + $0x1ef8] sm:$0xff] %v2261
        %3286 = vst [vmem:[%s234 + $0x1f00] sm:$0xff] %v2262
        %3287 = vst [vmem:[%s234 + $0x1f08] sm:$0xff] %v2263
        %3288 = vst [vmem:[%s234 + $0x1f10] sm:$0xff] %v2264
        %3289 = vst [vmem:[%s234 + $0x1f18] sm:$0xff] %v2265
        %3290 = vst [vmem:[%s234 + $0x1f20] sm:$0xff] %v2266
        %3291 = vst [vmem:[%s234 + $0x1f28] sm:$0xff] %v2267
        %3292 = vst [vmem:[%s234 + $0x1f30] sm:$0xff] %v2268
        %3293 = vst [vmem:[%s234 + $0x1f38] sm:$0xff] %v2269
        %3294 = vst [vmem:[%s234 + $0x1f40] sm:$0xff] %v2270
        %3295 = vst [vmem:[%s234 + $0x1f48] sm:$0xff] %v2271
        %3296 = vst [vmem:[%s234 + $0x1f50] sm:$0xff] %v2272
        %3297 = vst [vmem:[%s234 + $0x1f58] sm:$0xff] %v2273
        %3298 = vst [vmem:[%s234 + $0x1f60] sm:$0xff] %v2274
        %3299 = vst [vmem:[%s234 + $0x1f68] sm:$0xff] %v2275
        %3300 = vst [vmem:[%s234 + $0x1f70] sm:$0xff] %v2276
        %3301 = vst [vmem:[%s234 + $0x1f78] sm:$0xff] %v2277
        %3302 = vst [vmem:[%s234 + $0x1f80] sm:$0xff] %v2278
        %3303 = vst [vmem:[%s234 + $0x1f88] sm:$0xff] %v2279
        %3304 = vst [vmem:[%s234 + $0x1f90] sm:$0xff] %v2280
        %3305 = vst [vmem:[%s234 + $0x1f98] sm:$0xff] %v2281
        %3306 = vst [vmem:[%s234 + $0x1fa0] sm:$0xff] %v2282
        %3307 = vst [vmem:[%s234 + $0x1fa8] sm:$0xff] %v2283
        %3308 = vst [vmem:[%s234 + $0x1fb0] sm:$0xff] %v2284
        %3309 = vst [vmem:[%s234 + $0x1fb8] sm:$0xff] %v2285
        %3310 = vst [vmem:[%s234 + $0x1fc0] sm:$0xff] %v2286
        %3311 = vst [vmem:[%s234 + $0x1fc8] sm:$0xff] %v2287
        %3312 = vst [vmem:[%s234 + $0x1fd0] sm:$0xff] %v2288
        %3313 = vst [vmem:[%s234 + $0x1fd8] sm:$0xff] %v2289
        %3314 = vst [vmem:[%s234 + $0x1fe0] sm:$0xff] %v2290
        %3315 = vst [vmem:[%s234 + $0x1fe8] sm:$0xff] %v2291
        %3316 = vst [vmem:[%s234 + $0x1ff0] sm:$0xff] %v2292
        %3317 = vst [vmem:[%s234 + $0x1ff8] sm:$0xff] %v2293
        %v3318 = vld [vmem:[%s209] sm:$0xff]
        %v3319 = vld [vmem:[%s209 + $0x8] sm:$0xff]
        %v3320 = vld [vmem:[%s209 + $0x10] sm:$0xff]
        %v3321 = vld [vmem:[%s209 + $0x18] sm:$0xff]
        %v3322 = vld [vmem:[%s209 + $0x20] sm:$0xff]
        %v3323 = vld [vmem:[%s209 + $0x28] sm:$0xff]
        %v3324 = vld [vmem:[%s209 + $0x30] sm:$0xff]
        %v3325 = vld [vmem:[%s209 + $0x38] sm:$0xff]
        %v3326 = vld [vmem:[%s209 + $0x40] sm:$0xff]
        %v3327 = vld [vmem:[%s209 + $0x48] sm:$0xff]
        %v3328 = vld [vmem:[%s209 + $0x50] sm:$0xff]
        %v3329 = vld [vmem:[%s209 + $0x58] sm:$0xff]
        %v3330 = vld [vmem:[%s209 + $0x60] sm:$0xff]
        %v3331 = vld [vmem:[%s209 + $0x68] sm:$0xff]
        %v3332 = vld [vmem:[%s209 + $0x70] sm:$0xff]
        %v3333 = vld [vmem:[%s209 + $0x78] sm:$0xff]
        %v3334 = vld [vmem:[%s209 + $0x80] sm:$0xff]
        %v3335 = vld [vmem:[%s209 + $0x88] sm:$0xff]
        %v3336 = vld [vmem:[%s209 + $0x90] sm:$0xff]
        %v3337 = vld [vmem:[%s209 + $0x98] sm:$0xff]
        %v3338 = vld [vmem:[%s209 + $0xa0] sm:$0xff]
        %v3339 = vld [vmem:[%s209 + $0xa8] sm:$0xff]
        %v3340 = vld [vmem:[%s209 + $0xb0] sm:$0xff]
        %v3341 = vld [vmem:[%s209 + $0xb8] sm:$0xff]
        %v3342 = vld [vmem:[%s209 + $0xc0] sm:$0xff]
        %v3343 = vld [vmem:[%s209 + $0xc8] sm:$0xff]
        %v3344 = vld [vmem:[%s209 + $0xd0] sm:$0xff]
        %v3345 = vld [vmem:[%s209 + $0xd8] sm:$0xff]
        %v3346 = vld [vmem:[%s209 + $0xe0] sm:$0xff]
        %v3347 = vld [vmem:[%s209 + $0xe8] sm:$0xff]
        %v3348 = vld [vmem:[%s209 + $0xf0] sm:$0xff]
        %v3349 = vld [vmem:[%s209 + $0xf8] sm:$0xff]
        %v3350 = vld [vmem:[%s209 + $0x100] sm:$0xff]
        %v3351 = vld [vmem:[%s209 + $0x108] sm:$0xff]
        %v3352 = vld [vmem:[%s209 + $0x110] sm:$0xff]
        %v3353 = vld [vmem:[%s209 + $0x118] sm:$0xff]
        %v3354 = vld [vmem:[%s209 + $0x120] sm:$0xff]
        %v3355 = vld [vmem:[%s209 + $0x128] sm:$0xff]
        %v3356 = vld [vmem:[%s209 + $0x130] sm:$0xff]
        %v3357 = vld [vmem:[%s209 + $0x138] sm:$0xff]
        %v3358 = vld [vmem:[%s209 + $0x140] sm:$0xff]
        %v3359 = vld [vmem:[%s209 + $0x148] sm:$0xff]
        %v3360 = vld [vmem:[%s209 + $0x150] sm:$0xff]
        %v3361 = vld [vmem:[%s209 + $0x158] sm:$0xff]
        %v3362 = vld [vmem:[%s209 + $0x160] sm:$0xff]
        %v3363 = vld [vmem:[%s209 + $0x168] sm:$0xff]
        %v3364 = vld [vmem:[%s209 + $0x170] sm:$0xff]
        %v3365 = vld [vmem:[%s209 + $0x178] sm:$0xff]
        %v3366 = vld [vmem:[%s209 + $0x180] sm:$0xff]
        %v3367 = vld [vmem:[%s209 + $0x188] sm:$0xff]
        %v3368 = vld [vmem:[%s209 + $0x190] sm:$0xff]
        %v3369 = vld [vmem:[%s209 + $0x198] sm:$0xff]
        %v3370 = vld [vmem:[%s209 + $0x1a0] sm:$0xff]
        %v3371 = vld [vmem:[%s209 + $0x1a8] sm:$0xff]
        %v3372 = vld [vmem:[%s209 + $0x1b0] sm:$0xff]
        %v3373 = vld [vmem:[%s209 + $0x1b8] sm:$0xff]
        %v3374 = vld [vmem:[%s209 + $0x1c0] sm:$0xff]
        %v3375 = vld [vmem:[%s209 + $0x1c8] sm:$0xff]
        %v3376 = vld [vmem:[%s209 + $0x1d0] sm:$0xff]
        %v3377 = vld [vmem:[%s209 + $0x1d8] sm:$0xff]
        %v3378 = vld [vmem:[%s209 + $0x1e0] sm:$0xff]
        %v3379 = vld [vmem:[%s209 + $0x1e8] sm:$0xff]
        %v3380 = vld [vmem:[%s209 + $0x1f0] sm:$0xff]
        %v3381 = vld [vmem:[%s209 + $0x1f8] sm:$0xff]
        %v3382 = vld [vmem:[%s209 + $0x200] sm:$0xff]
        %v3383 = vld [vmem:[%s209 + $0x208] sm:$0xff]
        %v3384 = vld [vmem:[%s209 + $0x210] sm:$0xff]
        %v3385 = vld [vmem:[%s209 + $0x218] sm:$0xff]
        %v3386 = vld [vmem:[%s209 + $0x220] sm:$0xff]
        %v3387 = vld [vmem:[%s209 + $0x228] sm:$0xff]
        %v3388 = vld [vmem:[%s209 + $0x230] sm:$0xff]
        %v3389 = vld [vmem:[%s209 + $0x238] sm:$0xff]
        %v3390 = vld [vmem:[%s209 + $0x240] sm:$0xff]
        %v3391 = vld [vmem:[%s209 + $0x248] sm:$0xff]
        %v3392 = vld [vmem:[%s209 + $0x250] sm:$0xff]
        %v3393 = vld [vmem:[%s209 + $0x258] sm:$0xff]
        %v3394 = vld [vmem:[%s209 + $0x260] sm:$0xff]
        %v3395 = vld [vmem:[%s209 + $0x268] sm:$0xff]
        %v3396 = vld [vmem:[%s209 + $0x270] sm:$0xff]
        %v3397 = vld [vmem:[%s209 + $0x278] sm:$0xff]
        %v3398 = vld [vmem:[%s209 + $0x280] sm:$0xff]
        %v3399 = vld [vmem:[%s209 + $0x288] sm:$0xff]
        %v3400 = vld [vmem:[%s209 + $0x290] sm:$0xff]
        %v3401 = vld [vmem:[%s209 + $0x298] sm:$0xff]
        %v3402 = vld [vmem:[%s209 + $0x2a0] sm:$0xff]
        %v3403 = vld [vmem:[%s209 + $0x2a8] sm:$0xff]
        %v3404 = vld [vmem:[%s209 + $0x2b0] sm:$0xff]
        %v3405 = vld [vmem:[%s209 + $0x2b8] sm:$0xff]
        %v3406 = vld [vmem:[%s209 + $0x2c0] sm:$0xff]
        %v3407 = vld [vmem:[%s209 + $0x2c8] sm:$0xff]
        %v3408 = vld [vmem:[%s209 + $0x2d0] sm:$0xff]
        %v3409 = vld [vmem:[%s209 + $0x2d8] sm:$0xff]
        %v3410 = vld [vmem:[%s209 + $0x2e0] sm:$0xff]
        %v3411 = vld [vmem:[%s209 + $0x2e8] sm:$0xff]
        %v3412 = vld [vmem:[%s209 + $0x2f0] sm:$0xff]
        %v3413 = vld [vmem:[%s209 + $0x2f8] sm:$0xff]
        %v3414 = vld [vmem:[%s209 + $0x300] sm:$0xff]
        %v3415 = vld [vmem:[%s209 + $0x308] sm:$0xff]
        %v3416 = vld [vmem:[%s209 + $0x310] sm:$0xff]
        %v3417 = vld [vmem:[%s209 + $0x318] sm:$0xff]
        %v3418 = vld [vmem:[%s209 + $0x320] sm:$0xff]
        %v3419 = vld [vmem:[%s209 + $0x328] sm:$0xff]
        %v3420 = vld [vmem:[%s209 + $0x330] sm:$0xff]
        %v3421 = vld [vmem:[%s209 + $0x338] sm:$0xff]
        %v3422 = vld [vmem:[%s209 + $0x340] sm:$0xff]
        %v3423 = vld [vmem:[%s209 + $0x348] sm:$0xff]
        %v3424 = vld [vmem:[%s209 + $0x350] sm:$0xff]
        %v3425 = vld [vmem:[%s209 + $0x358] sm:$0xff]
        %v3426 = vld [vmem:[%s209 + $0x360] sm:$0xff]
        %v3427 = vld [vmem:[%s209 + $0x368] sm:$0xff]
        %v3428 = vld [vmem:[%s209 + $0x370] sm:$0xff]
        %v3429 = vld [vmem:[%s209 + $0x378] sm:$0xff]
        %v3430 = vld [vmem:[%s209 + $0x380] sm:$0xff]
        %v3431 = vld [vmem:[%s209 + $0x388] sm:$0xff]
        %v3432 = vld [vmem:[%s209 + $0x390] sm:$0xff]
        %v3433 = vld [vmem:[%s209 + $0x398] sm:$0xff]
        %v3434 = vld [vmem:[%s209 + $0x3a0] sm:$0xff]
        %v3435 = vld [vmem:[%s209 + $0x3a8] sm:$0xff]
        %v3436 = vld [vmem:[%s209 + $0x3b0] sm:$0xff]
        %v3437 = vld [vmem:[%s209 + $0x3b8] sm:$0xff]
        %v3438 = vld [vmem:[%s209 + $0x3c0] sm:$0xff]
        %v3439 = vld [vmem:[%s209 + $0x3c8] sm:$0xff]
        %v3440 = vld [vmem:[%s209 + $0x3d0] sm:$0xff]
        %v3441 = vld [vmem:[%s209 + $0x3d8] sm:$0xff]
        %v3442 = vld [vmem:[%s209 + $0x3e0] sm:$0xff]
        %v3443 = vld [vmem:[%s209 + $0x3e8] sm:$0xff]
        %v3444 = vld [vmem:[%s209 + $0x3f0] sm:$0xff]
        %v3445 = vld [vmem:[%s209 + $0x3f8] sm:$0xff]
        %v3446 = vld [vmem:[%s209 + $0x400] sm:$0xff]
        %v3447 = vld [vmem:[%s209 + $0x408] sm:$0xff]
        %v3448 = vld [vmem:[%s209 + $0x410] sm:$0xff]
        %v3449 = vld [vmem:[%s209 + $0x418] sm:$0xff]
        %v3450 = vld [vmem:[%s209 + $0x420] sm:$0xff]
        %v3451 = vld [vmem:[%s209 + $0x428] sm:$0xff]
        %v3452 = vld [vmem:[%s209 + $0x430] sm:$0xff]
        %v3453 = vld [vmem:[%s209 + $0x438] sm:$0xff]
        %v3454 = vld [vmem:[%s209 + $0x440] sm:$0xff]
        %v3455 = vld [vmem:[%s209 + $0x448] sm:$0xff]
        %v3456 = vld [vmem:[%s209 + $0x450] sm:$0xff]
        %v3457 = vld [vmem:[%s209 + $0x458] sm:$0xff]
        %v3458 = vld [vmem:[%s209 + $0x460] sm:$0xff]
        %v3459 = vld [vmem:[%s209 + $0x468] sm:$0xff]
        %v3460 = vld [vmem:[%s209 + $0x470] sm:$0xff]
        %v3461 = vld [vmem:[%s209 + $0x478] sm:$0xff]
        %v3462 = vld [vmem:[%s209 + $0x480] sm:$0xff]
        %v3463 = vld [vmem:[%s209 + $0x488] sm:$0xff]
        %v3464 = vld [vmem:[%s209 + $0x490] sm:$0xff]
        %v3465 = vld [vmem:[%s209 + $0x498] sm:$0xff]
        %v3466 = vld [vmem:[%s209 + $0x4a0] sm:$0xff]
        %v3467 = vld [vmem:[%s209 + $0x4a8] sm:$0xff]
        %v3468 = vld [vmem:[%s209 + $0x4b0] sm:$0xff]
        %v3469 = vld [vmem:[%s209 + $0x4b8] sm:$0xff]
        %v3470 = vld [vmem:[%s209 + $0x4c0] sm:$0xff]
        %v3471 = vld [vmem:[%s209 + $0x4c8] sm:$0xff]
        %v3472 = vld [vmem:[%s209 + $0x4d0] sm:$0xff]
        %v3473 = vld [vmem:[%s209 + $0x4d8] sm:$0xff]
        %v3474 = vld [vmem:[%s209 + $0x4e0] sm:$0xff]
        %v3475 = vld [vmem:[%s209 + $0x4e8] sm:$0xff]
        %v3476 = vld [vmem:[%s209 + $0x4f0] sm:$0xff]
        %v3477 = vld [vmem:[%s209 + $0x4f8] sm:$0xff]
        %v3478 = vld [vmem:[%s209 + $0x500] sm:$0xff]
        %v3479 = vld [vmem:[%s209 + $0x508] sm:$0xff]
        %v3480 = vld [vmem:[%s209 + $0x510] sm:$0xff]
        %v3481 = vld [vmem:[%s209 + $0x518] sm:$0xff]
        %v3482 = vld [vmem:[%s209 + $0x520] sm:$0xff]
        %v3483 = vld [vmem:[%s209 + $0x528] sm:$0xff]
        %v3484 = vld [vmem:[%s209 + $0x530] sm:$0xff]
        %v3485 = vld [vmem:[%s209 + $0x538] sm:$0xff]
        %v3486 = vld [vmem:[%s209 + $0x540] sm:$0xff]
        %v3487 = vld [vmem:[%s209 + $0x548] sm:$0xff]
        %v3488 = vld [vmem:[%s209 + $0x550] sm:$0xff]
        %v3489 = vld [vmem:[%s209 + $0x558] sm:$0xff]
        %v3490 = vld [vmem:[%s209 + $0x560] sm:$0xff]
        %v3491 = vld [vmem:[%s209 + $0x568] sm:$0xff]
        %v3492 = vld [vmem:[%s209 + $0x570] sm:$0xff]
        %v3493 = vld [vmem:[%s209 + $0x578] sm:$0xff]
        %v3494 = vld [vmem:[%s209 + $0x580] sm:$0xff]
        %v3495 = vld [vmem:[%s209 + $0x588] sm:$0xff]
        %v3496 = vld [vmem:[%s209 + $0x590] sm:$0xff]
        %v3497 = vld [vmem:[%s209 + $0x598] sm:$0xff]
        %v3498 = vld [vmem:[%s209 + $0x5a0] sm:$0xff]
        %v3499 = vld [vmem:[%s209 + $0x5a8] sm:$0xff]
        %v3500 = vld [vmem:[%s209 + $0x5b0] sm:$0xff]
        %v3501 = vld [vmem:[%s209 + $0x5b8] sm:$0xff]
        %v3502 = vld [vmem:[%s209 + $0x5c0] sm:$0xff]
        %v3503 = vld [vmem:[%s209 + $0x5c8] sm:$0xff]
        %v3504 = vld [vmem:[%s209 + $0x5d0] sm:$0xff]
        %v3505 = vld [vmem:[%s209 + $0x5d8] sm:$0xff]
        %v3506 = vld [vmem:[%s209 + $0x5e0] sm:$0xff]
        %v3507 = vld [vmem:[%s209 + $0x5e8] sm:$0xff]
        %v3508 = vld [vmem:[%s209 + $0x5f0] sm:$0xff]
        %v3509 = vld [vmem:[%s209 + $0x5f8] sm:$0xff]
        %v3510 = vld [vmem:[%s209 + $0x600] sm:$0xff]
        %v3511 = vld [vmem:[%s209 + $0x608] sm:$0xff]
        %v3512 = vld [vmem:[%s209 + $0x610] sm:$0xff]
        %v3513 = vld [vmem:[%s209 + $0x618] sm:$0xff]
        %v3514 = vld [vmem:[%s209 + $0x620] sm:$0xff]
        %v3515 = vld [vmem:[%s209 + $0x628] sm:$0xff]
        %v3516 = vld [vmem:[%s209 + $0x630] sm:$0xff]
        %v3517 = vld [vmem:[%s209 + $0x638] sm:$0xff]
        %v3518 = vld [vmem:[%s209 + $0x640] sm:$0xff]
        %v3519 = vld [vmem:[%s209 + $0x648] sm:$0xff]
        %v3520 = vld [vmem:[%s209 + $0x650] sm:$0xff]
        %v3521 = vld [vmem:[%s209 + $0x658] sm:$0xff]
        %v3522 = vld [vmem:[%s209 + $0x660] sm:$0xff]
        %v3523 = vld [vmem:[%s209 + $0x668] sm:$0xff]
        %v3524 = vld [vmem:[%s209 + $0x670] sm:$0xff]
        %v3525 = vld [vmem:[%s209 + $0x678] sm:$0xff]
        %v3526 = vld [vmem:[%s209 + $0x680] sm:$0xff]
        %v3527 = vld [vmem:[%s209 + $0x688] sm:$0xff]
        %v3528 = vld [vmem:[%s209 + $0x690] sm:$0xff]
        %v3529 = vld [vmem:[%s209 + $0x698] sm:$0xff]
        %v3530 = vld [vmem:[%s209 + $0x6a0] sm:$0xff]
        %v3531 = vld [vmem:[%s209 + $0x6a8] sm:$0xff]
        %v3532 = vld [vmem:[%s209 + $0x6b0] sm:$0xff]
        %v3533 = vld [vmem:[%s209 + $0x6b8] sm:$0xff]
        %v3534 = vld [vmem:[%s209 + $0x6c0] sm:$0xff]
        %v3535 = vld [vmem:[%s209 + $0x6c8] sm:$0xff]
        %v3536 = vld [vmem:[%s209 + $0x6d0] sm:$0xff]
        %v3537 = vld [vmem:[%s209 + $0x6d8] sm:$0xff]
        %v3538 = vld [vmem:[%s209 + $0x6e0] sm:$0xff]
        %v3539 = vld [vmem:[%s209 + $0x6e8] sm:$0xff]
        %v3540 = vld [vmem:[%s209 + $0x6f0] sm:$0xff]
        %v3541 = vld [vmem:[%s209 + $0x6f8] sm:$0xff]
        %v3542 = vld [vmem:[%s209 + $0x700] sm:$0xff]
        %v3543 = vld [vmem:[%s209 + $0x708] sm:$0xff]
        %v3544 = vld [vmem:[%s209 + $0x710] sm:$0xff]
        %v3545 = vld [vmem:[%s209 + $0x718] sm:$0xff]
        %v3546 = vld [vmem:[%s209 + $0x720] sm:$0xff]
        %v3547 = vld [vmem:[%s209 + $0x728] sm:$0xff]
        %v3548 = vld [vmem:[%s209 + $0x730] sm:$0xff]
        %v3549 = vld [vmem:[%s209 + $0x738] sm:$0xff]
        %v3550 = vld [vmem:[%s209 + $0x740] sm:$0xff]
        %v3551 = vld [vmem:[%s209 + $0x748] sm:$0xff]
        %v3552 = vld [vmem:[%s209 + $0x750] sm:$0xff]
        %v3553 = vld [vmem:[%s209 + $0x758] sm:$0xff]
        %v3554 = vld [vmem:[%s209 + $0x760] sm:$0xff]
        %v3555 = vld [vmem:[%s209 + $0x768] sm:$0xff]
        %v3556 = vld [vmem:[%s209 + $0x770] sm:$0xff]
        %v3557 = vld [vmem:[%s209 + $0x778] sm:$0xff]
        %v3558 = vld [vmem:[%s209 + $0x780] sm:$0xff]
        %v3559 = vld [vmem:[%s209 + $0x788] sm:$0xff]
        %v3560 = vld [vmem:[%s209 + $0x790] sm:$0xff]
        %v3561 = vld [vmem:[%s209 + $0x798] sm:$0xff]
        %v3562 = vld [vmem:[%s209 + $0x7a0] sm:$0xff]
        %v3563 = vld [vmem:[%s209 + $0x7a8] sm:$0xff]
        %v3564 = vld [vmem:[%s209 + $0x7b0] sm:$0xff]
        %v3565 = vld [vmem:[%s209 + $0x7b8] sm:$0xff]
        %v3566 = vld [vmem:[%s209 + $0x7c0] sm:$0xff]
        %v3567 = vld [vmem:[%s209 + $0x7c8] sm:$0xff]
        %v3568 = vld [vmem:[%s209 + $0x7d0] sm:$0xff]
        %v3569 = vld [vmem:[%s209 + $0x7d8] sm:$0xff]
        %v3570 = vld [vmem:[%s209 + $0x7e0] sm:$0xff]
        %v3571 = vld [vmem:[%s209 + $0x7e8] sm:$0xff]
        %v3572 = vld [vmem:[%s209 + $0x7f0] sm:$0xff]
        %v3573 = vld [vmem:[%s209 + $0x7f8] sm:$0xff]
        %v3574 = vld [vmem:[%s209 + $0x800] sm:$0xff]
        %v3575 = vld [vmem:[%s209 + $0x808] sm:$0xff]
        %v3576 = vld [vmem:[%s209 + $0x810] sm:$0xff]
        %v3577 = vld [vmem:[%s209 + $0x818] sm:$0xff]
        %v3578 = vld [vmem:[%s209 + $0x820] sm:$0xff]
        %v3579 = vld [vmem:[%s209 + $0x828] sm:$0xff]
        %v3580 = vld [vmem:[%s209 + $0x830] sm:$0xff]
        %v3581 = vld [vmem:[%s209 + $0x838] sm:$0xff]
        %v3582 = vld [vmem:[%s209 + $0x840] sm:$0xff]
        %v3583 = vld [vmem:[%s209 + $0x848] sm:$0xff]
        %v3584 = vld [vmem:[%s209 + $0x850] sm:$0xff]
        %v3585 = vld [vmem:[%s209 + $0x858] sm:$0xff]
        %v3586 = vld [vmem:[%s209 + $0x860] sm:$0xff]
        %v3587 = vld [vmem:[%s209 + $0x868] sm:$0xff]
        %v3588 = vld [vmem:[%s209 + $0x870] sm:$0xff]
        %v3589 = vld [vmem:[%s209 + $0x878] sm:$0xff]
        %v3590 = vld [vmem:[%s209 + $0x880] sm:$0xff]
        %v3591 = vld [vmem:[%s209 + $0x888] sm:$0xff]
        %v3592 = vld [vmem:[%s209 + $0x890] sm:$0xff]
        %v3593 = vld [vmem:[%s209 + $0x898] sm:$0xff]
        %v3594 = vld [vmem:[%s209 + $0x8a0] sm:$0xff]
        %v3595 = vld [vmem:[%s209 + $0x8a8] sm:$0xff]
        %v3596 = vld [vmem:[%s209 + $0x8b0] sm:$0xff]
        %v3597 = vld [vmem:[%s209 + $0x8b8] sm:$0xff]
        %v3598 = vld [vmem:[%s209 + $0x8c0] sm:$0xff]
        %v3599 = vld [vmem:[%s209 + $0x8c8] sm:$0xff]
        %v3600 = vld [vmem:[%s209 + $0x8d0] sm:$0xff]
        %v3601 = vld [vmem:[%s209 + $0x8d8] sm:$0xff]
        %v3602 = vld [vmem:[%s209 + $0x8e0] sm:$0xff]
        %v3603 = vld [vmem:[%s209 + $0x8e8] sm:$0xff]
        %v3604 = vld [vmem:[%s209 + $0x8f0] sm:$0xff]
        %v3605 = vld [vmem:[%s209 + $0x8f8] sm:$0xff]
        %v3606 = vld [vmem:[%s209 + $0x900] sm:$0xff]
        %v3607 = vld [vmem:[%s209 + $0x908] sm:$0xff]
        %v3608 = vld [vmem:[%s209 + $0x910] sm:$0xff]
        %v3609 = vld [vmem:[%s209 + $0x918] sm:$0xff]
        %v3610 = vld [vmem:[%s209 + $0x920] sm:$0xff]
        %v3611 = vld [vmem:[%s209 + $0x928] sm:$0xff]
        %v3612 = vld [vmem:[%s209 + $0x930] sm:$0xff]
        %v3613 = vld [vmem:[%s209 + $0x938] sm:$0xff]
        %v3614 = vld [vmem:[%s209 + $0x940] sm:$0xff]
        %v3615 = vld [vmem:[%s209 + $0x948] sm:$0xff]
        %v3616 = vld [vmem:[%s209 + $0x950] sm:$0xff]
        %v3617 = vld [vmem:[%s209 + $0x958] sm:$0xff]
        %v3618 = vld [vmem:[%s209 + $0x960] sm:$0xff]
        %v3619 = vld [vmem:[%s209 + $0x968] sm:$0xff]
        %v3620 = vld [vmem:[%s209 + $0x970] sm:$0xff]
        %v3621 = vld [vmem:[%s209 + $0x978] sm:$0xff]
        %v3622 = vld [vmem:[%s209 + $0x980] sm:$0xff]
        %v3623 = vld [vmem:[%s209 + $0x988] sm:$0xff]
        %v3624 = vld [vmem:[%s209 + $0x990] sm:$0xff]
        %v3625 = vld [vmem:[%s209 + $0x998] sm:$0xff]
        %v3626 = vld [vmem:[%s209 + $0x9a0] sm:$0xff]
        %v3627 = vld [vmem:[%s209 + $0x9a8] sm:$0xff]
        %v3628 = vld [vmem:[%s209 + $0x9b0] sm:$0xff]
        %v3629 = vld [vmem:[%s209 + $0x9b8] sm:$0xff]
        %v3630 = vld [vmem:[%s209 + $0x9c0] sm:$0xff]
        %v3631 = vld [vmem:[%s209 + $0x9c8] sm:$0xff]
        %v3632 = vld [vmem:[%s209 + $0x9d0] sm:$0xff]
        %v3633 = vld [vmem:[%s209 + $0x9d8] sm:$0xff]
        %v3634 = vld [vmem:[%s209 + $0x9e0] sm:$0xff]
        %v3635 = vld [vmem:[%s209 + $0x9e8] sm:$0xff]
        %v3636 = vld [vmem:[%s209 + $0x9f0] sm:$0xff]
        %v3637 = vld [vmem:[%s209 + $0x9f8] sm:$0xff]
        %v3638 = vld [vmem:[%s209 + $0xa00] sm:$0xff]
        %v3639 = vld [vmem:[%s209 + $0xa08] sm:$0xff]
        %v3640 = vld [vmem:[%s209 + $0xa10] sm:$0xff]
        %v3641 = vld [vmem:[%s209 + $0xa18] sm:$0xff]
        %v3642 = vld [vmem:[%s209 + $0xa20] sm:$0xff]
        %v3643 = vld [vmem:[%s209 + $0xa28] sm:$0xff]
        %v3644 = vld [vmem:[%s209 + $0xa30] sm:$0xff]
        %v3645 = vld [vmem:[%s209 + $0xa38] sm:$0xff]
        %v3646 = vld [vmem:[%s209 + $0xa40] sm:$0xff]
        %v3647 = vld [vmem:[%s209 + $0xa48] sm:$0xff]
        %v3648 = vld [vmem:[%s209 + $0xa50] sm:$0xff]
        %v3649 = vld [vmem:[%s209 + $0xa58] sm:$0xff]
        %v3650 = vld [vmem:[%s209 + $0xa60] sm:$0xff]
        %v3651 = vld [vmem:[%s209 + $0xa68] sm:$0xff]
        %v3652 = vld [vmem:[%s209 + $0xa70] sm:$0xff]
        %v3653 = vld [vmem:[%s209 + $0xa78] sm:$0xff]
        %v3654 = vld [vmem:[%s209 + $0xa80] sm:$0xff]
        %v3655 = vld [vmem:[%s209 + $0xa88] sm:$0xff]
        %v3656 = vld [vmem:[%s209 + $0xa90] sm:$0xff]
        %v3657 = vld [vmem:[%s209 + $0xa98] sm:$0xff]
        %v3658 = vld [vmem:[%s209 + $0xaa0] sm:$0xff]
        %v3659 = vld [vmem:[%s209 + $0xaa8] sm:$0xff]
        %v3660 = vld [vmem:[%s209 + $0xab0] sm:$0xff]
        %v3661 = vld [vmem:[%s209 + $0xab8] sm:$0xff]
        %v3662 = vld [vmem:[%s209 + $0xac0] sm:$0xff]
        %v3663 = vld [vmem:[%s209 + $0xac8] sm:$0xff]
        %v3664 = vld [vmem:[%s209 + $0xad0] sm:$0xff]
        %v3665 = vld [vmem:[%s209 + $0xad8] sm:$0xff]
        %v3666 = vld [vmem:[%s209 + $0xae0] sm:$0xff]
        %v3667 = vld [vmem:[%s209 + $0xae8] sm:$0xff]
        %v3668 = vld [vmem:[%s209 + $0xaf0] sm:$0xff]
        %v3669 = vld [vmem:[%s209 + $0xaf8] sm:$0xff]
        %v3670 = vld [vmem:[%s209 + $0xb00] sm:$0xff]
        %v3671 = vld [vmem:[%s209 + $0xb08] sm:$0xff]
        %v3672 = vld [vmem:[%s209 + $0xb10] sm:$0xff]
        %v3673 = vld [vmem:[%s209 + $0xb18] sm:$0xff]
        %v3674 = vld [vmem:[%s209 + $0xb20] sm:$0xff]
        %v3675 = vld [vmem:[%s209 + $0xb28] sm:$0xff]
        %v3676 = vld [vmem:[%s209 + $0xb30] sm:$0xff]
        %v3677 = vld [vmem:[%s209 + $0xb38] sm:$0xff]
        %v3678 = vld [vmem:[%s209 + $0xb40] sm:$0xff]
        %v3679 = vld [vmem:[%s209 + $0xb48] sm:$0xff]
        %v3680 = vld [vmem:[%s209 + $0xb50] sm:$0xff]
        %v3681 = vld [vmem:[%s209 + $0xb58] sm:$0xff]
        %v3682 = vld [vmem:[%s209 + $0xb60] sm:$0xff]
        %v3683 = vld [vmem:[%s209 + $0xb68] sm:$0xff]
        %v3684 = vld [vmem:[%s209 + $0xb70] sm:$0xff]
        %v3685 = vld [vmem:[%s209 + $0xb78] sm:$0xff]
        %v3686 = vld [vmem:[%s209 + $0xb80] sm:$0xff]
        %v3687 = vld [vmem:[%s209 + $0xb88] sm:$0xff]
        %v3688 = vld [vmem:[%s209 + $0xb90] sm:$0xff]
        %v3689 = vld [vmem:[%s209 + $0xb98] sm:$0xff]
        %v3690 = vld [vmem:[%s209 + $0xba0] sm:$0xff]
        %v3691 = vld [vmem:[%s209 + $0xba8] sm:$0xff]
        %v3692 = vld [vmem:[%s209 + $0xbb0] sm:$0xff]
        %v3693 = vld [vmem:[%s209 + $0xbb8] sm:$0xff]
        %v3694 = vld [vmem:[%s209 + $0xbc0] sm:$0xff]
        %v3695 = vld [vmem:[%s209 + $0xbc8] sm:$0xff]
        %v3696 = vld [vmem:[%s209 + $0xbd0] sm:$0xff]
        %v3697 = vld [vmem:[%s209 + $0xbd8] sm:$0xff]
        %v3698 = vld [vmem:[%s209 + $0xbe0] sm:$0xff]
        %v3699 = vld [vmem:[%s209 + $0xbe8] sm:$0xff]
        %v3700 = vld [vmem:[%s209 + $0xbf0] sm:$0xff]
        %v3701 = vld [vmem:[%s209 + $0xbf8] sm:$0xff]
        %v3702 = vld [vmem:[%s209 + $0xc00] sm:$0xff]
        %v3703 = vld [vmem:[%s209 + $0xc08] sm:$0xff]
        %v3704 = vld [vmem:[%s209 + $0xc10] sm:$0xff]
        %v3705 = vld [vmem:[%s209 + $0xc18] sm:$0xff]
        %v3706 = vld [vmem:[%s209 + $0xc20] sm:$0xff]
        %v3707 = vld [vmem:[%s209 + $0xc28] sm:$0xff]
        %v3708 = vld [vmem:[%s209 + $0xc30] sm:$0xff]
        %v3709 = vld [vmem:[%s209 + $0xc38] sm:$0xff]
        %v3710 = vld [vmem:[%s209 + $0xc40] sm:$0xff]
        %v3711 = vld [vmem:[%s209 + $0xc48] sm:$0xff]
        %v3712 = vld [vmem:[%s209 + $0xc50] sm:$0xff]
        %v3713 = vld [vmem:[%s209 + $0xc58] sm:$0xff]
        %v3714 = vld [vmem:[%s209 + $0xc60] sm:$0xff]
        %v3715 = vld [vmem:[%s209 + $0xc68] sm:$0xff]
        %v3716 = vld [vmem:[%s209 + $0xc70] sm:$0xff]
        %v3717 = vld [vmem:[%s209 + $0xc78] sm:$0xff]
        %v3718 = vld [vmem:[%s209 + $0xc80] sm:$0xff]
        %v3719 = vld [vmem:[%s209 + $0xc88] sm:$0xff]
        %v3720 = vld [vmem:[%s209 + $0xc90] sm:$0xff]
        %v3721 = vld [vmem:[%s209 + $0xc98] sm:$0xff]
        %v3722 = vld [vmem:[%s209 + $0xca0] sm:$0xff]
        %v3723 = vld [vmem:[%s209 + $0xca8] sm:$0xff]
        %v3724 = vld [vmem:[%s209 + $0xcb0] sm:$0xff]
        %v3725 = vld [vmem:[%s209 + $0xcb8] sm:$0xff]
        %v3726 = vld [vmem:[%s209 + $0xcc0] sm:$0xff]
        %v3727 = vld [vmem:[%s209 + $0xcc8] sm:$0xff]
        %v3728 = vld [vmem:[%s209 + $0xcd0] sm:$0xff]
        %v3729 = vld [vmem:[%s209 + $0xcd8] sm:$0xff]
        %v3730 = vld [vmem:[%s209 + $0xce0] sm:$0xff]
        %v3731 = vld [vmem:[%s209 + $0xce8] sm:$0xff]
        %v3732 = vld [vmem:[%s209 + $0xcf0] sm:$0xff]
        %v3733 = vld [vmem:[%s209 + $0xcf8] sm:$0xff]
        %v3734 = vld [vmem:[%s209 + $0xd00] sm:$0xff]
        %v3735 = vld [vmem:[%s209 + $0xd08] sm:$0xff]
        %v3736 = vld [vmem:[%s209 + $0xd10] sm:$0xff]
        %v3737 = vld [vmem:[%s209 + $0xd18] sm:$0xff]
        %v3738 = vld [vmem:[%s209 + $0xd20] sm:$0xff]
        %v3739 = vld [vmem:[%s209 + $0xd28] sm:$0xff]
        %v3740 = vld [vmem:[%s209 + $0xd30] sm:$0xff]
        %v3741 = vld [vmem:[%s209 + $0xd38] sm:$0xff]
        %v3742 = vld [vmem:[%s209 + $0xd40] sm:$0xff]
        %v3743 = vld [vmem:[%s209 + $0xd48] sm:$0xff]
        %v3744 = vld [vmem:[%s209 + $0xd50] sm:$0xff]
        %v3745 = vld [vmem:[%s209 + $0xd58] sm:$0xff]
        %v3746 = vld [vmem:[%s209 + $0xd60] sm:$0xff]
        %v3747 = vld [vmem:[%s209 + $0xd68] sm:$0xff]
        %v3748 = vld [vmem:[%s209 + $0xd70] sm:$0xff]
        %v3749 = vld [vmem:[%s209 + $0xd78] sm:$0xff]
        %v3750 = vld [vmem:[%s209 + $0xd80] sm:$0xff]
        %v3751 = vld [vmem:[%s209 + $0xd88] sm:$0xff]
        %v3752 = vld [vmem:[%s209 + $0xd90] sm:$0xff]
        %v3753 = vld [vmem:[%s209 + $0xd98] sm:$0xff]
        %v3754 = vld [vmem:[%s209 + $0xda0] sm:$0xff]
        %v3755 = vld [vmem:[%s209 + $0xda8] sm:$0xff]
        %v3756 = vld [vmem:[%s209 + $0xdb0] sm:$0xff]
        %v3757 = vld [vmem:[%s209 + $0xdb8] sm:$0xff]
        %v3758 = vld [vmem:[%s209 + $0xdc0] sm:$0xff]
        %v3759 = vld [vmem:[%s209 + $0xdc8] sm:$0xff]
        %v3760 = vld [vmem:[%s209 + $0xdd0] sm:$0xff]
        %v3761 = vld [vmem:[%s209 + $0xdd8] sm:$0xff]
        %v3762 = vld [vmem:[%s209 + $0xde0] sm:$0xff]
        %v3763 = vld [vmem:[%s209 + $0xde8] sm:$0xff]
        %v3764 = vld [vmem:[%s209 + $0xdf0] sm:$0xff]
        %v3765 = vld [vmem:[%s209 + $0xdf8] sm:$0xff]
        %v3766 = vld [vmem:[%s209 + $0xe00] sm:$0xff]
        %v3767 = vld [vmem:[%s209 + $0xe08] sm:$0xff]
        %v3768 = vld [vmem:[%s209 + $0xe10] sm:$0xff]
        %v3769 = vld [vmem:[%s209 + $0xe18] sm:$0xff]
        %v3770 = vld [vmem:[%s209 + $0xe20] sm:$0xff]
        %v3771 = vld [vmem:[%s209 + $0xe28] sm:$0xff]
        %v3772 = vld [vmem:[%s209 + $0xe30] sm:$0xff]
        %v3773 = vld [vmem:[%s209 + $0xe38] sm:$0xff]
        %v3774 = vld [vmem:[%s209 + $0xe40] sm:$0xff]
        %v3775 = vld [vmem:[%s209 + $0xe48] sm:$0xff]
        %v3776 = vld [vmem:[%s209 + $0xe50] sm:$0xff]
        %v3777 = vld [vmem:[%s209 + $0xe58] sm:$0xff]
        %v3778 = vld [vmem:[%s209 + $0xe60] sm:$0xff]
        %v3779 = vld [vmem:[%s209 + $0xe68] sm:$0xff]
        %v3780 = vld [vmem:[%s209 + $0xe70] sm:$0xff]
        %v3781 = vld [vmem:[%s209 + $0xe78] sm:$0xff]
        %v3782 = vld [vmem:[%s209 + $0xe80] sm:$0xff]
        %v3783 = vld [vmem:[%s209 + $0xe88] sm:$0xff]
        %v3784 = vld [vmem:[%s209 + $0xe90] sm:$0xff]
        %v3785 = vld [vmem:[%s209 + $0xe98] sm:$0xff]
        %v3786 = vld [vmem:[%s209 + $0xea0] sm:$0xff]
        %v3787 = vld [vmem:[%s209 + $0xea8] sm:$0xff]
        %v3788 = vld [vmem:[%s209 + $0xeb0] sm:$0xff]
        %v3789 = vld [vmem:[%s209 + $0xeb8] sm:$0xff]
        %v3790 = vld [vmem:[%s209 + $0xec0] sm:$0xff]
        %v3791 = vld [vmem:[%s209 + $0xec8] sm:$0xff]
        %v3792 = vld [vmem:[%s209 + $0xed0] sm:$0xff]
        %v3793 = vld [vmem:[%s209 + $0xed8] sm:$0xff]
        %v3794 = vld [vmem:[%s209 + $0xee0] sm:$0xff]
        %v3795 = vld [vmem:[%s209 + $0xee8] sm:$0xff]
        %v3796 = vld [vmem:[%s209 + $0xef0] sm:$0xff]
        %v3797 = vld [vmem:[%s209 + $0xef8] sm:$0xff]
        %v3798 = vld [vmem:[%s209 + $0xf00] sm:$0xff]
        %v3799 = vld [vmem:[%s209 + $0xf08] sm:$0xff]
        %v3800 = vld [vmem:[%s209 + $0xf10] sm:$0xff]
        %v3801 = vld [vmem:[%s209 + $0xf18] sm:$0xff]
        %v3802 = vld [vmem:[%s209 + $0xf20] sm:$0xff]
        %v3803 = vld [vmem:[%s209 + $0xf28] sm:$0xff]
        %v3804 = vld [vmem:[%s209 + $0xf30] sm:$0xff]
        %v3805 = vld [vmem:[%s209 + $0xf38] sm:$0xff]
        %v3806 = vld [vmem:[%s209 + $0xf40] sm:$0xff]
        %v3807 = vld [vmem:[%s209 + $0xf48] sm:$0xff]
        %v3808 = vld [vmem:[%s209 + $0xf50] sm:$0xff]
        %v3809 = vld [vmem:[%s209 + $0xf58] sm:$0xff]
        %v3810 = vld [vmem:[%s209 + $0xf60] sm:$0xff]
        %v3811 = vld [vmem:[%s209 + $0xf68] sm:$0xff]
        %v3812 = vld [vmem:[%s209 + $0xf70] sm:$0xff]
        %v3813 = vld [vmem:[%s209 + $0xf78] sm:$0xff]
        %v3814 = vld [vmem:[%s209 + $0xf80] sm:$0xff]
        %v3815 = vld [vmem:[%s209 + $0xf88] sm:$0xff]
        %v3816 = vld [vmem:[%s209 + $0xf90] sm:$0xff]
        %v3817 = vld [vmem:[%s209 + $0xf98] sm:$0xff]
        %v3818 = vld [vmem:[%s209 + $0xfa0] sm:$0xff]
        %v3819 = vld [vmem:[%s209 + $0xfa8] sm:$0xff]
        %v3820 = vld [vmem:[%s209 + $0xfb0] sm:$0xff]
        %v3821 = vld [vmem:[%s209 + $0xfb8] sm:$0xff]
        %v3822 = vld [vmem:[%s209 + $0xfc0] sm:$0xff]
        %v3823 = vld [vmem:[%s209 + $0xfc8] sm:$0xff]
        %v3824 = vld [vmem:[%s209 + $0xfd0] sm:$0xff]
        %v3825 = vld [vmem:[%s209 + $0xfd8] sm:$0xff]
        %v3826 = vld [vmem:[%s209 + $0xfe0] sm:$0xff]
        %v3827 = vld [vmem:[%s209 + $0xfe8] sm:$0xff]
        %v3828 = vld [vmem:[%s209 + $0xff0] sm:$0xff]
        %v3829 = vld [vmem:[%s209 + $0xff8] sm:$0xff]
        %v3830 = vld [vmem:[%s209 + $0x1000] sm:$0xff]
        %v3831 = vld [vmem:[%s209 + $0x1008] sm:$0xff]
        %v3832 = vld [vmem:[%s209 + $0x1010] sm:$0xff]
        %v3833 = vld [vmem:[%s209 + $0x1018] sm:$0xff]
        %v3834 = vld [vmem:[%s209 + $0x1020] sm:$0xff]
        %v3835 = vld [vmem:[%s209 + $0x1028] sm:$0xff]
        %v3836 = vld [vmem:[%s209 + $0x1030] sm:$0xff]
        %v3837 = vld [vmem:[%s209 + $0x1038] sm:$0xff]
        %v3838 = vld [vmem:[%s209 + $0x1040] sm:$0xff]
        %v3839 = vld [vmem:[%s209 + $0x1048] sm:$0xff]
        %v3840 = vld [vmem:[%s209 + $0x1050] sm:$0xff]
        %v3841 = vld [vmem:[%s209 + $0x1058] sm:$0xff]
        %v3842 = vld [vmem:[%s209 + $0x1060] sm:$0xff]
        %v3843 = vld [vmem:[%s209 + $0x1068] sm:$0xff]
        %v3844 = vld [vmem:[%s209 + $0x1070] sm:$0xff]
        %v3845 = vld [vmem:[%s209 + $0x1078] sm:$0xff]
        %v3846 = vld [vmem:[%s209 + $0x1080] sm:$0xff]
        %v3847 = vld [vmem:[%s209 + $0x1088] sm:$0xff]
        %v3848 = vld [vmem:[%s209 + $0x1090] sm:$0xff]
        %v3849 = vld [vmem:[%s209 + $0x1098] sm:$0xff]
        %v3850 = vld [vmem:[%s209 + $0x10a0] sm:$0xff]
        %v3851 = vld [vmem:[%s209 + $0x10a8] sm:$0xff]
        %v3852 = vld [vmem:[%s209 + $0x10b0] sm:$0xff]
        %v3853 = vld [vmem:[%s209 + $0x10b8] sm:$0xff]
        %v3854 = vld [vmem:[%s209 + $0x10c0] sm:$0xff]
        %v3855 = vld [vmem:[%s209 + $0x10c8] sm:$0xff]
        %v3856 = vld [vmem:[%s209 + $0x10d0] sm:$0xff]
        %v3857 = vld [vmem:[%s209 + $0x10d8] sm:$0xff]
        %v3858 = vld [vmem:[%s209 + $0x10e0] sm:$0xff]
        %v3859 = vld [vmem:[%s209 + $0x10e8] sm:$0xff]
        %v3860 = vld [vmem:[%s209 + $0x10f0] sm:$0xff]
        %v3861 = vld [vmem:[%s209 + $0x10f8] sm:$0xff]
        %v3862 = vld [vmem:[%s209 + $0x1100] sm:$0xff]
        %v3863 = vld [vmem:[%s209 + $0x1108] sm:$0xff]
        %v3864 = vld [vmem:[%s209 + $0x1110] sm:$0xff]
        %v3865 = vld [vmem:[%s209 + $0x1118] sm:$0xff]
        %v3866 = vld [vmem:[%s209 + $0x1120] sm:$0xff]
        %v3867 = vld [vmem:[%s209 + $0x1128] sm:$0xff]
        %v3868 = vld [vmem:[%s209 + $0x1130] sm:$0xff]
        %v3869 = vld [vmem:[%s209 + $0x1138] sm:$0xff]
        %v3870 = vld [vmem:[%s209 + $0x1140] sm:$0xff]
        %v3871 = vld [vmem:[%s209 + $0x1148] sm:$0xff]
        %v3872 = vld [vmem:[%s209 + $0x1150] sm:$0xff]
        %v3873 = vld [vmem:[%s209 + $0x1158] sm:$0xff]
        %v3874 = vld [vmem:[%s209 + $0x1160] sm:$0xff]
        %v3875 = vld [vmem:[%s209 + $0x1168] sm:$0xff]
        %v3876 = vld [vmem:[%s209 + $0x1170] sm:$0xff]
        %v3877 = vld [vmem:[%s209 + $0x1178] sm:$0xff]
        %v3878 = vld [vmem:[%s209 + $0x1180] sm:$0xff]
        %v3879 = vld [vmem:[%s209 + $0x1188] sm:$0xff]
        %v3880 = vld [vmem:[%s209 + $0x1190] sm:$0xff]
        %v3881 = vld [vmem:[%s209 + $0x1198] sm:$0xff]
        %v3882 = vld [vmem:[%s209 + $0x11a0] sm:$0xff]
        %v3883 = vld [vmem:[%s209 + $0x11a8] sm:$0xff]
        %v3884 = vld [vmem:[%s209 + $0x11b0] sm:$0xff]
        %v3885 = vld [vmem:[%s209 + $0x11b8] sm:$0xff]
        %v3886 = vld [vmem:[%s209 + $0x11c0] sm:$0xff]
        %v3887 = vld [vmem:[%s209 + $0x11c8] sm:$0xff]
        %v3888 = vld [vmem:[%s209 + $0x11d0] sm:$0xff]
        %v3889 = vld [vmem:[%s209 + $0x11d8] sm:$0xff]
        %v3890 = vld [vmem:[%s209 + $0x11e0] sm:$0xff]
        %v3891 = vld [vmem:[%s209 + $0x11e8] sm:$0xff]
        %v3892 = vld [vmem:[%s209 + $0x11f0] sm:$0xff]
        %v3893 = vld [vmem:[%s209 + $0x11f8] sm:$0xff]
        %v3894 = vld [vmem:[%s209 + $0x1200] sm:$0xff]
        %v3895 = vld [vmem:[%s209 + $0x1208] sm:$0xff]
        %v3896 = vld [vmem:[%s209 + $0x1210] sm:$0xff]
        %v3897 = vld [vmem:[%s209 + $0x1218] sm:$0xff]
        %v3898 = vld [vmem:[%s209 + $0x1220] sm:$0xff]
        %v3899 = vld [vmem:[%s209 + $0x1228] sm:$0xff]
        %v3900 = vld [vmem:[%s209 + $0x1230] sm:$0xff]
        %v3901 = vld [vmem:[%s209 + $0x1238] sm:$0xff]
        %v3902 = vld [vmem:[%s209 + $0x1240] sm:$0xff]
        %v3903 = vld [vmem:[%s209 + $0x1248] sm:$0xff]
        %v3904 = vld [vmem:[%s209 + $0x1250] sm:$0xff]
        %v3905 = vld [vmem:[%s209 + $0x1258] sm:$0xff]
        %v3906 = vld [vmem:[%s209 + $0x1260] sm:$0xff]
        %v3907 = vld [vmem:[%s209 + $0x1268] sm:$0xff]
        %v3908 = vld [vmem:[%s209 + $0x1270] sm:$0xff]
        %v3909 = vld [vmem:[%s209 + $0x1278] sm:$0xff]
        %v3910 = vld [vmem:[%s209 + $0x1280] sm:$0xff]
        %v3911 = vld [vmem:[%s209 + $0x1288] sm:$0xff]
        %v3912 = vld [vmem:[%s209 + $0x1290] sm:$0xff]
        %v3913 = vld [vmem:[%s209 + $0x1298] sm:$0xff]
        %v3914 = vld [vmem:[%s209 + $0x12a0] sm:$0xff]
        %v3915 = vld [vmem:[%s209 + $0x12a8] sm:$0xff]
        %v3916 = vld [vmem:[%s209 + $0x12b0] sm:$0xff]
        %v3917 = vld [vmem:[%s209 + $0x12b8] sm:$0xff]
        %v3918 = vld [vmem:[%s209 + $0x12c0] sm:$0xff]
        %v3919 = vld [vmem:[%s209 + $0x12c8] sm:$0xff]
        %v3920 = vld [vmem:[%s209 + $0x12d0] sm:$0xff]
        %v3921 = vld [vmem:[%s209 + $0x12d8] sm:$0xff]
        %v3922 = vld [vmem:[%s209 + $0x12e0] sm:$0xff]
        %v3923 = vld [vmem:[%s209 + $0x12e8] sm:$0xff]
        %v3924 = vld [vmem:[%s209 + $0x12f0] sm:$0xff]
        %v3925 = vld [vmem:[%s209 + $0x12f8] sm:$0xff]
        %v3926 = vld [vmem:[%s209 + $0x1300] sm:$0xff]
        %v3927 = vld [vmem:[%s209 + $0x1308] sm:$0xff]
        %v3928 = vld [vmem:[%s209 + $0x1310] sm:$0xff]
        %v3929 = vld [vmem:[%s209 + $0x1318] sm:$0xff]
        %v3930 = vld [vmem:[%s209 + $0x1320] sm:$0xff]
        %v3931 = vld [vmem:[%s209 + $0x1328] sm:$0xff]
        %v3932 = vld [vmem:[%s209 + $0x1330] sm:$0xff]
        %v3933 = vld [vmem:[%s209 + $0x1338] sm:$0xff]
        %v3934 = vld [vmem:[%s209 + $0x1340] sm:$0xff]
        %v3935 = vld [vmem:[%s209 + $0x1348] sm:$0xff]
        %v3936 = vld [vmem:[%s209 + $0x1350] sm:$0xff]
        %v3937 = vld [vmem:[%s209 + $0x1358] sm:$0xff]
        %v3938 = vld [vmem:[%s209 + $0x1360] sm:$0xff]
        %v3939 = vld [vmem:[%s209 + $0x1368] sm:$0xff]
        %v3940 = vld [vmem:[%s209 + $0x1370] sm:$0xff]
        %v3941 = vld [vmem:[%s209 + $0x1378] sm:$0xff]
        %v3942 = vld [vmem:[%s209 + $0x1380] sm:$0xff]
        %v3943 = vld [vmem:[%s209 + $0x1388] sm:$0xff]
        %v3944 = vld [vmem:[%s209 + $0x1390] sm:$0xff]
        %v3945 = vld [vmem:[%s209 + $0x1398] sm:$0xff]
        %v3946 = vld [vmem:[%s209 + $0x13a0] sm:$0xff]
        %v3947 = vld [vmem:[%s209 + $0x13a8] sm:$0xff]
        %v3948 = vld [vmem:[%s209 + $0x13b0] sm:$0xff]
        %v3949 = vld [vmem:[%s209 + $0x13b8] sm:$0xff]
        %v3950 = vld [vmem:[%s209 + $0x13c0] sm:$0xff]
        %v3951 = vld [vmem:[%s209 + $0x13c8] sm:$0xff]
        %v3952 = vld [vmem:[%s209 + $0x13d0] sm:$0xff]
        %v3953 = vld [vmem:[%s209 + $0x13d8] sm:$0xff]
        %v3954 = vld [vmem:[%s209 + $0x13e0] sm:$0xff]
        %v3955 = vld [vmem:[%s209 + $0x13e8] sm:$0xff]
        %v3956 = vld [vmem:[%s209 + $0x13f0] sm:$0xff]
        %v3957 = vld [vmem:[%s209 + $0x13f8] sm:$0xff]
        %v3958 = vld [vmem:[%s209 + $0x1400] sm:$0xff]
        %v3959 = vld [vmem:[%s209 + $0x1408] sm:$0xff]
        %v3960 = vld [vmem:[%s209 + $0x1410] sm:$0xff]
        %v3961 = vld [vmem:[%s209 + $0x1418] sm:$0xff]
        %v3962 = vld [vmem:[%s209 + $0x1420] sm:$0xff]
        %v3963 = vld [vmem:[%s209 + $0x1428] sm:$0xff]
        %v3964 = vld [vmem:[%s209 + $0x1430] sm:$0xff]
        %v3965 = vld [vmem:[%s209 + $0x1438] sm:$0xff]
        %v3966 = vld [vmem:[%s209 + $0x1440] sm:$0xff]
        %v3967 = vld [vmem:[%s209 + $0x1448] sm:$0xff]
        %v3968 = vld [vmem:[%s209 + $0x1450] sm:$0xff]
        %v3969 = vld [vmem:[%s209 + $0x1458] sm:$0xff]
        %v3970 = vld [vmem:[%s209 + $0x1460] sm:$0xff]
        %v3971 = vld [vmem:[%s209 + $0x1468] sm:$0xff]
        %v3972 = vld [vmem:[%s209 + $0x1470] sm:$0xff]
        %v3973 = vld [vmem:[%s209 + $0x1478] sm:$0xff]
        %v3974 = vld [vmem:[%s209 + $0x1480] sm:$0xff]
        %v3975 = vld [vmem:[%s209 + $0x1488] sm:$0xff]
        %v3976 = vld [vmem:[%s209 + $0x1490] sm:$0xff]
        %v3977 = vld [vmem:[%s209 + $0x1498] sm:$0xff]
        %v3978 = vld [vmem:[%s209 + $0x14a0] sm:$0xff]
        %v3979 = vld [vmem:[%s209 + $0x14a8] sm:$0xff]
        %v3980 = vld [vmem:[%s209 + $0x14b0] sm:$0xff]
        %v3981 = vld [vmem:[%s209 + $0x14b8] sm:$0xff]
        %v3982 = vld [vmem:[%s209 + $0x14c0] sm:$0xff]
        %v3983 = vld [vmem:[%s209 + $0x14c8] sm:$0xff]
        %v3984 = vld [vmem:[%s209 + $0x14d0] sm:$0xff]
        %v3985 = vld [vmem:[%s209 + $0x14d8] sm:$0xff]
        %v3986 = vld [vmem:[%s209 + $0x14e0] sm:$0xff]
        %v3987 = vld [vmem:[%s209 + $0x14e8] sm:$0xff]
        %v3988 = vld [vmem:[%s209 + $0x14f0] sm:$0xff]
        %v3989 = vld [vmem:[%s209 + $0x14f8] sm:$0xff]
        %v3990 = vld [vmem:[%s209 + $0x1500] sm:$0xff]
        %v3991 = vld [vmem:[%s209 + $0x1508] sm:$0xff]
        %v3992 = vld [vmem:[%s209 + $0x1510] sm:$0xff]
        %v3993 = vld [vmem:[%s209 + $0x1518] sm:$0xff]
        %v3994 = vld [vmem:[%s209 + $0x1520] sm:$0xff]
        %v3995 = vld [vmem:[%s209 + $0x1528] sm:$0xff]
        %v3996 = vld [vmem:[%s209 + $0x1530] sm:$0xff]
        %v3997 = vld [vmem:[%s209 + $0x1538] sm:$0xff]
        %v3998 = vld [vmem:[%s209 + $0x1540] sm:$0xff]
        %v3999 = vld [vmem:[%s209 + $0x1548] sm:$0xff]
        %v4000 = vld [vmem:[%s209 + $0x1550] sm:$0xff]
        %v4001 = vld [vmem:[%s209 + $0x1558] sm:$0xff]
        %v4002 = vld [vmem:[%s209 + $0x1560] sm:$0xff]
        %v4003 = vld [vmem:[%s209 + $0x1568] sm:$0xff]
        %v4004 = vld [vmem:[%s209 + $0x1570] sm:$0xff]
        %v4005 = vld [vmem:[%s209 + $0x1578] sm:$0xff]
        %v4006 = vld [vmem:[%s209 + $0x1580] sm:$0xff]
        %v4007 = vld [vmem:[%s209 + $0x1588] sm:$0xff]
        %v4008 = vld [vmem:[%s209 + $0x1590] sm:$0xff]
        %v4009 = vld [vmem:[%s209 + $0x1598] sm:$0xff]
        %v4010 = vld [vmem:[%s209 + $0x15a0] sm:$0xff]
        %v4011 = vld [vmem:[%s209 + $0x15a8] sm:$0xff]
        %v4012 = vld [vmem:[%s209 + $0x15b0] sm:$0xff]
        %v4013 = vld [vmem:[%s209 + $0x15b8] sm:$0xff]
        %v4014 = vld [vmem:[%s209 + $0x15c0] sm:$0xff]
        %v4015 = vld [vmem:[%s209 + $0x15c8] sm:$0xff]
        %v4016 = vld [vmem:[%s209 + $0x15d0] sm:$0xff]
        %v4017 = vld [vmem:[%s209 + $0x15d8] sm:$0xff]
        %v4018 = vld [vmem:[%s209 + $0x15e0] sm:$0xff]
        %v4019 = vld [vmem:[%s209 + $0x15e8] sm:$0xff]
        %v4020 = vld [vmem:[%s209 + $0x15f0] sm:$0xff]
        %v4021 = vld [vmem:[%s209 + $0x15f8] sm:$0xff]
        %v4022 = vld [vmem:[%s209 + $0x1600] sm:$0xff]
        %v4023 = vld [vmem:[%s209 + $0x1608] sm:$0xff]
        %v4024 = vld [vmem:[%s209 + $0x1610] sm:$0xff]
        %v4025 = vld [vmem:[%s209 + $0x1618] sm:$0xff]
        %v4026 = vld [vmem:[%s209 + $0x1620] sm:$0xff]
        %v4027 = vld [vmem:[%s209 + $0x1628] sm:$0xff]
        %v4028 = vld [vmem:[%s209 + $0x1630] sm:$0xff]
        %v4029 = vld [vmem:[%s209 + $0x1638] sm:$0xff]
        %v4030 = vld [vmem:[%s209 + $0x1640] sm:$0xff]
        %v4031 = vld [vmem:[%s209 + $0x1648] sm:$0xff]
        %v4032 = vld [vmem:[%s209 + $0x1650] sm:$0xff]
        %v4033 = vld [vmem:[%s209 + $0x1658] sm:$0xff]
        %v4034 = vld [vmem:[%s209 + $0x1660] sm:$0xff]
        %v4035 = vld [vmem:[%s209 + $0x1668] sm:$0xff]
        %v4036 = vld [vmem:[%s209 + $0x1670] sm:$0xff]
        %v4037 = vld [vmem:[%s209 + $0x1678] sm:$0xff]
        %v4038 = vld [vmem:[%s209 + $0x1680] sm:$0xff]
        %v4039 = vld [vmem:[%s209 + $0x1688] sm:$0xff]
        %v4040 = vld [vmem:[%s209 + $0x1690] sm:$0xff]
        %v4041 = vld [vmem:[%s209 + $0x1698] sm:$0xff]
        %v4042 = vld [vmem:[%s209 + $0x16a0] sm:$0xff]
        %v4043 = vld [vmem:[%s209 + $0x16a8] sm:$0xff]
        %v4044 = vld [vmem:[%s209 + $0x16b0] sm:$0xff]
        %v4045 = vld [vmem:[%s209 + $0x16b8] sm:$0xff]
        %v4046 = vld [vmem:[%s209 + $0x16c0] sm:$0xff]
        %v4047 = vld [vmem:[%s209 + $0x16c8] sm:$0xff]
        %v4048 = vld [vmem:[%s209 + $0x16d0] sm:$0xff]
        %v4049 = vld [vmem:[%s209 + $0x16d8] sm:$0xff]
        %v4050 = vld [vmem:[%s209 + $0x16e0] sm:$0xff]
        %v4051 = vld [vmem:[%s209 + $0x16e8] sm:$0xff]
        %v4052 = vld [vmem:[%s209 + $0x16f0] sm:$0xff]
        %v4053 = vld [vmem:[%s209 + $0x16f8] sm:$0xff]
        %v4054 = vld [vmem:[%s209 + $0x1700] sm:$0xff]
        %v4055 = vld [vmem:[%s209 + $0x1708] sm:$0xff]
        %v4056 = vld [vmem:[%s209 + $0x1710] sm:$0xff]
        %v4057 = vld [vmem:[%s209 + $0x1718] sm:$0xff]
        %v4058 = vld [vmem:[%s209 + $0x1720] sm:$0xff]
        %v4059 = vld [vmem:[%s209 + $0x1728] sm:$0xff]
        %v4060 = vld [vmem:[%s209 + $0x1730] sm:$0xff]
        %v4061 = vld [vmem:[%s209 + $0x1738] sm:$0xff]
        %v4062 = vld [vmem:[%s209 + $0x1740] sm:$0xff]
        %v4063 = vld [vmem:[%s209 + $0x1748] sm:$0xff]
        %v4064 = vld [vmem:[%s209 + $0x1750] sm:$0xff]
        %v4065 = vld [vmem:[%s209 + $0x1758] sm:$0xff]
        %v4066 = vld [vmem:[%s209 + $0x1760] sm:$0xff]
        %v4067 = vld [vmem:[%s209 + $0x1768] sm:$0xff]
        %v4068 = vld [vmem:[%s209 + $0x1770] sm:$0xff]
        %v4069 = vld [vmem:[%s209 + $0x1778] sm:$0xff]
        %v4070 = vld [vmem:[%s209 + $0x1780] sm:$0xff]
        %v4071 = vld [vmem:[%s209 + $0x1788] sm:$0xff]
        %v4072 = vld [vmem:[%s209 + $0x1790] sm:$0xff]
        %v4073 = vld [vmem:[%s209 + $0x1798] sm:$0xff]
        %v4074 = vld [vmem:[%s209 + $0x17a0] sm:$0xff]
        %v4075 = vld [vmem:[%s209 + $0x17a8] sm:$0xff]
        %v4076 = vld [vmem:[%s209 + $0x17b0] sm:$0xff]
        %v4077 = vld [vmem:[%s209 + $0x17b8] sm:$0xff]
        %v4078 = vld [vmem:[%s209 + $0x17c0] sm:$0xff]
        %v4079 = vld [vmem:[%s209 + $0x17c8] sm:$0xff]
        %v4080 = vld [vmem:[%s209 + $0x17d0] sm:$0xff]
        %v4081 = vld [vmem:[%s209 + $0x17d8] sm:$0xff]
        %v4082 = vld [vmem:[%s209 + $0x17e0] sm:$0xff]
        %v4083 = vld [vmem:[%s209 + $0x17e8] sm:$0xff]
        %v4084 = vld [vmem:[%s209 + $0x17f0] sm:$0xff]
        %v4085 = vld [vmem:[%s209 + $0x17f8] sm:$0xff]
        %v4086 = vld [vmem:[%s209 + $0x1800] sm:$0xff]
        %v4087 = vld [vmem:[%s209 + $0x1808] sm:$0xff]
        %v4088 = vld [vmem:[%s209 + $0x1810] sm:$0xff]
        %v4089 = vld [vmem:[%s209 + $0x1818] sm:$0xff]
        %v4090 = vld [vmem:[%s209 + $0x1820] sm:$0xff]
        %v4091 = vld [vmem:[%s209 + $0x1828] sm:$0xff]
        %v4092 = vld [vmem:[%s209 + $0x1830] sm:$0xff]
        %v4093 = vld [vmem:[%s209 + $0x1838] sm:$0xff]
        %v4094 = vld [vmem:[%s209 + $0x1840] sm:$0xff]
        %v4095 = vld [vmem:[%s209 + $0x1848] sm:$0xff]
        %v4096 = vld [vmem:[%s209 + $0x1850] sm:$0xff]
        %v4097 = vld [vmem:[%s209 + $0x1858] sm:$0xff]
        %v4098 = vld [vmem:[%s209 + $0x1860] sm:$0xff]
        %v4099 = vld [vmem:[%s209 + $0x1868] sm:$0xff]
        %v4100 = vld [vmem:[%s209 + $0x1870] sm:$0xff]
        %v4101 = vld [vmem:[%s209 + $0x1878] sm:$0xff]
        %v4102 = vld [vmem:[%s209 + $0x1880] sm:$0xff]
        %v4103 = vld [vmem:[%s209 + $0x1888] sm:$0xff]
        %v4104 = vld [vmem:[%s209 + $0x1890] sm:$0xff]
        %v4105 = vld [vmem:[%s209 + $0x1898] sm:$0xff]
        %v4106 = vld [vmem:[%s209 + $0x18a0] sm:$0xff]
        %v4107 = vld [vmem:[%s209 + $0x18a8] sm:$0xff]
        %v4108 = vld [vmem:[%s209 + $0x18b0] sm:$0xff]
        %v4109 = vld [vmem:[%s209 + $0x18b8] sm:$0xff]
        %v4110 = vld [vmem:[%s209 + $0x18c0] sm:$0xff]
        %v4111 = vld [vmem:[%s209 + $0x18c8] sm:$0xff]
        %v4112 = vld [vmem:[%s209 + $0x18d0] sm:$0xff]
        %v4113 = vld [vmem:[%s209 + $0x18d8] sm:$0xff]
        %v4114 = vld [vmem:[%s209 + $0x18e0] sm:$0xff]
        %v4115 = vld [vmem:[%s209 + $0x18e8] sm:$0xff]
        %v4116 = vld [vmem:[%s209 + $0x18f0] sm:$0xff]
        %v4117 = vld [vmem:[%s209 + $0x18f8] sm:$0xff]
        %v4118 = vld [vmem:[%s209 + $0x1900] sm:$0xff]
        %v4119 = vld [vmem:[%s209 + $0x1908] sm:$0xff]
        %v4120 = vld [vmem:[%s209 + $0x1910] sm:$0xff]
        %v4121 = vld [vmem:[%s209 + $0x1918] sm:$0xff]
        %v4122 = vld [vmem:[%s209 + $0x1920] sm:$0xff]
        %v4123 = vld [vmem:[%s209 + $0x1928] sm:$0xff]
        %v4124 = vld [vmem:[%s209 + $0x1930] sm:$0xff]
        %v4125 = vld [vmem:[%s209 + $0x1938] sm:$0xff]
        %v4126 = vld [vmem:[%s209 + $0x1940] sm:$0xff]
        %v4127 = vld [vmem:[%s209 + $0x1948] sm:$0xff]
        %v4128 = vld [vmem:[%s209 + $0x1950] sm:$0xff]
        %v4129 = vld [vmem:[%s209 + $0x1958] sm:$0xff]
        %v4130 = vld [vmem:[%s209 + $0x1960] sm:$0xff]
        %v4131 = vld [vmem:[%s209 + $0x1968] sm:$0xff]
        %v4132 = vld [vmem:[%s209 + $0x1970] sm:$0xff]
        %v4133 = vld [vmem:[%s209 + $0x1978] sm:$0xff]
        %v4134 = vld [vmem:[%s209 + $0x1980] sm:$0xff]
        %v4135 = vld [vmem:[%s209 + $0x1988] sm:$0xff]
        %v4136 = vld [vmem:[%s209 + $0x1990] sm:$0xff]
        %v4137 = vld [vmem:[%s209 + $0x1998] sm:$0xff]
        %v4138 = vld [vmem:[%s209 + $0x19a0] sm:$0xff]
        %v4139 = vld [vmem:[%s209 + $0x19a8] sm:$0xff]
        %v4140 = vld [vmem:[%s209 + $0x19b0] sm:$0xff]
        %v4141 = vld [vmem:[%s209 + $0x19b8] sm:$0xff]
        %v4142 = vld [vmem:[%s209 + $0x19c0] sm:$0xff]
        %v4143 = vld [vmem:[%s209 + $0x19c8] sm:$0xff]
        %v4144 = vld [vmem:[%s209 + $0x19d0] sm:$0xff]
        %v4145 = vld [vmem:[%s209 + $0x19d8] sm:$0xff]
        %v4146 = vld [vmem:[%s209 + $0x19e0] sm:$0xff]
        %v4147 = vld [vmem:[%s209 + $0x19e8] sm:$0xff]
        %v4148 = vld [vmem:[%s209 + $0x19f0] sm:$0xff]
        %v4149 = vld [vmem:[%s209 + $0x19f8] sm:$0xff]
        %v4150 = vld [vmem:[%s209 + $0x1a00] sm:$0xff]
        %v4151 = vld [vmem:[%s209 + $0x1a08] sm:$0xff]
        %v4152 = vld [vmem:[%s209 + $0x1a10] sm:$0xff]
        %v4153 = vld [vmem:[%s209 + $0x1a18] sm:$0xff]
        %v4154 = vld [vmem:[%s209 + $0x1a20] sm:$0xff]
        %v4155 = vld [vmem:[%s209 + $0x1a28] sm:$0xff]
        %v4156 = vld [vmem:[%s209 + $0x1a30] sm:$0xff]
        %v4157 = vld [vmem:[%s209 + $0x1a38] sm:$0xff]
        %v4158 = vld [vmem:[%s209 + $0x1a40] sm:$0xff]
        %v4159 = vld [vmem:[%s209 + $0x1a48] sm:$0xff]
        %v4160 = vld [vmem:[%s209 + $0x1a50] sm:$0xff]
        %v4161 = vld [vmem:[%s209 + $0x1a58] sm:$0xff]
        %v4162 = vld [vmem:[%s209 + $0x1a60] sm:$0xff]
        %v4163 = vld [vmem:[%s209 + $0x1a68] sm:$0xff]
        %v4164 = vld [vmem:[%s209 + $0x1a70] sm:$0xff]
        %v4165 = vld [vmem:[%s209 + $0x1a78] sm:$0xff]
        %v4166 = vld [vmem:[%s209 + $0x1a80] sm:$0xff]
        %v4167 = vld [vmem:[%s209 + $0x1a88] sm:$0xff]
        %v4168 = vld [vmem:[%s209 + $0x1a90] sm:$0xff]
        %v4169 = vld [vmem:[%s209 + $0x1a98] sm:$0xff]
        %v4170 = vld [vmem:[%s209 + $0x1aa0] sm:$0xff]
        %v4171 = vld [vmem:[%s209 + $0x1aa8] sm:$0xff]
        %v4172 = vld [vmem:[%s209 + $0x1ab0] sm:$0xff]
        %v4173 = vld [vmem:[%s209 + $0x1ab8] sm:$0xff]
        %v4174 = vld [vmem:[%s209 + $0x1ac0] sm:$0xff]
        %v4175 = vld [vmem:[%s209 + $0x1ac8] sm:$0xff]
        %v4176 = vld [vmem:[%s209 + $0x1ad0] sm:$0xff]
        %v4177 = vld [vmem:[%s209 + $0x1ad8] sm:$0xff]
        %v4178 = vld [vmem:[%s209 + $0x1ae0] sm:$0xff]
        %v4179 = vld [vmem:[%s209 + $0x1ae8] sm:$0xff]
        %v4180 = vld [vmem:[%s209 + $0x1af0] sm:$0xff]
        %v4181 = vld [vmem:[%s209 + $0x1af8] sm:$0xff]
        %v4182 = vld [vmem:[%s209 + $0x1b00] sm:$0xff]
        %v4183 = vld [vmem:[%s209 + $0x1b08] sm:$0xff]
        %v4184 = vld [vmem:[%s209 + $0x1b10] sm:$0xff]
        %v4185 = vld [vmem:[%s209 + $0x1b18] sm:$0xff]
        %v4186 = vld [vmem:[%s209 + $0x1b20] sm:$0xff]
        %v4187 = vld [vmem:[%s209 + $0x1b28] sm:$0xff]
        %v4188 = vld [vmem:[%s209 + $0x1b30] sm:$0xff]
        %v4189 = vld [vmem:[%s209 + $0x1b38] sm:$0xff]
        %v4190 = vld [vmem:[%s209 + $0x1b40] sm:$0xff]
        %v4191 = vld [vmem:[%s209 + $0x1b48] sm:$0xff]
        %v4192 = vld [vmem:[%s209 + $0x1b50] sm:$0xff]
        %v4193 = vld [vmem:[%s209 + $0x1b58] sm:$0xff]
        %v4194 = vld [vmem:[%s209 + $0x1b60] sm:$0xff]
        %v4195 = vld [vmem:[%s209 + $0x1b68] sm:$0xff]
        %v4196 = vld [vmem:[%s209 + $0x1b70] sm:$0xff]
        %v4197 = vld [vmem:[%s209 + $0x1b78] sm:$0xff]
        %v4198 = vld [vmem:[%s209 + $0x1b80] sm:$0xff]
        %v4199 = vld [vmem:[%s209 + $0x1b88] sm:$0xff]
        %v4200 = vld [vmem:[%s209 + $0x1b90] sm:$0xff]
        %v4201 = vld [vmem:[%s209 + $0x1b98] sm:$0xff]
        %v4202 = vld [vmem:[%s209 + $0x1ba0] sm:$0xff]
        %v4203 = vld [vmem:[%s209 + $0x1ba8] sm:$0xff]
        %v4204 = vld [vmem:[%s209 + $0x1bb0] sm:$0xff]
        %v4205 = vld [vmem:[%s209 + $0x1bb8] sm:$0xff]
        %v4206 = vld [vmem:[%s209 + $0x1bc0] sm:$0xff]
        %v4207 = vld [vmem:[%s209 + $0x1bc8] sm:$0xff]
        %v4208 = vld [vmem:[%s209 + $0x1bd0] sm:$0xff]
        %v4209 = vld [vmem:[%s209 + $0x1bd8] sm:$0xff]
        %v4210 = vld [vmem:[%s209 + $0x1be0] sm:$0xff]
        %v4211 = vld [vmem:[%s209 + $0x1be8] sm:$0xff]
        %v4212 = vld [vmem:[%s209 + $0x1bf0] sm:$0xff]
        %v4213 = vld [vmem:[%s209 + $0x1bf8] sm:$0xff]
        %v4214 = vld [vmem:[%s209 + $0x1c00] sm:$0xff]
        %v4215 = vld [vmem:[%s209 + $0x1c08] sm:$0xff]
        %v4216 = vld [vmem:[%s209 + $0x1c10] sm:$0xff]
        %v4217 = vld [vmem:[%s209 + $0x1c18] sm:$0xff]
        %v4218 = vld [vmem:[%s209 + $0x1c20] sm:$0xff]
        %v4219 = vld [vmem:[%s209 + $0x1c28] sm:$0xff]
        %v4220 = vld [vmem:[%s209 + $0x1c30] sm:$0xff]
        %v4221 = vld [vmem:[%s209 + $0x1c38] sm:$0xff]
        %v4222 = vld [vmem:[%s209 + $0x1c40] sm:$0xff]
        %v4223 = vld [vmem:[%s209 + $0x1c48] sm:$0xff]
        %v4224 = vld [vmem:[%s209 + $0x1c50] sm:$0xff]
        %v4225 = vld [vmem:[%s209 + $0x1c58] sm:$0xff]
        %v4226 = vld [vmem:[%s209 + $0x1c60] sm:$0xff]
        %v4227 = vld [vmem:[%s209 + $0x1c68] sm:$0xff]
        %v4228 = vld [vmem:[%s209 + $0x1c70] sm:$0xff]
        %v4229 = vld [vmem:[%s209 + $0x1c78] sm:$0xff]
        %v4230 = vld [vmem:[%s209 + $0x1c80] sm:$0xff]
        %v4231 = vld [vmem:[%s209 + $0x1c88] sm:$0xff]
        %v4232 = vld [vmem:[%s209 + $0x1c90] sm:$0xff]
        %v4233 = vld [vmem:[%s209 + $0x1c98] sm:$0xff]
        %v4234 = vld [vmem:[%s209 + $0x1ca0] sm:$0xff]
        %v4235 = vld [vmem:[%s209 + $0x1ca8] sm:$0xff]
        %v4236 = vld [vmem:[%s209 + $0x1cb0] sm:$0xff]
        %v4237 = vld [vmem:[%s209 + $0x1cb8] sm:$0xff]
        %v4238 = vld [vmem:[%s209 + $0x1cc0] sm:$0xff]
        %v4239 = vld [vmem:[%s209 + $0x1cc8] sm:$0xff]
        %v4240 = vld [vmem:[%s209 + $0x1cd0] sm:$0xff]
        %v4241 = vld [vmem:[%s209 + $0x1cd8] sm:$0xff]
        %v4242 = vld [vmem:[%s209 + $0x1ce0] sm:$0xff]
        %v4243 = vld [vmem:[%s209 + $0x1ce8] sm:$0xff]
        %v4244 = vld [vmem:[%s209 + $0x1cf0] sm:$0xff]
        %v4245 = vld [vmem:[%s209 + $0x1cf8] sm:$0xff]
        %v4246 = vld [vmem:[%s209 + $0x1d00] sm:$0xff]
        %v4247 = vld [vmem:[%s209 + $0x1d08] sm:$0xff]
        %v4248 = vld [vmem:[%s209 + $0x1d10] sm:$0xff]
        %v4249 = vld [vmem:[%s209 + $0x1d18] sm:$0xff]
        %v4250 = vld [vmem:[%s209 + $0x1d20] sm:$0xff]
        %v4251 = vld [vmem:[%s209 + $0x1d28] sm:$0xff]
        %v4252 = vld [vmem:[%s209 + $0x1d30] sm:$0xff]
        %v4253 = vld [vmem:[%s209 + $0x1d38] sm:$0xff]
        %v4254 = vld [vmem:[%s209 + $0x1d40] sm:$0xff]
        %v4255 = vld [vmem:[%s209 + $0x1d48] sm:$0xff]
        %v4256 = vld [vmem:[%s209 + $0x1d50] sm:$0xff]
        %v4257 = vld [vmem:[%s209 + $0x1d58] sm:$0xff]
        %v4258 = vld [vmem:[%s209 + $0x1d60] sm:$0xff]
        %v4259 = vld [vmem:[%s209 + $0x1d68] sm:$0xff]
        %v4260 = vld [vmem:[%s209 + $0x1d70] sm:$0xff]
        %v4261 = vld [vmem:[%s209 + $0x1d78] sm:$0xff]
        %v4262 = vld [vmem:[%s209 + $0x1d80] sm:$0xff]
        %v4263 = vld [vmem:[%s209 + $0x1d88] sm:$0xff]
        %v4264 = vld [vmem:[%s209 + $0x1d90] sm:$0xff]
        %v4265 = vld [vmem:[%s209 + $0x1d98] sm:$0xff]
        %v4266 = vld [vmem:[%s209 + $0x1da0] sm:$0xff]
        %v4267 = vld [vmem:[%s209 + $0x1da8] sm:$0xff]
        %v4268 = vld [vmem:[%s209 + $0x1db0] sm:$0xff]
        %v4269 = vld [vmem:[%s209 + $0x1db8] sm:$0xff]
        %v4270 = vld [vmem:[%s209 + $0x1dc0] sm:$0xff]
        %v4271 = vld [vmem:[%s209 + $0x1dc8] sm:$0xff]
        %v4272 = vld [vmem:[%s209 + $0x1dd0] sm:$0xff]
        %v4273 = vld [vmem:[%s209 + $0x1dd8] sm:$0xff]
        %v4274 = vld [vmem:[%s209 + $0x1de0] sm:$0xff]
        %v4275 = vld [vmem:[%s209 + $0x1de8] sm:$0xff]
        %v4276 = vld [vmem:[%s209 + $0x1df0] sm:$0xff]
        %v4277 = vld [vmem:[%s209 + $0x1df8] sm:$0xff]
        %v4278 = vld [vmem:[%s209 + $0x1e00] sm:$0xff]
        %v4279 = vld [vmem:[%s209 + $0x1e08] sm:$0xff]
        %v4280 = vld [vmem:[%s209 + $0x1e10] sm:$0xff]
        %v4281 = vld [vmem:[%s209 + $0x1e18] sm:$0xff]
        %v4282 = vld [vmem:[%s209 + $0x1e20] sm:$0xff]
        %v4283 = vld [vmem:[%s209 + $0x1e28] sm:$0xff]
        %v4284 = vld [vmem:[%s209 + $0x1e30] sm:$0xff]
        %v4285 = vld [vmem:[%s209 + $0x1e38] sm:$0xff]
        %v4286 = vld [vmem:[%s209 + $0x1e40] sm:$0xff]
        %v4287 = vld [vmem:[%s209 + $0x1e48] sm:$0xff]
        %v4288 = vld [vmem:[%s209 + $0x1e50] sm:$0xff]
        %v4289 = vld [vmem:[%s209 + $0x1e58] sm:$0xff]
        %v4290 = vld [vmem:[%s209 + $0x1e60] sm:$0xff]
        %v4291 = vld [vmem:[%s209 + $0x1e68] sm:$0xff]
        %v4292 = vld [vmem:[%s209 + $0x1e70] sm:$0xff]
        %v4293 = vld [vmem:[%s209 + $0x1e78] sm:$0xff]
        %v4294 = vld [vmem:[%s209 + $0x1e80] sm:$0xff]
        %v4295 = vld [vmem:[%s209 + $0x1e88] sm:$0xff]
        %v4296 = vld [vmem:[%s209 + $0x1e90] sm:$0xff]
        %v4297 = vld [vmem:[%s209 + $0x1e98] sm:$0xff]
        %v4298 = vld [vmem:[%s209 + $0x1ea0] sm:$0xff]
        %v4299 = vld [vmem:[%s209 + $0x1ea8] sm:$0xff]
        %v4300 = vld [vmem:[%s209 + $0x1eb0] sm:$0xff]
        %v4301 = vld [vmem:[%s209 + $0x1eb8] sm:$0xff]
        %v4302 = vld [vmem:[%s209 + $0x1ec0] sm:$0xff]
        %v4303 = vld [vmem:[%s209 + $0x1ec8] sm:$0xff]
        %v4304 = vld [vmem:[%s209 + $0x1ed0] sm:$0xff]
        %v4305 = vld [vmem:[%s209 + $0x1ed8] sm:$0xff]
        %v4306 = vld [vmem:[%s209 + $0x1ee0] sm:$0xff]
        %v4307 = vld [vmem:[%s209 + $0x1ee8] sm:$0xff]
        %v4308 = vld [vmem:[%s209 + $0x1ef0] sm:$0xff]
        %v4309 = vld [vmem:[%s209 + $0x1ef8] sm:$0xff]
        %v4310 = vld [vmem:[%s209 + $0x1f00] sm:$0xff]
        %v4311 = vld [vmem:[%s209 + $0x1f08] sm:$0xff]
        %v4312 = vld [vmem:[%s209 + $0x1f10] sm:$0xff]
        %v4313 = vld [vmem:[%s209 + $0x1f18] sm:$0xff]
        %v4314 = vld [vmem:[%s209 + $0x1f20] sm:$0xff]
        %v4315 = vld [vmem:[%s209 + $0x1f28] sm:$0xff]
        %v4316 = vld [vmem:[%s209 + $0x1f30] sm:$0xff]
        %v4317 = vld [vmem:[%s209 + $0x1f38] sm:$0xff]
        %v4318 = vld [vmem:[%s209 + $0x1f40] sm:$0xff]
        %v4319 = vld [vmem:[%s209 + $0x1f48] sm:$0xff]
        %v4320 = vld [vmem:[%s209 + $0x1f50] sm:$0xff]
        %v4321 = vld [vmem:[%s209 + $0x1f58] sm:$0xff]
        %v4322 = vld [vmem:[%s209 + $0x1f60] sm:$0xff]
        %v4323 = vld [vmem:[%s209 + $0x1f68] sm:$0xff]
        %v4324 = vld [vmem:[%s209 + $0x1f70] sm:$0xff]
        %v4325 = vld [vmem:[%s209 + $0x1f78] sm:$0xff]
        %v4326 = vld [vmem:[%s209 + $0x1f80] sm:$0xff]
        %v4327 = vld [vmem:[%s209 + $0x1f88] sm:$0xff]
        %v4328 = vld [vmem:[%s209 + $0x1f90] sm:$0xff]
        %v4329 = vld [vmem:[%s209 + $0x1f98] sm:$0xff]
        %v4330 = vld [vmem:[%s209 + $0x1fa0] sm:$0xff]
        %v4331 = vld [vmem:[%s209 + $0x1fa8] sm:$0xff]
        %v4332 = vld [vmem:[%s209 + $0x1fb0] sm:$0xff]
        %v4333 = vld [vmem:[%s209 + $0x1fb8] sm:$0xff]
        %v4334 = vld [vmem:[%s209 + $0x1fc0] sm:$0xff]
        %v4335 = vld [vmem:[%s209 + $0x1fc8] sm:$0xff]
        %v4336 = vld [vmem:[%s209 + $0x1fd0] sm:$0xff]
        %v4337 = vld [vmem:[%s209 + $0x1fd8] sm:$0xff]
        %v4338 = vld [vmem:[%s209 + $0x1fe0] sm:$0xff]
        %v4339 = vld [vmem:[%s209 + $0x1fe8] sm:$0xff]
        %v4340 = vld [vmem:[%s209 + $0x1ff0] sm:$0xff]
        %v4341 = vld [vmem:[%s209 + $0x1ff8] sm:$0xff]
        %v4342 = vmax.f32 %v3318, 0.0
        %v4343 = vmax.f32 %v3319, 0.0
        %v4344 = vmax.f32 %v3320, 0.0
        %v4345 = vmax.f32 %v3321, 0.0
        %v4346 = vmax.f32 %v3322, 0.0
        %v4347 = vmax.f32 %v3323, 0.0
        %v4348 = vmax.f32 %v3324, 0.0
        %v4349 = vmax.f32 %v3325, 0.0
        %v4350 = vmax.f32 %v3326, 0.0
        %v4351 = vmax.f32 %v3327, 0.0
        %v4352 = vmax.f32 %v3328, 0.0
        %v4353 = vmax.f32 %v3329, 0.0
        %v4354 = vmax.f32 %v3330, 0.0
        %v4355 = vmax.f32 %v3331, 0.0
        %v4356 = vmax.f32 %v3332, 0.0
        %v4357 = vmax.f32 %v3333, 0.0
        %v4358 = vmax.f32 %v3334, 0.0
        %v4359 = vmax.f32 %v3335, 0.0
        %v4360 = vmax.f32 %v3336, 0.0
        %v4361 = vmax.f32 %v3337, 0.0
        %v4362 = vmax.f32 %v3338, 0.0
        %v4363 = vmax.f32 %v3339, 0.0
        %v4364 = vmax.f32 %v3340, 0.0
        %v4365 = vmax.f32 %v3341, 0.0
        %v4366 = vmax.f32 %v3342, 0.0
        %v4367 = vmax.f32 %v3343, 0.0
        %v4368 = vmax.f32 %v3344, 0.0
        %v4369 = vmax.f32 %v3345, 0.0
        %v4370 = vmax.f32 %v3346, 0.0
        %v4371 = vmax.f32 %v3347, 0.0
        %v4372 = vmax.f32 %v3348, 0.0
        %v4373 = vmax.f32 %v3349, 0.0
        %v4374 = vmax.f32 %v3350, 0.0
        %v4375 = vmax.f32 %v3351, 0.0
        %v4376 = vmax.f32 %v3352, 0.0
        %v4377 = vmax.f32 %v3353, 0.0
        %v4378 = vmax.f32 %v3354, 0.0
        %v4379 = vmax.f32 %v3355, 0.0
        %v4380 = vmax.f32 %v3356, 0.0
        %v4381 = vmax.f32 %v3357, 0.0
        %v4382 = vmax.f32 %v3358, 0.0
        %v4383 = vmax.f32 %v3359, 0.0
        %v4384 = vmax.f32 %v3360, 0.0
        %v4385 = vmax.f32 %v3361, 0.0
        %v4386 = vmax.f32 %v3362, 0.0
        %v4387 = vmax.f32 %v3363, 0.0
        %v4388 = vmax.f32 %v3364, 0.0
        %v4389 = vmax.f32 %v3365, 0.0
        %v4390 = vmax.f32 %v3366, 0.0
        %v4391 = vmax.f32 %v3367, 0.0
        %v4392 = vmax.f32 %v3368, 0.0
        %v4393 = vmax.f32 %v3369, 0.0
        %v4394 = vmax.f32 %v3370, 0.0
        %v4395 = vmax.f32 %v3371, 0.0
        %v4396 = vmax.f32 %v3372, 0.0
        %v4397 = vmax.f32 %v3373, 0.0
        %v4398 = vmax.f32 %v3374, 0.0
        %v4399 = vmax.f32 %v3375, 0.0
        %v4400 = vmax.f32 %v3376, 0.0
        %v4401 = vmax.f32 %v3377, 0.0
        %v4402 = vmax.f32 %v3378, 0.0
        %v4403 = vmax.f32 %v3379, 0.0
        %v4404 = vmax.f32 %v3380, 0.0
        %v4405 = vmax.f32 %v3381, 0.0
        %v4406 = vmax.f32 %v3382, 0.0
        %v4407 = vmax.f32 %v3383, 0.0
        %v4408 = vmax.f32 %v3384, 0.0
        %v4409 = vmax.f32 %v3385, 0.0
        %v4410 = vmax.f32 %v3386, 0.0
        %v4411 = vmax.f32 %v3387, 0.0
        %v4412 = vmax.f32 %v3388, 0.0
        %v4413 = vmax.f32 %v3389, 0.0
        %v4414 = vmax.f32 %v3390, 0.0
        %v4415 = vmax.f32 %v3391, 0.0
        %v4416 = vmax.f32 %v3392, 0.0
        %v4417 = vmax.f32 %v3393, 0.0
        %v4418 = vmax.f32 %v3394, 0.0
        %v4419 = vmax.f32 %v3395, 0.0
        %v4420 = vmax.f32 %v3396, 0.0
        %v4421 = vmax.f32 %v3397, 0.0
        %v4422 = vmax.f32 %v3398, 0.0
        %v4423 = vmax.f32 %v3399, 0.0
        %v4424 = vmax.f32 %v3400, 0.0
        %v4425 = vmax.f32 %v3401, 0.0
        %v4426 = vmax.f32 %v3402, 0.0
        %v4427 = vmax.f32 %v3403, 0.0
        %v4428 = vmax.f32 %v3404, 0.0
        %v4429 = vmax.f32 %v3405, 0.0
        %v4430 = vmax.f32 %v3406, 0.0
        %v4431 = vmax.f32 %v3407, 0.0
        %v4432 = vmax.f32 %v3408, 0.0
        %v4433 = vmax.f32 %v3409, 0.0
        %v4434 = vmax.f32 %v3410, 0.0
        %v4435 = vmax.f32 %v3411, 0.0
        %v4436 = vmax.f32 %v3412, 0.0
        %v4437 = vmax.f32 %v3413, 0.0
        %v4438 = vmax.f32 %v3414, 0.0
        %v4439 = vmax.f32 %v3415, 0.0
        %v4440 = vmax.f32 %v3416, 0.0
        %v4441 = vmax.f32 %v3417, 0.0
        %v4442 = vmax.f32 %v3418, 0.0
        %v4443 = vmax.f32 %v3419, 0.0
        %v4444 = vmax.f32 %v3420, 0.0
        %v4445 = vmax.f32 %v3421, 0.0
        %v4446 = vmax.f32 %v3422, 0.0
        %v4447 = vmax.f32 %v3423, 0.0
        %v4448 = vmax.f32 %v3424, 0.0
        %v4449 = vmax.f32 %v3425, 0.0
        %v4450 = vmax.f32 %v3426, 0.0
        %v4451 = vmax.f32 %v3427, 0.0
        %v4452 = vmax.f32 %v3428, 0.0
        %v4453 = vmax.f32 %v3429, 0.0
        %v4454 = vmax.f32 %v3430, 0.0
        %v4455 = vmax.f32 %v3431, 0.0
        %v4456 = vmax.f32 %v3432, 0.0
        %v4457 = vmax.f32 %v3433, 0.0
        %v4458 = vmax.f32 %v3434, 0.0
        %v4459 = vmax.f32 %v3435, 0.0
        %v4460 = vmax.f32 %v3436, 0.0
        %v4461 = vmax.f32 %v3437, 0.0
        %v4462 = vmax.f32 %v3438, 0.0
        %v4463 = vmax.f32 %v3439, 0.0
        %v4464 = vmax.f32 %v3440, 0.0
        %v4465 = vmax.f32 %v3441, 0.0
        %v4466 = vmax.f32 %v3442, 0.0
        %v4467 = vmax.f32 %v3443, 0.0
        %v4468 = vmax.f32 %v3444, 0.0
        %v4469 = vmax.f32 %v3445, 0.0
        %v4470 = vmax.f32 %v3446, 0.0
        %v4471 = vmax.f32 %v3447, 0.0
        %v4472 = vmax.f32 %v3448, 0.0
        %v4473 = vmax.f32 %v3449, 0.0
        %v4474 = vmax.f32 %v3450, 0.0
        %v4475 = vmax.f32 %v3451, 0.0
        %v4476 = vmax.f32 %v3452, 0.0
        %v4477 = vmax.f32 %v3453, 0.0
        %v4478 = vmax.f32 %v3454, 0.0
        %v4479 = vmax.f32 %v3455, 0.0
        %v4480 = vmax.f32 %v3456, 0.0
        %v4481 = vmax.f32 %v3457, 0.0
        %v4482 = vmax.f32 %v3458, 0.0
        %v4483 = vmax.f32 %v3459, 0.0
        %v4484 = vmax.f32 %v3460, 0.0
        %v4485 = vmax.f32 %v3461, 0.0
        %v4486 = vmax.f32 %v3462, 0.0
        %v4487 = vmax.f32 %v3463, 0.0
        %v4488 = vmax.f32 %v3464, 0.0
        %v4489 = vmax.f32 %v3465, 0.0
        %v4490 = vmax.f32 %v3466, 0.0
        %v4491 = vmax.f32 %v3467, 0.0
        %v4492 = vmax.f32 %v3468, 0.0
        %v4493 = vmax.f32 %v3469, 0.0
        %v4494 = vmax.f32 %v3470, 0.0
        %v4495 = vmax.f32 %v3471, 0.0
        %v4496 = vmax.f32 %v3472, 0.0
        %v4497 = vmax.f32 %v3473, 0.0
        %v4498 = vmax.f32 %v3474, 0.0
        %v4499 = vmax.f32 %v3475, 0.0
        %v4500 = vmax.f32 %v3476, 0.0
        %v4501 = vmax.f32 %v3477, 0.0
        %v4502 = vmax.f32 %v3478, 0.0
        %v4503 = vmax.f32 %v3479, 0.0
        %v4504 = vmax.f32 %v3480, 0.0
        %v4505 = vmax.f32 %v3481, 0.0
        %v4506 = vmax.f32 %v3482, 0.0
        %v4507 = vmax.f32 %v3483, 0.0
        %v4508 = vmax.f32 %v3484, 0.0
        %v4509 = vmax.f32 %v3485, 0.0
        %v4510 = vmax.f32 %v3486, 0.0
        %v4511 = vmax.f32 %v3487, 0.0
        %v4512 = vmax.f32 %v3488, 0.0
        %v4513 = vmax.f32 %v3489, 0.0
        %v4514 = vmax.f32 %v3490, 0.0
        %v4515 = vmax.f32 %v3491, 0.0
        %v4516 = vmax.f32 %v3492, 0.0
        %v4517 = vmax.f32 %v3493, 0.0
        %v4518 = vmax.f32 %v3494, 0.0
        %v4519 = vmax.f32 %v3495, 0.0
        %v4520 = vmax.f32 %v3496, 0.0
        %v4521 = vmax.f32 %v3497, 0.0
        %v4522 = vmax.f32 %v3498, 0.0
        %v4523 = vmax.f32 %v3499, 0.0
        %v4524 = vmax.f32 %v3500, 0.0
        %v4525 = vmax.f32 %v3501, 0.0
        %v4526 = vmax.f32 %v3502, 0.0
        %v4527 = vmax.f32 %v3503, 0.0
        %v4528 = vmax.f32 %v3504, 0.0
        %v4529 = vmax.f32 %v3505, 0.0
        %v4530 = vmax.f32 %v3506, 0.0
        %v4531 = vmax.f32 %v3507, 0.0
        %v4532 = vmax.f32 %v3508, 0.0
        %v4533 = vmax.f32 %v3509, 0.0
        %v4534 = vmax.f32 %v3510, 0.0
        %v4535 = vmax.f32 %v3511, 0.0
        %v4536 = vmax.f32 %v3512, 0.0
        %v4537 = vmax.f32 %v3513, 0.0
        %v4538 = vmax.f32 %v3514, 0.0
        %v4539 = vmax.f32 %v3515, 0.0
        %v4540 = vmax.f32 %v3516, 0.0
        %v4541 = vmax.f32 %v3517, 0.0
        %v4542 = vmax.f32 %v3518, 0.0
        %v4543 = vmax.f32 %v3519, 0.0
        %v4544 = vmax.f32 %v3520, 0.0
        %v4545 = vmax.f32 %v3521, 0.0
        %v4546 = vmax.f32 %v3522, 0.0
        %v4547 = vmax.f32 %v3523, 0.0
        %v4548 = vmax.f32 %v3524, 0.0
        %v4549 = vmax.f32 %v3525, 0.0
        %v4550 = vmax.f32 %v3526, 0.0
        %v4551 = vmax.f32 %v3527, 0.0
        %v4552 = vmax.f32 %v3528, 0.0
        %v4553 = vmax.f32 %v3529, 0.0
        %v4554 = vmax.f32 %v3530, 0.0
        %v4555 = vmax.f32 %v3531, 0.0
        %v4556 = vmax.f32 %v3532, 0.0
        %v4557 = vmax.f32 %v3533, 0.0
        %v4558 = vmax.f32 %v3534, 0.0
        %v4559 = vmax.f32 %v3535, 0.0
        %v4560 = vmax.f32 %v3536, 0.0
        %v4561 = vmax.f32 %v3537, 0.0
        %v4562 = vmax.f32 %v3538, 0.0
        %v4563 = vmax.f32 %v3539, 0.0
        %v4564 = vmax.f32 %v3540, 0.0
        %v4565 = vmax.f32 %v3541, 0.0
        %v4566 = vmax.f32 %v3542, 0.0
        %v4567 = vmax.f32 %v3543, 0.0
        %v4568 = vmax.f32 %v3544, 0.0
        %v4569 = vmax.f32 %v3545, 0.0
        %v4570 = vmax.f32 %v3546, 0.0
        %v4571 = vmax.f32 %v3547, 0.0
        %v4572 = vmax.f32 %v3548, 0.0
        %v4573 = vmax.f32 %v3549, 0.0
        %v4574 = vmax.f32 %v3550, 0.0
        %v4575 = vmax.f32 %v3551, 0.0
        %v4576 = vmax.f32 %v3552, 0.0
        %v4577 = vmax.f32 %v3553, 0.0
        %v4578 = vmax.f32 %v3554, 0.0
        %v4579 = vmax.f32 %v3555, 0.0
        %v4580 = vmax.f32 %v3556, 0.0
        %v4581 = vmax.f32 %v3557, 0.0
        %v4582 = vmax.f32 %v3558, 0.0
        %v4583 = vmax.f32 %v3559, 0.0
        %v4584 = vmax.f32 %v3560, 0.0
        %v4585 = vmax.f32 %v3561, 0.0
        %v4586 = vmax.f32 %v3562, 0.0
        %v4587 = vmax.f32 %v3563, 0.0
        %v4588 = vmax.f32 %v3564, 0.0
        %v4589 = vmax.f32 %v3565, 0.0
        %v4590 = vmax.f32 %v3566, 0.0
        %v4591 = vmax.f32 %v3567, 0.0
        %v4592 = vmax.f32 %v3568, 0.0
        %v4593 = vmax.f32 %v3569, 0.0
        %v4594 = vmax.f32 %v3570, 0.0
        %v4595 = vmax.f32 %v3571, 0.0
        %v4596 = vmax.f32 %v3572, 0.0
        %v4597 = vmax.f32 %v3573, 0.0
        %v4598 = vmax.f32 %v3574, 0.0
        %v4599 = vmax.f32 %v3575, 0.0
        %v4600 = vmax.f32 %v3576, 0.0
        %v4601 = vmax.f32 %v3577, 0.0
        %v4602 = vmax.f32 %v3578, 0.0
        %v4603 = vmax.f32 %v3579, 0.0
        %v4604 = vmax.f32 %v3580, 0.0
        %v4605 = vmax.f32 %v3581, 0.0
        %v4606 = vmax.f32 %v3582, 0.0
        %v4607 = vmax.f32 %v3583, 0.0
        %v4608 = vmax.f32 %v3584, 0.0
        %v4609 = vmax.f32 %v3585, 0.0
        %v4610 = vmax.f32 %v3586, 0.0
        %v4611 = vmax.f32 %v3587, 0.0
        %v4612 = vmax.f32 %v3588, 0.0
        %v4613 = vmax.f32 %v3589, 0.0
        %v4614 = vmax.f32 %v3590, 0.0
        %v4615 = vmax.f32 %v3591, 0.0
        %v4616 = vmax.f32 %v3592, 0.0
        %v4617 = vmax.f32 %v3593, 0.0
        %v4618 = vmax.f32 %v3594, 0.0
        %v4619 = vmax.f32 %v3595, 0.0
        %v4620 = vmax.f32 %v3596, 0.0
        %v4621 = vmax.f32 %v3597, 0.0
        %v4622 = vmax.f32 %v3598, 0.0
        %v4623 = vmax.f32 %v3599, 0.0
        %v4624 = vmax.f32 %v3600, 0.0
        %v4625 = vmax.f32 %v3601, 0.0
        %v4626 = vmax.f32 %v3602, 0.0
        %v4627 = vmax.f32 %v3603, 0.0
        %v4628 = vmax.f32 %v3604, 0.0
        %v4629 = vmax.f32 %v3605, 0.0
        %v4630 = vmax.f32 %v3606, 0.0
        %v4631 = vmax.f32 %v3607, 0.0
        %v4632 = vmax.f32 %v3608, 0.0
        %v4633 = vmax.f32 %v3609, 0.0
        %v4634 = vmax.f32 %v3610, 0.0
        %v4635 = vmax.f32 %v3611, 0.0
        %v4636 = vmax.f32 %v3612, 0.0
        %v4637 = vmax.f32 %v3613, 0.0
        %v4638 = vmax.f32 %v3614, 0.0
        %v4639 = vmax.f32 %v3615, 0.0
        %v4640 = vmax.f32 %v3616, 0.0
        %v4641 = vmax.f32 %v3617, 0.0
        %v4642 = vmax.f32 %v3618, 0.0
        %v4643 = vmax.f32 %v3619, 0.0
        %v4644 = vmax.f32 %v3620, 0.0
        %v4645 = vmax.f32 %v3621, 0.0
        %v4646 = vmax.f32 %v3622, 0.0
        %v4647 = vmax.f32 %v3623, 0.0
        %v4648 = vmax.f32 %v3624, 0.0
        %v4649 = vmax.f32 %v3625, 0.0
        %v4650 = vmax.f32 %v3626, 0.0
        %v4651 = vmax.f32 %v3627, 0.0
        %v4652 = vmax.f32 %v3628, 0.0
        %v4653 = vmax.f32 %v3629, 0.0
        %v4654 = vmax.f32 %v3630, 0.0
        %v4655 = vmax.f32 %v3631, 0.0
        %v4656 = vmax.f32 %v3632, 0.0
        %v4657 = vmax.f32 %v3633, 0.0
        %v4658 = vmax.f32 %v3634, 0.0
        %v4659 = vmax.f32 %v3635, 0.0
        %v4660 = vmax.f32 %v3636, 0.0
        %v4661 = vmax.f32 %v3637, 0.0
        %v4662 = vmax.f32 %v3638, 0.0
        %v4663 = vmax.f32 %v3639, 0.0
        %v4664 = vmax.f32 %v3640, 0.0
        %v4665 = vmax.f32 %v3641, 0.0
        %v4666 = vmax.f32 %v3642, 0.0
        %v4667 = vmax.f32 %v3643, 0.0
        %v4668 = vmax.f32 %v3644, 0.0
        %v4669 = vmax.f32 %v3645, 0.0
        %v4670 = vmax.f32 %v3646, 0.0
        %v4671 = vmax.f32 %v3647, 0.0
        %v4672 = vmax.f32 %v3648, 0.0
        %v4673 = vmax.f32 %v3649, 0.0
        %v4674 = vmax.f32 %v3650, 0.0
        %v4675 = vmax.f32 %v3651, 0.0
        %v4676 = vmax.f32 %v3652, 0.0
        %v4677 = vmax.f32 %v3653, 0.0
        %v4678 = vmax.f32 %v3654, 0.0
        %v4679 = vmax.f32 %v3655, 0.0
        %v4680 = vmax.f32 %v3656, 0.0
        %v4681 = vmax.f32 %v3657, 0.0
        %v4682 = vmax.f32 %v3658, 0.0
        %v4683 = vmax.f32 %v3659, 0.0
        %v4684 = vmax.f32 %v3660, 0.0
        %v4685 = vmax.f32 %v3661, 0.0
        %v4686 = vmax.f32 %v3662, 0.0
        %v4687 = vmax.f32 %v3663, 0.0
        %v4688 = vmax.f32 %v3664, 0.0
        %v4689 = vmax.f32 %v3665, 0.0
        %v4690 = vmax.f32 %v3666, 0.0
        %v4691 = vmax.f32 %v3667, 0.0
        %v4692 = vmax.f32 %v3668, 0.0
        %v4693 = vmax.f32 %v3669, 0.0
        %v4694 = vmax.f32 %v3670, 0.0
        %v4695 = vmax.f32 %v3671, 0.0
        %v4696 = vmax.f32 %v3672, 0.0
        %v4697 = vmax.f32 %v3673, 0.0
        %v4698 = vmax.f32 %v3674, 0.0
        %v4699 = vmax.f32 %v3675, 0.0
        %v4700 = vmax.f32 %v3676, 0.0
        %v4701 = vmax.f32 %v3677, 0.0
        %v4702 = vmax.f32 %v3678, 0.0
        %v4703 = vmax.f32 %v3679, 0.0
        %v4704 = vmax.f32 %v3680, 0.0
        %v4705 = vmax.f32 %v3681, 0.0
        %v4706 = vmax.f32 %v3682, 0.0
        %v4707 = vmax.f32 %v3683, 0.0
        %v4708 = vmax.f32 %v3684, 0.0
        %v4709 = vmax.f32 %v3685, 0.0
        %v4710 = vmax.f32 %v3686, 0.0
        %v4711 = vmax.f32 %v3687, 0.0
        %v4712 = vmax.f32 %v3688, 0.0
        %v4713 = vmax.f32 %v3689, 0.0
        %v4714 = vmax.f32 %v3690, 0.0
        %v4715 = vmax.f32 %v3691, 0.0
        %v4716 = vmax.f32 %v3692, 0.0
        %v4717 = vmax.f32 %v3693, 0.0
        %v4718 = vmax.f32 %v3694, 0.0
        %v4719 = vmax.f32 %v3695, 0.0
        %v4720 = vmax.f32 %v3696, 0.0
        %v4721 = vmax.f32 %v3697, 0.0
        %v4722 = vmax.f32 %v3698, 0.0
        %v4723 = vmax.f32 %v3699, 0.0
        %v4724 = vmax.f32 %v3700, 0.0
        %v4725 = vmax.f32 %v3701, 0.0
        %v4726 = vmax.f32 %v3702, 0.0
        %v4727 = vmax.f32 %v3703, 0.0
        %v4728 = vmax.f32 %v3704, 0.0
        %v4729 = vmax.f32 %v3705, 0.0
        %v4730 = vmax.f32 %v3706, 0.0
        %v4731 = vmax.f32 %v3707, 0.0
        %v4732 = vmax.f32 %v3708, 0.0
        %v4733 = vmax.f32 %v3709, 0.0
        %v4734 = vmax.f32 %v3710, 0.0
        %v4735 = vmax.f32 %v3711, 0.0
        %v4736 = vmax.f32 %v3712, 0.0
        %v4737 = vmax.f32 %v3713, 0.0
        %v4738 = vmax.f32 %v3714, 0.0
        %v4739 = vmax.f32 %v3715, 0.0
        %v4740 = vmax.f32 %v3716, 0.0
        %v4741 = vmax.f32 %v3717, 0.0
        %v4742 = vmax.f32 %v3718, 0.0
        %v4743 = vmax.f32 %v3719, 0.0
        %v4744 = vmax.f32 %v3720, 0.0
        %v4745 = vmax.f32 %v3721, 0.0
        %v4746 = vmax.f32 %v3722, 0.0
        %v4747 = vmax.f32 %v3723, 0.0
        %v4748 = vmax.f32 %v3724, 0.0
        %v4749 = vmax.f32 %v3725, 0.0
        %v4750 = vmax.f32 %v3726, 0.0
        %v4751 = vmax.f32 %v3727, 0.0
        %v4752 = vmax.f32 %v3728, 0.0
        %v4753 = vmax.f32 %v3729, 0.0
        %v4754 = vmax.f32 %v3730, 0.0
        %v4755 = vmax.f32 %v3731, 0.0
        %v4756 = vmax.f32 %v3732, 0.0
        %v4757 = vmax.f32 %v3733, 0.0
        %v4758 = vmax.f32 %v3734, 0.0
        %v4759 = vmax.f32 %v3735, 0.0
        %v4760 = vmax.f32 %v3736, 0.0
        %v4761 = vmax.f32 %v3737, 0.0
        %v4762 = vmax.f32 %v3738, 0.0
        %v4763 = vmax.f32 %v3739, 0.0
        %v4764 = vmax.f32 %v3740, 0.0
        %v4765 = vmax.f32 %v3741, 0.0
        %v4766 = vmax.f32 %v3742, 0.0
        %v4767 = vmax.f32 %v3743, 0.0
        %v4768 = vmax.f32 %v3744, 0.0
        %v4769 = vmax.f32 %v3745, 0.0
        %v4770 = vmax.f32 %v3746, 0.0
        %v4771 = vmax.f32 %v3747, 0.0
        %v4772 = vmax.f32 %v3748, 0.0
        %v4773 = vmax.f32 %v3749, 0.0
        %v4774 = vmax.f32 %v3750, 0.0
        %v4775 = vmax.f32 %v3751, 0.0
        %v4776 = vmax.f32 %v3752, 0.0
        %v4777 = vmax.f32 %v3753, 0.0
        %v4778 = vmax.f32 %v3754, 0.0
        %v4779 = vmax.f32 %v3755, 0.0
        %v4780 = vmax.f32 %v3756, 0.0
        %v4781 = vmax.f32 %v3757, 0.0
        %v4782 = vmax.f32 %v3758, 0.0
        %v4783 = vmax.f32 %v3759, 0.0
        %v4784 = vmax.f32 %v3760, 0.0
        %v4785 = vmax.f32 %v3761, 0.0
        %v4786 = vmax.f32 %v3762, 0.0
        %v4787 = vmax.f32 %v3763, 0.0
        %v4788 = vmax.f32 %v3764, 0.0
        %v4789 = vmax.f32 %v3765, 0.0
        %v4790 = vmax.f32 %v3766, 0.0
        %v4791 = vmax.f32 %v3767, 0.0
        %v4792 = vmax.f32 %v3768, 0.0
        %v4793 = vmax.f32 %v3769, 0.0
        %v4794 = vmax.f32 %v3770, 0.0
        %v4795 = vmax.f32 %v3771, 0.0
        %v4796 = vmax.f32 %v3772, 0.0
        %v4797 = vmax.f32 %v3773, 0.0
        %v4798 = vmax.f32 %v3774, 0.0
        %v4799 = vmax.f32 %v3775, 0.0
        %v4800 = vmax.f32 %v3776, 0.0
        %v4801 = vmax.f32 %v3777, 0.0
        %v4802 = vmax.f32 %v3778, 0.0
        %v4803 = vmax.f32 %v3779, 0.0
        %v4804 = vmax.f32 %v3780, 0.0
        %v4805 = vmax.f32 %v3781, 0.0
        %v4806 = vmax.f32 %v3782, 0.0
        %v4807 = vmax.f32 %v3783, 0.0
        %v4808 = vmax.f32 %v3784, 0.0
        %v4809 = vmax.f32 %v3785, 0.0
        %v4810 = vmax.f32 %v3786, 0.0
        %v4811 = vmax.f32 %v3787, 0.0
        %v4812 = vmax.f32 %v3788, 0.0
        %v4813 = vmax.f32 %v3789, 0.0
        %v4814 = vmax.f32 %v3790, 0.0
        %v4815 = vmax.f32 %v3791, 0.0
        %v4816 = vmax.f32 %v3792, 0.0
        %v4817 = vmax.f32 %v3793, 0.0
        %v4818 = vmax.f32 %v3794, 0.0
        %v4819 = vmax.f32 %v3795, 0.0
        %v4820 = vmax.f32 %v3796, 0.0
        %v4821 = vmax.f32 %v3797, 0.0
        %v4822 = vmax.f32 %v3798, 0.0
        %v4823 = vmax.f32 %v3799, 0.0
        %v4824 = vmax.f32 %v3800, 0.0
        %v4825 = vmax.f32 %v3801, 0.0
        %v4826 = vmax.f32 %v3802, 0.0
        %v4827 = vmax.f32 %v3803, 0.0
        %v4828 = vmax.f32 %v3804, 0.0
        %v4829 = vmax.f32 %v3805, 0.0
        %v4830 = vmax.f32 %v3806, 0.0
        %v4831 = vmax.f32 %v3807, 0.0
        %v4832 = vmax.f32 %v3808, 0.0
        %v4833 = vmax.f32 %v3809, 0.0
        %v4834 = vmax.f32 %v3810, 0.0
        %v4835 = vmax.f32 %v3811, 0.0
        %v4836 = vmax.f32 %v3812, 0.0
        %v4837 = vmax.f32 %v3813, 0.0
        %v4838 = vmax.f32 %v3814, 0.0
        %v4839 = vmax.f32 %v3815, 0.0
        %v4840 = vmax.f32 %v3816, 0.0
        %v4841 = vmax.f32 %v3817, 0.0
        %v4842 = vmax.f32 %v3818, 0.0
        %v4843 = vmax.f32 %v3819, 0.0
        %v4844 = vmax.f32 %v3820, 0.0
        %v4845 = vmax.f32 %v3821, 0.0
        %v4846 = vmax.f32 %v3822, 0.0
        %v4847 = vmax.f32 %v3823, 0.0
        %v4848 = vmax.f32 %v3824, 0.0
        %v4849 = vmax.f32 %v3825, 0.0
        %v4850 = vmax.f32 %v3826, 0.0
        %v4851 = vmax.f32 %v3827, 0.0
        %v4852 = vmax.f32 %v3828, 0.0
        %v4853 = vmax.f32 %v3829, 0.0
        %v4854 = vmax.f32 %v3830, 0.0
        %v4855 = vmax.f32 %v3831, 0.0
        %v4856 = vmax.f32 %v3832, 0.0
        %v4857 = vmax.f32 %v3833, 0.0
        %v4858 = vmax.f32 %v3834, 0.0
        %v4859 = vmax.f32 %v3835, 0.0
        %v4860 = vmax.f32 %v3836, 0.0
        %v4861 = vmax.f32 %v3837, 0.0
        %v4862 = vmax.f32 %v3838, 0.0
        %v4863 = vmax.f32 %v3839, 0.0
        %v4864 = vmax.f32 %v3840, 0.0
        %v4865 = vmax.f32 %v3841, 0.0
        %v4866 = vmax.f32 %v3842, 0.0
        %v4867 = vmax.f32 %v3843, 0.0
        %v4868 = vmax.f32 %v3844, 0.0
        %v4869 = vmax.f32 %v3845, 0.0
        %v4870 = vmax.f32 %v3846, 0.0
        %v4871 = vmax.f32 %v3847, 0.0
        %v4872 = vmax.f32 %v3848, 0.0
        %v4873 = vmax.f32 %v3849, 0.0
        %v4874 = vmax.f32 %v3850, 0.0
        %v4875 = vmax.f32 %v3851, 0.0
        %v4876 = vmax.f32 %v3852, 0.0
        %v4877 = vmax.f32 %v3853, 0.0
        %v4878 = vmax.f32 %v3854, 0.0
        %v4879 = vmax.f32 %v3855, 0.0
        %v4880 = vmax.f32 %v3856, 0.0
        %v4881 = vmax.f32 %v3857, 0.0
        %v4882 = vmax.f32 %v3858, 0.0
        %v4883 = vmax.f32 %v3859, 0.0
        %v4884 = vmax.f32 %v3860, 0.0
        %v4885 = vmax.f32 %v3861, 0.0
        %v4886 = vmax.f32 %v3862, 0.0
        %v4887 = vmax.f32 %v3863, 0.0
        %v4888 = vmax.f32 %v3864, 0.0
        %v4889 = vmax.f32 %v3865, 0.0
        %v4890 = vmax.f32 %v3866, 0.0
        %v4891 = vmax.f32 %v3867, 0.0
        %v4892 = vmax.f32 %v3868, 0.0
        %v4893 = vmax.f32 %v3869, 0.0
        %v4894 = vmax.f32 %v3870, 0.0
        %v4895 = vmax.f32 %v3871, 0.0
        %v4896 = vmax.f32 %v3872, 0.0
        %v4897 = vmax.f32 %v3873, 0.0
        %v4898 = vmax.f32 %v3874, 0.0
        %v4899 = vmax.f32 %v3875, 0.0
        %v4900 = vmax.f32 %v3876, 0.0
        %v4901 = vmax.f32 %v3877, 0.0
        %v4902 = vmax.f32 %v3878, 0.0
        %v4903 = vmax.f32 %v3879, 0.0
        %v4904 = vmax.f32 %v3880, 0.0
        %v4905 = vmax.f32 %v3881, 0.0
        %v4906 = vmax.f32 %v3882, 0.0
        %v4907 = vmax.f32 %v3883, 0.0
        %v4908 = vmax.f32 %v3884, 0.0
        %v4909 = vmax.f32 %v3885, 0.0
        %v4910 = vmax.f32 %v3886, 0.0
        %v4911 = vmax.f32 %v3887, 0.0
        %v4912 = vmax.f32 %v3888, 0.0
        %v4913 = vmax.f32 %v3889, 0.0
        %v4914 = vmax.f32 %v3890, 0.0
        %v4915 = vmax.f32 %v3891, 0.0
        %v4916 = vmax.f32 %v3892, 0.0
        %v4917 = vmax.f32 %v3893, 0.0
        %v4918 = vmax.f32 %v3894, 0.0
        %v4919 = vmax.f32 %v3895, 0.0
        %v4920 = vmax.f32 %v3896, 0.0
        %v4921 = vmax.f32 %v3897, 0.0
        %v4922 = vmax.f32 %v3898, 0.0
        %v4923 = vmax.f32 %v3899, 0.0
        %v4924 = vmax.f32 %v3900, 0.0
        %v4925 = vmax.f32 %v3901, 0.0
        %v4926 = vmax.f32 %v3902, 0.0
        %v4927 = vmax.f32 %v3903, 0.0
        %v4928 = vmax.f32 %v3904, 0.0
        %v4929 = vmax.f32 %v3905, 0.0
        %v4930 = vmax.f32 %v3906, 0.0
        %v4931 = vmax.f32 %v3907, 0.0
        %v4932 = vmax.f32 %v3908, 0.0
        %v4933 = vmax.f32 %v3909, 0.0
        %v4934 = vmax.f32 %v3910, 0.0
        %v4935 = vmax.f32 %v3911, 0.0
        %v4936 = vmax.f32 %v3912, 0.0
        %v4937 = vmax.f32 %v3913, 0.0
        %v4938 = vmax.f32 %v3914, 0.0
        %v4939 = vmax.f32 %v3915, 0.0
        %v4940 = vmax.f32 %v3916, 0.0
        %v4941 = vmax.f32 %v3917, 0.0
        %v4942 = vmax.f32 %v3918, 0.0
        %v4943 = vmax.f32 %v3919, 0.0
        %v4944 = vmax.f32 %v3920, 0.0
        %v4945 = vmax.f32 %v3921, 0.0
        %v4946 = vmax.f32 %v3922, 0.0
        %v4947 = vmax.f32 %v3923, 0.0
        %v4948 = vmax.f32 %v3924, 0.0
        %v4949 = vmax.f32 %v3925, 0.0
        %v4950 = vmax.f32 %v3926, 0.0
        %v4951 = vmax.f32 %v3927, 0.0
        %v4952 = vmax.f32 %v3928, 0.0
        %v4953 = vmax.f32 %v3929, 0.0
        %v4954 = vmax.f32 %v3930, 0.0
        %v4955 = vmax.f32 %v3931, 0.0
        %v4956 = vmax.f32 %v3932, 0.0
        %v4957 = vmax.f32 %v3933, 0.0
        %v4958 = vmax.f32 %v3934, 0.0
        %v4959 = vmax.f32 %v3935, 0.0
        %v4960 = vmax.f32 %v3936, 0.0
        %v4961 = vmax.f32 %v3937, 0.0
        %v4962 = vmax.f32 %v3938, 0.0
        %v4963 = vmax.f32 %v3939, 0.0
        %v4964 = vmax.f32 %v3940, 0.0
        %v4965 = vmax.f32 %v3941, 0.0
        %v4966 = vmax.f32 %v3942, 0.0
        %v4967 = vmax.f32 %v3943, 0.0
        %v4968 = vmax.f32 %v3944, 0.0
        %v4969 = vmax.f32 %v3945, 0.0
        %v4970 = vmax.f32 %v3946, 0.0
        %v4971 = vmax.f32 %v3947, 0.0
        %v4972 = vmax.f32 %v3948, 0.0
        %v4973 = vmax.f32 %v3949, 0.0
        %v4974 = vmax.f32 %v3950, 0.0
        %v4975 = vmax.f32 %v3951, 0.0
        %v4976 = vmax.f32 %v3952, 0.0
        %v4977 = vmax.f32 %v3953, 0.0
        %v4978 = vmax.f32 %v3954, 0.0
        %v4979 = vmax.f32 %v3955, 0.0
        %v4980 = vmax.f32 %v3956, 0.0
        %v4981 = vmax.f32 %v3957, 0.0
        %v4982 = vmax.f32 %v3958, 0.0
        %v4983 = vmax.f32 %v3959, 0.0
        %v4984 = vmax.f32 %v3960, 0.0
        %v4985 = vmax.f32 %v3961, 0.0
        %v4986 = vmax.f32 %v3962, 0.0
        %v4987 = vmax.f32 %v3963, 0.0
        %v4988 = vmax.f32 %v3964, 0.0
        %v4989 = vmax.f32 %v3965, 0.0
        %v4990 = vmax.f32 %v3966, 0.0
        %v4991 = vmax.f32 %v3967, 0.0
        %v4992 = vmax.f32 %v3968, 0.0
        %v4993 = vmax.f32 %v3969, 0.0
        %v4994 = vmax.f32 %v3970, 0.0
        %v4995 = vmax.f32 %v3971, 0.0
        %v4996 = vmax.f32 %v3972, 0.0
        %v4997 = vmax.f32 %v3973, 0.0
        %v4998 = vmax.f32 %v3974, 0.0
        %v4999 = vmax.f32 %v3975, 0.0
        %v5000 = vmax.f32 %v3976, 0.0
        %v5001 = vmax.f32 %v3977, 0.0
        %v5002 = vmax.f32 %v3978, 0.0
        %v5003 = vmax.f32 %v3979, 0.0
        %v5004 = vmax.f32 %v3980, 0.0
        %v5005 = vmax.f32 %v3981, 0.0
        %v5006 = vmax.f32 %v3982, 0.0
        %v5007 = vmax.f32 %v3983, 0.0
        %v5008 = vmax.f32 %v3984, 0.0
        %v5009 = vmax.f32 %v3985, 0.0
        %v5010 = vmax.f32 %v3986, 0.0
        %v5011 = vmax.f32 %v3987, 0.0
        %v5012 = vmax.f32 %v3988, 0.0
        %v5013 = vmax.f32 %v3989, 0.0
        %v5014 = vmax.f32 %v3990, 0.0
        %v5015 = vmax.f32 %v3991, 0.0
        %v5016 = vmax.f32 %v3992, 0.0
        %v5017 = vmax.f32 %v3993, 0.0
        %v5018 = vmax.f32 %v3994, 0.0
        %v5019 = vmax.f32 %v3995, 0.0
        %v5020 = vmax.f32 %v3996, 0.0
        %v5021 = vmax.f32 %v3997, 0.0
        %v5022 = vmax.f32 %v3998, 0.0
        %v5023 = vmax.f32 %v3999, 0.0
        %v5024 = vmax.f32 %v4000, 0.0
        %v5025 = vmax.f32 %v4001, 0.0
        %v5026 = vmax.f32 %v4002, 0.0
        %v5027 = vmax.f32 %v4003, 0.0
        %v5028 = vmax.f32 %v4004, 0.0
        %v5029 = vmax.f32 %v4005, 0.0
        %v5030 = vmax.f32 %v4006, 0.0
        %v5031 = vmax.f32 %v4007, 0.0
        %v5032 = vmax.f32 %v4008, 0.0
        %v5033 = vmax.f32 %v4009, 0.0
        %v5034 = vmax.f32 %v4010, 0.0
        %v5035 = vmax.f32 %v4011, 0.0
        %v5036 = vmax.f32 %v4012, 0.0
        %v5037 = vmax.f32 %v4013, 0.0
        %v5038 = vmax.f32 %v4014, 0.0
        %v5039 = vmax.f32 %v4015, 0.0
        %v5040 = vmax.f32 %v4016, 0.0
        %v5041 = vmax.f32 %v4017, 0.0
        %v5042 = vmax.f32 %v4018, 0.0
        %v5043 = vmax.f32 %v4019, 0.0
        %v5044 = vmax.f32 %v4020, 0.0
        %v5045 = vmax.f32 %v4021, 0.0
        %v5046 = vmax.f32 %v4022, 0.0
        %v5047 = vmax.f32 %v4023, 0.0
        %v5048 = vmax.f32 %v4024, 0.0
        %v5049 = vmax.f32 %v4025, 0.0
        %v5050 = vmax.f32 %v4026, 0.0
        %v5051 = vmax.f32 %v4027, 0.0
        %v5052 = vmax.f32 %v4028, 0.0
        %v5053 = vmax.f32 %v4029, 0.0
        %v5054 = vmax.f32 %v4030, 0.0
        %v5055 = vmax.f32 %v4031, 0.0
        %v5056 = vmax.f32 %v4032, 0.0
        %v5057 = vmax.f32 %v4033, 0.0
        %v5058 = vmax.f32 %v4034, 0.0
        %v5059 = vmax.f32 %v4035, 0.0
        %v5060 = vmax.f32 %v4036, 0.0
        %v5061 = vmax.f32 %v4037, 0.0
        %v5062 = vmax.f32 %v4038, 0.0
        %v5063 = vmax.f32 %v4039, 0.0
        %v5064 = vmax.f32 %v4040, 0.0
        %v5065 = vmax.f32 %v4041, 0.0
        %v5066 = vmax.f32 %v4042, 0.0
        %v5067 = vmax.f32 %v4043, 0.0
        %v5068 = vmax.f32 %v4044, 0.0
        %v5069 = vmax.f32 %v4045, 0.0
        %v5070 = vmax.f32 %v4046, 0.0
        %v5071 = vmax.f32 %v4047, 0.0
        %v5072 = vmax.f32 %v4048, 0.0
        %v5073 = vmax.f32 %v4049, 0.0
        %v5074 = vmax.f32 %v4050, 0.0
        %v5075 = vmax.f32 %v4051, 0.0
        %v5076 = vmax.f32 %v4052, 0.0
        %v5077 = vmax.f32 %v4053, 0.0
        %v5078 = vmax.f32 %v4054, 0.0
        %v5079 = vmax.f32 %v4055, 0.0
        %v5080 = vmax.f32 %v4056, 0.0
        %v5081 = vmax.f32 %v4057, 0.0
        %v5082 = vmax.f32 %v4058, 0.0
        %v5083 = vmax.f32 %v4059, 0.0
        %v5084 = vmax.f32 %v4060, 0.0
        %v5085 = vmax.f32 %v4061, 0.0
        %v5086 = vmax.f32 %v4062, 0.0
        %v5087 = vmax.f32 %v4063, 0.0
        %v5088 = vmax.f32 %v4064, 0.0
        %v5089 = vmax.f32 %v4065, 0.0
        %v5090 = vmax.f32 %v4066, 0.0
        %v5091 = vmax.f32 %v4067, 0.0
        %v5092 = vmax.f32 %v4068, 0.0
        %v5093 = vmax.f32 %v4069, 0.0
        %v5094 = vmax.f32 %v4070, 0.0
        %v5095 = vmax.f32 %v4071, 0.0
        %v5096 = vmax.f32 %v4072, 0.0
        %v5097 = vmax.f32 %v4073, 0.0
        %v5098 = vmax.f32 %v4074, 0.0
        %v5099 = vmax.f32 %v4075, 0.0
        %v5100 = vmax.f32 %v4076, 0.0
        %v5101 = vmax.f32 %v4077, 0.0
        %v5102 = vmax.f32 %v4078, 0.0
        %v5103 = vmax.f32 %v4079, 0.0
        %v5104 = vmax.f32 %v4080, 0.0
        %v5105 = vmax.f32 %v4081, 0.0
        %v5106 = vmax.f32 %v4082, 0.0
        %v5107 = vmax.f32 %v4083, 0.0
        %v5108 = vmax.f32 %v4084, 0.0
        %v5109 = vmax.f32 %v4085, 0.0
        %v5110 = vmax.f32 %v4086, 0.0
        %v5111 = vmax.f32 %v4087, 0.0
        %v5112 = vmax.f32 %v4088, 0.0
        %v5113 = vmax.f32 %v4089, 0.0
        %v5114 = vmax.f32 %v4090, 0.0
        %v5115 = vmax.f32 %v4091, 0.0
        %v5116 = vmax.f32 %v4092, 0.0
        %v5117 = vmax.f32 %v4093, 0.0
        %v5118 = vmax.f32 %v4094, 0.0
        %v5119 = vmax.f32 %v4095, 0.0
        %v5120 = vmax.f32 %v4096, 0.0
        %v5121 = vmax.f32 %v4097, 0.0
        %v5122 = vmax.f32 %v4098, 0.0
        %v5123 = vmax.f32 %v4099, 0.0
        %v5124 = vmax.f32 %v4100, 0.0
        %v5125 = vmax.f32 %v4101, 0.0
        %v5126 = vmax.f32 %v4102, 0.0
        %v5127 = vmax.f32 %v4103, 0.0
        %v5128 = vmax.f32 %v4104, 0.0
        %v5129 = vmax.f32 %v4105, 0.0
        %v5130 = vmax.f32 %v4106, 0.0
        %v5131 = vmax.f32 %v4107, 0.0
        %v5132 = vmax.f32 %v4108, 0.0
        %v5133 = vmax.f32 %v4109, 0.0
        %v5134 = vmax.f32 %v4110, 0.0
        %v5135 = vmax.f32 %v4111, 0.0
        %v5136 = vmax.f32 %v4112, 0.0
        %v5137 = vmax.f32 %v4113, 0.0
        %v5138 = vmax.f32 %v4114, 0.0
        %v5139 = vmax.f32 %v4115, 0.0
        %v5140 = vmax.f32 %v4116, 0.0
        %v5141 = vmax.f32 %v4117, 0.0
        %v5142 = vmax.f32 %v4118, 0.0
        %v5143 = vmax.f32 %v4119, 0.0
        %v5144 = vmax.f32 %v4120, 0.0
        %v5145 = vmax.f32 %v4121, 0.0
        %v5146 = vmax.f32 %v4122, 0.0
        %v5147 = vmax.f32 %v4123, 0.0
        %v5148 = vmax.f32 %v4124, 0.0
        %v5149 = vmax.f32 %v4125, 0.0
        %v5150 = vmax.f32 %v4126, 0.0
        %v5151 = vmax.f32 %v4127, 0.0
        %v5152 = vmax.f32 %v4128, 0.0
        %v5153 = vmax.f32 %v4129, 0.0
        %v5154 = vmax.f32 %v4130, 0.0
        %v5155 = vmax.f32 %v4131, 0.0
        %v5156 = vmax.f32 %v4132, 0.0
        %v5157 = vmax.f32 %v4133, 0.0
        %v5158 = vmax.f32 %v4134, 0.0
        %v5159 = vmax.f32 %v4135, 0.0
        %v5160 = vmax.f32 %v4136, 0.0
        %v5161 = vmax.f32 %v4137, 0.0
        %v5162 = vmax.f32 %v4138, 0.0
        %v5163 = vmax.f32 %v4139, 0.0
        %v5164 = vmax.f32 %v4140, 0.0
        %v5165 = vmax.f32 %v4141, 0.0
        %v5166 = vmax.f32 %v4142, 0.0
        %v5167 = vmax.f32 %v4143, 0.0
        %v5168 = vmax.f32 %v4144, 0.0
        %v5169 = vmax.f32 %v4145, 0.0
        %v5170 = vmax.f32 %v4146, 0.0
        %v5171 = vmax.f32 %v4147, 0.0
        %v5172 = vmax.f32 %v4148, 0.0
        %v5173 = vmax.f32 %v4149, 0.0
        %v5174 = vmax.f32 %v4150, 0.0
        %v5175 = vmax.f32 %v4151, 0.0
        %v5176 = vmax.f32 %v4152, 0.0
        %v5177 = vmax.f32 %v4153, 0.0
        %v5178 = vmax.f32 %v4154, 0.0
        %v5179 = vmax.f32 %v4155, 0.0
        %v5180 = vmax.f32 %v4156, 0.0
        %v5181 = vmax.f32 %v4157, 0.0
        %v5182 = vmax.f32 %v4158, 0.0
        %v5183 = vmax.f32 %v4159, 0.0
        %v5184 = vmax.f32 %v4160, 0.0
        %v5185 = vmax.f32 %v4161, 0.0
        %v5186 = vmax.f32 %v4162, 0.0
        %v5187 = vmax.f32 %v4163, 0.0
        %v5188 = vmax.f32 %v4164, 0.0
        %v5189 = vmax.f32 %v4165, 0.0
        %v5190 = vmax.f32 %v4166, 0.0
        %v5191 = vmax.f32 %v4167, 0.0
        %v5192 = vmax.f32 %v4168, 0.0
        %v5193 = vmax.f32 %v4169, 0.0
        %v5194 = vmax.f32 %v4170, 0.0
        %v5195 = vmax.f32 %v4171, 0.0
        %v5196 = vmax.f32 %v4172, 0.0
        %v5197 = vmax.f32 %v4173, 0.0
        %v5198 = vmax.f32 %v4174, 0.0
        %v5199 = vmax.f32 %v4175, 0.0
        %v5200 = vmax.f32 %v4176, 0.0
        %v5201 = vmax.f32 %v4177, 0.0
        %v5202 = vmax.f32 %v4178, 0.0
        %v5203 = vmax.f32 %v4179, 0.0
        %v5204 = vmax.f32 %v4180, 0.0
        %v5205 = vmax.f32 %v4181, 0.0
        %v5206 = vmax.f32 %v4182, 0.0
        %v5207 = vmax.f32 %v4183, 0.0
        %v5208 = vmax.f32 %v4184, 0.0
        %v5209 = vmax.f32 %v4185, 0.0
        %v5210 = vmax.f32 %v4186, 0.0
        %v5211 = vmax.f32 %v4187, 0.0
        %v5212 = vmax.f32 %v4188, 0.0
        %v5213 = vmax.f32 %v4189, 0.0
        %v5214 = vmax.f32 %v4190, 0.0
        %v5215 = vmax.f32 %v4191, 0.0
        %v5216 = vmax.f32 %v4192, 0.0
        %v5217 = vmax.f32 %v4193, 0.0
        %v5218 = vmax.f32 %v4194, 0.0
        %v5219 = vmax.f32 %v4195, 0.0
        %v5220 = vmax.f32 %v4196, 0.0
        %v5221 = vmax.f32 %v4197, 0.0
        %v5222 = vmax.f32 %v4198, 0.0
        %v5223 = vmax.f32 %v4199, 0.0
        %v5224 = vmax.f32 %v4200, 0.0
        %v5225 = vmax.f32 %v4201, 0.0
        %v5226 = vmax.f32 %v4202, 0.0
        %v5227 = vmax.f32 %v4203, 0.0
        %v5228 = vmax.f32 %v4204, 0.0
        %v5229 = vmax.f32 %v4205, 0.0
        %v5230 = vmax.f32 %v4206, 0.0
        %v5231 = vmax.f32 %v4207, 0.0
        %v5232 = vmax.f32 %v4208, 0.0
        %v5233 = vmax.f32 %v4209, 0.0
        %v5234 = vmax.f32 %v4210, 0.0
        %v5235 = vmax.f32 %v4211, 0.0
        %v5236 = vmax.f32 %v4212, 0.0
        %v5237 = vmax.f32 %v4213, 0.0
        %v5238 = vmax.f32 %v4214, 0.0
        %v5239 = vmax.f32 %v4215, 0.0
        %v5240 = vmax.f32 %v4216, 0.0
        %v5241 = vmax.f32 %v4217, 0.0
        %v5242 = vmax.f32 %v4218, 0.0
        %v5243 = vmax.f32 %v4219, 0.0
        %v5244 = vmax.f32 %v4220, 0.0
        %v5245 = vmax.f32 %v4221, 0.0
        %v5246 = vmax.f32 %v4222, 0.0
        %v5247 = vmax.f32 %v4223, 0.0
        %v5248 = vmax.f32 %v4224, 0.0
        %v5249 = vmax.f32 %v4225, 0.0
        %v5250 = vmax.f32 %v4226, 0.0
        %v5251 = vmax.f32 %v4227, 0.0
        %v5252 = vmax.f32 %v4228, 0.0
        %v5253 = vmax.f32 %v4229, 0.0
        %v5254 = vmax.f32 %v4230, 0.0
        %v5255 = vmax.f32 %v4231, 0.0
        %v5256 = vmax.f32 %v4232, 0.0
        %v5257 = vmax.f32 %v4233, 0.0
        %v5258 = vmax.f32 %v4234, 0.0
        %v5259 = vmax.f32 %v4235, 0.0
        %v5260 = vmax.f32 %v4236, 0.0
        %v5261 = vmax.f32 %v4237, 0.0
        %v5262 = vmax.f32 %v4238, 0.0
        %v5263 = vmax.f32 %v4239, 0.0
        %v5264 = vmax.f32 %v4240, 0.0
        %v5265 = vmax.f32 %v4241, 0.0
        %v5266 = vmax.f32 %v4242, 0.0
        %v5267 = vmax.f32 %v4243, 0.0
        %v5268 = vmax.f32 %v4244, 0.0
        %v5269 = vmax.f32 %v4245, 0.0
        %v5270 = vmax.f32 %v4246, 0.0
        %v5271 = vmax.f32 %v4247, 0.0
        %v5272 = vmax.f32 %v4248, 0.0
        %v5273 = vmax.f32 %v4249, 0.0
        %v5274 = vmax.f32 %v4250, 0.0
        %v5275 = vmax.f32 %v4251, 0.0
        %v5276 = vmax.f32 %v4252, 0.0
        %v5277 = vmax.f32 %v4253, 0.0
        %v5278 = vmax.f32 %v4254, 0.0
        %v5279 = vmax.f32 %v4255, 0.0
        %v5280 = vmax.f32 %v4256, 0.0
        %v5281 = vmax.f32 %v4257, 0.0
        %v5282 = vmax.f32 %v4258, 0.0
        %v5283 = vmax.f32 %v4259, 0.0
        %v5284 = vmax.f32 %v4260, 0.0
        %v5285 = vmax.f32 %v4261, 0.0
        %v5286 = vmax.f32 %v4262, 0.0
        %v5287 = vmax.f32 %v4263, 0.0
        %v5288 = vmax.f32 %v4264, 0.0
        %v5289 = vmax.f32 %v4265, 0.0
        %v5290 = vmax.f32 %v4266, 0.0
        %v5291 = vmax.f32 %v4267, 0.0
        %v5292 = vmax.f32 %v4268, 0.0
        %v5293 = vmax.f32 %v4269, 0.0
        %v5294 = vmax.f32 %v4270, 0.0
        %v5295 = vmax.f32 %v4271, 0.0
        %v5296 = vmax.f32 %v4272, 0.0
        %v5297 = vmax.f32 %v4273, 0.0
        %v5298 = vmax.f32 %v4274, 0.0
        %v5299 = vmax.f32 %v4275, 0.0
        %v5300 = vmax.f32 %v4276, 0.0
        %v5301 = vmax.f32 %v4277, 0.0
        %v5302 = vmax.f32 %v4278, 0.0
        %v5303 = vmax.f32 %v4279, 0.0
        %v5304 = vmax.f32 %v4280, 0.0
        %v5305 = vmax.f32 %v4281, 0.0
        %v5306 = vmax.f32 %v4282, 0.0
        %v5307 = vmax.f32 %v4283, 0.0
        %v5308 = vmax.f32 %v4284, 0.0
        %v5309 = vmax.f32 %v4285, 0.0
        %v5310 = vmax.f32 %v4286, 0.0
        %v5311 = vmax.f32 %v4287, 0.0
        %v5312 = vmax.f32 %v4288, 0.0
        %v5313 = vmax.f32 %v4289, 0.0
        %v5314 = vmax.f32 %v4290, 0.0
        %v5315 = vmax.f32 %v4291, 0.0
        %v5316 = vmax.f32 %v4292, 0.0
        %v5317 = vmax.f32 %v4293, 0.0
        %v5318 = vmax.f32 %v4294, 0.0
        %v5319 = vmax.f32 %v4295, 0.0
        %v5320 = vmax.f32 %v4296, 0.0
        %v5321 = vmax.f32 %v4297, 0.0
        %v5322 = vmax.f32 %v4298, 0.0
        %v5323 = vmax.f32 %v4299, 0.0
        %v5324 = vmax.f32 %v4300, 0.0
        %v5325 = vmax.f32 %v4301, 0.0
        %v5326 = vmax.f32 %v4302, 0.0
        %v5327 = vmax.f32 %v4303, 0.0
        %v5328 = vmax.f32 %v4304, 0.0
        %v5329 = vmax.f32 %v4305, 0.0
        %v5330 = vmax.f32 %v4306, 0.0
        %v5331 = vmax.f32 %v4307, 0.0
        %v5332 = vmax.f32 %v4308, 0.0
        %v5333 = vmax.f32 %v4309, 0.0
        %v5334 = vmax.f32 %v4310, 0.0
        %v5335 = vmax.f32 %v4311, 0.0
        %v5336 = vmax.f32 %v4312, 0.0
        %v5337 = vmax.f32 %v4313, 0.0
        %v5338 = vmax.f32 %v4314, 0.0
        %v5339 = vmax.f32 %v4315, 0.0
        %v5340 = vmax.f32 %v4316, 0.0
        %v5341 = vmax.f32 %v4317, 0.0
        %v5342 = vmax.f32 %v4318, 0.0
        %v5343 = vmax.f32 %v4319, 0.0
        %v5344 = vmax.f32 %v4320, 0.0
        %v5345 = vmax.f32 %v4321, 0.0
        %v5346 = vmax.f32 %v4322, 0.0
        %v5347 = vmax.f32 %v4323, 0.0
        %v5348 = vmax.f32 %v4324, 0.0
        %v5349 = vmax.f32 %v4325, 0.0
        %v5350 = vmax.f32 %v4326, 0.0
        %v5351 = vmax.f32 %v4327, 0.0
        %v5352 = vmax.f32 %v4328, 0.0
        %v5353 = vmax.f32 %v4329, 0.0
        %v5354 = vmax.f32 %v4330, 0.0
        %v5355 = vmax.f32 %v4331, 0.0
        %v5356 = vmax.f32 %v4332, 0.0
        %v5357 = vmax.f32 %v4333, 0.0
        %v5358 = vmax.f32 %v4334, 0.0
        %v5359 = vmax.f32 %v4335, 0.0
        %v5360 = vmax.f32 %v4336, 0.0
        %v5361 = vmax.f32 %v4337, 0.0
        %v5362 = vmax.f32 %v4338, 0.0
        %v5363 = vmax.f32 %v4339, 0.0
        %v5364 = vmax.f32 %v4340, 0.0
        %v5365 = vmax.f32 %v4341, 0.0
        %5366 = vst [vmem:[%s241] sm:$0xff] %v4342
        %5367 = vst [vmem:[%s241 + $0x8] sm:$0xff] %v4343
        %5368 = vst [vmem:[%s241 + $0x10] sm:$0xff] %v4344
        %5369 = vst [vmem:[%s241 + $0x18] sm:$0xff] %v4345
        %5370 = vst [vmem:[%s241 + $0x20] sm:$0xff] %v4346
        %5371 = vst [vmem:[%s241 + $0x28] sm:$0xff] %v4347
        %5372 = vst [vmem:[%s241 + $0x30] sm:$0xff] %v4348
        %5373 = vst [vmem:[%s241 + $0x38] sm:$0xff] %v4349
        %5374 = vst [vmem:[%s241 + $0x40] sm:$0xff] %v4350
        %5375 = vst [vmem:[%s241 + $0x48] sm:$0xff] %v4351
        %5376 = vst [vmem:[%s241 + $0x50] sm:$0xff] %v4352
        %5377 = vst [vmem:[%s241 + $0x58] sm:$0xff] %v4353
        %5378 = vst [vmem:[%s241 + $0x60] sm:$0xff] %v4354
        %5379 = vst [vmem:[%s241 + $0x68] sm:$0xff] %v4355
        %5380 = vst [vmem:[%s241 + $0x70] sm:$0xff] %v4356
        %5381 = vst [vmem:[%s241 + $0x78] sm:$0xff] %v4357
        %5382 = vst [vmem:[%s241 + $0x80] sm:$0xff] %v4358
        %5383 = vst [vmem:[%s241 + $0x88] sm:$0xff] %v4359
        %5384 = vst [vmem:[%s241 + $0x90] sm:$0xff] %v4360
        %5385 = vst [vmem:[%s241 + $0x98] sm:$0xff] %v4361
        %5386 = vst [vmem:[%s241 + $0xa0] sm:$0xff] %v4362
        %5387 = vst [vmem:[%s241 + $0xa8] sm:$0xff] %v4363
        %5388 = vst [vmem:[%s241 + $0xb0] sm:$0xff] %v4364
        %5389 = vst [vmem:[%s241 + $0xb8] sm:$0xff] %v4365
        %5390 = vst [vmem:[%s241 + $0xc0] sm:$0xff] %v4366
        %5391 = vst [vmem:[%s241 + $0xc8] sm:$0xff] %v4367
        %5392 = vst [vmem:[%s241 + $0xd0] sm:$0xff] %v4368
        %5393 = vst [vmem:[%s241 + $0xd8] sm:$0xff] %v4369
        %5394 = vst [vmem:[%s241 + $0xe0] sm:$0xff] %v4370
        %5395 = vst [vmem:[%s241 + $0xe8] sm:$0xff] %v4371
        %5396 = vst [vmem:[%s241 + $0xf0] sm:$0xff] %v4372
        %5397 = vst [vmem:[%s241 + $0xf8] sm:$0xff] %v4373
        %5398 = vst [vmem:[%s241 + $0x100] sm:$0xff] %v4374
        %5399 = vst [vmem:[%s241 + $0x108] sm:$0xff] %v4375
        %5400 = vst [vmem:[%s241 + $0x110] sm:$0xff] %v4376
        %5401 = vst [vmem:[%s241 + $0x118] sm:$0xff] %v4377
        %5402 = vst [vmem:[%s241 + $0x120] sm:$0xff] %v4378
        %5403 = vst [vmem:[%s241 + $0x128] sm:$0xff] %v4379
        %5404 = vst [vmem:[%s241 + $0x130] sm:$0xff] %v4380
        %5405 = vst [vmem:[%s241 + $0x138] sm:$0xff] %v4381
        %5406 = vst [vmem:[%s241 + $0x140] sm:$0xff] %v4382
        %5407 = vst [vmem:[%s241 + $0x148] sm:$0xff] %v4383
        %5408 = vst [vmem:[%s241 + $0x150] sm:$0xff] %v4384
        %5409 = vst [vmem:[%s241 + $0x158] sm:$0xff] %v4385
        %5410 = vst [vmem:[%s241 + $0x160] sm:$0xff] %v4386
        %5411 = vst [vmem:[%s241 + $0x168] sm:$0xff] %v4387
        %5412 = vst [vmem:[%s241 + $0x170] sm:$0xff] %v4388
        %5413 = vst [vmem:[%s241 + $0x178] sm:$0xff] %v4389
        %5414 = vst [vmem:[%s241 + $0x180] sm:$0xff] %v4390
        %5415 = vst [vmem:[%s241 + $0x188] sm:$0xff] %v4391
        %5416 = vst [vmem:[%s241 + $0x190] sm:$0xff] %v4392
        %5417 = vst [vmem:[%s241 + $0x198] sm:$0xff] %v4393
        %5418 = vst [vmem:[%s241 + $0x1a0] sm:$0xff] %v4394
        %5419 = vst [vmem:[%s241 + $0x1a8] sm:$0xff] %v4395
        %5420 = vst [vmem:[%s241 + $0x1b0] sm:$0xff] %v4396
        %5421 = vst [vmem:[%s241 + $0x1b8] sm:$0xff] %v4397
        %5422 = vst [vmem:[%s241 + $0x1c0] sm:$0xff] %v4398
        %5423 = vst [vmem:[%s241 + $0x1c8] sm:$0xff] %v4399
        %5424 = vst [vmem:[%s241 + $0x1d0] sm:$0xff] %v4400
        %5425 = vst [vmem:[%s241 + $0x1d8] sm:$0xff] %v4401
        %5426 = vst [vmem:[%s241 + $0x1e0] sm:$0xff] %v4402
        %5427 = vst [vmem:[%s241 + $0x1e8] sm:$0xff] %v4403
        %5428 = vst [vmem:[%s241 + $0x1f0] sm:$0xff] %v4404
        %5429 = vst [vmem:[%s241 + $0x1f8] sm:$0xff] %v4405
        %5430 = vst [vmem:[%s241 + $0x200] sm:$0xff] %v4406
        %5431 = vst [vmem:[%s241 + $0x208] sm:$0xff] %v4407
        %5432 = vst [vmem:[%s241 + $0x210] sm:$0xff] %v4408
        %5433 = vst [vmem:[%s241 + $0x218] sm:$0xff] %v4409
        %5434 = vst [vmem:[%s241 + $0x220] sm:$0xff] %v4410
        %5435 = vst [vmem:[%s241 + $0x228] sm:$0xff] %v4411
        %5436 = vst [vmem:[%s241 + $0x230] sm:$0xff] %v4412
        %5437 = vst [vmem:[%s241 + $0x238] sm:$0xff] %v4413
        %5438 = vst [vmem:[%s241 + $0x240] sm:$0xff] %v4414
        %5439 = vst [vmem:[%s241 + $0x248] sm:$0xff] %v4415
        %5440 = vst [vmem:[%s241 + $0x250] sm:$0xff] %v4416
        %5441 = vst [vmem:[%s241 + $0x258] sm:$0xff] %v4417
        %5442 = vst [vmem:[%s241 + $0x260] sm:$0xff] %v4418
        %5443 = vst [vmem:[%s241 + $0x268] sm:$0xff] %v4419
        %5444 = vst [vmem:[%s241 + $0x270] sm:$0xff] %v4420
        %5445 = vst [vmem:[%s241 + $0x278] sm:$0xff] %v4421
        %5446 = vst [vmem:[%s241 + $0x280] sm:$0xff] %v4422
        %5447 = vst [vmem:[%s241 + $0x288] sm:$0xff] %v4423
        %5448 = vst [vmem:[%s241 + $0x290] sm:$0xff] %v4424
        %5449 = vst [vmem:[%s241 + $0x298] sm:$0xff] %v4425
        %5450 = vst [vmem:[%s241 + $0x2a0] sm:$0xff] %v4426
        %5451 = vst [vmem:[%s241 + $0x2a8] sm:$0xff] %v4427
        %5452 = vst [vmem:[%s241 + $0x2b0] sm:$0xff] %v4428
        %5453 = vst [vmem:[%s241 + $0x2b8] sm:$0xff] %v4429
        %5454 = vst [vmem:[%s241 + $0x2c0] sm:$0xff] %v4430
        %5455 = vst [vmem:[%s241 + $0x2c8] sm:$0xff] %v4431
        %5456 = vst [vmem:[%s241 + $0x2d0] sm:$0xff] %v4432
        %5457 = vst [vmem:[%s241 + $0x2d8] sm:$0xff] %v4433
        %5458 = vst [vmem:[%s241 + $0x2e0] sm:$0xff] %v4434
        %5459 = vst [vmem:[%s241 + $0x2e8] sm:$0xff] %v4435
        %5460 = vst [vmem:[%s241 + $0x2f0] sm:$0xff] %v4436
        %5461 = vst [vmem:[%s241 + $0x2f8] sm:$0xff] %v4437
        %5462 = vst [vmem:[%s241 + $0x300] sm:$0xff] %v4438
        %5463 = vst [vmem:[%s241 + $0x308] sm:$0xff] %v4439
        %5464 = vst [vmem:[%s241 + $0x310] sm:$0xff] %v4440
        %5465 = vst [vmem:[%s241 + $0x318] sm:$0xff] %v4441
        %5466 = vst [vmem:[%s241 + $0x320] sm:$0xff] %v4442
        %5467 = vst [vmem:[%s241 + $0x328] sm:$0xff] %v4443
        %5468 = vst [vmem:[%s241 + $0x330] sm:$0xff] %v4444
        %5469 = vst [vmem:[%s241 + $0x338] sm:$0xff] %v4445
        %5470 = vst [vmem:[%s241 + $0x340] sm:$0xff] %v4446
        %5471 = vst [vmem:[%s241 + $0x348] sm:$0xff] %v4447
        %5472 = vst [vmem:[%s241 + $0x350] sm:$0xff] %v4448
        %5473 = vst [vmem:[%s241 + $0x358] sm:$0xff] %v4449
        %5474 = vst [vmem:[%s241 + $0x360] sm:$0xff] %v4450
        %5475 = vst [vmem:[%s241 + $0x368] sm:$0xff] %v4451
        %5476 = vst [vmem:[%s241 + $0x370] sm:$0xff] %v4452
        %5477 = vst [vmem:[%s241 + $0x378] sm:$0xff] %v4453
        %5478 = vst [vmem:[%s241 + $0x380] sm:$0xff] %v4454
        %5479 = vst [vmem:[%s241 + $0x388] sm:$0xff] %v4455
        %5480 = vst [vmem:[%s241 + $0x390] sm:$0xff] %v4456
        %5481 = vst [vmem:[%s241 + $0x398] sm:$0xff] %v4457
        %5482 = vst [vmem:[%s241 + $0x3a0] sm:$0xff] %v4458
        %5483 = vst [vmem:[%s241 + $0x3a8] sm:$0xff] %v4459
        %5484 = vst [vmem:[%s241 + $0x3b0] sm:$0xff] %v4460
        %5485 = vst [vmem:[%s241 + $0x3b8] sm:$0xff] %v4461
        %5486 = vst [vmem:[%s241 + $0x3c0] sm:$0xff] %v4462
        %5487 = vst [vmem:[%s241 + $0x3c8] sm:$0xff] %v4463
        %5488 = vst [vmem:[%s241 + $0x3d0] sm:$0xff] %v4464
        %5489 = vst [vmem:[%s241 + $0x3d8] sm:$0xff] %v4465
        %5490 = vst [vmem:[%s241 + $0x3e0] sm:$0xff] %v4466
        %5491 = vst [vmem:[%s241 + $0x3e8] sm:$0xff] %v4467
        %5492 = vst [vmem:[%s241 + $0x3f0] sm:$0xff] %v4468
        %5493 = vst [vmem:[%s241 + $0x3f8] sm:$0xff] %v4469
        %5494 = vst [vmem:[%s241 + $0x400] sm:$0xff] %v4470
        %5495 = vst [vmem:[%s241 + $0x408] sm:$0xff] %v4471
        %5496 = vst [vmem:[%s241 + $0x410] sm:$0xff] %v4472
        %5497 = vst [vmem:[%s241 + $0x418] sm:$0xff] %v4473
        %5498 = vst [vmem:[%s241 + $0x420] sm:$0xff] %v4474
        %5499 = vst [vmem:[%s241 + $0x428] sm:$0xff] %v4475
        %5500 = vst [vmem:[%s241 + $0x430] sm:$0xff] %v4476
        %5501 = vst [vmem:[%s241 + $0x438] sm:$0xff] %v4477
        %5502 = vst [vmem:[%s241 + $0x440] sm:$0xff] %v4478
        %5503 = vst [vmem:[%s241 + $0x448] sm:$0xff] %v4479
        %5504 = vst [vmem:[%s241 + $0x450] sm:$0xff] %v4480
        %5505 = vst [vmem:[%s241 + $0x458] sm:$0xff] %v4481
        %5506 = vst [vmem:[%s241 + $0x460] sm:$0xff] %v4482
        %5507 = vst [vmem:[%s241 + $0x468] sm:$0xff] %v4483
        %5508 = vst [vmem:[%s241 + $0x470] sm:$0xff] %v4484
        %5509 = vst [vmem:[%s241 + $0x478] sm:$0xff] %v4485
        %5510 = vst [vmem:[%s241 + $0x480] sm:$0xff] %v4486
        %5511 = vst [vmem:[%s241 + $0x488] sm:$0xff] %v4487
        %5512 = vst [vmem:[%s241 + $0x490] sm:$0xff] %v4488
        %5513 = vst [vmem:[%s241 + $0x498] sm:$0xff] %v4489
        %5514 = vst [vmem:[%s241 + $0x4a0] sm:$0xff] %v4490
        %5515 = vst [vmem:[%s241 + $0x4a8] sm:$0xff] %v4491
        %5516 = vst [vmem:[%s241 + $0x4b0] sm:$0xff] %v4492
        %5517 = vst [vmem:[%s241 + $0x4b8] sm:$0xff] %v4493
        %5518 = vst [vmem:[%s241 + $0x4c0] sm:$0xff] %v4494
        %5519 = vst [vmem:[%s241 + $0x4c8] sm:$0xff] %v4495
        %5520 = vst [vmem:[%s241 + $0x4d0] sm:$0xff] %v4496
        %5521 = vst [vmem:[%s241 + $0x4d8] sm:$0xff] %v4497
        %5522 = vst [vmem:[%s241 + $0x4e0] sm:$0xff] %v4498
        %5523 = vst [vmem:[%s241 + $0x4e8] sm:$0xff] %v4499
        %5524 = vst [vmem:[%s241 + $0x4f0] sm:$0xff] %v4500
        %5525 = vst [vmem:[%s241 + $0x4f8] sm:$0xff] %v4501
        %5526 = vst [vmem:[%s241 + $0x500] sm:$0xff] %v4502
        %5527 = vst [vmem:[%s241 + $0x508] sm:$0xff] %v4503
        %5528 = vst [vmem:[%s241 + $0x510] sm:$0xff] %v4504
        %5529 = vst [vmem:[%s241 + $0x518] sm:$0xff] %v4505
        %5530 = vst [vmem:[%s241 + $0x520] sm:$0xff] %v4506
        %5531 = vst [vmem:[%s241 + $0x528] sm:$0xff] %v4507
        %5532 = vst [vmem:[%s241 + $0x530] sm:$0xff] %v4508
        %5533 = vst [vmem:[%s241 + $0x538] sm:$0xff] %v4509
        %5534 = vst [vmem:[%s241 + $0x540] sm:$0xff] %v4510
        %5535 = vst [vmem:[%s241 + $0x548] sm:$0xff] %v4511
        %5536 = vst [vmem:[%s241 + $0x550] sm:$0xff] %v4512
        %5537 = vst [vmem:[%s241 + $0x558] sm:$0xff] %v4513
        %5538 = vst [vmem:[%s241 + $0x560] sm:$0xff] %v4514
        %5539 = vst [vmem:[%s241 + $0x568] sm:$0xff] %v4515
        %5540 = vst [vmem:[%s241 + $0x570] sm:$0xff] %v4516
        %5541 = vst [vmem:[%s241 + $0x578] sm:$0xff] %v4517
        %5542 = vst [vmem:[%s241 + $0x580] sm:$0xff] %v4518
        %5543 = vst [vmem:[%s241 + $0x588] sm:$0xff] %v4519
        %5544 = vst [vmem:[%s241 + $0x590] sm:$0xff] %v4520
        %5545 = vst [vmem:[%s241 + $0x598] sm:$0xff] %v4521
        %5546 = vst [vmem:[%s241 + $0x5a0] sm:$0xff] %v4522
        %5547 = vst [vmem:[%s241 + $0x5a8] sm:$0xff] %v4523
        %5548 = vst [vmem:[%s241 + $0x5b0] sm:$0xff] %v4524
        %5549 = vst [vmem:[%s241 + $0x5b8] sm:$0xff] %v4525
        %5550 = vst [vmem:[%s241 + $0x5c0] sm:$0xff] %v4526
        %5551 = vst [vmem:[%s241 + $0x5c8] sm:$0xff] %v4527
        %5552 = vst [vmem:[%s241 + $0x5d0] sm:$0xff] %v4528
        %5553 = vst [vmem:[%s241 + $0x5d8] sm:$0xff] %v4529
        %5554 = vst [vmem:[%s241 + $0x5e0] sm:$0xff] %v4530
        %5555 = vst [vmem:[%s241 + $0x5e8] sm:$0xff] %v4531
        %5556 = vst [vmem:[%s241 + $0x5f0] sm:$0xff] %v4532
        %5557 = vst [vmem:[%s241 + $0x5f8] sm:$0xff] %v4533
        %5558 = vst [vmem:[%s241 + $0x600] sm:$0xff] %v4534
        %5559 = vst [vmem:[%s241 + $0x608] sm:$0xff] %v4535
        %5560 = vst [vmem:[%s241 + $0x610] sm:$0xff] %v4536
        %5561 = vst [vmem:[%s241 + $0x618] sm:$0xff] %v4537
        %5562 = vst [vmem:[%s241 + $0x620] sm:$0xff] %v4538
        %5563 = vst [vmem:[%s241 + $0x628] sm:$0xff] %v4539
        %5564 = vst [vmem:[%s241 + $0x630] sm:$0xff] %v4540
        %5565 = vst [vmem:[%s241 + $0x638] sm:$0xff] %v4541
        %5566 = vst [vmem:[%s241 + $0x640] sm:$0xff] %v4542
        %5567 = vst [vmem:[%s241 + $0x648] sm:$0xff] %v4543
        %5568 = vst [vmem:[%s241 + $0x650] sm:$0xff] %v4544
        %5569 = vst [vmem:[%s241 + $0x658] sm:$0xff] %v4545
        %5570 = vst [vmem:[%s241 + $0x660] sm:$0xff] %v4546
        %5571 = vst [vmem:[%s241 + $0x668] sm:$0xff] %v4547
        %5572 = vst [vmem:[%s241 + $0x670] sm:$0xff] %v4548
        %5573 = vst [vmem:[%s241 + $0x678] sm:$0xff] %v4549
        %5574 = vst [vmem:[%s241 + $0x680] sm:$0xff] %v4550
        %5575 = vst [vmem:[%s241 + $0x688] sm:$0xff] %v4551
        %5576 = vst [vmem:[%s241 + $0x690] sm:$0xff] %v4552
        %5577 = vst [vmem:[%s241 + $0x698] sm:$0xff] %v4553
        %5578 = vst [vmem:[%s241 + $0x6a0] sm:$0xff] %v4554
        %5579 = vst [vmem:[%s241 + $0x6a8] sm:$0xff] %v4555
        %5580 = vst [vmem:[%s241 + $0x6b0] sm:$0xff] %v4556
        %5581 = vst [vmem:[%s241 + $0x6b8] sm:$0xff] %v4557
        %5582 = vst [vmem:[%s241 + $0x6c0] sm:$0xff] %v4558
        %5583 = vst [vmem:[%s241 + $0x6c8] sm:$0xff] %v4559
        %5584 = vst [vmem:[%s241 + $0x6d0] sm:$0xff] %v4560
        %5585 = vst [vmem:[%s241 + $0x6d8] sm:$0xff] %v4561
        %5586 = vst [vmem:[%s241 + $0x6e0] sm:$0xff] %v4562
        %5587 = vst [vmem:[%s241 + $0x6e8] sm:$0xff] %v4563
        %5588 = vst [vmem:[%s241 + $0x6f0] sm:$0xff] %v4564
        %5589 = vst [vmem:[%s241 + $0x6f8] sm:$0xff] %v4565
        %5590 = vst [vmem:[%s241 + $0x700] sm:$0xff] %v4566
        %5591 = vst [vmem:[%s241 + $0x708] sm:$0xff] %v4567
        %5592 = vst [vmem:[%s241 + $0x710] sm:$0xff] %v4568
        %5593 = vst [vmem:[%s241 + $0x718] sm:$0xff] %v4569
        %5594 = vst [vmem:[%s241 + $0x720] sm:$0xff] %v4570
        %5595 = vst [vmem:[%s241 + $0x728] sm:$0xff] %v4571
        %5596 = vst [vmem:[%s241 + $0x730] sm:$0xff] %v4572
        %5597 = vst [vmem:[%s241 + $0x738] sm:$0xff] %v4573
        %5598 = vst [vmem:[%s241 + $0x740] sm:$0xff] %v4574
        %5599 = vst [vmem:[%s241 + $0x748] sm:$0xff] %v4575
        %5600 = vst [vmem:[%s241 + $0x750] sm:$0xff] %v4576
        %5601 = vst [vmem:[%s241 + $0x758] sm:$0xff] %v4577
        %5602 = vst [vmem:[%s241 + $0x760] sm:$0xff] %v4578
        %5603 = vst [vmem:[%s241 + $0x768] sm:$0xff] %v4579
        %5604 = vst [vmem:[%s241 + $0x770] sm:$0xff] %v4580
        %5605 = vst [vmem:[%s241 + $0x778] sm:$0xff] %v4581
        %5606 = vst [vmem:[%s241 + $0x780] sm:$0xff] %v4582
        %5607 = vst [vmem:[%s241 + $0x788] sm:$0xff] %v4583
        %5608 = vst [vmem:[%s241 + $0x790] sm:$0xff] %v4584
        %5609 = vst [vmem:[%s241 + $0x798] sm:$0xff] %v4585
        %5610 = vst [vmem:[%s241 + $0x7a0] sm:$0xff] %v4586
        %5611 = vst [vmem:[%s241 + $0x7a8] sm:$0xff] %v4587
        %5612 = vst [vmem:[%s241 + $0x7b0] sm:$0xff] %v4588
        %5613 = vst [vmem:[%s241 + $0x7b8] sm:$0xff] %v4589
        %5614 = vst [vmem:[%s241 + $0x7c0] sm:$0xff] %v4590
        %5615 = vst [vmem:[%s241 + $0x7c8] sm:$0xff] %v4591
        %5616 = vst [vmem:[%s241 + $0x7d0] sm:$0xff] %v4592
        %5617 = vst [vmem:[%s241 + $0x7d8] sm:$0xff] %v4593
        %5618 = vst [vmem:[%s241 + $0x7e0] sm:$0xff] %v4594
        %5619 = vst [vmem:[%s241 + $0x7e8] sm:$0xff] %v4595
        %5620 = vst [vmem:[%s241 + $0x7f0] sm:$0xff] %v4596
        %5621 = vst [vmem:[%s241 + $0x7f8] sm:$0xff] %v4597
        %5622 = vst [vmem:[%s241 + $0x800] sm:$0xff] %v4598
        %5623 = vst [vmem:[%s241 + $0x808] sm:$0xff] %v4599
        %5624 = vst [vmem:[%s241 + $0x810] sm:$0xff] %v4600
        %5625 = vst [vmem:[%s241 + $0x818] sm:$0xff] %v4601
        %5626 = vst [vmem:[%s241 + $0x820] sm:$0xff] %v4602
        %5627 = vst [vmem:[%s241 + $0x828] sm:$0xff] %v4603
        %5628 = vst [vmem:[%s241 + $0x830] sm:$0xff] %v4604
        %5629 = vst [vmem:[%s241 + $0x838] sm:$0xff] %v4605
        %5630 = vst [vmem:[%s241 + $0x840] sm:$0xff] %v4606
        %5631 = vst [vmem:[%s241 + $0x848] sm:$0xff] %v4607
        %5632 = vst [vmem:[%s241 + $0x850] sm:$0xff] %v4608
        %5633 = vst [vmem:[%s241 + $0x858] sm:$0xff] %v4609
        %5634 = vst [vmem:[%s241 + $0x860] sm:$0xff] %v4610
        %5635 = vst [vmem:[%s241 + $0x868] sm:$0xff] %v4611
        %5636 = vst [vmem:[%s241 + $0x870] sm:$0xff] %v4612
        %5637 = vst [vmem:[%s241 + $0x878] sm:$0xff] %v4613
        %5638 = vst [vmem:[%s241 + $0x880] sm:$0xff] %v4614
        %5639 = vst [vmem:[%s241 + $0x888] sm:$0xff] %v4615
        %5640 = vst [vmem:[%s241 + $0x890] sm:$0xff] %v4616
        %5641 = vst [vmem:[%s241 + $0x898] sm:$0xff] %v4617
        %5642 = vst [vmem:[%s241 + $0x8a0] sm:$0xff] %v4618
        %5643 = vst [vmem:[%s241 + $0x8a8] sm:$0xff] %v4619
        %5644 = vst [vmem:[%s241 + $0x8b0] sm:$0xff] %v4620
        %5645 = vst [vmem:[%s241 + $0x8b8] sm:$0xff] %v4621
        %5646 = vst [vmem:[%s241 + $0x8c0] sm:$0xff] %v4622
        %5647 = vst [vmem:[%s241 + $0x8c8] sm:$0xff] %v4623
        %5648 = vst [vmem:[%s241 + $0x8d0] sm:$0xff] %v4624
        %5649 = vst [vmem:[%s241 + $0x8d8] sm:$0xff] %v4625
        %5650 = vst [vmem:[%s241 + $0x8e0] sm:$0xff] %v4626
        %5651 = vst [vmem:[%s241 + $0x8e8] sm:$0xff] %v4627
        %5652 = vst [vmem:[%s241 + $0x8f0] sm:$0xff] %v4628
        %5653 = vst [vmem:[%s241 + $0x8f8] sm:$0xff] %v4629
        %5654 = vst [vmem:[%s241 + $0x900] sm:$0xff] %v4630
        %5655 = vst [vmem:[%s241 + $0x908] sm:$0xff] %v4631
        %5656 = vst [vmem:[%s241 + $0x910] sm:$0xff] %v4632
        %5657 = vst [vmem:[%s241 + $0x918] sm:$0xff] %v4633
        %5658 = vst [vmem:[%s241 + $0x920] sm:$0xff] %v4634
        %5659 = vst [vmem:[%s241 + $0x928] sm:$0xff] %v4635
        %5660 = vst [vmem:[%s241 + $0x930] sm:$0xff] %v4636
        %5661 = vst [vmem:[%s241 + $0x938] sm:$0xff] %v4637
        %5662 = vst [vmem:[%s241 + $0x940] sm:$0xff] %v4638
        %5663 = vst [vmem:[%s241 + $0x948] sm:$0xff] %v4639
        %5664 = vst [vmem:[%s241 + $0x950] sm:$0xff] %v4640
        %5665 = vst [vmem:[%s241 + $0x958] sm:$0xff] %v4641
        %5666 = vst [vmem:[%s241 + $0x960] sm:$0xff] %v4642
        %5667 = vst [vmem:[%s241 + $0x968] sm:$0xff] %v4643
        %5668 = vst [vmem:[%s241 + $0x970] sm:$0xff] %v4644
        %5669 = vst [vmem:[%s241 + $0x978] sm:$0xff] %v4645
        %5670 = vst [vmem:[%s241 + $0x980] sm:$0xff] %v4646
        %5671 = vst [vmem:[%s241 + $0x988] sm:$0xff] %v4647
        %5672 = vst [vmem:[%s241 + $0x990] sm:$0xff] %v4648
        %5673 = vst [vmem:[%s241 + $0x998] sm:$0xff] %v4649
        %5674 = vst [vmem:[%s241 + $0x9a0] sm:$0xff] %v4650
        %5675 = vst [vmem:[%s241 + $0x9a8] sm:$0xff] %v4651
        %5676 = vst [vmem:[%s241 + $0x9b0] sm:$0xff] %v4652
        %5677 = vst [vmem:[%s241 + $0x9b8] sm:$0xff] %v4653
        %5678 = vst [vmem:[%s241 + $0x9c0] sm:$0xff] %v4654
        %5679 = vst [vmem:[%s241 + $0x9c8] sm:$0xff] %v4655
        %5680 = vst [vmem:[%s241 + $0x9d0] sm:$0xff] %v4656
        %5681 = vst [vmem:[%s241 + $0x9d8] sm:$0xff] %v4657
        %5682 = vst [vmem:[%s241 + $0x9e0] sm:$0xff] %v4658
        %5683 = vst [vmem:[%s241 + $0x9e8] sm:$0xff] %v4659
        %5684 = vst [vmem:[%s241 + $0x9f0] sm:$0xff] %v4660
        %5685 = vst [vmem:[%s241 + $0x9f8] sm:$0xff] %v4661
        %5686 = vst [vmem:[%s241 + $0xa00] sm:$0xff] %v4662
        %5687 = vst [vmem:[%s241 + $0xa08] sm:$0xff] %v4663
        %5688 = vst [vmem:[%s241 + $0xa10] sm:$0xff] %v4664
        %5689 = vst [vmem:[%s241 + $0xa18] sm:$0xff] %v4665
        %5690 = vst [vmem:[%s241 + $0xa20] sm:$0xff] %v4666
        %5691 = vst [vmem:[%s241 + $0xa28] sm:$0xff] %v4667
        %5692 = vst [vmem:[%s241 + $0xa30] sm:$0xff] %v4668
        %5693 = vst [vmem:[%s241 + $0xa38] sm:$0xff] %v4669
        %5694 = vst [vmem:[%s241 + $0xa40] sm:$0xff] %v4670
        %5695 = vst [vmem:[%s241 + $0xa48] sm:$0xff] %v4671
        %5696 = vst [vmem:[%s241 + $0xa50] sm:$0xff] %v4672
        %5697 = vst [vmem:[%s241 + $0xa58] sm:$0xff] %v4673
        %5698 = vst [vmem:[%s241 + $0xa60] sm:$0xff] %v4674
        %5699 = vst [vmem:[%s241 + $0xa68] sm:$0xff] %v4675
        %5700 = vst [vmem:[%s241 + $0xa70] sm:$0xff] %v4676
        %5701 = vst [vmem:[%s241 + $0xa78] sm:$0xff] %v4677
        %5702 = vst [vmem:[%s241 + $0xa80] sm:$0xff] %v4678
        %5703 = vst [vmem:[%s241 + $0xa88] sm:$0xff] %v4679
        %5704 = vst [vmem:[%s241 + $0xa90] sm:$0xff] %v4680
        %5705 = vst [vmem:[%s241 + $0xa98] sm:$0xff] %v4681
        %5706 = vst [vmem:[%s241 + $0xaa0] sm:$0xff] %v4682
        %5707 = vst [vmem:[%s241 + $0xaa8] sm:$0xff] %v4683
        %5708 = vst [vmem:[%s241 + $0xab0] sm:$0xff] %v4684
        %5709 = vst [vmem:[%s241 + $0xab8] sm:$0xff] %v4685
        %5710 = vst [vmem:[%s241 + $0xac0] sm:$0xff] %v4686
        %5711 = vst [vmem:[%s241 + $0xac8] sm:$0xff] %v4687
        %5712 = vst [vmem:[%s241 + $0xad0] sm:$0xff] %v4688
        %5713 = vst [vmem:[%s241 + $0xad8] sm:$0xff] %v4689
        %5714 = vst [vmem:[%s241 + $0xae0] sm:$0xff] %v4690
        %5715 = vst [vmem:[%s241 + $0xae8] sm:$0xff] %v4691
        %5716 = vst [vmem:[%s241 + $0xaf0] sm:$0xff] %v4692
        %5717 = vst [vmem:[%s241 + $0xaf8] sm:$0xff] %v4693
        %5718 = vst [vmem:[%s241 + $0xb00] sm:$0xff] %v4694
        %5719 = vst [vmem:[%s241 + $0xb08] sm:$0xff] %v4695
        %5720 = vst [vmem:[%s241 + $0xb10] sm:$0xff] %v4696
        %5721 = vst [vmem:[%s241 + $0xb18] sm:$0xff] %v4697
        %5722 = vst [vmem:[%s241 + $0xb20] sm:$0xff] %v4698
        %5723 = vst [vmem:[%s241 + $0xb28] sm:$0xff] %v4699
        %5724 = vst [vmem:[%s241 + $0xb30] sm:$0xff] %v4700
        %5725 = vst [vmem:[%s241 + $0xb38] sm:$0xff] %v4701
        %5726 = vst [vmem:[%s241 + $0xb40] sm:$0xff] %v4702
        %5727 = vst [vmem:[%s241 + $0xb48] sm:$0xff] %v4703
        %5728 = vst [vmem:[%s241 + $0xb50] sm:$0xff] %v4704
        %5729 = vst [vmem:[%s241 + $0xb58] sm:$0xff] %v4705
        %5730 = vst [vmem:[%s241 + $0xb60] sm:$0xff] %v4706
        %5731 = vst [vmem:[%s241 + $0xb68] sm:$0xff] %v4707
        %5732 = vst [vmem:[%s241 + $0xb70] sm:$0xff] %v4708
        %5733 = vst [vmem:[%s241 + $0xb78] sm:$0xff] %v4709
        %5734 = vst [vmem:[%s241 + $0xb80] sm:$0xff] %v4710
        %5735 = vst [vmem:[%s241 + $0xb88] sm:$0xff] %v4711
        %5736 = vst [vmem:[%s241 + $0xb90] sm:$0xff] %v4712
        %5737 = vst [vmem:[%s241 + $0xb98] sm:$0xff] %v4713
        %5738 = vst [vmem:[%s241 + $0xba0] sm:$0xff] %v4714
        %5739 = vst [vmem:[%s241 + $0xba8] sm:$0xff] %v4715
        %5740 = vst [vmem:[%s241 + $0xbb0] sm:$0xff] %v4716
        %5741 = vst [vmem:[%s241 + $0xbb8] sm:$0xff] %v4717
        %5742 = vst [vmem:[%s241 + $0xbc0] sm:$0xff] %v4718
        %5743 = vst [vmem:[%s241 + $0xbc8] sm:$0xff] %v4719
        %5744 = vst [vmem:[%s241 + $0xbd0] sm:$0xff] %v4720
        %5745 = vst [vmem:[%s241 + $0xbd8] sm:$0xff] %v4721
        %5746 = vst [vmem:[%s241 + $0xbe0] sm:$0xff] %v4722
        %5747 = vst [vmem:[%s241 + $0xbe8] sm:$0xff] %v4723
        %5748 = vst [vmem:[%s241 + $0xbf0] sm:$0xff] %v4724
        %5749 = vst [vmem:[%s241 + $0xbf8] sm:$0xff] %v4725
        %5750 = vst [vmem:[%s241 + $0xc00] sm:$0xff] %v4726
        %5751 = vst [vmem:[%s241 + $0xc08] sm:$0xff] %v4727
        %5752 = vst [vmem:[%s241 + $0xc10] sm:$0xff] %v4728
        %5753 = vst [vmem:[%s241 + $0xc18] sm:$0xff] %v4729
        %5754 = vst [vmem:[%s241 + $0xc20] sm:$0xff] %v4730
        %5755 = vst [vmem:[%s241 + $0xc28] sm:$0xff] %v4731
        %5756 = vst [vmem:[%s241 + $0xc30] sm:$0xff] %v4732
        %5757 = vst [vmem:[%s241 + $0xc38] sm:$0xff] %v4733
        %5758 = vst [vmem:[%s241 + $0xc40] sm:$0xff] %v4734
        %5759 = vst [vmem:[%s241 + $0xc48] sm:$0xff] %v4735
        %5760 = vst [vmem:[%s241 + $0xc50] sm:$0xff] %v4736
        %5761 = vst [vmem:[%s241 + $0xc58] sm:$0xff] %v4737
        %5762 = vst [vmem:[%s241 + $0xc60] sm:$0xff] %v4738
        %5763 = vst [vmem:[%s241 + $0xc68] sm:$0xff] %v4739
        %5764 = vst [vmem:[%s241 + $0xc70] sm:$0xff] %v4740
        %5765 = vst [vmem:[%s241 + $0xc78] sm:$0xff] %v4741
        %5766 = vst [vmem:[%s241 + $0xc80] sm:$0xff] %v4742
        %5767 = vst [vmem:[%s241 + $0xc88] sm:$0xff] %v4743
        %5768 = vst [vmem:[%s241 + $0xc90] sm:$0xff] %v4744
        %5769 = vst [vmem:[%s241 + $0xc98] sm:$0xff] %v4745
        %5770 = vst [vmem:[%s241 + $0xca0] sm:$0xff] %v4746
        %5771 = vst [vmem:[%s241 + $0xca8] sm:$0xff] %v4747
        %5772 = vst [vmem:[%s241 + $0xcb0] sm:$0xff] %v4748
        %5773 = vst [vmem:[%s241 + $0xcb8] sm:$0xff] %v4749
        %5774 = vst [vmem:[%s241 + $0xcc0] sm:$0xff] %v4750
        %5775 = vst [vmem:[%s241 + $0xcc8] sm:$0xff] %v4751
        %5776 = vst [vmem:[%s241 + $0xcd0] sm:$0xff] %v4752
        %5777 = vst [vmem:[%s241 + $0xcd8] sm:$0xff] %v4753
        %5778 = vst [vmem:[%s241 + $0xce0] sm:$0xff] %v4754
        %5779 = vst [vmem:[%s241 + $0xce8] sm:$0xff] %v4755
        %5780 = vst [vmem:[%s241 + $0xcf0] sm:$0xff] %v4756
        %5781 = vst [vmem:[%s241 + $0xcf8] sm:$0xff] %v4757
        %5782 = vst [vmem:[%s241 + $0xd00] sm:$0xff] %v4758
        %5783 = vst [vmem:[%s241 + $0xd08] sm:$0xff] %v4759
        %5784 = vst [vmem:[%s241 + $0xd10] sm:$0xff] %v4760
        %5785 = vst [vmem:[%s241 + $0xd18] sm:$0xff] %v4761
        %5786 = vst [vmem:[%s241 + $0xd20] sm:$0xff] %v4762
        %5787 = vst [vmem:[%s241 + $0xd28] sm:$0xff] %v4763
        %5788 = vst [vmem:[%s241 + $0xd30] sm:$0xff] %v4764
        %5789 = vst [vmem:[%s241 + $0xd38] sm:$0xff] %v4765
        %5790 = vst [vmem:[%s241 + $0xd40] sm:$0xff] %v4766
        %5791 = vst [vmem:[%s241 + $0xd48] sm:$0xff] %v4767
        %5792 = vst [vmem:[%s241 + $0xd50] sm:$0xff] %v4768
        %5793 = vst [vmem:[%s241 + $0xd58] sm:$0xff] %v4769
        %5794 = vst [vmem:[%s241 + $0xd60] sm:$0xff] %v4770
        %5795 = vst [vmem:[%s241 + $0xd68] sm:$0xff] %v4771
        %5796 = vst [vmem:[%s241 + $0xd70] sm:$0xff] %v4772
        %5797 = vst [vmem:[%s241 + $0xd78] sm:$0xff] %v4773
        %5798 = vst [vmem:[%s241 + $0xd80] sm:$0xff] %v4774
        %5799 = vst [vmem:[%s241 + $0xd88] sm:$0xff] %v4775
        %5800 = vst [vmem:[%s241 + $0xd90] sm:$0xff] %v4776
        %5801 = vst [vmem:[%s241 + $0xd98] sm:$0xff] %v4777
        %5802 = vst [vmem:[%s241 + $0xda0] sm:$0xff] %v4778
        %5803 = vst [vmem:[%s241 + $0xda8] sm:$0xff] %v4779
        %5804 = vst [vmem:[%s241 + $0xdb0] sm:$0xff] %v4780
        %5805 = vst [vmem:[%s241 + $0xdb8] sm:$0xff] %v4781
        %5806 = vst [vmem:[%s241 + $0xdc0] sm:$0xff] %v4782
        %5807 = vst [vmem:[%s241 + $0xdc8] sm:$0xff] %v4783
        %5808 = vst [vmem:[%s241 + $0xdd0] sm:$0xff] %v4784
        %5809 = vst [vmem:[%s241 + $0xdd8] sm:$0xff] %v4785
        %5810 = vst [vmem:[%s241 + $0xde0] sm:$0xff] %v4786
        %5811 = vst [vmem:[%s241 + $0xde8] sm:$0xff] %v4787
        %5812 = vst [vmem:[%s241 + $0xdf0] sm:$0xff] %v4788
        %5813 = vst [vmem:[%s241 + $0xdf8] sm:$0xff] %v4789
        %5814 = vst [vmem:[%s241 + $0xe00] sm:$0xff] %v4790
        %5815 = vst [vmem:[%s241 + $0xe08] sm:$0xff] %v4791
        %5816 = vst [vmem:[%s241 + $0xe10] sm:$0xff] %v4792
        %5817 = vst [vmem:[%s241 + $0xe18] sm:$0xff] %v4793
        %5818 = vst [vmem:[%s241 + $0xe20] sm:$0xff] %v4794
        %5819 = vst [vmem:[%s241 + $0xe28] sm:$0xff] %v4795
        %5820 = vst [vmem:[%s241 + $0xe30] sm:$0xff] %v4796
        %5821 = vst [vmem:[%s241 + $0xe38] sm:$0xff] %v4797
        %5822 = vst [vmem:[%s241 + $0xe40] sm:$0xff] %v4798
        %5823 = vst [vmem:[%s241 + $0xe48] sm:$0xff] %v4799
        %5824 = vst [vmem:[%s241 + $0xe50] sm:$0xff] %v4800
        %5825 = vst [vmem:[%s241 + $0xe58] sm:$0xff] %v4801
        %5826 = vst [vmem:[%s241 + $0xe60] sm:$0xff] %v4802
        %5827 = vst [vmem:[%s241 + $0xe68] sm:$0xff] %v4803
        %5828 = vst [vmem:[%s241 + $0xe70] sm:$0xff] %v4804
        %5829 = vst [vmem:[%s241 + $0xe78] sm:$0xff] %v4805
        %5830 = vst [vmem:[%s241 + $0xe80] sm:$0xff] %v4806
        %5831 = vst [vmem:[%s241 + $0xe88] sm:$0xff] %v4807
        %5832 = vst [vmem:[%s241 + $0xe90] sm:$0xff] %v4808
        %5833 = vst [vmem:[%s241 + $0xe98] sm:$0xff] %v4809
        %5834 = vst [vmem:[%s241 + $0xea0] sm:$0xff] %v4810
        %5835 = vst [vmem:[%s241 + $0xea8] sm:$0xff] %v4811
        %5836 = vst [vmem:[%s241 + $0xeb0] sm:$0xff] %v4812
        %5837 = vst [vmem:[%s241 + $0xeb8] sm:$0xff] %v4813
        %5838 = vst [vmem:[%s241 + $0xec0] sm:$0xff] %v4814
        %5839 = vst [vmem:[%s241 + $0xec8] sm:$0xff] %v4815
        %5840 = vst [vmem:[%s241 + $0xed0] sm:$0xff] %v4816
        %5841 = vst [vmem:[%s241 + $0xed8] sm:$0xff] %v4817
        %5842 = vst [vmem:[%s241 + $0xee0] sm:$0xff] %v4818
        %5843 = vst [vmem:[%s241 + $0xee8] sm:$0xff] %v4819
        %5844 = vst [vmem:[%s241 + $0xef0] sm:$0xff] %v4820
        %5845 = vst [vmem:[%s241 + $0xef8] sm:$0xff] %v4821
        %5846 = vst [vmem:[%s241 + $0xf00] sm:$0xff] %v4822
        %5847 = vst [vmem:[%s241 + $0xf08] sm:$0xff] %v4823
        %5848 = vst [vmem:[%s241 + $0xf10] sm:$0xff] %v4824
        %5849 = vst [vmem:[%s241 + $0xf18] sm:$0xff] %v4825
        %5850 = vst [vmem:[%s241 + $0xf20] sm:$0xff] %v4826
        %5851 = vst [vmem:[%s241 + $0xf28] sm:$0xff] %v4827
        %5852 = vst [vmem:[%s241 + $0xf30] sm:$0xff] %v4828
        %5853 = vst [vmem:[%s241 + $0xf38] sm:$0xff] %v4829
        %5854 = vst [vmem:[%s241 + $0xf40] sm:$0xff] %v4830
        %5855 = vst [vmem:[%s241 + $0xf48] sm:$0xff] %v4831
        %5856 = vst [vmem:[%s241 + $0xf50] sm:$0xff] %v4832
        %5857 = vst [vmem:[%s241 + $0xf58] sm:$0xff] %v4833
        %5858 = vst [vmem:[%s241 + $0xf60] sm:$0xff] %v4834
        %5859 = vst [vmem:[%s241 + $0xf68] sm:$0xff] %v4835
        %5860 = vst [vmem:[%s241 + $0xf70] sm:$0xff] %v4836
        %5861 = vst [vmem:[%s241 + $0xf78] sm:$0xff] %v4837
        %5862 = vst [vmem:[%s241 + $0xf80] sm:$0xff] %v4838
        %5863 = vst [vmem:[%s241 + $0xf88] sm:$0xff] %v4839
        %5864 = vst [vmem:[%s241 + $0xf90] sm:$0xff] %v4840
        %5865 = vst [vmem:[%s241 + $0xf98] sm:$0xff] %v4841
        %5866 = vst [vmem:[%s241 + $0xfa0] sm:$0xff] %v4842
        %5867 = vst [vmem:[%s241 + $0xfa8] sm:$0xff] %v4843
        %5868 = vst [vmem:[%s241 + $0xfb0] sm:$0xff] %v4844
        %5869 = vst [vmem:[%s241 + $0xfb8] sm:$0xff] %v4845
        %5870 = vst [vmem:[%s241 + $0xfc0] sm:$0xff] %v4846
        %5871 = vst [vmem:[%s241 + $0xfc8] sm:$0xff] %v4847
        %5872 = vst [vmem:[%s241 + $0xfd0] sm:$0xff] %v4848
        %5873 = vst [vmem:[%s241 + $0xfd8] sm:$0xff] %v4849
        %5874 = vst [vmem:[%s241 + $0xfe0] sm:$0xff] %v4850
        %5875 = vst [vmem:[%s241 + $0xfe8] sm:$0xff] %v4851
        %5876 = vst [vmem:[%s241 + $0xff0] sm:$0xff] %v4852
        %5877 = vst [vmem:[%s241 + $0xff8] sm:$0xff] %v4853
        %5878 = vst [vmem:[%s241 + $0x1000] sm:$0xff] %v4854
        %5879 = vst [vmem:[%s241 + $0x1008] sm:$0xff] %v4855
        %5880 = vst [vmem:[%s241 + $0x1010] sm:$0xff] %v4856
        %5881 = vst [vmem:[%s241 + $0x1018] sm:$0xff] %v4857
        %5882 = vst [vmem:[%s241 + $0x1020] sm:$0xff] %v4858
        %5883 = vst [vmem:[%s241 + $0x1028] sm:$0xff] %v4859
        %5884 = vst [vmem:[%s241 + $0x1030] sm:$0xff] %v4860
        %5885 = vst [vmem:[%s241 + $0x1038] sm:$0xff] %v4861
        %5886 = vst [vmem:[%s241 + $0x1040] sm:$0xff] %v4862
        %5887 = vst [vmem:[%s241 + $0x1048] sm:$0xff] %v4863
        %5888 = vst [vmem:[%s241 + $0x1050] sm:$0xff] %v4864
        %5889 = vst [vmem:[%s241 + $0x1058] sm:$0xff] %v4865
        %5890 = vst [vmem:[%s241 + $0x1060] sm:$0xff] %v4866
        %5891 = vst [vmem:[%s241 + $0x1068] sm:$0xff] %v4867
        %5892 = vst [vmem:[%s241 + $0x1070] sm:$0xff] %v4868
        %5893 = vst [vmem:[%s241 + $0x1078] sm:$0xff] %v4869
        %5894 = vst [vmem:[%s241 + $0x1080] sm:$0xff] %v4870
        %5895 = vst [vmem:[%s241 + $0x1088] sm:$0xff] %v4871
        %5896 = vst [vmem:[%s241 + $0x1090] sm:$0xff] %v4872
        %5897 = vst [vmem:[%s241 + $0x1098] sm:$0xff] %v4873
        %5898 = vst [vmem:[%s241 + $0x10a0] sm:$0xff] %v4874
        %5899 = vst [vmem:[%s241 + $0x10a8] sm:$0xff] %v4875
        %5900 = vst [vmem:[%s241 + $0x10b0] sm:$0xff] %v4876
        %5901 = vst [vmem:[%s241 + $0x10b8] sm:$0xff] %v4877
        %5902 = vst [vmem:[%s241 + $0x10c0] sm:$0xff] %v4878
        %5903 = vst [vmem:[%s241 + $0x10c8] sm:$0xff] %v4879
        %5904 = vst [vmem:[%s241 + $0x10d0] sm:$0xff] %v4880
        %5905 = vst [vmem:[%s241 + $0x10d8] sm:$0xff] %v4881
        %5906 = vst [vmem:[%s241 + $0x10e0] sm:$0xff] %v4882
        %5907 = vst [vmem:[%s241 + $0x10e8] sm:$0xff] %v4883
        %5908 = vst [vmem:[%s241 + $0x10f0] sm:$0xff] %v4884
        %5909 = vst [vmem:[%s241 + $0x10f8] sm:$0xff] %v4885
        %5910 = vst [vmem:[%s241 + $0x1100] sm:$0xff] %v4886
        %5911 = vst [vmem:[%s241 + $0x1108] sm:$0xff] %v4887
        %5912 = vst [vmem:[%s241 + $0x1110] sm:$0xff] %v4888
        %5913 = vst [vmem:[%s241 + $0x1118] sm:$0xff] %v4889
        %5914 = vst [vmem:[%s241 + $0x1120] sm:$0xff] %v4890
        %5915 = vst [vmem:[%s241 + $0x1128] sm:$0xff] %v4891
        %5916 = vst [vmem:[%s241 + $0x1130] sm:$0xff] %v4892
        %5917 = vst [vmem:[%s241 + $0x1138] sm:$0xff] %v4893
        %5918 = vst [vmem:[%s241 + $0x1140] sm:$0xff] %v4894
        %5919 = vst [vmem:[%s241 + $0x1148] sm:$0xff] %v4895
        %5920 = vst [vmem:[%s241 + $0x1150] sm:$0xff] %v4896
        %5921 = vst [vmem:[%s241 + $0x1158] sm:$0xff] %v4897
        %5922 = vst [vmem:[%s241 + $0x1160] sm:$0xff] %v4898
        %5923 = vst [vmem:[%s241 + $0x1168] sm:$0xff] %v4899
        %5924 = vst [vmem:[%s241 + $0x1170] sm:$0xff] %v4900
        %5925 = vst [vmem:[%s241 + $0x1178] sm:$0xff] %v4901
        %5926 = vst [vmem:[%s241 + $0x1180] sm:$0xff] %v4902
        %5927 = vst [vmem:[%s241 + $0x1188] sm:$0xff] %v4903
        %5928 = vst [vmem:[%s241 + $0x1190] sm:$0xff] %v4904
        %5929 = vst [vmem:[%s241 + $0x1198] sm:$0xff] %v4905
        %5930 = vst [vmem:[%s241 + $0x11a0] sm:$0xff] %v4906
        %5931 = vst [vmem:[%s241 + $0x11a8] sm:$0xff] %v4907
        %5932 = vst [vmem:[%s241 + $0x11b0] sm:$0xff] %v4908
        %5933 = vst [vmem:[%s241 + $0x11b8] sm:$0xff] %v4909
        %5934 = vst [vmem:[%s241 + $0x11c0] sm:$0xff] %v4910
        %5935 = vst [vmem:[%s241 + $0x11c8] sm:$0xff] %v4911
        %5936 = vst [vmem:[%s241 + $0x11d0] sm:$0xff] %v4912
        %5937 = vst [vmem:[%s241 + $0x11d8] sm:$0xff] %v4913
        %5938 = vst [vmem:[%s241 + $0x11e0] sm:$0xff] %v4914
        %5939 = vst [vmem:[%s241 + $0x11e8] sm:$0xff] %v4915
        %5940 = vst [vmem:[%s241 + $0x11f0] sm:$0xff] %v4916
        %5941 = vst [vmem:[%s241 + $0x11f8] sm:$0xff] %v4917
        %5942 = vst [vmem:[%s241 + $0x1200] sm:$0xff] %v4918
        %5943 = vst [vmem:[%s241 + $0x1208] sm:$0xff] %v4919
        %5944 = vst [vmem:[%s241 + $0x1210] sm:$0xff] %v4920
        %5945 = vst [vmem:[%s241 + $0x1218] sm:$0xff] %v4921
        %5946 = vst [vmem:[%s241 + $0x1220] sm:$0xff] %v4922
        %5947 = vst [vmem:[%s241 + $0x1228] sm:$0xff] %v4923
        %5948 = vst [vmem:[%s241 + $0x1230] sm:$0xff] %v4924
        %5949 = vst [vmem:[%s241 + $0x1238] sm:$0xff] %v4925
        %5950 = vst [vmem:[%s241 + $0x1240] sm:$0xff] %v4926
        %5951 = vst [vmem:[%s241 + $0x1248] sm:$0xff] %v4927
        %5952 = vst [vmem:[%s241 + $0x1250] sm:$0xff] %v4928
        %5953 = vst [vmem:[%s241 + $0x1258] sm:$0xff] %v4929
        %5954 = vst [vmem:[%s241 + $0x1260] sm:$0xff] %v4930
        %5955 = vst [vmem:[%s241 + $0x1268] sm:$0xff] %v4931
        %5956 = vst [vmem:[%s241 + $0x1270] sm:$0xff] %v4932
        %5957 = vst [vmem:[%s241 + $0x1278] sm:$0xff] %v4933
        %5958 = vst [vmem:[%s241 + $0x1280] sm:$0xff] %v4934
        %5959 = vst [vmem:[%s241 + $0x1288] sm:$0xff] %v4935
        %5960 = vst [vmem:[%s241 + $0x1290] sm:$0xff] %v4936
        %5961 = vst [vmem:[%s241 + $0x1298] sm:$0xff] %v4937
        %5962 = vst [vmem:[%s241 + $0x12a0] sm:$0xff] %v4938
        %5963 = vst [vmem:[%s241 + $0x12a8] sm:$0xff] %v4939
        %5964 = vst [vmem:[%s241 + $0x12b0] sm:$0xff] %v4940
        %5965 = vst [vmem:[%s241 + $0x12b8] sm:$0xff] %v4941
        %5966 = vst [vmem:[%s241 + $0x12c0] sm:$0xff] %v4942
        %5967 = vst [vmem:[%s241 + $0x12c8] sm:$0xff] %v4943
        %5968 = vst [vmem:[%s241 + $0x12d0] sm:$0xff] %v4944
        %5969 = vst [vmem:[%s241 + $0x12d8] sm:$0xff] %v4945
        %5970 = vst [vmem:[%s241 + $0x12e0] sm:$0xff] %v4946
        %5971 = vst [vmem:[%s241 + $0x12e8] sm:$0xff] %v4947
        %5972 = vst [vmem:[%s241 + $0x12f0] sm:$0xff] %v4948
        %5973 = vst [vmem:[%s241 + $0x12f8] sm:$0xff] %v4949
        %5974 = vst [vmem:[%s241 + $0x1300] sm:$0xff] %v4950
        %5975 = vst [vmem:[%s241 + $0x1308] sm:$0xff] %v4951
        %5976 = vst [vmem:[%s241 + $0x1310] sm:$0xff] %v4952
        %5977 = vst [vmem:[%s241 + $0x1318] sm:$0xff] %v4953
        %5978 = vst [vmem:[%s241 + $0x1320] sm:$0xff] %v4954
        %5979 = vst [vmem:[%s241 + $0x1328] sm:$0xff] %v4955
        %5980 = vst [vmem:[%s241 + $0x1330] sm:$0xff] %v4956
        %5981 = vst [vmem:[%s241 + $0x1338] sm:$0xff] %v4957
        %5982 = vst [vmem:[%s241 + $0x1340] sm:$0xff] %v4958
        %5983 = vst [vmem:[%s241 + $0x1348] sm:$0xff] %v4959
        %5984 = vst [vmem:[%s241 + $0x1350] sm:$0xff] %v4960
        %5985 = vst [vmem:[%s241 + $0x1358] sm:$0xff] %v4961
        %5986 = vst [vmem:[%s241 + $0x1360] sm:$0xff] %v4962
        %5987 = vst [vmem:[%s241 + $0x1368] sm:$0xff] %v4963
        %5988 = vst [vmem:[%s241 + $0x1370] sm:$0xff] %v4964
        %5989 = vst [vmem:[%s241 + $0x1378] sm:$0xff] %v4965
        %5990 = vst [vmem:[%s241 + $0x1380] sm:$0xff] %v4966
        %5991 = vst [vmem:[%s241 + $0x1388] sm:$0xff] %v4967
        %5992 = vst [vmem:[%s241 + $0x1390] sm:$0xff] %v4968
        %5993 = vst [vmem:[%s241 + $0x1398] sm:$0xff] %v4969
        %5994 = vst [vmem:[%s241 + $0x13a0] sm:$0xff] %v4970
        %5995 = vst [vmem:[%s241 + $0x13a8] sm:$0xff] %v4971
        %5996 = vst [vmem:[%s241 + $0x13b0] sm:$0xff] %v4972
        %5997 = vst [vmem:[%s241 + $0x13b8] sm:$0xff] %v4973
        %5998 = vst [vmem:[%s241 + $0x13c0] sm:$0xff] %v4974
        %5999 = vst [vmem:[%s241 + $0x13c8] sm:$0xff] %v4975
        %6000 = vst [vmem:[%s241 + $0x13d0] sm:$0xff] %v4976
        %6001 = vst [vmem:[%s241 + $0x13d8] sm:$0xff] %v4977
        %6002 = vst [vmem:[%s241 + $0x13e0] sm:$0xff] %v4978
        %6003 = vst [vmem:[%s241 + $0x13e8] sm:$0xff] %v4979
        %6004 = vst [vmem:[%s241 + $0x13f0] sm:$0xff] %v4980
        %6005 = vst [vmem:[%s241 + $0x13f8] sm:$0xff] %v4981
        %6006 = vst [vmem:[%s241 + $0x1400] sm:$0xff] %v4982
        %6007 = vst [vmem:[%s241 + $0x1408] sm:$0xff] %v4983
        %6008 = vst [vmem:[%s241 + $0x1410] sm:$0xff] %v4984
        %6009 = vst [vmem:[%s241 + $0x1418] sm:$0xff] %v4985
        %6010 = vst [vmem:[%s241 + $0x1420] sm:$0xff] %v4986
        %6011 = vst [vmem:[%s241 + $0x1428] sm:$0xff] %v4987
        %6012 = vst [vmem:[%s241 + $0x1430] sm:$0xff] %v4988
        %6013 = vst [vmem:[%s241 + $0x1438] sm:$0xff] %v4989
        %6014 = vst [vmem:[%s241 + $0x1440] sm:$0xff] %v4990
        %6015 = vst [vmem:[%s241 + $0x1448] sm:$0xff] %v4991
        %6016 = vst [vmem:[%s241 + $0x1450] sm:$0xff] %v4992
        %6017 = vst [vmem:[%s241 + $0x1458] sm:$0xff] %v4993
        %6018 = vst [vmem:[%s241 + $0x1460] sm:$0xff] %v4994
        %6019 = vst [vmem:[%s241 + $0x1468] sm:$0xff] %v4995
        %6020 = vst [vmem:[%s241 + $0x1470] sm:$0xff] %v4996
        %6021 = vst [vmem:[%s241 + $0x1478] sm:$0xff] %v4997
        %6022 = vst [vmem:[%s241 + $0x1480] sm:$0xff] %v4998
        %6023 = vst [vmem:[%s241 + $0x1488] sm:$0xff] %v4999
        %6024 = vst [vmem:[%s241 + $0x1490] sm:$0xff] %v5000
        %6025 = vst [vmem:[%s241 + $0x1498] sm:$0xff] %v5001
        %6026 = vst [vmem:[%s241 + $0x14a0] sm:$0xff] %v5002
        %6027 = vst [vmem:[%s241 + $0x14a8] sm:$0xff] %v5003
        %6028 = vst [vmem:[%s241 + $0x14b0] sm:$0xff] %v5004
        %6029 = vst [vmem:[%s241 + $0x14b8] sm:$0xff] %v5005
        %6030 = vst [vmem:[%s241 + $0x14c0] sm:$0xff] %v5006
        %6031 = vst [vmem:[%s241 + $0x14c8] sm:$0xff] %v5007
        %6032 = vst [vmem:[%s241 + $0x14d0] sm:$0xff] %v5008
        %6033 = vst [vmem:[%s241 + $0x14d8] sm:$0xff] %v5009
        %6034 = vst [vmem:[%s241 + $0x14e0] sm:$0xff] %v5010
        %6035 = vst [vmem:[%s241 + $0x14e8] sm:$0xff] %v5011
        %6036 = vst [vmem:[%s241 + $0x14f0] sm:$0xff] %v5012
        %6037 = vst [vmem:[%s241 + $0x14f8] sm:$0xff] %v5013
        %6038 = vst [vmem:[%s241 + $0x1500] sm:$0xff] %v5014
        %6039 = vst [vmem:[%s241 + $0x1508] sm:$0xff] %v5015
        %6040 = vst [vmem:[%s241 + $0x1510] sm:$0xff] %v5016
        %6041 = vst [vmem:[%s241 + $0x1518] sm:$0xff] %v5017
        %6042 = vst [vmem:[%s241 + $0x1520] sm:$0xff] %v5018
        %6043 = vst [vmem:[%s241 + $0x1528] sm:$0xff] %v5019
        %6044 = vst [vmem:[%s241 + $0x1530] sm:$0xff] %v5020
        %6045 = vst [vmem:[%s241 + $0x1538] sm:$0xff] %v5021
        %6046 = vst [vmem:[%s241 + $0x1540] sm:$0xff] %v5022
        %6047 = vst [vmem:[%s241 + $0x1548] sm:$0xff] %v5023
        %6048 = vst [vmem:[%s241 + $0x1550] sm:$0xff] %v5024
        %6049 = vst [vmem:[%s241 + $0x1558] sm:$0xff] %v5025
        %6050 = vst [vmem:[%s241 + $0x1560] sm:$0xff] %v5026
        %6051 = vst [vmem:[%s241 + $0x1568] sm:$0xff] %v5027
        %6052 = vst [vmem:[%s241 + $0x1570] sm:$0xff] %v5028
        %6053 = vst [vmem:[%s241 + $0x1578] sm:$0xff] %v5029
        %6054 = vst [vmem:[%s241 + $0x1580] sm:$0xff] %v5030
        %6055 = vst [vmem:[%s241 + $0x1588] sm:$0xff] %v5031
        %6056 = vst [vmem:[%s241 + $0x1590] sm:$0xff] %v5032
        %6057 = vst [vmem:[%s241 + $0x1598] sm:$0xff] %v5033
        %6058 = vst [vmem:[%s241 + $0x15a0] sm:$0xff] %v5034
        %6059 = vst [vmem:[%s241 + $0x15a8] sm:$0xff] %v5035
        %6060 = vst [vmem:[%s241 + $0x15b0] sm:$0xff] %v5036
        %6061 = vst [vmem:[%s241 + $0x15b8] sm:$0xff] %v5037
        %6062 = vst [vmem:[%s241 + $0x15c0] sm:$0xff] %v5038
        %6063 = vst [vmem:[%s241 + $0x15c8] sm:$0xff] %v5039
        %6064 = vst [vmem:[%s241 + $0x15d0] sm:$0xff] %v5040
        %6065 = vst [vmem:[%s241 + $0x15d8] sm:$0xff] %v5041
        %6066 = vst [vmem:[%s241 + $0x15e0] sm:$0xff] %v5042
        %6067 = vst [vmem:[%s241 + $0x15e8] sm:$0xff] %v5043
        %6068 = vst [vmem:[%s241 + $0x15f0] sm:$0xff] %v5044
        %6069 = vst [vmem:[%s241 + $0x15f8] sm:$0xff] %v5045
        %6070 = vst [vmem:[%s241 + $0x1600] sm:$0xff] %v5046
        %6071 = vst [vmem:[%s241 + $0x1608] sm:$0xff] %v5047
        %6072 = vst [vmem:[%s241 + $0x1610] sm:$0xff] %v5048
        %6073 = vst [vmem:[%s241 + $0x1618] sm:$0xff] %v5049
        %6074 = vst [vmem:[%s241 + $0x1620] sm:$0xff] %v5050
        %6075 = vst [vmem:[%s241 + $0x1628] sm:$0xff] %v5051
        %6076 = vst [vmem:[%s241 + $0x1630] sm:$0xff] %v5052
        %6077 = vst [vmem:[%s241 + $0x1638] sm:$0xff] %v5053
        %6078 = vst [vmem:[%s241 + $0x1640] sm:$0xff] %v5054
        %6079 = vst [vmem:[%s241 + $0x1648] sm:$0xff] %v5055
        %6080 = vst [vmem:[%s241 + $0x1650] sm:$0xff] %v5056
        %6081 = vst [vmem:[%s241 + $0x1658] sm:$0xff] %v5057
        %6082 = vst [vmem:[%s241 + $0x1660] sm:$0xff] %v5058
        %6083 = vst [vmem:[%s241 + $0x1668] sm:$0xff] %v5059
        %6084 = vst [vmem:[%s241 + $0x1670] sm:$0xff] %v5060
        %6085 = vst [vmem:[%s241 + $0x1678] sm:$0xff] %v5061
        %6086 = vst [vmem:[%s241 + $0x1680] sm:$0xff] %v5062
        %6087 = vst [vmem:[%s241 + $0x1688] sm:$0xff] %v5063
        %6088 = vst [vmem:[%s241 + $0x1690] sm:$0xff] %v5064
        %6089 = vst [vmem:[%s241 + $0x1698] sm:$0xff] %v5065
        %6090 = vst [vmem:[%s241 + $0x16a0] sm:$0xff] %v5066
        %6091 = vst [vmem:[%s241 + $0x16a8] sm:$0xff] %v5067
        %6092 = vst [vmem:[%s241 + $0x16b0] sm:$0xff] %v5068
        %6093 = vst [vmem:[%s241 + $0x16b8] sm:$0xff] %v5069
        %6094 = vst [vmem:[%s241 + $0x16c0] sm:$0xff] %v5070
        %6095 = vst [vmem:[%s241 + $0x16c8] sm:$0xff] %v5071
        %6096 = vst [vmem:[%s241 + $0x16d0] sm:$0xff] %v5072
        %6097 = vst [vmem:[%s241 + $0x16d8] sm:$0xff] %v5073
        %6098 = vst [vmem:[%s241 + $0x16e0] sm:$0xff] %v5074
        %6099 = vst [vmem:[%s241 + $0x16e8] sm:$0xff] %v5075
        %6100 = vst [vmem:[%s241 + $0x16f0] sm:$0xff] %v5076
        %6101 = vst [vmem:[%s241 + $0x16f8] sm:$0xff] %v5077
        %6102 = vst [vmem:[%s241 + $0x1700] sm:$0xff] %v5078
        %6103 = vst [vmem:[%s241 + $0x1708] sm:$0xff] %v5079
        %6104 = vst [vmem:[%s241 + $0x1710] sm:$0xff] %v5080
        %6105 = vst [vmem:[%s241 + $0x1718] sm:$0xff] %v5081
        %6106 = vst [vmem:[%s241 + $0x1720] sm:$0xff] %v5082
        %6107 = vst [vmem:[%s241 + $0x1728] sm:$0xff] %v5083
        %6108 = vst [vmem:[%s241 + $0x1730] sm:$0xff] %v5084
        %6109 = vst [vmem:[%s241 + $0x1738] sm:$0xff] %v5085
        %6110 = vst [vmem:[%s241 + $0x1740] sm:$0xff] %v5086
        %6111 = vst [vmem:[%s241 + $0x1748] sm:$0xff] %v5087
        %6112 = vst [vmem:[%s241 + $0x1750] sm:$0xff] %v5088
        %6113 = vst [vmem:[%s241 + $0x1758] sm:$0xff] %v5089
        %6114 = vst [vmem:[%s241 + $0x1760] sm:$0xff] %v5090
        %6115 = vst [vmem:[%s241 + $0x1768] sm:$0xff] %v5091
        %6116 = vst [vmem:[%s241 + $0x1770] sm:$0xff] %v5092
        %6117 = vst [vmem:[%s241 + $0x1778] sm:$0xff] %v5093
        %6118 = vst [vmem:[%s241 + $0x1780] sm:$0xff] %v5094
        %6119 = vst [vmem:[%s241 + $0x1788] sm:$0xff] %v5095
        %6120 = vst [vmem:[%s241 + $0x1790] sm:$0xff] %v5096
        %6121 = vst [vmem:[%s241 + $0x1798] sm:$0xff] %v5097
        %6122 = vst [vmem:[%s241 + $0x17a0] sm:$0xff] %v5098
        %6123 = vst [vmem:[%s241 + $0x17a8] sm:$0xff] %v5099
        %6124 = vst [vmem:[%s241 + $0x17b0] sm:$0xff] %v5100
        %6125 = vst [vmem:[%s241 + $0x17b8] sm:$0xff] %v5101
        %6126 = vst [vmem:[%s241 + $0x17c0] sm:$0xff] %v5102
        %6127 = vst [vmem:[%s241 + $0x17c8] sm:$0xff] %v5103
        %6128 = vst [vmem:[%s241 + $0x17d0] sm:$0xff] %v5104
        %6129 = vst [vmem:[%s241 + $0x17d8] sm:$0xff] %v5105
        %6130 = vst [vmem:[%s241 + $0x17e0] sm:$0xff] %v5106
        %6131 = vst [vmem:[%s241 + $0x17e8] sm:$0xff] %v5107
        %6132 = vst [vmem:[%s241 + $0x17f0] sm:$0xff] %v5108
        %6133 = vst [vmem:[%s241 + $0x17f8] sm:$0xff] %v5109
        %6134 = vst [vmem:[%s241 + $0x1800] sm:$0xff] %v5110
        %6135 = vst [vmem:[%s241 + $0x1808] sm:$0xff] %v5111
        %6136 = vst [vmem:[%s241 + $0x1810] sm:$0xff] %v5112
        %6137 = vst [vmem:[%s241 + $0x1818] sm:$0xff] %v5113
        %6138 = vst [vmem:[%s241 + $0x1820] sm:$0xff] %v5114
        %6139 = vst [vmem:[%s241 + $0x1828] sm:$0xff] %v5115
        %6140 = vst [vmem:[%s241 + $0x1830] sm:$0xff] %v5116
        %6141 = vst [vmem:[%s241 + $0x1838] sm:$0xff] %v5117
        %6142 = vst [vmem:[%s241 + $0x1840] sm:$0xff] %v5118
        %6143 = vst [vmem:[%s241 + $0x1848] sm:$0xff] %v5119
        %6144 = vst [vmem:[%s241 + $0x1850] sm:$0xff] %v5120
        %6145 = vst [vmem:[%s241 + $0x1858] sm:$0xff] %v5121
        %6146 = vst [vmem:[%s241 + $0x1860] sm:$0xff] %v5122
        %6147 = vst [vmem:[%s241 + $0x1868] sm:$0xff] %v5123
        %6148 = vst [vmem:[%s241 + $0x1870] sm:$0xff] %v5124
        %6149 = vst [vmem:[%s241 + $0x1878] sm:$0xff] %v5125
        %6150 = vst [vmem:[%s241 + $0x1880] sm:$0xff] %v5126
        %6151 = vst [vmem:[%s241 + $0x1888] sm:$0xff] %v5127
        %6152 = vst [vmem:[%s241 + $0x1890] sm:$0xff] %v5128
        %6153 = vst [vmem:[%s241 + $0x1898] sm:$0xff] %v5129
        %6154 = vst [vmem:[%s241 + $0x18a0] sm:$0xff] %v5130
        %6155 = vst [vmem:[%s241 + $0x18a8] sm:$0xff] %v5131
        %6156 = vst [vmem:[%s241 + $0x18b0] sm:$0xff] %v5132
        %6157 = vst [vmem:[%s241 + $0x18b8] sm:$0xff] %v5133
        %6158 = vst [vmem:[%s241 + $0x18c0] sm:$0xff] %v5134
        %6159 = vst [vmem:[%s241 + $0x18c8] sm:$0xff] %v5135
        %6160 = vst [vmem:[%s241 + $0x18d0] sm:$0xff] %v5136
        %6161 = vst [vmem:[%s241 + $0x18d8] sm:$0xff] %v5137
        %6162 = vst [vmem:[%s241 + $0x18e0] sm:$0xff] %v5138
        %6163 = vst [vmem:[%s241 + $0x18e8] sm:$0xff] %v5139
        %6164 = vst [vmem:[%s241 + $0x18f0] sm:$0xff] %v5140
        %6165 = vst [vmem:[%s241 + $0x18f8] sm:$0xff] %v5141
        %6166 = vst [vmem:[%s241 + $0x1900] sm:$0xff] %v5142
        %6167 = vst [vmem:[%s241 + $0x1908] sm:$0xff] %v5143
        %6168 = vst [vmem:[%s241 + $0x1910] sm:$0xff] %v5144
        %6169 = vst [vmem:[%s241 + $0x1918] sm:$0xff] %v5145
        %6170 = vst [vmem:[%s241 + $0x1920] sm:$0xff] %v5146
        %6171 = vst [vmem:[%s241 + $0x1928] sm:$0xff] %v5147
        %6172 = vst [vmem:[%s241 + $0x1930] sm:$0xff] %v5148
        %6173 = vst [vmem:[%s241 + $0x1938] sm:$0xff] %v5149
        %6174 = vst [vmem:[%s241 + $0x1940] sm:$0xff] %v5150
        %6175 = vst [vmem:[%s241 + $0x1948] sm:$0xff] %v5151
        %6176 = vst [vmem:[%s241 + $0x1950] sm:$0xff] %v5152
        %6177 = vst [vmem:[%s241 + $0x1958] sm:$0xff] %v5153
        %6178 = vst [vmem:[%s241 + $0x1960] sm:$0xff] %v5154
        %6179 = vst [vmem:[%s241 + $0x1968] sm:$0xff] %v5155
        %6180 = vst [vmem:[%s241 + $0x1970] sm:$0xff] %v5156
        %6181 = vst [vmem:[%s241 + $0x1978] sm:$0xff] %v5157
        %6182 = vst [vmem:[%s241 + $0x1980] sm:$0xff] %v5158
        %6183 = vst [vmem:[%s241 + $0x1988] sm:$0xff] %v5159
        %6184 = vst [vmem:[%s241 + $0x1990] sm:$0xff] %v5160
        %6185 = vst [vmem:[%s241 + $0x1998] sm:$0xff] %v5161
        %6186 = vst [vmem:[%s241 + $0x19a0] sm:$0xff] %v5162
        %6187 = vst [vmem:[%s241 + $0x19a8] sm:$0xff] %v5163
        %6188 = vst [vmem:[%s241 + $0x19b0] sm:$0xff] %v5164
        %6189 = vst [vmem:[%s241 + $0x19b8] sm:$0xff] %v5165
        %6190 = vst [vmem:[%s241 + $0x19c0] sm:$0xff] %v5166
        %6191 = vst [vmem:[%s241 + $0x19c8] sm:$0xff] %v5167
        %6192 = vst [vmem:[%s241 + $0x19d0] sm:$0xff] %v5168
        %6193 = vst [vmem:[%s241 + $0x19d8] sm:$0xff] %v5169
        %6194 = vst [vmem:[%s241 + $0x19e0] sm:$0xff] %v5170
        %6195 = vst [vmem:[%s241 + $0x19e8] sm:$0xff] %v5171
        %6196 = vst [vmem:[%s241 + $0x19f0] sm:$0xff] %v5172
        %6197 = vst [vmem:[%s241 + $0x19f8] sm:$0xff] %v5173
        %6198 = vst [vmem:[%s241 + $0x1a00] sm:$0xff] %v5174
        %6199 = vst [vmem:[%s241 + $0x1a08] sm:$0xff] %v5175
        %6200 = vst [vmem:[%s241 + $0x1a10] sm:$0xff] %v5176
        %6201 = vst [vmem:[%s241 + $0x1a18] sm:$0xff] %v5177
        %6202 = vst [vmem:[%s241 + $0x1a20] sm:$0xff] %v5178
        %6203 = vst [vmem:[%s241 + $0x1a28] sm:$0xff] %v5179
        %6204 = vst [vmem:[%s241 + $0x1a30] sm:$0xff] %v5180
        %6205 = vst [vmem:[%s241 + $0x1a38] sm:$0xff] %v5181
        %6206 = vst [vmem:[%s241 + $0x1a40] sm:$0xff] %v5182
        %6207 = vst [vmem:[%s241 + $0x1a48] sm:$0xff] %v5183
        %6208 = vst [vmem:[%s241 + $0x1a50] sm:$0xff] %v5184
        %6209 = vst [vmem:[%s241 + $0x1a58] sm:$0xff] %v5185
        %6210 = vst [vmem:[%s241 + $0x1a60] sm:$0xff] %v5186
        %6211 = vst [vmem:[%s241 + $0x1a68] sm:$0xff] %v5187
        %6212 = vst [vmem:[%s241 + $0x1a70] sm:$0xff] %v5188
        %6213 = vst [vmem:[%s241 + $0x1a78] sm:$0xff] %v5189
        %6214 = vst [vmem:[%s241 + $0x1a80] sm:$0xff] %v5190
        %6215 = vst [vmem:[%s241 + $0x1a88] sm:$0xff] %v5191
        %6216 = vst [vmem:[%s241 + $0x1a90] sm:$0xff] %v5192
        %6217 = vst [vmem:[%s241 + $0x1a98] sm:$0xff] %v5193
        %6218 = vst [vmem:[%s241 + $0x1aa0] sm:$0xff] %v5194
        %6219 = vst [vmem:[%s241 + $0x1aa8] sm:$0xff] %v5195
        %6220 = vst [vmem:[%s241 + $0x1ab0] sm:$0xff] %v5196
        %6221 = vst [vmem:[%s241 + $0x1ab8] sm:$0xff] %v5197
        %6222 = vst [vmem:[%s241 + $0x1ac0] sm:$0xff] %v5198
        %6223 = vst [vmem:[%s241 + $0x1ac8] sm:$0xff] %v5199
        %6224 = vst [vmem:[%s241 + $0x1ad0] sm:$0xff] %v5200
        %6225 = vst [vmem:[%s241 + $0x1ad8] sm:$0xff] %v5201
        %6226 = vst [vmem:[%s241 + $0x1ae0] sm:$0xff] %v5202
        %6227 = vst [vmem:[%s241 + $0x1ae8] sm:$0xff] %v5203
        %6228 = vst [vmem:[%s241 + $0x1af0] sm:$0xff] %v5204
        %6229 = vst [vmem:[%s241 + $0x1af8] sm:$0xff] %v5205
        %6230 = vst [vmem:[%s241 + $0x1b00] sm:$0xff] %v5206
        %6231 = vst [vmem:[%s241 + $0x1b08] sm:$0xff] %v5207
        %6232 = vst [vmem:[%s241 + $0x1b10] sm:$0xff] %v5208
        %6233 = vst [vmem:[%s241 + $0x1b18] sm:$0xff] %v5209
        %6234 = vst [vmem:[%s241 + $0x1b20] sm:$0xff] %v5210
        %6235 = vst [vmem:[%s241 + $0x1b28] sm:$0xff] %v5211
        %6236 = vst [vmem:[%s241 + $0x1b30] sm:$0xff] %v5212
        %6237 = vst [vmem:[%s241 + $0x1b38] sm:$0xff] %v5213
        %6238 = vst [vmem:[%s241 + $0x1b40] sm:$0xff] %v5214
        %6239 = vst [vmem:[%s241 + $0x1b48] sm:$0xff] %v5215
        %6240 = vst [vmem:[%s241 + $0x1b50] sm:$0xff] %v5216
        %6241 = vst [vmem:[%s241 + $0x1b58] sm:$0xff] %v5217
        %6242 = vst [vmem:[%s241 + $0x1b60] sm:$0xff] %v5218
        %6243 = vst [vmem:[%s241 + $0x1b68] sm:$0xff] %v5219
        %6244 = vst [vmem:[%s241 + $0x1b70] sm:$0xff] %v5220
        %6245 = vst [vmem:[%s241 + $0x1b78] sm:$0xff] %v5221
        %6246 = vst [vmem:[%s241 + $0x1b80] sm:$0xff] %v5222
        %6247 = vst [vmem:[%s241 + $0x1b88] sm:$0xff] %v5223
        %6248 = vst [vmem:[%s241 + $0x1b90] sm:$0xff] %v5224
        %6249 = vst [vmem:[%s241 + $0x1b98] sm:$0xff] %v5225
        %6250 = vst [vmem:[%s241 + $0x1ba0] sm:$0xff] %v5226
        %6251 = vst [vmem:[%s241 + $0x1ba8] sm:$0xff] %v5227
        %6252 = vst [vmem:[%s241 + $0x1bb0] sm:$0xff] %v5228
        %6253 = vst [vmem:[%s241 + $0x1bb8] sm:$0xff] %v5229
        %6254 = vst [vmem:[%s241 + $0x1bc0] sm:$0xff] %v5230
        %6255 = vst [vmem:[%s241 + $0x1bc8] sm:$0xff] %v5231
        %6256 = vst [vmem:[%s241 + $0x1bd0] sm:$0xff] %v5232
        %6257 = vst [vmem:[%s241 + $0x1bd8] sm:$0xff] %v5233
        %6258 = vst [vmem:[%s241 + $0x1be0] sm:$0xff] %v5234
        %6259 = vst [vmem:[%s241 + $0x1be8] sm:$0xff] %v5235
        %6260 = vst [vmem:[%s241 + $0x1bf0] sm:$0xff] %v5236
        %6261 = vst [vmem:[%s241 + $0x1bf8] sm:$0xff] %v5237
        %6262 = vst [vmem:[%s241 + $0x1c00] sm:$0xff] %v5238
        %6263 = vst [vmem:[%s241 + $0x1c08] sm:$0xff] %v5239
        %6264 = vst [vmem:[%s241 + $0x1c10] sm:$0xff] %v5240
        %6265 = vst [vmem:[%s241 + $0x1c18] sm:$0xff] %v5241
        %6266 = vst [vmem:[%s241 + $0x1c20] sm:$0xff] %v5242
        %6267 = vst [vmem:[%s241 + $0x1c28] sm:$0xff] %v5243
        %6268 = vst [vmem:[%s241 + $0x1c30] sm:$0xff] %v5244
        %6269 = vst [vmem:[%s241 + $0x1c38] sm:$0xff] %v5245
        %6270 = vst [vmem:[%s241 + $0x1c40] sm:$0xff] %v5246
        %6271 = vst [vmem:[%s241 + $0x1c48] sm:$0xff] %v5247
        %6272 = vst [vmem:[%s241 + $0x1c50] sm:$0xff] %v5248
        %6273 = vst [vmem:[%s241 + $0x1c58] sm:$0xff] %v5249
        %6274 = vst [vmem:[%s241 + $0x1c60] sm:$0xff] %v5250
        %6275 = vst [vmem:[%s241 + $0x1c68] sm:$0xff] %v5251
        %6276 = vst [vmem:[%s241 + $0x1c70] sm:$0xff] %v5252
        %6277 = vst [vmem:[%s241 + $0x1c78] sm:$0xff] %v5253
        %6278 = vst [vmem:[%s241 + $0x1c80] sm:$0xff] %v5254
        %6279 = vst [vmem:[%s241 + $0x1c88] sm:$0xff] %v5255
        %6280 = vst [vmem:[%s241 + $0x1c90] sm:$0xff] %v5256
        %6281 = vst [vmem:[%s241 + $0x1c98] sm:$0xff] %v5257
        %6282 = vst [vmem:[%s241 + $0x1ca0] sm:$0xff] %v5258
        %6283 = vst [vmem:[%s241 + $0x1ca8] sm:$0xff] %v5259
        %6284 = vst [vmem:[%s241 + $0x1cb0] sm:$0xff] %v5260
        %6285 = vst [vmem:[%s241 + $0x1cb8] sm:$0xff] %v5261
        %6286 = vst [vmem:[%s241 + $0x1cc0] sm:$0xff] %v5262
        %6287 = vst [vmem:[%s241 + $0x1cc8] sm:$0xff] %v5263
        %6288 = vst [vmem:[%s241 + $0x1cd0] sm:$0xff] %v5264
        %6289 = vst [vmem:[%s241 + $0x1cd8] sm:$0xff] %v5265
        %6290 = vst [vmem:[%s241 + $0x1ce0] sm:$0xff] %v5266
        %6291 = vst [vmem:[%s241 + $0x1ce8] sm:$0xff] %v5267
        %6292 = vst [vmem:[%s241 + $0x1cf0] sm:$0xff] %v5268
        %6293 = vst [vmem:[%s241 + $0x1cf8] sm:$0xff] %v5269
        %6294 = vst [vmem:[%s241 + $0x1d00] sm:$0xff] %v5270
        %6295 = vst [vmem:[%s241 + $0x1d08] sm:$0xff] %v5271
        %6296 = vst [vmem:[%s241 + $0x1d10] sm:$0xff] %v5272
        %6297 = vst [vmem:[%s241 + $0x1d18] sm:$0xff] %v5273
        %6298 = vst [vmem:[%s241 + $0x1d20] sm:$0xff] %v5274
        %6299 = vst [vmem:[%s241 + $0x1d28] sm:$0xff] %v5275
        %6300 = vst [vmem:[%s241 + $0x1d30] sm:$0xff] %v5276
        %6301 = vst [vmem:[%s241 + $0x1d38] sm:$0xff] %v5277
        %6302 = vst [vmem:[%s241 + $0x1d40] sm:$0xff] %v5278
        %6303 = vst [vmem:[%s241 + $0x1d48] sm:$0xff] %v5279
        %6304 = vst [vmem:[%s241 + $0x1d50] sm:$0xff] %v5280
        %6305 = vst [vmem:[%s241 + $0x1d58] sm:$0xff] %v5281
        %6306 = vst [vmem:[%s241 + $0x1d60] sm:$0xff] %v5282
        %6307 = vst [vmem:[%s241 + $0x1d68] sm:$0xff] %v5283
        %6308 = vst [vmem:[%s241 + $0x1d70] sm:$0xff] %v5284
        %6309 = vst [vmem:[%s241 + $0x1d78] sm:$0xff] %v5285
        %6310 = vst [vmem:[%s241 + $0x1d80] sm:$0xff] %v5286
        %6311 = vst [vmem:[%s241 + $0x1d88] sm:$0xff] %v5287
        %6312 = vst [vmem:[%s241 + $0x1d90] sm:$0xff] %v5288
        %6313 = vst [vmem:[%s241 + $0x1d98] sm:$0xff] %v5289
        %6314 = vst [vmem:[%s241 + $0x1da0] sm:$0xff] %v5290
        %6315 = vst [vmem:[%s241 + $0x1da8] sm:$0xff] %v5291
        %6316 = vst [vmem:[%s241 + $0x1db0] sm:$0xff] %v5292
        %6317 = vst [vmem:[%s241 + $0x1db8] sm:$0xff] %v5293
        %6318 = vst [vmem:[%s241 + $0x1dc0] sm:$0xff] %v5294
        %6319 = vst [vmem:[%s241 + $0x1dc8] sm:$0xff] %v5295
        %6320 = vst [vmem:[%s241 + $0x1dd0] sm:$0xff] %v5296
        %6321 = vst [vmem:[%s241 + $0x1dd8] sm:$0xff] %v5297
        %6322 = vst [vmem:[%s241 + $0x1de0] sm:$0xff] %v5298
        %6323 = vst [vmem:[%s241 + $0x1de8] sm:$0xff] %v5299
        %6324 = vst [vmem:[%s241 + $0x1df0] sm:$0xff] %v5300
        %6325 = vst [vmem:[%s241 + $0x1df8] sm:$0xff] %v5301
        %6326 = vst [vmem:[%s241 + $0x1e00] sm:$0xff] %v5302
        %6327 = vst [vmem:[%s241 + $0x1e08] sm:$0xff] %v5303
        %6328 = vst [vmem:[%s241 + $0x1e10] sm:$0xff] %v5304
        %6329 = vst [vmem:[%s241 + $0x1e18] sm:$0xff] %v5305
        %6330 = vst [vmem:[%s241 + $0x1e20] sm:$0xff] %v5306
        %6331 = vst [vmem:[%s241 + $0x1e28] sm:$0xff] %v5307
        %6332 = vst [vmem:[%s241 + $0x1e30] sm:$0xff] %v5308
        %6333 = vst [vmem:[%s241 + $0x1e38] sm:$0xff] %v5309
        %6334 = vst [vmem:[%s241 + $0x1e40] sm:$0xff] %v5310
        %6335 = vst [vmem:[%s241 + $0x1e48] sm:$0xff] %v5311
        %6336 = vst [vmem:[%s241 + $0x1e50] sm:$0xff] %v5312
        %6337 = vst [vmem:[%s241 + $0x1e58] sm:$0xff] %v5313
        %6338 = vst [vmem:[%s241 + $0x1e60] sm:$0xff] %v5314
        %6339 = vst [vmem:[%s241 + $0x1e68] sm:$0xff] %v5315
        %6340 = vst [vmem:[%s241 + $0x1e70] sm:$0xff] %v5316
        %6341 = vst [vmem:[%s241 + $0x1e78] sm:$0xff] %v5317
        %6342 = vst [vmem:[%s241 + $0x1e80] sm:$0xff] %v5318
        %6343 = vst [vmem:[%s241 + $0x1e88] sm:$0xff] %v5319
        %6344 = vst [vmem:[%s241 + $0x1e90] sm:$0xff] %v5320
        %6345 = vst [vmem:[%s241 + $0x1e98] sm:$0xff] %v5321
        %6346 = vst [vmem:[%s241 + $0x1ea0] sm:$0xff] %v5322
        %6347 = vst [vmem:[%s241 + $0x1ea8] sm:$0xff] %v5323
        %6348 = vst [vmem:[%s241 + $0x1eb0] sm:$0xff] %v5324
        %6349 = vst [vmem:[%s241 + $0x1eb8] sm:$0xff] %v5325
        %6350 = vst [vmem:[%s241 + $0x1ec0] sm:$0xff] %v5326
        %6351 = vst [vmem:[%s241 + $0x1ec8] sm:$0xff] %v5327
        %6352 = vst [vmem:[%s241 + $0x1ed0] sm:$0xff] %v5328
        %6353 = vst [vmem:[%s241 + $0x1ed8] sm:$0xff] %v5329
        %6354 = vst [vmem:[%s241 + $0x1ee0] sm:$0xff] %v5330
        %6355 = vst [vmem:[%s241 + $0x1ee8] sm:$0xff] %v5331
        %6356 = vst [vmem:[%s241 + $0x1ef0] sm:$0xff] %v5332
        %6357 = vst [vmem:[%s241 + $0x1ef8] sm:$0xff] %v5333
        %6358 = vst [vmem:[%s241 + $0x1f00] sm:$0xff] %v5334
        %6359 = vst [vmem:[%s241 + $0x1f08] sm:$0xff] %v5335
        %6360 = vst [vmem:[%s241 + $0x1f10] sm:$0xff] %v5336
        %6361 = vst [vmem:[%s241 + $0x1f18] sm:$0xff] %v5337
        %6362 = vst [vmem:[%s241 + $0x1f20] sm:$0xff] %v5338
        %6363 = vst [vmem:[%s241 + $0x1f28] sm:$0xff] %v5339
        %6364 = vst [vmem:[%s241 + $0x1f30] sm:$0xff] %v5340
        %6365 = vst [vmem:[%s241 + $0x1f38] sm:$0xff] %v5341
        %6366 = vst [vmem:[%s241 + $0x1f40] sm:$0xff] %v5342
        %6367 = vst [vmem:[%s241 + $0x1f48] sm:$0xff] %v5343
        %6368 = vst [vmem:[%s241 + $0x1f50] sm:$0xff] %v5344
        %6369 = vst [vmem:[%s241 + $0x1f58] sm:$0xff] %v5345
        %6370 = vst [vmem:[%s241 + $0x1f60] sm:$0xff] %v5346
        %6371 = vst [vmem:[%s241 + $0x1f68] sm:$0xff] %v5347
        %6372 = vst [vmem:[%s241 + $0x1f70] sm:$0xff] %v5348
        %6373 = vst [vmem:[%s241 + $0x1f78] sm:$0xff] %v5349
        %6374 = vst [vmem:[%s241 + $0x1f80] sm:$0xff] %v5350
        %6375 = vst [vmem:[%s241 + $0x1f88] sm:$0xff] %v5351
        %6376 = vst [vmem:[%s241 + $0x1f90] sm:$0xff] %v5352
        %6377 = vst [vmem:[%s241 + $0x1f98] sm:$0xff] %v5353
        %6378 = vst [vmem:[%s241 + $0x1fa0] sm:$0xff] %v5354
        %6379 = vst [vmem:[%s241 + $0x1fa8] sm:$0xff] %v5355
        %6380 = vst [vmem:[%s241 + $0x1fb0] sm:$0xff] %v5356
        %6381 = vst [vmem:[%s241 + $0x1fb8] sm:$0xff] %v5357
        %6382 = vst [vmem:[%s241 + $0x1fc0] sm:$0xff] %v5358
        %6383 = vst [vmem:[%s241 + $0x1fc8] sm:$0xff] %v5359
        %6384 = vst [vmem:[%s241 + $0x1fd0] sm:$0xff] %v5360
        %6385 = vst [vmem:[%s241 + $0x1fd8] sm:$0xff] %v5361
        %6386 = vst [vmem:[%s241 + $0x1fe0] sm:$0xff] %v5362
        %6387 = vst [vmem:[%s241 + $0x1fe8] sm:$0xff] %v5363
        %6388 = vst [vmem:[%s241 + $0x1ff0] sm:$0xff] %v5364
        %6389 = vst [vmem:[%s241 + $0x1ff8] sm:$0xff] %v5365
        %s6390 = sand.u32 %s87, 1
        %s6391 = scalar_lea.sflag [#allocation4], %s6390
        %s6392 = sand.u32 %s87, 1
        %s6393 = smul.addr %s6392, 8192
        %s6394 = scalar_lea.vmem [#allocation7], %s6393
        %s6395 = sand.u32 %s113, 1
        %s6396 = scalar_lea.sflag [#allocation9], %s6395
        %s6397 = sand.u32 %s113, 1
        %s6398 = smul.addr %s6397, 8192
        %s6399 = scalar_lea.vmem [#allocation8], %s6398
        // Predicated region
        $region37: #{tpu_custom_call.1} parent=27 // pred_check
          %p6400 = pneg %p97
        $region38: #{tpu_custom_call.1} parent=27 // pred_check_branch
          %6402 = sbr.rel (%p6400) target = $region40
        $region39: #{tpu_custom_call.1} parent=27 // pred_region
          %s6403 = smul.u32 32, %s27
          %s6405 = ssub.s32 131072, 131072
          %6406 = vsyncadd %s6391, %s6405
          %s6407 = smul.addr %s6403, 32
          %s6408 = smul.addr %s6407, 128
          %s6409 = scalar_lea.hbm %s2, %s6408
          %s6410 = sshll.u32 %s6394, 4
          %s6411 = int_to_ptr.vmem [resolvable:$true] %s6410
          %6416 = dma.vmem_to_hbm [thread:$0]  %s6411, 131072, %s6409, %s6391, 4096, 4096, 256
        $region40: #{tpu_custom_call.1} parent=27 // pred_fallthru
          _
        // Predicated region
        $region41: #{tpu_custom_call.1} parent=27 // pred_check
          %p6417 = pneg %p123
        $region42: #{tpu_custom_call.1} parent=27 // pred_check_branch
          %6419 = sbr.rel (%p6417) target = $region44
        $region43: #{tpu_custom_call.1} parent=27 // pred_region
          %s6420 = smul.u32 32, %s27
          %s6422 = ssub.s32 131072, 131072
          %6423 = vsyncadd %s6396, %s6422
          %s6424 = smul.addr %s6420, 32
          %s6425 = smul.addr %s6424, 128
          %s6426 = scalar_lea.hbm %s3, %s6425
          %s6427 = sshll.u32 %s6399, 4
          %s6428 = int_to_ptr.vmem [resolvable:$true] %s6427
          %6433 = dma.vmem_to_hbm [thread:$0]  %s6428, 131072, %s6426, %s6396, 4096, 4096, 256
        $region44: #{tpu_custom_call.1} parent=27 // pred_fallthru
          _
      $region28: #{tpu_custom_call.1} parent=5 // pred_fallthru
        _
      %p6434 = scmp.le.s32.totalorder 2, %s22
      // Predicated region
      $region45: #{tpu_custom_call.1} parent=5 // pred_check
        %p6435 = pneg %p6434
      $region46: #{tpu_custom_call.1} parent=5 // pred_check_branch
        %6437 = sbr.rel (%p6435) target = $region48
      $region47: #{tpu_custom_call.1} parent=5 // pred_region
        %s6438 = ssub.s32 %s22, 2
        // Predicated region
        $region49: #{tpu_custom_call.1} parent=47 // pred_check
          %p6439 = pneg %p103
        $region50: #{tpu_custom_call.1} parent=47 // pred_check_branch
          %6441 = sbr.rel (%p6439) target = $region52
        $region51: #{tpu_custom_call.1} parent=47 // pred_region
          %s6442 = sand.u32 %s88, 1
          %s6443 = scalar_lea.sflag [#allocation4], %s6442
          %s6444 = sand.u32 %s88, 1
          %s6445 = smul.addr %s6444, 8192
          %s6446 = scalar_lea.vmem [#allocation7], %s6445
          %6447 = dma.done %s6443, 131072
        $region52: #{tpu_custom_call.1} parent=47 // pred_fallthru
          _
        // Predicated region
        $region53: #{tpu_custom_call.1} parent=47 // pred_check
          %p6448 = pneg %p129
        $region54: #{tpu_custom_call.1} parent=47 // pred_check_branch
          %6450 = sbr.rel (%p6448) target = $region56
        $region55: #{tpu_custom_call.1} parent=47 // pred_region
          %s6451 = sand.u32 %s114, 1
          %s6452 = scalar_lea.sflag [#allocation9], %s6451
          %s6453 = sand.u32 %s114, 1
          %s6454 = smul.addr %s6453, 8192
          %s6455 = scalar_lea.vmem [#allocation8], %s6454
          %6456 = dma.done %s6452, 131072
        $region56: #{tpu_custom_call.1} parent=47 // pred_fallthru
          _
      $region48: #{tpu_custom_call.1} parent=5 // pred_fallthru
        _
    $region6: #{tpu_custom_call.1} parent=1 // loop_footer
      %s26 = sadd.s32 1, %s22
    $region7: #{tpu_custom_call.1} parent=1 // loop_footer_branch
      %21 = sbr.rel target = $region3
    $region8: #{tpu_custom_call.1} parent=1 // loop_exit
      _
    %6457 = vsyncpa [#allocation3], 1
    %s6458 = scalar_lea.sflag [#allocation3], 1
    %6459 = vsyncpa %s6458, 1
    %6460 = vsyncpa [#allocation6], 1
    %s6461 = scalar_lea.sflag [#allocation6], 1
    %6462 = vsyncpa %s6461, 1
    %6463 = vsyncpa [#allocation4], 1
    %s6464 = scalar_lea.sflag [#allocation4], 1
    %6465 = vsyncpa %s6464, 1
    %6466 = vsyncpa [#allocation9], 1
    %s6467 = scalar_lea.sflag [#allocation9], 1
    %6468 = vsyncpa %s6467, 1

</llo_original>
